<compile_context>
chip_gen: v7x
topology: tpu7x:2x2x1
jax: 0.10.0
libtpu: 0.0.40
codegen_flags: <defaults>
</compile_context>

<pallas_src>
import functools

import jax
import jax.numpy as jnp
from jax import lax
from jax.experimental import pallas as pl
from jax.experimental.pallas import tpu as pltpu


# ---------------------------------------------------------------------------
# Kernel
# ---------------------------------------------------------------------------
def _make_kernel(D, H, W, Cin, Cout, Dblk):
    """Fused BasicBlock step for (sample b, depth block d of Dblk rows)."""
    nD = D // Dblk
    P = Dblk + 2              # conv1 rows computed per step (1-row halo recompute)
    K1 = W * Cin              # conv1 contraction width (kw + Cin folded in Toeplitz)
    K2 = W * Cout             # conv2 contraction width
    Nw = W * Cout             # output lane width

    def kernel(x_ref, w1_ref, b1_ref, w2_ref, b2_ref, out_ref,
               xs0, xs1, xs2, hs0, hs1, hs2, acc1, acc2):
        # kh-shifted slabs: xsh[kh][r, q, :] == x[d0-2+r, q+kh-1, :] (0 if OOR)
        xsh = (xs0, xs1, xs2)              # each (Dblk+4, H, K1) bf16
        hsh = (hs0, hs1, hs2)              # each (P,      H, K2) bf16

        d_idx = pl.program_id(1)
        d0 = pl.multiple_of(d_idx * Dblk, Dblk)

        # ---- stage kh-shifted x slabs (zero only the thin halo slabs) --------
        def stage_x(blk, dst, n):
            zrow = jnp.zeros((n, 1, K1), xs0.dtype)
            xs1[dst:dst + n, :, :] = blk
            xs0[dst:dst + n, 1:H, :] = blk[:, :H - 1, :]
            xs0[dst:dst + n, 0:1, :] = zrow
            xs2[dst:dst + n, :H - 1, :] = blk[:, 1:, :]
            xs2[dst:dst + n, H - 1:H, :] = zrow

        def zero_x(dst, n):
            z = jnp.zeros((n, H, K1), xs0.dtype)
            xs0[dst:dst + n, :, :] = z
            xs1[dst:dst + n, :, :] = z
            xs2[dst:dst + n, :, :] = z

        # rows of this D block are always valid
        stage_x(x_ref[0, pl.ds(d0, Dblk), :, :], 2, Dblk)

        @pl.when(d_idx > 0)
        def _():            # two leading halo rows from the previous block
            stage_x(x_ref[0, pl.ds(d0 - 2, 2), :, :], 0, 2)

        @pl.when(d_idx == 0)
        def _():
            zero_x(0, 2)

        @pl.when(d_idx < nD - 1)
        def _():            # two trailing halo rows from the next block
            stage_x(x_ref[0, pl.ds(d0 + Dblk, 2), :, :], Dblk + 2, 2)

        @pl.when(d_idx == nD - 1)
        def _():
            zero_x(Dblk + 2, 2)

        # ---- conv1 (BN1 scale folded) + bias + ReLU ---------------------------
        # 9 (kd, kh) taps; kw taps + Cin contraction live inside the Toeplitz
        # weight (K1 x Nw) -> one fat-K MXU matmul per tap.  The kd slice of the
        # pre-shifted slab is a leading-axis slice (pure address offset).
        acc1[...] = jnp.zeros_like(acc1)
        for kd in range(3):
            for kh in range(3):
                lhs = xsh[kh][kd:kd + P, :, :].reshape(P * H, K1)
                acc1[...] += jnp.dot(lhs, w1_ref[kd, kh],
                                     preferred_element_type=jnp.float32)
        h = jnp.maximum(acc1[...] + b1_ref[0, :], 0.0)
        h = h.astype(jnp.bfloat16).reshape(P, H, K2)

        # ---- stage kh-shifted h slabs (h never leaves VMEM) -------------------
        zrow_h = jnp.zeros((P, 1, K2), hs0.dtype)
        hs1[...] = h
        hs0[:, 1:H, :] = h[:, :H - 1, :]
        hs0[:, 0:1, :] = zrow_h
        hs2[:, :H - 1, :] = h[:, 1:, :]
        hs2[:, H - 1:H, :] = zrow_h

        # conv2's D padding: h rows that fall outside [0, D) must be zero.
        @pl.when(d_idx == 0)
        def _():
            z = jnp.zeros((1, H, K2), hs0.dtype)
            hs0[0:1, :, :] = z
            hs1[0:1, :, :] = z
            hs2[0:1, :, :] = z

        @pl.when(d_idx == nD - 1)
        def _():
            z = jnp.zeros((1, H, K2), hs0.dtype)
            hs0[P - 1:P, :, :] = z
            hs1[P - 1:P, :, :] = z
            hs2[P - 1:P, :, :] = z

        # ---- conv2 (BN2 scale folded) + bias + residual add + ReLU ------------
        acc2[...] = jnp.zeros_like(acc2)
        for kd in range(3):
            for kh in range(3):
                lhs = hsh[kh][kd:kd + Dblk, :, :].reshape(Dblk * H, K2)
                acc2[...] += jnp.dot(lhs, w2_ref[kd, kh],
                                     preferred_element_type=jnp.float32)
        res = x_ref[0, pl.ds(d0, Dblk), :, :].reshape(Dblk * H, K1)
        out = jnp.maximum(acc2[...] + b2_ref[0, :] + res.astype(jnp.float32), 0.0)
        out_ref[0] = out.reshape(Dblk, H, Nw).astype(out_ref.dtype)

    return kernel


# ---------------------------------------------------------------------------
# Trace-time weight / BN preparation
# ---------------------------------------------------------------------------
def _fold_bn(gamma, beta, mean, var, eps=1e-5):
    scale = gamma / jnp.sqrt(var + eps)
    bias = beta - mean * scale
    return scale, bias


def _toeplitz_weights(w_dhwio, scale, W):
    """Fold the kw taps + Cin contraction of a 3x3x3 "same" conv into a block-
    Toeplitz matrix over the *unpadded* W axis (out-of-range kw taps are dropped,
    which matches zero padding), with the per-Cout BN scale folded in.

    w_dhwio: (3,3,3,Cin,Cout) f32;  scale: (Cout,) f32
    returns: (3, 3, W*Cin, W*Cout) bf16
    """
    kD, kH, kW, Cin, Cout = w_dhwio.shape
    w = w_dhwio * scale                           # fold BN scale over Cout
    p = jnp.arange(W)[:, None]                    # input W position
    q = jnp.arange(W)[None, :]                    # output W position
    mat = jnp.zeros((kD, kH, W, Cin, W, Cout), jnp.float32)
    for kw in range(kW):
        sel = (p == q + kw - 1).astype(jnp.float32)   # (W, W) selection matrix
        mat = mat + jnp.einsum("pw,dhio->dhpiwo", sel, w[:, :, kw])
    return mat.reshape(kD, kH, W * Cin, W * Cout).astype(jnp.bfloat16)


# ---------------------------------------------------------------------------
# Forward wrapper
# ---------------------------------------------------------------------------
@functools.partial(jax.jit, static_argnames=("single_buffer_weights",))
def _forward_impl(x_ncdhw, params, *, single_buffer_weights=True):
    # TODO(synk): stride>1 / downsample branch not implemented (default path only).
    # TODO(synk): BN applied in inference mode (folded running stats); training-mode
    #             batch statistics are not computed in-kernel.
    x = jnp.transpose(x_ncdhw, (0, 2, 3, 4, 1))          # NCDHW -> NDHWC
    N, D, H, W, Cin = x.shape
    Cout = params["w1"].shape[-1]
    assert Cin == Cout, "identity-residual path requires inplanes == planes"

    # D-block tiling (halo rows recomputed in-kernel): bounds per-step VMEM and
    # gives the pipeline several steps per TensorCore.
    Dblk = 4 if (D % 4 == 0 and D > 4) else D
    nD = D // Dblk
    P = Dblk + 2

    s1, b1 = _fold_bn(params["bn1_gamma"], params["bn1_beta"],
                      params["bn1_mean"], params["bn1_var"])
    s2, b2 = _fold_bn(params["bn2_gamma"], params["bn2_beta"],
                      params["bn2_mean"], params["bn2_var"])

    w1m = _toeplitz_weights(params["w1"], s1, W)          # (3,3,W*Cin,W*Cout) bf16
    w2m = _toeplitz_weights(params["w2"], s2, W)
    b1f = jnp.tile(b1, W).reshape(1, W * Cout).astype(jnp.float32)
    b2f = jnp.tile(b2, W).reshape(1, W * Cout).astype(jnp.float32)

    K1, K2, Nw = W * Cin, W * Cout, W * Cout
    # bf16, lane-dense W-folded activations.
    # TODO(synk): if W*Cin < 128, fold H rows into the lane axis as well so the
    #             output stores stay lane-dense (vst instead of vst.msk).
    xf = x.astype(jnp.bfloat16).reshape(N, D, H, K1)

    kernel = _make_kernel(D, H, W, Cin, Cout, Dblk)

    # Actual MXU work (including Toeplitz structural zeros and halo recompute).
    flops = 2 * 9 * N * nD * (P * H * K1 * Nw + Dblk * H * K2 * Nw)
    bytes_accessed = (xf.size * 2 + N * D * H * Nw * 2
                      + (w1m.size + w2m.size) * 2 + (b1f.size + b2f.size) * 4)

    # Derive the VMEM limit from the real per-step footprint (not a fixed 32 MiB).
    wbuf = 1 if single_buffer_weights else 2
    footprint = (2 * (D * H * K1) * 2 + 2 * (Dblk * H * Nw) * 2            # x / out blocks
                 + wbuf * (w1m.size + w2m.size) * 2
                 + 2 * (b1f.size + b2f.size) * 4
                 + 3 * ((Dblk + 4) * H * K1 + P * H * K2) * 2              # shifted slabs
                 + (P * H + Dblk * H) * Nw * 4)                            # accumulators
    vmem_limit = int(min(100 * 2 ** 20, max(16 * 2 ** 20, 2 * footprint)))

    w_kwargs = {"pipeline_mode": pl.Buffered(1)} if single_buffer_weights else {}

    out = pl.pallas_call(
        kernel,
        out_shape=jax.ShapeDtypeStruct((N, D, H, Nw), jnp.bfloat16),
        grid_spec=pltpu.PrefetchScalarGridSpec(
            num_scalar_prefetch=0,
            grid=(N, nD),
            in_specs=[
                # full sample; constant over d -> fetched once per sample
                pl.BlockSpec((1, D, H, K1), lambda b, d: (b, 0, 0, 0)),
                pl.BlockSpec((3, 3, K1, Nw), lambda b, d: (0, 0, 0, 0), **w_kwargs),
                pl.BlockSpec((1, Nw), lambda b, d: (0, 0)),
                pl.BlockSpec((3, 3, K2, Nw), lambda b, d: (0, 0, 0, 0), **w_kwargs),
                pl.BlockSpec((1, Nw), lambda b, d: (0, 0)),
            ],
            out_specs=pl.BlockSpec((1, Dblk, H, Nw), lambda b, d: (b, d, 0, 0)),
            scratch_shapes=[
                pltpu.VMEM((Dblk + 4, H, K1), jnp.bfloat16),   # kh=0 shifted x slab
                pltpu.VMEM((Dblk + 4, H, K1), jnp.bfloat16),   # kh=1
                pltpu.VMEM((Dblk + 4, H, K1), jnp.bfloat16),   # kh=2
                pltpu.VMEM((P, H, K2), jnp.bfloat16),          # kh=0 shifted h slab
                pltpu.VMEM((P, H, K2), jnp.bfloat16),          # kh=1
                pltpu.VMEM((P, H, K2), jnp.bfloat16),          # kh=2
                pltpu.VMEM((P * H, Nw), jnp.float32),          # conv1 accumulator
                pltpu.VMEM((Dblk * H, Nw), jnp.float32),       # conv2 accumulator
            ]),
        compiler_params=pltpu.CompilerParams(
            dimension_semantics=("parallel", "parallel"),      # disjoint outputs
            vmem_limit_bytes=vmem_limit),
        cost_estimate=pl.CostEstimate(flops=int(flops), transcendentals=0,
                                      bytes_accessed=int(bytes_accessed)),
    )(xf, w1m, b1f, w2m, b2f)

    out = out.reshape(N, D, H, W, Cout)
    return jnp.transpose(out, (0, 4, 1, 2, 3)).astype(jnp.float32)   # -> NCDHW


def basic_block_forward(x_ncdhw, params):
    """BasicBlock forward. x_ncdhw: (N, C, D, H, W) f32 (PyTorch layout)."""
    try:
        # single-buffered resident Toeplitz weights (constant index_map)
        return _forward_impl(x_ncdhw, params, single_buffer_weights=True)
    except Exception:
        # pl.Buffered(1) not supported by this jax/jaxlib -> default double buffering
        return _forward_impl(x_ncdhw, params, single_buffer_weights=False)


# ---------------------------------------------------------------------------
# Pure-JAX reference (mirrors the kernel's bf16-in / f32-accumulate / bf16-out math)
# ---------------------------------------------------------------------------
def _ref_forward(x_ncdhw, params):
    x = jnp.transpose(x_ncdhw, (0, 2, 3, 4, 1)).astype(jnp.float32)
    s1, b1 = _fold_bn(params["bn1_gamma"], params["bn1_beta"],
                      params["bn1_mean"], params["bn1_var"])
    s2, b2 = _fold_bn(params["bn2_gamma"], params["bn2_beta"],
                      params["bn2_mean"], params["bn2_var"])
    w1 = (params["w1"] * s1).astype(jnp.bfloat16)
    w2 = (params["w2"] * s2).astype(jnp.bfloat16)
    xb = x.astype(jnp.bfloat16)

    def conv(inp, w):
        return lax.conv_general_dilated(
            inp, w, window_strides=(1, 1, 1), padding="SAME",
            dimension_numbers=("NDHWC", "DHWIO", "NDHWC"),
            preferred_element_type=jnp.float32)

    h = jnp.maximum(conv(xb, w1) + b1, 0.0)
    o = jnp.maximum(conv(h.astype(jnp.bfloat16), w2) + b2
                    + xb.astype(jnp.float32), 0.0)
    o = o.astype(jnp.bfloat16).astype(jnp.float32)        # mirror bf16 kernel output
    return jnp.transpose(o, (0, 4, 1, 2, 3))


# ---------------------------------------------------------------------------
# Deterministic parameter init
# ---------------------------------------------------------------------------
def make_params(key, inplanes, planes):
    ks = jax.random.split(key, 10)
    # torch conv3d weight shape is (O, I, kd, kh, kw); transpose to DHWIO.
    w1_oidhw = 0.1 * jax.random.normal(ks[0], (planes, inplanes, 3, 3, 3), jnp.float32)
    w2_oidhw = 0.1 * jax.random.normal(ks[1], (planes, planes, 3, 3, 3), jnp.float32)
    return {
        "w1": jnp.transpose(w1_oidhw, (2, 3, 4, 1, 0)),
        "w2": jnp.transpose(w2_oidhw, (2, 3, 4, 1, 0)),
        "bn1_gamma": 1.0 + 0.1 * jax.random.normal(ks[2], (planes,), jnp.float32),
        "bn1_beta": 0.1 * jax.random.normal(ks[3], (planes,), jnp.float32),
        "bn1_mean": 0.1 * jax.random.normal(ks[4], (planes,), jnp.float32),
        "bn1_var": jax.random.uniform(ks[5], (planes,), jnp.float32, 0.5, 1.5),
        "bn2_gamma": 1.0 + 0.1 * jax.random.normal(ks[6], (planes,), jnp.float32),
        "bn2_beta": 0.1 * jax.random.normal(ks[7], (planes,), jnp.float32),
        "bn2_mean": 0.1 * jax.random.normal(ks[8], (planes,), jnp.float32),
        "bn2_var": jax.random.uniform(ks[9], (planes,), jnp.float32, 0.5, 1.5),
    }


if __name__ == "__main__":
    key = jax.random.PRNGKey(0)
    k_x, k_p = jax.random.split(key)

    # inplanes = planes = 16 so the lane width W*C = 128 (lane-dense stores).
    N, C, D, H, W = 2, 16, 8, 8, 8
    x = jax.random.normal(k_x, (N, C, D, H, W), jnp.float32)      # PyTorch NCDHW
    params = make_params(k_p, inplanes=C, planes=C)

    out = jax.block_until_ready(basic_block_forward(x, params))
    ref = jax.block_until_ready(_ref_forward(x, params))

    assert out.shape == (N, C, D, H, W)
    err = float(jnp.max(jnp.abs(out - ref)))
    assert jnp.allclose(out, ref, rtol=2e-2, atol=2e-2), f"max err {err}"

    print("KERNEL_OK")
</pallas_src>

<mosaic_0001>
module attributes {stable_mosaic.version = 11 : i64} {
  func.func @kernel(%arg0: i32, %arg1: i32, %arg2: memref<1x8x8x128xbf16, #tpu.memory_space<vmem>>, %arg3: memref<3x3x128x128xbf16, #tpu.memory_space<vmem>>, %arg4: memref<1x128xf32, #tpu.memory_space<vmem>>, %arg5: memref<3x3x128x128xbf16, #tpu.memory_space<vmem>>, %arg6: memref<1x128xf32, #tpu.memory_space<vmem>>, %arg7: memref<1x4x8x128xbf16, #tpu.memory_space<vmem>>, %arg8: memref<8x8x128xbf16, #tpu.memory_space<vmem>>, %arg9: memref<8x8x128xbf16, #tpu.memory_space<vmem>>, %arg10: memref<8x8x128xbf16, #tpu.memory_space<vmem>>, %arg11: memref<6x8x128xbf16, #tpu.memory_space<vmem>>, %arg12: memref<6x8x128xbf16, #tpu.memory_space<vmem>>, %arg13: memref<6x8x128xbf16, #tpu.memory_space<vmem>>, %arg14: memref<48x128xf32, #tpu.memory_space<vmem>>, %arg15: memref<32x128xf32, #tpu.memory_space<vmem>>) attributes {dimension_semantics = [#tpu.dimension_semantics<parallel>, #tpu.dimension_semantics<parallel>], iteration_bounds = array<i64: 2, 2>, scalar_prefetch = 0 : i64, scratch_operands = 8 : i64, tpu.core_type = #tpu.core_type<tc>, window_params = [{transform_indices = @transform_0, window_bounds = array<i64: 1, 8, 8, 128>}, {pipeline_mode = #tpu.pipeline_mode<synchronous>, transform_indices = @transform_1, window_bounds = array<i64: 3, 3, 128, 128>}, {pipeline_mode = #tpu.pipeline_mode<synchronous>, transform_indices = @transform_2, window_bounds = array<i64: 1, 128>}, {pipeline_mode = #tpu.pipeline_mode<synchronous>, transform_indices = @transform_3, window_bounds = array<i64: 3, 3, 128, 128>}, {pipeline_mode = #tpu.pipeline_mode<synchronous>, transform_indices = @transform_4, window_bounds = array<i64: 1, 128>}, {transform_indices = @transform_5, window_bounds = array<i64: 1, 4, 8, 128>}]} {
    %c4_i32 = arith.constant 4 : i32
    %0 = arith.muli %arg1, %c4_i32 : i32
    %1 = tpu.assume_multiple %0, 4 : i32
    %c0 = arith.constant 0 : index
    %2 = arith.index_cast %1 : i32 to index
    %c0_0 = arith.constant 0 : index
    %c0_1 = arith.constant 0 : index
    %3 = vector.load %arg2[%c0, %2, %c0_0, %c0_1] : memref<1x8x8x128xbf16, #tpu.memory_space<vmem>>, vector<1x4x8x128xbf16>
    %4 = vector.shape_cast %3 : vector<1x4x8x128xbf16> to vector<4x8x128xbf16>
    %cst = arith.constant 0.000000e+00 : bf16
    %5 = vector.broadcast %cst : bf16 to vector<4x1x128xbf16>
    %c2 = arith.constant 2 : index
    %c0_2 = arith.constant 0 : index
    %c0_3 = arith.constant 0 : index
    %6 = vector.load %arg9[%c2, %c0_2, %c0_3] : memref<8x8x128xbf16, #tpu.memory_space<vmem>>, vector<4x8x128xbf16>
    tpu.vector_store %arg9[%c2, %c0_2, %c0_3], %4 {strides = array<i32>} : memref<8x8x128xbf16, #tpu.memory_space<vmem>>, vector<4x8x128xbf16>,
    %7 = vector.extract_strided_slice %4 {offsets = [0, 0, 0], sizes = [4, 7, 128], strides = [1, 1, 1]} : vector<4x8x128xbf16> to vector<4x7x128xbf16>
    %c2_4 = arith.constant 2 : index
    %c1 = arith.constant 1 : index
    %c0_5 = arith.constant 0 : index
    %8 = vector.load %arg8[%c2_4, %c1, %c0_5] : memref<8x8x128xbf16, #tpu.memory_space<vmem>>, vector<4x7x128xbf16>
    tpu.vector_store %arg8[%c2_4, %c1, %c0_5], %7 {strides = array<i32>} : memref<8x8x128xbf16, #tpu.memory_space<vmem>>, vector<4x7x128xbf16>,
    %c2_6 = arith.constant 2 : index
    %c0_7 = arith.constant 0 : index
    %c0_8 = arith.constant 0 : index
    %9 = vector.load %arg8[%c2_6, %c0_7, %c0_8] : memref<8x8x128xbf16, #tpu.memory_space<vmem>>, vector<4x1x128xbf16>
    tpu.vector_store %arg8[%c2_6, %c0_7, %c0_8], %5 {strides = array<i32>} : memref<8x8x128xbf16, #tpu.memory_space<vmem>>, vector<4x1x128xbf16>,
    %10 = vector.extract_strided_slice %4 {offsets = [0, 1, 0], sizes = [4, 7, 128], strides = [1, 1, 1]} : vector<4x8x128xbf16> to vector<4x7x128xbf16>
    %c2_9 = arith.constant 2 : index
    %c0_10 = arith.constant 0 : index
    %c0_11 = arith.constant 0 : index
    %11 = vector.load %arg10[%c2_9, %c0_10, %c0_11] : memref<8x8x128xbf16, #tpu.memory_space<vmem>>, vector<4x7x128xbf16>
    tpu.vector_store %arg10[%c2_9, %c0_10, %c0_11], %10 {strides = array<i32>} : memref<8x8x128xbf16, #tpu.memory_space<vmem>>, vector<4x7x128xbf16>,
    %c2_12 = arith.constant 2 : index
    %c7 = arith.constant 7 : index
    %c0_13 = arith.constant 0 : index
    %12 = vector.load %arg10[%c2_12, %c7, %c0_13] : memref<8x8x128xbf16, #tpu.memory_space<vmem>>, vector<4x1x128xbf16>
    tpu.vector_store %arg10[%c2_12, %c7, %c0_13], %5 {strides = array<i32>} : memref<8x8x128xbf16, #tpu.memory_space<vmem>>, vector<4x1x128xbf16>,
    %c0_i32 = arith.constant 0 : i32
    %13 = arith.cmpi sgt, %arg1, %c0_i32 : i32
    %14 = arith.extui %13 : i1 to i32
    %c0_i32_14 = arith.constant 0 : i32
    %15 = arith.cmpi ne, %14, %c0_i32_14 : i32
    scf.if %15 {
      %c2_i32 = arith.constant 2 : i32
      %216 = arith.subi %1, %c2_i32 : i32
      %c0_279 = arith.constant 0 : index
      %217 = arith.index_cast %216 : i32 to index
      %c0_280 = arith.constant 0 : index
      %c0_281 = arith.constant 0 : index
      %218 = vector.load %arg2[%c0_279, %217, %c0_280, %c0_281] : memref<1x8x8x128xbf16, #tpu.memory_space<vmem>>, vector<1x2x8x128xbf16>
      %219 = vector.shape_cast %218 : vector<1x2x8x128xbf16> to vector<2x8x128xbf16>
      %cst_282 = arith.constant 0.000000e+00 : bf16
      %220 = vector.broadcast %cst_282 : bf16 to vector<2x1x128xbf16>
      %c0_283 = arith.constant 0 : index
      %c0_284 = arith.constant 0 : index
      %c0_285 = arith.constant 0 : index
      %221 = vector.load %arg9[%c0_283, %c0_284, %c0_285] : memref<8x8x128xbf16, #tpu.memory_space<vmem>>, vector<2x8x128xbf16>
      tpu.vector_store %arg9[%c0_283, %c0_284, %c0_285], %219 {strides = array<i32>} : memref<8x8x128xbf16, #tpu.memory_space<vmem>>, vector<2x8x128xbf16>,
      %222 = vector.extract_strided_slice %219 {offsets = [0, 0, 0], sizes = [2, 7, 128], strides = [1, 1, 1]} : vector<2x8x128xbf16> to vector<2x7x128xbf16>
      %c0_286 = arith.constant 0 : index
      %c1_287 = arith.constant 1 : index
      %c0_288 = arith.constant 0 : index
      %223 = vector.load %arg8[%c0_286, %c1_287, %c0_288] : memref<8x8x128xbf16, #tpu.memory_space<vmem>>, vector<2x7x128xbf16>
      tpu.vector_store %arg8[%c0_286, %c1_287, %c0_288], %222 {strides = array<i32>} : memref<8x8x128xbf16, #tpu.memory_space<vmem>>, vector<2x7x128xbf16>,
      %c0_289 = arith.constant 0 : index
      %c0_290 = arith.constant 0 : index
      %c0_291 = arith.constant 0 : index
      %224 = vector.load %arg8[%c0_289, %c0_290, %c0_291] : memref<8x8x128xbf16, #tpu.memory_space<vmem>>, vector<2x1x128xbf16>
      tpu.vector_store %arg8[%c0_289, %c0_290, %c0_291], %220 {strides = array<i32>} : memref<8x8x128xbf16, #tpu.memory_space<vmem>>, vector<2x1x128xbf16>,
      %225 = vector.extract_strided_slice %219 {offsets = [0, 1, 0], sizes = [2, 7, 128], strides = [1, 1, 1]} : vector<2x8x128xbf16> to vector<2x7x128xbf16>
      %c0_292 = arith.constant 0 : index
      %c0_293 = arith.constant 0 : index
      %c0_294 = arith.constant 0 : index
      %226 = vector.load %arg10[%c0_292, %c0_293, %c0_294] : memref<8x8x128xbf16, #tpu.memory_space<vmem>>, vector<2x7x128xbf16>
      tpu.vector_store %arg10[%c0_292, %c0_293, %c0_294], %225 {strides = array<i32>} : memref<8x8x128xbf16, #tpu.memory_space<vmem>>, vector<2x7x128xbf16>,
      %c0_295 = arith.constant 0 : index
      %c7_296 = arith.constant 7 : index
      %c0_297 = arith.constant 0 : index
      %227 = vector.load %arg10[%c0_295, %c7_296, %c0_297] : memref<8x8x128xbf16, #tpu.memory_space<vmem>>, vector<2x1x128xbf16>
      tpu.vector_store %arg10[%c0_295, %c7_296, %c0_297], %220 {strides = array<i32>} : memref<8x8x128xbf16, #tpu.memory_space<vmem>>, vector<2x1x128xbf16>,
    } else {
    }
    %c0_i32_15 = arith.constant 0 : i32
    %16 = arith.cmpi eq, %arg1, %c0_i32_15 : i32
    %17 = arith.extui %16 : i1 to i32
    %c0_i32_16 = arith.constant 0 : i32
    %18 = arith.cmpi ne, %17, %c0_i32_16 : i32
    scf.if %18 {
      %cst_279 = arith.constant 0.000000e+00 : bf16
      %216 = vector.broadcast %cst_279 : bf16 to vector<2x8x128xbf16>
      %c0_280 = arith.constant 0 : index
      %c0_281 = arith.constant 0 : index
      %c0_282 = arith.constant 0 : index
      %217 = vector.load %arg8[%c0_280, %c0_281, %c0_282] : memref<8x8x128xbf16, #tpu.memory_space<vmem>>, vector<2x8x128xbf16>
      tpu.vector_store %arg8[%c0_280, %c0_281, %c0_282], %216 {strides = array<i32>} : memref<8x8x128xbf16, #tpu.memory_space<vmem>>, vector<2x8x128xbf16>,
      %c0_283 = arith.constant 0 : index
      %c0_284 = arith.constant 0 : index
      %c0_285 = arith.constant 0 : index
      %218 = vector.load %arg9[%c0_283, %c0_284, %c0_285] : memref<8x8x128xbf16, #tpu.memory_space<vmem>>, vector<2x8x128xbf16>
      tpu.vector_store %arg9[%c0_283, %c0_284, %c0_285], %216 {strides = array<i32>} : memref<8x8x128xbf16, #tpu.memory_space<vmem>>, vector<2x8x128xbf16>,
      %c0_286 = arith.constant 0 : index
      %c0_287 = arith.constant 0 : index
      %c0_288 = arith.constant 0 : index
      %219 = vector.load %arg10[%c0_286, %c0_287, %c0_288] : memref<8x8x128xbf16, #tpu.memory_space<vmem>>, vector<2x8x128xbf16>
      tpu.vector_store %arg10[%c0_286, %c0_287, %c0_288], %216 {strides = array<i32>} : memref<8x8x128xbf16, #tpu.memory_space<vmem>>, vector<2x8x128xbf16>,
    } else {
    }
    %c1_i32 = arith.constant 1 : i32
    %19 = arith.cmpi slt, %arg1, %c1_i32 : i32
    %20 = arith.extui %19 : i1 to i32
    %c0_i32_17 = arith.constant 0 : i32
    %21 = arith.cmpi ne, %20, %c0_i32_17 : i32
    scf.if %21 {
      %c4_i32_279 = arith.constant 4 : i32
      %216 = arith.addi %1, %c4_i32_279 : i32
      %c0_280 = arith.constant 0 : index
      %217 = arith.index_cast %216 : i32 to index
      %c0_281 = arith.constant 0 : index
      %c0_282 = arith.constant 0 : index
      %218 = vector.load %arg2[%c0_280, %217, %c0_281, %c0_282] : memref<1x8x8x128xbf16, #tpu.memory_space<vmem>>, vector<1x2x8x128xbf16>
      %219 = vector.shape_cast %218 : vector<1x2x8x128xbf16> to vector<2x8x128xbf16>
      %cst_283 = arith.constant 0.000000e+00 : bf16
      %220 = vector.broadcast %cst_283 : bf16 to vector<2x1x128xbf16>
      %c6 = arith.constant 6 : index
      %c0_284 = arith.constant 0 : index
      %c0_285 = arith.constant 0 : index
      %221 = vector.load %arg9[%c6, %c0_284, %c0_285] : memref<8x8x128xbf16, #tpu.memory_space<vmem>>, vector<2x8x128xbf16>
      tpu.vector_store %arg9[%c6, %c0_284, %c0_285], %219 {strides = array<i32>} : memref<8x8x128xbf16, #tpu.memory_space<vmem>>, vector<2x8x128xbf16>,
      %222 = vector.extract_strided_slice %219 {offsets = [0, 0, 0], sizes = [2, 7, 128], strides = [1, 1, 1]} : vector<2x8x128xbf16> to vector<2x7x128xbf16>
      %c6_286 = arith.constant 6 : index
      %c1_287 = arith.constant 1 : index
      %c0_288 = arith.constant 0 : index
      %223 = vector.load %arg8[%c6_286, %c1_287, %c0_288] : memref<8x8x128xbf16, #tpu.memory_space<vmem>>, vector<2x7x128xbf16>
      tpu.vector_store %arg8[%c6_286, %c1_287, %c0_288], %222 {strides = array<i32>} : memref<8x8x128xbf16, #tpu.memory_space<vmem>>, vector<2x7x128xbf16>,
      %c6_289 = arith.constant 6 : index
      %c0_290 = arith.constant 0 : index
      %c0_291 = arith.constant 0 : index
      %224 = vector.load %arg8[%c6_289, %c0_290, %c0_291] : memref<8x8x128xbf16, #tpu.memory_space<vmem>>, vector<2x1x128xbf16>
      tpu.vector_store %arg8[%c6_289, %c0_290, %c0_291], %220 {strides = array<i32>} : memref<8x8x128xbf16, #tpu.memory_space<vmem>>, vector<2x1x128xbf16>,
      %225 = vector.extract_strided_slice %219 {offsets = [0, 1, 0], sizes = [2, 7, 128], strides = [1, 1, 1]} : vector<2x8x128xbf16> to vector<2x7x128xbf16>
      %c6_292 = arith.constant 6 : index
      %c0_293 = arith.constant 0 : index
      %c0_294 = arith.constant 0 : index
      %226 = vector.load %arg10[%c6_292, %c0_293, %c0_294] : memref<8x8x128xbf16, #tpu.memory_space<vmem>>, vector<2x7x128xbf16>
      tpu.vector_store %arg10[%c6_292, %c0_293, %c0_294], %225 {strides = array<i32>} : memref<8x8x128xbf16, #tpu.memory_space<vmem>>, vector<2x7x128xbf16>,
      %c6_295 = arith.constant 6 : index
      %c7_296 = arith.constant 7 : index
      %c0_297 = arith.constant 0 : index
      %227 = vector.load %arg10[%c6_295, %c7_296, %c0_297] : memref<8x8x128xbf16, #tpu.memory_space<vmem>>, vector<2x1x128xbf16>
      tpu.vector_store %arg10[%c6_295, %c7_296, %c0_297], %220 {strides = array<i32>} : memref<8x8x128xbf16, #tpu.memory_space<vmem>>, vector<2x1x128xbf16>,
    } else {
    }
    %c1_i32_18 = arith.constant 1 : i32
    %22 = arith.cmpi eq, %arg1, %c1_i32_18 : i32
    %23 = arith.extui %22 : i1 to i32
    %c0_i32_19 = arith.constant 0 : i32
    %24 = arith.cmpi ne, %23, %c0_i32_19 : i32
    scf.if %24 {
      %cst_279 = arith.constant 0.000000e+00 : bf16
      %216 = vector.broadcast %cst_279 : bf16 to vector<2x8x128xbf16>
      %c6 = arith.constant 6 : index
      %c0_280 = arith.constant 0 : index
      %c0_281 = arith.constant 0 : index
      %217 = vector.load %arg8[%c6, %c0_280, %c0_281] : memref<8x8x128xbf16, #tpu.memory_space<vmem>>, vector<2x8x128xbf16>
      tpu.vector_store %arg8[%c6, %c0_280, %c0_281], %216 {strides = array<i32>} : memref<8x8x128xbf16, #tpu.memory_space<vmem>>, vector<2x8x128xbf16>,
      %c6_282 = arith.constant 6 : index
      %c0_283 = arith.constant 0 : index
      %c0_284 = arith.constant 0 : index
      %218 = vector.load %arg9[%c6_282, %c0_283, %c0_284] : memref<8x8x128xbf16, #tpu.memory_space<vmem>>, vector<2x8x128xbf16>
      tpu.vector_store %arg9[%c6_282, %c0_283, %c0_284], %216 {strides = array<i32>} : memref<8x8x128xbf16, #tpu.memory_space<vmem>>, vector<2x8x128xbf16>,
      %c6_285 = arith.constant 6 : index
      %c0_286 = arith.constant 0 : index
      %c0_287 = arith.constant 0 : index
      %219 = vector.load %arg10[%c6_285, %c0_286, %c0_287] : memref<8x8x128xbf16, #tpu.memory_space<vmem>>, vector<2x8x128xbf16>
      tpu.vector_store %arg10[%c6_285, %c0_286, %c0_287], %216 {strides = array<i32>} : memref<8x8x128xbf16, #tpu.memory_space<vmem>>, vector<2x8x128xbf16>,
    } else {
    }
    %cst_20 = arith.constant 0.000000e+00 : f32
    %25 = vector.broadcast %cst_20 : f32 to vector<48x128xf32>
    %c0_21 = arith.constant 0 : index
    %c0_22 = arith.constant 0 : index
    %26 = vector.load %arg14[%c0_21, %c0_22] : memref<48x128xf32, #tpu.memory_space<vmem>>, vector<48x128xf32>
    tpu.vector_store %arg14[%c0_21, %c0_22], %25 {strides = array<i32>} : memref<48x128xf32, #tpu.memory_space<vmem>>, vector<48x128xf32>,
    %c0_23 = arith.constant 0 : index
    %c0_24 = arith.constant 0 : index
    %c0_25 = arith.constant 0 : index
    %27 = vector.load %arg8[%c0_23, %c0_24, %c0_25] : memref<8x8x128xbf16, #tpu.memory_space<vmem>>, vector<6x8x128xbf16>
    %28 = vector.shape_cast %27 : vector<6x8x128xbf16> to vector<48x128xbf16>
    %c0_26 = arith.constant 0 : index
    %c0_27 = arith.constant 0 : index
    %29 = vector.load %arg14[%c0_26, %c0_27] : memref<48x128xf32, #tpu.memory_space<vmem>>, vector<48x128xf32>
    %c0_28 = arith.constant 0 : index
    %c0_29 = arith.constant 0 : index
    %c0_30 = arith.constant 0 : index
    %c0_31 = arith.constant 0 : index
    %30 = vector.load %arg3[%c0_28, %c0_29, %c0_30, %c0_31] : memref<3x3x128x128xbf16, #tpu.memory_space<vmem>>, vector<1x1x128x128xbf16>
    %31 = vector.shape_cast %30 : vector<1x1x128x128xbf16> to vector<128x128xbf16>
    %cst_32 = arith.constant dense<0.000000e+00> : vector<48x128xf32>
    %32 = tpu.matmul %28, %31, %cst_32 {dimension_numbers = #tpu.dot_dimension_numbers<[1], [0], [0], [1], [0, 0, 1, 1], [], []>} : vector<48x128xbf16>, vector<128x128xbf16>, vector<48x128xf32> -> vector<48x128xf32>
    %33 = arith.addf %29, %32 : vector<48x128xf32>
    %c0_33 = arith.constant 0 : index
    %c0_34 = arith.constant 0 : index
    %34 = vector.load %arg14[%c0_33, %c0_34] : memref<48x128xf32, #tpu.memory_space<vmem>>, vector<48x128xf32>
    tpu.vector_store %arg14[%c0_33, %c0_34], %33 {strides = array<i32>} : memref<48x128xf32, #tpu.memory_space<vmem>>, vector<48x128xf32>,
    %c0_35 = arith.constant 0 : index
    %c0_36 = arith.constant 0 : index
    %c0_37 = arith.constant 0 : index
    %35 = vector.load %arg9[%c0_35, %c0_36, %c0_37] : memref<8x8x128xbf16, #tpu.memory_space<vmem>>, vector<6x8x128xbf16>
    %36 = vector.shape_cast %35 : vector<6x8x128xbf16> to vector<48x128xbf16>
    %c0_38 = arith.constant 0 : index
    %c0_39 = arith.constant 0 : index
    %37 = vector.load %arg14[%c0_38, %c0_39] : memref<48x128xf32, #tpu.memory_space<vmem>>, vector<48x128xf32>
    %c0_40 = arith.constant 0 : index
    %c1_41 = arith.constant 1 : index
    %c0_42 = arith.constant 0 : index
    %c0_43 = arith.constant 0 : index
    %38 = vector.load %arg3[%c0_40, %c1_41, %c0_42, %c0_43] : memref<3x3x128x128xbf16, #tpu.memory_space<vmem>>, vector<1x1x128x128xbf16>
    %39 = vector.shape_cast %38 : vector<1x1x128x128xbf16> to vector<128x128xbf16>
    %cst_44 = arith.constant dense<0.000000e+00> : vector<48x128xf32>
    %40 = tpu.matmul %36, %39, %cst_44 {dimension_numbers = #tpu.dot_dimension_numbers<[1], [0], [0], [1], [0, 0, 1, 1], [], []>} : vector<48x128xbf16>, vector<128x128xbf16>, vector<48x128xf32> -> vector<48x128xf32>
    %41 = arith.addf %37, %40 : vector<48x128xf32>
    %c0_45 = arith.constant 0 : index
    %c0_46 = arith.constant 0 : index
    %42 = vector.load %arg14[%c0_45, %c0_46] : memref<48x128xf32, #tpu.memory_space<vmem>>, vector<48x128xf32>
    tpu.vector_store %arg14[%c0_45, %c0_46], %41 {strides = array<i32>} : memref<48x128xf32, #tpu.memory_space<vmem>>, vector<48x128xf32>,
    %c0_47 = arith.constant 0 : index
    %c0_48 = arith.constant 0 : index
    %c0_49 = arith.constant 0 : index
    %43 = vector.load %arg10[%c0_47, %c0_48, %c0_49] : memref<8x8x128xbf16, #tpu.memory_space<vmem>>, vector<6x8x128xbf16>
    %44 = vector.shape_cast %43 : vector<6x8x128xbf16> to vector<48x128xbf16>
    %c0_50 = arith.constant 0 : index
    %c0_51 = arith.constant 0 : index
    %45 = vector.load %arg14[%c0_50, %c0_51] : memref<48x128xf32, #tpu.memory_space<vmem>>, vector<48x128xf32>
    %c0_52 = arith.constant 0 : index
    %c2_53 = arith.constant 2 : index
    %c0_54 = arith.constant 0 : index
    %c0_55 = arith.constant 0 : index
    %46 = vector.load %arg3[%c0_52, %c2_53, %c0_54, %c0_55] : memref<3x3x128x128xbf16, #tpu.memory_space<vmem>>, vector<1x1x128x128xbf16>
    %47 = vector.shape_cast %46 : vector<1x1x128x128xbf16> to vector<128x128xbf16>
    %cst_56 = arith.constant dense<0.000000e+00> : vector<48x128xf32>
    %48 = tpu.matmul %44, %47, %cst_56 {dimension_numbers = #tpu.dot_dimension_numbers<[1], [0], [0], [1], [0, 0, 1, 1], [], []>} : vector<48x128xbf16>, vector<128x128xbf16>, vector<48x128xf32> -> vector<48x128xf32>
    %49 = arith.addf %45, %48 : vector<48x128xf32>
    %c0_57 = arith.constant 0 : index
    %c0_58 = arith.constant 0 : index
    %50 = vector.load %arg14[%c0_57, %c0_58] : memref<48x128xf32, #tpu.memory_space<vmem>>, vector<48x128xf32>
    tpu.vector_store %arg14[%c0_57, %c0_58], %49 {strides = array<i32>} : memref<48x128xf32, #tpu.memory_space<vmem>>, vector<48x128xf32>,
    %c1_59 = arith.constant 1 : index
    %c0_60 = arith.constant 0 : index
    %c0_61 = arith.constant 0 : index
    %51 = vector.load %arg8[%c1_59, %c0_60, %c0_61] : memref<8x8x128xbf16, #tpu.memory_space<vmem>>, vector<6x8x128xbf16>
    %52 = vector.shape_cast %51 : vector<6x8x128xbf16> to vector<48x128xbf16>
    %c0_62 = arith.constant 0 : index
    %c0_63 = arith.constant 0 : index
    %53 = vector.load %arg14[%c0_62, %c0_63] : memref<48x128xf32, #tpu.memory_space<vmem>>, vector<48x128xf32>
    %c1_64 = arith.constant 1 : index
    %c0_65 = arith.constant 0 : index
    %c0_66 = arith.constant 0 : index
    %c0_67 = arith.constant 0 : index
    %54 = vector.load %arg3[%c1_64, %c0_65, %c0_66, %c0_67] : memref<3x3x128x128xbf16, #tpu.memory_space<vmem>>, vector<1x1x128x128xbf16>
    %55 = vector.shape_cast %54 : vector<1x1x128x128xbf16> to vector<128x128xbf16>
    %cst_68 = arith.constant dense<0.000000e+00> : vector<48x128xf32>
    %56 = tpu.matmul %52, %55, %cst_68 {dimension_numbers = #tpu.dot_dimension_numbers<[1], [0], [0], [1], [0, 0, 1, 1], [], []>} : vector<48x128xbf16>, vector<128x128xbf16>, vector<48x128xf32> -> vector<48x128xf32>
    %57 = arith.addf %53, %56 : vector<48x128xf32>
    %c0_69 = arith.constant 0 : index
    %c0_70 = arith.constant 0 : index
    %58 = vector.load %arg14[%c0_69, %c0_70] : memref<48x128xf32, #tpu.memory_space<vmem>>, vector<48x128xf32>
    tpu.vector_store %arg14[%c0_69, %c0_70], %57 {strides = array<i32>} : memref<48x128xf32, #tpu.memory_space<vmem>>, vector<48x128xf32>,
    %c1_71 = arith.constant 1 : index
    %c0_72 = arith.constant 0 : index
    %c0_73 = arith.constant 0 : index
    %59 = vector.load %arg9[%c1_71, %c0_72, %c0_73] : memref<8x8x128xbf16, #tpu.memory_space<vmem>>, vector<6x8x128xbf16>
    %60 = vector.shape_cast %59 : vector<6x8x128xbf16> to vector<48x128xbf16>
    %c0_74 = arith.constant 0 : index
    %c0_75 = arith.constant 0 : index
    %61 = vector.load %arg14[%c0_74, %c0_75] : memref<48x128xf32, #tpu.memory_space<vmem>>, vector<48x128xf32>
    %c1_76 = arith.constant 1 : index
    %c1_77 = arith.constant 1 : index
    %c0_78 = arith.constant 0 : index
    %c0_79 = arith.constant 0 : index
    %62 = vector.load %arg3[%c1_76, %c1_77, %c0_78, %c0_79] : memref<3x3x128x128xbf16, #tpu.memory_space<vmem>>, vector<1x1x128x128xbf16>
    %63 = vector.shape_cast %62 : vector<1x1x128x128xbf16> to vector<128x128xbf16>
    %cst_80 = arith.constant dense<0.000000e+00> : vector<48x128xf32>
    %64 = tpu.matmul %60, %63, %cst_80 {dimension_numbers = #tpu.dot_dimension_numbers<[1], [0], [0], [1], [0, 0, 1, 1], [], []>} : vector<48x128xbf16>, vector<128x128xbf16>, vector<48x128xf32> -> vector<48x128xf32>
    %65 = arith.addf %61, %64 : vector<48x128xf32>
    %c0_81 = arith.constant 0 : index
    %c0_82 = arith.constant 0 : index
    %66 = vector.load %arg14[%c0_81, %c0_82] : memref<48x128xf32, #tpu.memory_space<vmem>>, vector<48x128xf32>
    tpu.vector_store %arg14[%c0_81, %c0_82], %65 {strides = array<i32>} : memref<48x128xf32, #tpu.memory_space<vmem>>, vector<48x128xf32>,
    %c1_83 = arith.constant 1 : index
    %c0_84 = arith.constant 0 : index
    %c0_85 = arith.constant 0 : index
    %67 = vector.load %arg10[%c1_83, %c0_84, %c0_85] : memref<8x8x128xbf16, #tpu.memory_space<vmem>>, vector<6x8x128xbf16>
    %68 = vector.shape_cast %67 : vector<6x8x128xbf16> to vector<48x128xbf16>
    %c0_86 = arith.constant 0 : index
    %c0_87 = arith.constant 0 : index
    %69 = vector.load %arg14[%c0_86, %c0_87] : memref<48x128xf32, #tpu.memory_space<vmem>>, vector<48x128xf32>
    %c1_88 = arith.constant 1 : index
    %c2_89 = arith.constant 2 : index
    %c0_90 = arith.constant 0 : index
    %c0_91 = arith.constant 0 : index
    %70 = vector.load %arg3[%c1_88, %c2_89, %c0_90, %c0_91] : memref<3x3x128x128xbf16, #tpu.memory_space<vmem>>, vector<1x1x128x128xbf16>
    %71 = vector.shape_cast %70 : vector<1x1x128x128xbf16> to vector<128x128xbf16>
    %cst_92 = arith.constant dense<0.000000e+00> : vector<48x128xf32>
    %72 = tpu.matmul %68, %71, %cst_92 {dimension_numbers = #tpu.dot_dimension_numbers<[1], [0], [0], [1], [0, 0, 1, 1], [], []>} : vector<48x128xbf16>, vector<128x128xbf16>, vector<48x128xf32> -> vector<48x128xf32>
    %73 = arith.addf %69, %72 : vector<48x128xf32>
    %c0_93 = arith.constant 0 : index
    %c0_94 = arith.constant 0 : index
    %74 = vector.load %arg14[%c0_93, %c0_94] : memref<48x128xf32, #tpu.memory_space<vmem>>, vector<48x128xf32>
    tpu.vector_store %arg14[%c0_93, %c0_94], %73 {strides = array<i32>} : memref<48x128xf32, #tpu.memory_space<vmem>>, vector<48x128xf32>,
    %c2_95 = arith.constant 2 : index
    %c0_96 = arith.constant 0 : index
    %c0_97 = arith.constant 0 : index
    %75 = vector.load %arg8[%c2_95, %c0_96, %c0_97] : memref<8x8x128xbf16, #tpu.memory_space<vmem>>, vector<6x8x128xbf16>
    %76 = vector.shape_cast %75 : vector<6x8x128xbf16> to vector<48x128xbf16>
    %c0_98 = arith.constant 0 : index
    %c0_99 = arith.constant 0 : index
    %77 = vector.load %arg14[%c0_98, %c0_99] : memref<48x128xf32, #tpu.memory_space<vmem>>, vector<48x128xf32>
    %c2_100 = arith.constant 2 : index
    %c0_101 = arith.constant 0 : index
    %c0_102 = arith.constant 0 : index
    %c0_103 = arith.constant 0 : index
    %78 = vector.load %arg3[%c2_100, %c0_101, %c0_102, %c0_103] : memref<3x3x128x128xbf16, #tpu.memory_space<vmem>>, vector<1x1x128x128xbf16>
    %79 = vector.shape_cast %78 : vector<1x1x128x128xbf16> to vector<128x128xbf16>
    %cst_104 = arith.constant dense<0.000000e+00> : vector<48x128xf32>
    %80 = tpu.matmul %76, %79, %cst_104 {dimension_numbers = #tpu.dot_dimension_numbers<[1], [0], [0], [1], [0, 0, 1, 1], [], []>} : vector<48x128xbf16>, vector<128x128xbf16>, vector<48x128xf32> -> vector<48x128xf32>
    %81 = arith.addf %77, %80 : vector<48x128xf32>
    %c0_105 = arith.constant 0 : index
    %c0_106 = arith.constant 0 : index
    %82 = vector.load %arg14[%c0_105, %c0_106] : memref<48x128xf32, #tpu.memory_space<vmem>>, vector<48x128xf32>
    tpu.vector_store %arg14[%c0_105, %c0_106], %81 {strides = array<i32>} : memref<48x128xf32, #tpu.memory_space<vmem>>, vector<48x128xf32>,
    %c2_107 = arith.constant 2 : index
    %c0_108 = arith.constant 0 : index
    %c0_109 = arith.constant 0 : index
    %83 = vector.load %arg9[%c2_107, %c0_108, %c0_109] : memref<8x8x128xbf16, #tpu.memory_space<vmem>>, vector<6x8x128xbf16>
    %84 = vector.shape_cast %83 : vector<6x8x128xbf16> to vector<48x128xbf16>
    %c0_110 = arith.constant 0 : index
    %c0_111 = arith.constant 0 : index
    %85 = vector.load %arg14[%c0_110, %c0_111] : memref<48x128xf32, #tpu.memory_space<vmem>>, vector<48x128xf32>
    %c2_112 = arith.constant 2 : index
    %c1_113 = arith.constant 1 : index
    %c0_114 = arith.constant 0 : index
    %c0_115 = arith.constant 0 : index
    %86 = vector.load %arg3[%c2_112, %c1_113, %c0_114, %c0_115] : memref<3x3x128x128xbf16, #tpu.memory_space<vmem>>, vector<1x1x128x128xbf16>
    %87 = vector.shape_cast %86 : vector<1x1x128x128xbf16> to vector<128x128xbf16>
    %cst_116 = arith.constant dense<0.000000e+00> : vector<48x128xf32>
    %88 = tpu.matmul %84, %87, %cst_116 {dimension_numbers = #tpu.dot_dimension_numbers<[1], [0], [0], [1], [0, 0, 1, 1], [], []>} : vector<48x128xbf16>, vector<128x128xbf16>, vector<48x128xf32> -> vector<48x128xf32>
    %89 = arith.addf %85, %88 : vector<48x128xf32>
    %c0_117 = arith.constant 0 : index
    %c0_118 = arith.constant 0 : index
    %90 = vector.load %arg14[%c0_117, %c0_118] : memref<48x128xf32, #tpu.memory_space<vmem>>, vector<48x128xf32>
    tpu.vector_store %arg14[%c0_117, %c0_118], %89 {strides = array<i32>} : memref<48x128xf32, #tpu.memory_space<vmem>>, vector<48x128xf32>,
    %c2_119 = arith.constant 2 : index
    %c0_120 = arith.constant 0 : index
    %c0_121 = arith.constant 0 : index
    %91 = vector.load %arg10[%c2_119, %c0_120, %c0_121] : memref<8x8x128xbf16, #tpu.memory_space<vmem>>, vector<6x8x128xbf16>
    %92 = vector.shape_cast %91 : vector<6x8x128xbf16> to vector<48x128xbf16>
    %c0_122 = arith.constant 0 : index
    %c0_123 = arith.constant 0 : index
    %93 = vector.load %arg14[%c0_122, %c0_123] : memref<48x128xf32, #tpu.memory_space<vmem>>, vector<48x128xf32>
    %c2_124 = arith.constant 2 : index
    %c2_125 = arith.constant 2 : index
    %c0_126 = arith.constant 0 : index
    %c0_127 = arith.constant 0 : index
    %94 = vector.load %arg3[%c2_124, %c2_125, %c0_126, %c0_127] : memref<3x3x128x128xbf16, #tpu.memory_space<vmem>>, vector<1x1x128x128xbf16>
    %95 = vector.shape_cast %94 : vector<1x1x128x128xbf16> to vector<128x128xbf16>
    %cst_128 = arith.constant dense<0.000000e+00> : vector<48x128xf32>
    %96 = tpu.matmul %92, %95, %cst_128 {dimension_numbers = #tpu.dot_dimension_numbers<[1], [0], [0], [1], [0, 0, 1, 1], [], []>} : vector<48x128xbf16>, vector<128x128xbf16>, vector<48x128xf32> -> vector<48x128xf32>
    %97 = arith.addf %93, %96 : vector<48x128xf32>
    %c0_129 = arith.constant 0 : index
    %c0_130 = arith.constant 0 : index
    %98 = vector.load %arg14[%c0_129, %c0_130] : memref<48x128xf32, #tpu.memory_space<vmem>>, vector<48x128xf32>
    tpu.vector_store %arg14[%c0_129, %c0_130], %97 {strides = array<i32>} : memref<48x128xf32, #tpu.memory_space<vmem>>, vector<48x128xf32>,
    %c0_131 = arith.constant 0 : index
    %c0_132 = arith.constant 0 : index
    %99 = vector.load %arg14[%c0_131, %c0_132] : memref<48x128xf32, #tpu.memory_space<vmem>>, vector<48x128xf32>
    %c0_133 = arith.constant 0 : index
    %c0_134 = arith.constant 0 : index
    %100 = vector.load %arg4[%c0_133, %c0_134] : memref<1x128xf32, #tpu.memory_space<vmem>>, vector<1x128xf32>
    %101 = vector.shape_cast %100 : vector<1x128xf32> to vector<128xf32>
    %102 = vector.shape_cast %101 : vector<128xf32> to vector<1x128xf32>
    %103 = vector.broadcast %102 : vector<1x128xf32> to vector<48x128xf32>
    %104 = arith.addf %99, %103 : vector<48x128xf32>
    %cst_135 = arith.constant 0.000000e+00 : f32
    %105 = vector.broadcast %cst_135 : f32 to vector<48x128xf32>
    %106 = arith.maximumf %104, %105 : vector<48x128xf32>
    %107 = arith.truncf %106 : vector<48x128xf32> to vector<48x128xbf16>
    %108 = vector.shape_cast %107 : vector<48x128xbf16> to vector<6x8x128xbf16>
    %cst_136 = arith.constant 0.000000e+00 : bf16
    %109 = vector.broadcast %cst_136 : bf16 to vector<6x1x128xbf16>
    %c0_137 = arith.constant 0 : index
    %c0_138 = arith.constant 0 : index
    %c0_139 = arith.constant 0 : index
    %110 = vector.load %arg12[%c0_137, %c0_138, %c0_139] : memref<6x8x128xbf16, #tpu.memory_space<vmem>>, vector<6x8x128xbf16>
    tpu.vector_store %arg12[%c0_137, %c0_138, %c0_139], %108 {strides = array<i32>} : memref<6x8x128xbf16, #tpu.memory_space<vmem>>, vector<6x8x128xbf16>,
    %111 = vector.extract_strided_slice %108 {offsets = [0, 0, 0], sizes = [6, 7, 128], strides = [1, 1, 1]} : vector<6x8x128xbf16> to vector<6x7x128xbf16>
    %c0_140 = arith.constant 0 : index
    %c1_141 = arith.constant 1 : index
    %c0_142 = arith.constant 0 : index
    %112 = vector.load %arg11[%c0_140, %c1_141, %c0_142] : memref<6x8x128xbf16, #tpu.memory_space<vmem>>, vector<6x7x128xbf16>
    tpu.vector_store %arg11[%c0_140, %c1_141, %c0_142], %111 {strides = array<i32>} : memref<6x8x128xbf16, #tpu.memory_space<vmem>>, vector<6x7x128xbf16>,
    %c0_143 = arith.constant 0 : index
    %c0_144 = arith.constant 0 : index
    %c0_145 = arith.constant 0 : index
    %113 = vector.load %arg11[%c0_143, %c0_144, %c0_145] : memref<6x8x128xbf16, #tpu.memory_space<vmem>>, vector<6x1x128xbf16>
    tpu.vector_store %arg11[%c0_143, %c0_144, %c0_145], %109 {strides = array<i32>} : memref<6x8x128xbf16, #tpu.memory_space<vmem>>, vector<6x1x128xbf16>,
    %114 = vector.extract_strided_slice %108 {offsets = [0, 1, 0], sizes = [6, 7, 128], strides = [1, 1, 1]} : vector<6x8x128xbf16> to vector<6x7x128xbf16>
    %c0_146 = arith.constant 0 : index
    %c0_147 = arith.constant 0 : index
    %c0_148 = arith.constant 0 : index
    %115 = vector.load %arg13[%c0_146, %c0_147, %c0_148] : memref<6x8x128xbf16, #tpu.memory_space<vmem>>, vector<6x7x128xbf16>
    tpu.vector_store %arg13[%c0_146, %c0_147, %c0_148], %114 {strides = array<i32>} : memref<6x8x128xbf16, #tpu.memory_space<vmem>>, vector<6x7x128xbf16>,
    %c0_149 = arith.constant 0 : index
    %c7_150 = arith.constant 7 : index
    %c0_151 = arith.constant 0 : index
    %116 = vector.load %arg13[%c0_149, %c7_150, %c0_151] : memref<6x8x128xbf16, #tpu.memory_space<vmem>>, vector<6x1x128xbf16>
    tpu.vector_store %arg13[%c0_149, %c7_150, %c0_151], %109 {strides = array<i32>} : memref<6x8x128xbf16, #tpu.memory_space<vmem>>, vector<6x1x128xbf16>,
    %c0_i32_152 = arith.constant 0 : i32
    %117 = arith.cmpi eq, %arg1, %c0_i32_152 : i32
    %118 = arith.extui %117 : i1 to i32
    %c0_i32_153 = arith.constant 0 : i32
    %119 = arith.cmpi ne, %118, %c0_i32_153 : i32
    scf.if %119 {
      %cst_279 = arith.constant 0.000000e+00 : bf16
      %216 = vector.broadcast %cst_279 : bf16 to vector<1x8x128xbf16>
      %c0_280 = arith.constant 0 : index
      %c0_281 = arith.constant 0 : index
      %c0_282 = arith.constant 0 : index
      %217 = vector.load %arg11[%c0_280, %c0_281, %c0_282] : memref<6x8x128xbf16, #tpu.memory_space<vmem>>, vector<1x8x128xbf16>
      tpu.vector_store %arg11[%c0_280, %c0_281, %c0_282], %216 {strides = array<i32>} : memref<6x8x128xbf16, #tpu.memory_space<vmem>>, vector<1x8x128xbf16>,
      %c0_283 = arith.constant 0 : index
      %c0_284 = arith.constant 0 : index
      %c0_285 = arith.constant 0 : index
      %218 = vector.load %arg12[%c0_283, %c0_284, %c0_285] : memref<6x8x128xbf16, #tpu.memory_space<vmem>>, vector<1x8x128xbf16>
      tpu.vector_store %arg12[%c0_283, %c0_284, %c0_285], %216 {strides = array<i32>} : memref<6x8x128xbf16, #tpu.memory_space<vmem>>, vector<1x8x128xbf16>,
      %c0_286 = arith.constant 0 : index
      %c0_287 = arith.constant 0 : index
      %c0_288 = arith.constant 0 : index
      %219 = vector.load %arg13[%c0_286, %c0_287, %c0_288] : memref<6x8x128xbf16, #tpu.memory_space<vmem>>, vector<1x8x128xbf16>
      tpu.vector_store %arg13[%c0_286, %c0_287, %c0_288], %216 {strides = array<i32>} : memref<6x8x128xbf16, #tpu.memory_space<vmem>>, vector<1x8x128xbf16>,
    } else {
    }
    %c1_i32_154 = arith.constant 1 : i32
    %120 = arith.cmpi eq, %arg1, %c1_i32_154 : i32
    %121 = arith.extui %120 : i1 to i32
    %c0_i32_155 = arith.constant 0 : i32
    %122 = arith.cmpi ne, %121, %c0_i32_155 : i32
    scf.if %122 {
      %cst_279 = arith.constant 0.000000e+00 : bf16
      %216 = vector.broadcast %cst_279 : bf16 to vector<1x8x128xbf16>
      %c5 = arith.constant 5 : index
      %c0_280 = arith.constant 0 : index
      %c0_281 = arith.constant 0 : index
      %217 = vector.load %arg11[%c5, %c0_280, %c0_281] : memref<6x8x128xbf16, #tpu.memory_space<vmem>>, vector<1x8x128xbf16>
      tpu.vector_store %arg11[%c5, %c0_280, %c0_281], %216 {strides = array<i32>} : memref<6x8x128xbf16, #tpu.memory_space<vmem>>, vector<1x8x128xbf16>,
      %c5_282 = arith.constant 5 : index
      %c0_283 = arith.constant 0 : index
      %c0_284 = arith.constant 0 : index
      %218 = vector.load %arg12[%c5_282, %c0_283, %c0_284] : memref<6x8x128xbf16, #tpu.memory_space<vmem>>, vector<1x8x128xbf16>
      tpu.vector_store %arg12[%c5_282, %c0_283, %c0_284], %216 {strides = array<i32>} : memref<6x8x128xbf16, #tpu.memory_space<vmem>>, vector<1x8x128xbf16>,
      %c5_285 = arith.constant 5 : index
      %c0_286 = arith.constant 0 : index
      %c0_287 = arith.constant 0 : index
      %219 = vector.load %arg13[%c5_285, %c0_286, %c0_287] : memref<6x8x128xbf16, #tpu.memory_space<vmem>>, vector<1x8x128xbf16>
      tpu.vector_store %arg13[%c5_285, %c0_286, %c0_287], %216 {strides = array<i32>} : memref<6x8x128xbf16, #tpu.memory_space<vmem>>, vector<1x8x128xbf16>,
    } else {
    }
    %cst_156 = arith.constant 0.000000e+00 : f32
    %123 = vector.broadcast %cst_156 : f32 to vector<32x128xf32>
    %c0_157 = arith.constant 0 : index
    %c0_158 = arith.constant 0 : index
    %124 = vector.load %arg15[%c0_157, %c0_158] : memref<32x128xf32, #tpu.memory_space<vmem>>, vector<32x128xf32>
    tpu.vector_store %arg15[%c0_157, %c0_158], %123 {strides = array<i32>} : memref<32x128xf32, #tpu.memory_space<vmem>>, vector<32x128xf32>,
    %c0_159 = arith.constant 0 : index
    %c0_160 = arith.constant 0 : index
    %c0_161 = arith.constant 0 : index
    %125 = vector.load %arg11[%c0_159, %c0_160, %c0_161] : memref<6x8x128xbf16, #tpu.memory_space<vmem>>, vector<4x8x128xbf16>
    %126 = vector.shape_cast %125 : vector<4x8x128xbf16> to vector<32x128xbf16>
    %c0_162 = arith.constant 0 : index
    %c0_163 = arith.constant 0 : index
    %127 = vector.load %arg15[%c0_162, %c0_163] : memref<32x128xf32, #tpu.memory_space<vmem>>, vector<32x128xf32>
    %c0_164 = arith.constant 0 : index
    %c0_165 = arith.constant 0 : index
    %c0_166 = arith.constant 0 : index
    %c0_167 = arith.constant 0 : index
    %128 = vector.load %arg5[%c0_164, %c0_165, %c0_166, %c0_167] : memref<3x3x128x128xbf16, #tpu.memory_space<vmem>>, vector<1x1x128x128xbf16>
    %129 = vector.shape_cast %128 : vector<1x1x128x128xbf16> to vector<128x128xbf16>
    %cst_168 = arith.constant dense<0.000000e+00> : vector<32x128xf32>
    %130 = tpu.matmul %126, %129, %cst_168 {dimension_numbers = #tpu.dot_dimension_numbers<[1], [0], [0], [1], [0, 0, 1, 1], [], []>} : vector<32x128xbf16>, vector<128x128xbf16>, vector<32x128xf32> -> vector<32x128xf32>
    %131 = arith.addf %127, %130 : vector<32x128xf32>
    %c0_169 = arith.constant 0 : index
    %c0_170 = arith.constant 0 : index
    %132 = vector.load %arg15[%c0_169, %c0_170] : memref<32x128xf32, #tpu.memory_space<vmem>>, vector<32x128xf32>
    tpu.vector_store %arg15[%c0_169, %c0_170], %131 {strides = array<i32>} : memref<32x128xf32, #tpu.memory_space<vmem>>, vector<32x128xf32>,
    %c0_171 = arith.constant 0 : index
    %c0_172 = arith.constant 0 : index
    %c0_173 = arith.constant 0 : index
    %133 = vector.load %arg12[%c0_171, %c0_172, %c0_173] : memref<6x8x128xbf16, #tpu.memory_space<vmem>>, vector<4x8x128xbf16>
    %134 = vector.shape_cast %133 : vector<4x8x128xbf16> to vector<32x128xbf16>
    %c0_174 = arith.constant 0 : index
    %c0_175 = arith.constant 0 : index
    %135 = vector.load %arg15[%c0_174, %c0_175] : memref<32x128xf32, #tpu.memory_space<vmem>>, vector<32x128xf32>
    %c0_176 = arith.constant 0 : index
    %c1_177 = arith.constant 1 : index
    %c0_178 = arith.constant 0 : index
    %c0_179 = arith.constant 0 : index
    %136 = vector.load %arg5[%c0_176, %c1_177, %c0_178, %c0_179] : memref<3x3x128x128xbf16, #tpu.memory_space<vmem>>, vector<1x1x128x128xbf16>
    %137 = vector.shape_cast %136 : vector<1x1x128x128xbf16> to vector<128x128xbf16>
    %cst_180 = arith.constant dense<0.000000e+00> : vector<32x128xf32>
    %138 = tpu.matmul %134, %137, %cst_180 {dimension_numbers = #tpu.dot_dimension_numbers<[1], [0], [0], [1], [0, 0, 1, 1], [], []>} : vector<32x128xbf16>, vector<128x128xbf16>, vector<32x128xf32> -> vector<32x128xf32>
    %139 = arith.addf %135, %138 : vector<32x128xf32>
    %c0_181 = arith.constant 0 : index
    %c0_182 = arith.constant 0 : index
    %140 = vector.load %arg15[%c0_181, %c0_182] : memref<32x128xf32, #tpu.memory_space<vmem>>, vector<32x128xf32>
    tpu.vector_store %arg15[%c0_181, %c0_182], %139 {strides = array<i32>} : memref<32x128xf32, #tpu.memory_space<vmem>>, vector<32x128xf32>,
    %c0_183 = arith.constant 0 : index
    %c0_184 = arith.constant 0 : index
    %c0_185 = arith.constant 0 : index
    %141 = vector.load %arg13[%c0_183, %c0_184, %c0_185] : memref<6x8x128xbf16, #tpu.memory_space<vmem>>, vector<4x8x128xbf16>
    %142 = vector.shape_cast %141 : vector<4x8x128xbf16> to vector<32x128xbf16>
    %c0_186 = arith.constant 0 : index
    %c0_187 = arith.constant 0 : index
    %143 = vector.load %arg15[%c0_186, %c0_187] : memref<32x128xf32, #tpu.memory_space<vmem>>, vector<32x128xf32>
    %c0_188 = arith.constant 0 : index
    %c2_189 = arith.constant 2 : index
    %c0_190 = arith.constant 0 : index
    %c0_191 = arith.constant 0 : index
    %144 = vector.load %arg5[%c0_188, %c2_189, %c0_190, %c0_191] : memref<3x3x128x128xbf16, #tpu.memory_space<vmem>>, vector<1x1x128x128xbf16>
    %145 = vector.shape_cast %144 : vector<1x1x128x128xbf16> to vector<128x128xbf16>
    %cst_192 = arith.constant dense<0.000000e+00> : vector<32x128xf32>
    %146 = tpu.matmul %142, %145, %cst_192 {dimension_numbers = #tpu.dot_dimension_numbers<[1], [0], [0], [1], [0, 0, 1, 1], [], []>} : vector<32x128xbf16>, vector<128x128xbf16>, vector<32x128xf32> -> vector<32x128xf32>
    %147 = arith.addf %143, %146 : vector<32x128xf32>
    %c0_193 = arith.constant 0 : index
    %c0_194 = arith.constant 0 : index
    %148 = vector.load %arg15[%c0_193, %c0_194] : memref<32x128xf32, #tpu.memory_space<vmem>>, vector<32x128xf32>
    tpu.vector_store %arg15[%c0_193, %c0_194], %147 {strides = array<i32>} : memref<32x128xf32, #tpu.memory_space<vmem>>, vector<32x128xf32>,
    %c1_195 = arith.constant 1 : index
    %c0_196 = arith.constant 0 : index
    %c0_197 = arith.constant 0 : index
    %149 = vector.load %arg11[%c1_195, %c0_196, %c0_197] : memref<6x8x128xbf16, #tpu.memory_space<vmem>>, vector<4x8x128xbf16>
    %150 = vector.shape_cast %149 : vector<4x8x128xbf16> to vector<32x128xbf16>
    %c0_198 = arith.constant 0 : index
    %c0_199 = arith.constant 0 : index
    %151 = vector.load %arg15[%c0_198, %c0_199] : memref<32x128xf32, #tpu.memory_space<vmem>>, vector<32x128xf32>
    %c1_200 = arith.constant 1 : index
    %c0_201 = arith.constant 0 : index
    %c0_202 = arith.constant 0 : index
    %c0_203 = arith.constant 0 : index
    %152 = vector.load %arg5[%c1_200, %c0_201, %c0_202, %c0_203] : memref<3x3x128x128xbf16, #tpu.memory_space<vmem>>, vector<1x1x128x128xbf16>
    %153 = vector.shape_cast %152 : vector<1x1x128x128xbf16> to vector<128x128xbf16>
    %cst_204 = arith.constant dense<0.000000e+00> : vector<32x128xf32>
    %154 = tpu.matmul %150, %153, %cst_204 {dimension_numbers = #tpu.dot_dimension_numbers<[1], [0], [0], [1], [0, 0, 1, 1], [], []>} : vector<32x128xbf16>, vector<128x128xbf16>, vector<32x128xf32> -> vector<32x128xf32>
    %155 = arith.addf %151, %154 : vector<32x128xf32>
    %c0_205 = arith.constant 0 : index
    %c0_206 = arith.constant 0 : index
    %156 = vector.load %arg15[%c0_205, %c0_206] : memref<32x128xf32, #tpu.memory_space<vmem>>, vector<32x128xf32>
    tpu.vector_store %arg15[%c0_205, %c0_206], %155 {strides = array<i32>} : memref<32x128xf32, #tpu.memory_space<vmem>>, vector<32x128xf32>,
    %c1_207 = arith.constant 1 : index
    %c0_208 = arith.constant 0 : index
    %c0_209 = arith.constant 0 : index
    %157 = vector.load %arg12[%c1_207, %c0_208, %c0_209] : memref<6x8x128xbf16, #tpu.memory_space<vmem>>, vector<4x8x128xbf16>
    %158 = vector.shape_cast %157 : vector<4x8x128xbf16> to vector<32x128xbf16>
    %c0_210 = arith.constant 0 : index
    %c0_211 = arith.constant 0 : index
    %159 = vector.load %arg15[%c0_210, %c0_211] : memref<32x128xf32, #tpu.memory_space<vmem>>, vector<32x128xf32>
    %c1_212 = arith.constant 1 : index
    %c1_213 = arith.constant 1 : index
    %c0_214 = arith.constant 0 : index
    %c0_215 = arith.constant 0 : index
    %160 = vector.load %arg5[%c1_212, %c1_213, %c0_214, %c0_215] : memref<3x3x128x128xbf16, #tpu.memory_space<vmem>>, vector<1x1x128x128xbf16>
    %161 = vector.shape_cast %160 : vector<1x1x128x128xbf16> to vector<128x128xbf16>
    %cst_216 = arith.constant dense<0.000000e+00> : vector<32x128xf32>
    %162 = tpu.matmul %158, %161, %cst_216 {dimension_numbers = #tpu.dot_dimension_numbers<[1], [0], [0], [1], [0, 0, 1, 1], [], []>} : vector<32x128xbf16>, vector<128x128xbf16>, vector<32x128xf32> -> vector<32x128xf32>
    %163 = arith.addf %159, %162 : vector<32x128xf32>
    %c0_217 = arith.constant 0 : index
    %c0_218 = arith.constant 0 : index
    %164 = vector.load %arg15[%c0_217, %c0_218] : memref<32x128xf32, #tpu.memory_space<vmem>>, vector<32x128xf32>
    tpu.vector_store %arg15[%c0_217, %c0_218], %163 {strides = array<i32>} : memref<32x128xf32, #tpu.memory_space<vmem>>, vector<32x128xf32>,
    %c1_219 = arith.constant 1 : index
    %c0_220 = arith.constant 0 : index
    %c0_221 = arith.constant 0 : index
    %165 = vector.load %arg13[%c1_219, %c0_220, %c0_221] : memref<6x8x128xbf16, #tpu.memory_space<vmem>>, vector<4x8x128xbf16>
    %166 = vector.shape_cast %165 : vector<4x8x128xbf16> to vector<32x128xbf16>
    %c0_222 = arith.constant 0 : index
    %c0_223 = arith.constant 0 : index
    %167 = vector.load %arg15[%c0_222, %c0_223] : memref<32x128xf32, #tpu.memory_space<vmem>>, vector<32x128xf32>
    %c1_224 = arith.constant 1 : index
    %c2_225 = arith.constant 2 : index
    %c0_226 = arith.constant 0 : index
    %c0_227 = arith.constant 0 : index
    %168 = vector.load %arg5[%c1_224, %c2_225, %c0_226, %c0_227] : memref<3x3x128x128xbf16, #tpu.memory_space<vmem>>, vector<1x1x128x128xbf16>
    %169 = vector.shape_cast %168 : vector<1x1x128x128xbf16> to vector<128x128xbf16>
    %cst_228 = arith.constant dense<0.000000e+00> : vector<32x128xf32>
    %170 = tpu.matmul %166, %169, %cst_228 {dimension_numbers = #tpu.dot_dimension_numbers<[1], [0], [0], [1], [0, 0, 1, 1], [], []>} : vector<32x128xbf16>, vector<128x128xbf16>, vector<32x128xf32> -> vector<32x128xf32>
    %171 = arith.addf %167, %170 : vector<32x128xf32>
    %c0_229 = arith.constant 0 : index
    %c0_230 = arith.constant 0 : index
    %172 = vector.load %arg15[%c0_229, %c0_230] : memref<32x128xf32, #tpu.memory_space<vmem>>, vector<32x128xf32>
    tpu.vector_store %arg15[%c0_229, %c0_230], %171 {strides = array<i32>} : memref<32x128xf32, #tpu.memory_space<vmem>>, vector<32x128xf32>,
    %c2_231 = arith.constant 2 : index
    %c0_232 = arith.constant 0 : index
    %c0_233 = arith.constant 0 : index
    %173 = vector.load %arg11[%c2_231, %c0_232, %c0_233] : memref<6x8x128xbf16, #tpu.memory_space<vmem>>, vector<4x8x128xbf16>
    %174 = vector.shape_cast %173 : vector<4x8x128xbf16> to vector<32x128xbf16>
    %c0_234 = arith.constant 0 : index
    %c0_235 = arith.constant 0 : index
    %175 = vector.load %arg15[%c0_234, %c0_235] : memref<32x128xf32, #tpu.memory_space<vmem>>, vector<32x128xf32>
    %c2_236 = arith.constant 2 : index
    %c0_237 = arith.constant 0 : index
    %c0_238 = arith.constant 0 : index
    %c0_239 = arith.constant 0 : index
    %176 = vector.load %arg5[%c2_236, %c0_237, %c0_238, %c0_239] : memref<3x3x128x128xbf16, #tpu.memory_space<vmem>>, vector<1x1x128x128xbf16>
    %177 = vector.shape_cast %176 : vector<1x1x128x128xbf16> to vector<128x128xbf16>
    %cst_240 = arith.constant dense<0.000000e+00> : vector<32x128xf32>
    %178 = tpu.matmul %174, %177, %cst_240 {dimension_numbers = #tpu.dot_dimension_numbers<[1], [0], [0], [1], [0, 0, 1, 1], [], []>} : vector<32x128xbf16>, vector<128x128xbf16>, vector<32x128xf32> -> vector<32x128xf32>
    %179 = arith.addf %175, %178 : vector<32x128xf32>
    %c0_241 = arith.constant 0 : index
    %c0_242 = arith.constant 0 : index
    %180 = vector.load %arg15[%c0_241, %c0_242] : memref<32x128xf32, #tpu.memory_space<vmem>>, vector<32x128xf32>
    tpu.vector_store %arg15[%c0_241, %c0_242], %179 {strides = array<i32>} : memref<32x128xf32, #tpu.memory_space<vmem>>, vector<32x128xf32>,
    %c2_243 = arith.constant 2 : index
    %c0_244 = arith.constant 0 : index
    %c0_245 = arith.constant 0 : index
    %181 = vector.load %arg12[%c2_243, %c0_244, %c0_245] : memref<6x8x128xbf16, #tpu.memory_space<vmem>>, vector<4x8x128xbf16>
    %182 = vector.shape_cast %181 : vector<4x8x128xbf16> to vector<32x128xbf16>
    %c0_246 = arith.constant 0 : index
    %c0_247 = arith.constant 0 : index
    %183 = vector.load %arg15[%c0_246, %c0_247] : memref<32x128xf32, #tpu.memory_space<vmem>>, vector<32x128xf32>
    %c2_248 = arith.constant 2 : index
    %c1_249 = arith.constant 1 : index
    %c0_250 = arith.constant 0 : index
    %c0_251 = arith.constant 0 : index
    %184 = vector.load %arg5[%c2_248, %c1_249, %c0_250, %c0_251] : memref<3x3x128x128xbf16, #tpu.memory_space<vmem>>, vector<1x1x128x128xbf16>
    %185 = vector.shape_cast %184 : vector<1x1x128x128xbf16> to vector<128x128xbf16>
    %cst_252 = arith.constant dense<0.000000e+00> : vector<32x128xf32>
    %186 = tpu.matmul %182, %185, %cst_252 {dimension_numbers = #tpu.dot_dimension_numbers<[1], [0], [0], [1], [0, 0, 1, 1], [], []>} : vector<32x128xbf16>, vector<128x128xbf16>, vector<32x128xf32> -> vector<32x128xf32>
    %187 = arith.addf %183, %186 : vector<32x128xf32>
    %c0_253 = arith.constant 0 : index
    %c0_254 = arith.constant 0 : index
    %188 = vector.load %arg15[%c0_253, %c0_254] : memref<32x128xf32, #tpu.memory_space<vmem>>, vector<32x128xf32>
    tpu.vector_store %arg15[%c0_253, %c0_254], %187 {strides = array<i32>} : memref<32x128xf32, #tpu.memory_space<vmem>>, vector<32x128xf32>,
    %c2_255 = arith.constant 2 : index
    %c0_256 = arith.constant 0 : index
    %c0_257 = arith.constant 0 : index
    %189 = vector.load %arg13[%c2_255, %c0_256, %c0_257] : memref<6x8x128xbf16, #tpu.memory_space<vmem>>, vector<4x8x128xbf16>
    %190 = vector.shape_cast %189 : vector<4x8x128xbf16> to vector<32x128xbf16>
    %c0_258 = arith.constant 0 : index
    %c0_259 = arith.constant 0 : index
    %191 = vector.load %arg15[%c0_258, %c0_259] : memref<32x128xf32, #tpu.memory_space<vmem>>, vector<32x128xf32>
    %c2_260 = arith.constant 2 : index
    %c2_261 = arith.constant 2 : index
    %c0_262 = arith.constant 0 : index
    %c0_263 = arith.constant 0 : index
    %192 = vector.load %arg5[%c2_260, %c2_261, %c0_262, %c0_263] : memref<3x3x128x128xbf16, #tpu.memory_space<vmem>>, vector<1x1x128x128xbf16>
    %193 = vector.shape_cast %192 : vector<1x1x128x128xbf16> to vector<128x128xbf16>
    %cst_264 = arith.constant dense<0.000000e+00> : vector<32x128xf32>
    %194 = tpu.matmul %190, %193, %cst_264 {dimension_numbers = #tpu.dot_dimension_numbers<[1], [0], [0], [1], [0, 0, 1, 1], [], []>} : vector<32x128xbf16>, vector<128x128xbf16>, vector<32x128xf32> -> vector<32x128xf32>
    %195 = arith.addf %191, %194 : vector<32x128xf32>
    %c0_265 = arith.constant 0 : index
    %c0_266 = arith.constant 0 : index
    %196 = vector.load %arg15[%c0_265, %c0_266] : memref<32x128xf32, #tpu.memory_space<vmem>>, vector<32x128xf32>
    tpu.vector_store %arg15[%c0_265, %c0_266], %195 {strides = array<i32>} : memref<32x128xf32, #tpu.memory_space<vmem>>, vector<32x128xf32>,
    %c0_267 = arith.constant 0 : index
    %197 = arith.index_cast %1 : i32 to index
    %c0_268 = arith.constant 0 : index
    %c0_269 = arith.constant 0 : index
    %198 = vector.load %arg2[%c0_267, %197, %c0_268, %c0_269] : memref<1x8x8x128xbf16, #tpu.memory_space<vmem>>, vector<1x4x8x128xbf16>
    %199 = vector.shape_cast %198 : vector<1x4x8x128xbf16> to vector<4x8x128xbf16>
    %200 = vector.shape_cast %199 : vector<4x8x128xbf16> to vector<32x128xbf16>
    %c0_270 = arith.constant 0 : index
    %c0_271 = arith.constant 0 : index
    %201 = vector.load %arg15[%c0_270, %c0_271] : memref<32x128xf32, #tpu.memory_space<vmem>>, vector<32x128xf32>
    %c0_272 = arith.constant 0 : index
    %c0_273 = arith.constant 0 : index
    %202 = vector.load %arg6[%c0_272, %c0_273] : memref<1x128xf32, #tpu.memory_space<vmem>>, vector<1x128xf32>
    %203 = vector.shape_cast %202 : vector<1x128xf32> to vector<128xf32>
    %204 = vector.shape_cast %203 : vector<128xf32> to vector<1x128xf32>
    %205 = vector.broadcast %204 : vector<1x128xf32> to vector<32x128xf32>
    %206 = arith.addf %201, %205 : vector<32x128xf32>
    %207 = arith.extf %200 : vector<32x128xbf16> to vector<32x128xf32>
    %208 = arith.addf %206, %207 : vector<32x128xf32>
    %cst_274 = arith.constant 0.000000e+00 : f32
    %209 = vector.broadcast %cst_274 : f32 to vector<32x128xf32>
    %210 = arith.maximumf %208, %209 : vector<32x128xf32>
    %211 = vector.shape_cast %210 : vector<32x128xf32> to vector<4x8x128xf32>
    %212 = arith.truncf %211 : vector<4x8x128xf32> to vector<4x8x128xbf16>
    %c0_275 = arith.constant 0 : index
    %c0_276 = arith.constant 0 : index
    %c0_277 = arith.constant 0 : index
    %c0_278 = arith.constant 0 : index
    %213 = vector.load %arg7[%c0_275, %c0_276, %c0_277, %c0_278] : memref<1x4x8x128xbf16, #tpu.memory_space<vmem>>, vector<1x4x8x128xbf16>
    %214 = vector.shape_cast %213 : vector<1x4x8x128xbf16> to vector<4x8x128xbf16>
    %215 = vector.shape_cast %212 : vector<4x8x128xbf16> to vector<1x4x8x128xbf16>
    tpu.vector_store %arg7[%c0_275, %c0_276, %c0_277, %c0_278], %215 {strides = array<i32>} : memref<1x4x8x128xbf16, #tpu.memory_space<vmem>>, vector<1x4x8x128xbf16>,
    return
  }
  func.func @transform_0(%arg0: i32, %arg1: i32) -> (i32, i32, i32, i32) {
    %c0_i32 = arith.constant 0 : i32
    %c0_i32_0 = arith.constant 0 : i32
    %c0_i32_1 = arith.constant 0 : i32
    %c0_i32_2 = arith.constant 0 : i32
    return %arg0, %c0_i32, %c0_i32_0, %c0_i32_1 : i32, i32, i32, i32
  }
  func.func @transform_1(%arg0: i32, %arg1: i32) -> (i32, i32, i32, i32) {
    %c0_i32 = arith.constant 0 : i32
    %c0_i32_0 = arith.constant 0 : i32
    %c0_i32_1 = arith.constant 0 : i32
    %c0_i32_2 = arith.constant 0 : i32
    %c0_i32_3 = arith.constant 0 : i32
    return %c0_i32, %c0_i32_0, %c0_i32_1, %c0_i32_2 : i32, i32, i32, i32
  }
  func.func @transform_2(%arg0: i32, %arg1: i32) -> (i32, i32) {
    %c0_i32 = arith.constant 0 : i32
    %c0_i32_0 = arith.constant 0 : i32
    %c0_i32_1 = arith.constant 0 : i32
    return %c0_i32, %c0_i32_0 : i32, i32
  }
  func.func @transform_3(%arg0: i32, %arg1: i32) -> (i32, i32, i32, i32) {
    %c0_i32 = arith.constant 0 : i32
    %c0_i32_0 = arith.constant 0 : i32
    %c0_i32_1 = arith.constant 0 : i32
    %c0_i32_2 = arith.constant 0 : i32
    %c0_i32_3 = arith.constant 0 : i32
    return %c0_i32, %c0_i32_0, %c0_i32_1, %c0_i32_2 : i32, i32, i32, i32
  }
  func.func @transform_4(%arg0: i32, %arg1: i32) -> (i32, i32) {
    %c0_i32 = arith.constant 0 : i32
    %c0_i32_0 = arith.constant 0 : i32
    %c0_i32_1 = arith.constant 0 : i32
    return %c0_i32, %c0_i32_0 : i32, i32
  }
  func.func @transform_5(%arg0: i32, %arg1: i32) -> (i32, i32, i32, i32) {
    %c0_i32 = arith.constant 0 : i32
    %c0_i32_0 = arith.constant 0 : i32
    %c0_i32_1 = arith.constant 0 : i32
    return %arg0, %arg1, %c0_i32, %c0_i32_0 : i32, i32, i32, i32
  }
}

module attributes {stable_mosaic.version = 11 : i64} {
  func.func @kernel(%arg0: i32, %arg1: i32, %arg2: memref<1x8x8x128xbf16, #tpu.memory_space<vmem>>, %arg3: memref<3x3x128x128xbf16, #tpu.memory_space<vmem>>, %arg4: memref<1x128xf32, #tpu.memory_space<vmem>>, %arg5: memref<3x3x128x128xbf16, #tpu.memory_space<vmem>>, %arg6: memref<1x128xf32, #tpu.memory_space<vmem>>, %arg7: memref<1x4x8x128xbf16, #tpu.memory_space<vmem>>, %arg8: memref<8x8x128xbf16, #tpu.memory_space<vmem>>, %arg9: memref<8x8x128xbf16, #tpu.memory_space<vmem>>, %arg10: memref<8x8x128xbf16, #tpu.memory_space<vmem>>, %arg11: memref<6x8x128xbf16, #tpu.memory_space<vmem>>, %arg12: memref<6x8x128xbf16, #tpu.memory_space<vmem>>, %arg13: memref<6x8x128xbf16, #tpu.memory_space<vmem>>, %arg14: memref<48x128xf32, #tpu.memory_space<vmem>>, %arg15: memref<32x128xf32, #tpu.memory_space<vmem>>) attributes {dimension_semantics = [#tpu.dimension_semantics<parallel>, #tpu.dimension_semantics<parallel>], iteration_bounds = array<i64: 2, 2>, scalar_prefetch = 0 : i64, scratch_operands = 8 : i64, tpu.core_type = #tpu.core_type<tc>, window_params = [{transform_indices = @transform_0, window_bounds = array<i64: 1, 8, 8, 128>}, {pipeline_mode = #tpu.pipeline_mode<synchronous>, transform_indices = @transform_1, window_bounds = array<i64: 3, 3, 128, 128>}, {pipeline_mode = #tpu.pipeline_mode<synchronous>, transform_indices = @transform_2, window_bounds = array<i64: 1, 128>}, {pipeline_mode = #tpu.pipeline_mode<synchronous>, transform_indices = @transform_3, window_bounds = array<i64: 3, 3, 128, 128>}, {pipeline_mode = #tpu.pipeline_mode<synchronous>, transform_indices = @transform_4, window_bounds = array<i64: 1, 128>}, {transform_indices = @transform_5, window_bounds = array<i64: 1, 4, 8, 128>}]} {
    %c4_i32 = arith.constant 4 : i32
    %0 = arith.muli %arg1, %c4_i32 : i32
    %1 = tpu.assume_multiple %0, 4 : i32
    %c0 = arith.constant 0 : index
    %2 = arith.index_cast %1 : i32 to index
    %c0_0 = arith.constant 0 : index
    %c0_1 = arith.constant 0 : index
    %3 = vector.load %arg2[%c0, %2, %c0_0, %c0_1] : memref<1x8x8x128xbf16, #tpu.memory_space<vmem>>, vector<1x4x8x128xbf16>
    %4 = vector.shape_cast %3 : vector<1x4x8x128xbf16> to vector<4x8x128xbf16>
    %cst = arith.constant 0.000000e+00 : bf16
    %5 = vector.broadcast %cst : bf16 to vector<4x1x128xbf16>
    %c2 = arith.constant 2 : index
    %c0_2 = arith.constant 0 : index
    %c0_3 = arith.constant 0 : index
    %6 = vector.load %arg9[%c2, %c0_2, %c0_3] : memref<8x8x128xbf16, #tpu.memory_space<vmem>>, vector<4x8x128xbf16>
    tpu.vector_store %arg9[%c2, %c0_2, %c0_3], %4 {strides = array<i32>} : memref<8x8x128xbf16, #tpu.memory_space<vmem>>, vector<4x8x128xbf16>,
    %7 = vector.extract_strided_slice %4 {offsets = [0, 0, 0], sizes = [4, 7, 128], strides = [1, 1, 1]} : vector<4x8x128xbf16> to vector<4x7x128xbf16>
    %c2_4 = arith.constant 2 : index
    %c1 = arith.constant 1 : index
    %c0_5 = arith.constant 0 : index
    %8 = vector.load %arg8[%c2_4, %c1, %c0_5] : memref<8x8x128xbf16, #tpu.memory_space<vmem>>, vector<4x7x128xbf16>
    tpu.vector_store %arg8[%c2_4, %c1, %c0_5], %7 {strides = array<i32>} : memref<8x8x128xbf16, #tpu.memory_space<vmem>>, vector<4x7x128xbf16>,
    %c2_6 = arith.constant 2 : index
    %c0_7 = arith.constant 0 : index
    %c0_8 = arith.constant 0 : index
    %9 = vector.load %arg8[%c2_6, %c0_7, %c0_8] : memref<8x8x128xbf16, #tpu.memory_space<vmem>>, vector<4x1x128xbf16>
    tpu.vector_store %arg8[%c2_6, %c0_7, %c0_8], %5 {strides = array<i32>} : memref<8x8x128xbf16, #tpu.memory_space<vmem>>, vector<4x1x128xbf16>,
    %10 = vector.extract_strided_slice %4 {offsets = [0, 1, 0], sizes = [4, 7, 128], strides = [1, 1, 1]} : vector<4x8x128xbf16> to vector<4x7x128xbf16>
    %c2_9 = arith.constant 2 : index
    %c0_10 = arith.constant 0 : index
    %c0_11 = arith.constant 0 : index
    %11 = vector.load %arg10[%c2_9, %c0_10, %c0_11] : memref<8x8x128xbf16, #tpu.memory_space<vmem>>, vector<4x7x128xbf16>
    tpu.vector_store %arg10[%c2_9, %c0_10, %c0_11], %10 {strides = array<i32>} : memref<8x8x128xbf16, #tpu.memory_space<vmem>>, vector<4x7x128xbf16>,
    %c2_12 = arith.constant 2 : index
    %c7 = arith.constant 7 : index
    %c0_13 = arith.constant 0 : index
    %12 = vector.load %arg10[%c2_12, %c7, %c0_13] : memref<8x8x128xbf16, #tpu.memory_space<vmem>>, vector<4x1x128xbf16>
    tpu.vector_store %arg10[%c2_12, %c7, %c0_13], %5 {strides = array<i32>} : memref<8x8x128xbf16, #tpu.memory_space<vmem>>, vector<4x1x128xbf16>,
    %c0_i32 = arith.constant 0 : i32
    %13 = arith.cmpi sgt, %arg1, %c0_i32 : i32
    %14 = arith.extui %13 : i1 to i32
    %c0_i32_14 = arith.constant 0 : i32
    %15 = arith.cmpi ne, %14, %c0_i32_14 : i32
    scf.if %15 {
      %c2_i32 = arith.constant 2 : i32
      %216 = arith.subi %1, %c2_i32 : i32
      %c0_279 = arith.constant 0 : index
      %217 = arith.index_cast %216 : i32 to index
      %c0_280 = arith.constant 0 : index
      %c0_281 = arith.constant 0 : index
      %218 = vector.load %arg2[%c0_279, %217, %c0_280, %c0_281] : memref<1x8x8x128xbf16, #tpu.memory_space<vmem>>, vector<1x2x8x128xbf16>
      %219 = vector.shape_cast %218 : vector<1x2x8x128xbf16> to vector<2x8x128xbf16>
      %cst_282 = arith.constant 0.000000e+00 : bf16
      %220 = vector.broadcast %cst_282 : bf16 to vector<2x1x128xbf16>
      %c0_283 = arith.constant 0 : index
      %c0_284 = arith.constant 0 : index
      %c0_285 = arith.constant 0 : index
      %221 = vector.load %arg9[%c0_283, %c0_284, %c0_285] : memref<8x8x128xbf16, #tpu.memory_space<vmem>>, vector<2x8x128xbf16>
      tpu.vector_store %arg9[%c0_283, %c0_284, %c0_285], %219 {strides = array<i32>} : memref<8x8x128xbf16, #tpu.memory_space<vmem>>, vector<2x8x128xbf16>,
      %222 = vector.extract_strided_slice %219 {offsets = [0, 0, 0], sizes = [2, 7, 128], strides = [1, 1, 1]} : vector<2x8x128xbf16> to vector<2x7x128xbf16>
      %c0_286 = arith.constant 0 : index
      %c1_287 = arith.constant 1 : index
      %c0_288 = arith.constant 0 : index
      %223 = vector.load %arg8[%c0_286, %c1_287, %c0_288] : memref<8x8x128xbf16, #tpu.memory_space<vmem>>, vector<2x7x128xbf16>
      tpu.vector_store %arg8[%c0_286, %c1_287, %c0_288], %222 {strides = array<i32>} : memref<8x8x128xbf16, #tpu.memory_space<vmem>>, vector<2x7x128xbf16>,
      %c0_289 = arith.constant 0 : index
      %c0_290 = arith.constant 0 : index
      %c0_291 = arith.constant 0 : index
      %224 = vector.load %arg8[%c0_289, %c0_290, %c0_291] : memref<8x8x128xbf16, #tpu.memory_space<vmem>>, vector<2x1x128xbf16>
      tpu.vector_store %arg8[%c0_289, %c0_290, %c0_291], %220 {strides = array<i32>} : memref<8x8x128xbf16, #tpu.memory_space<vmem>>, vector<2x1x128xbf16>,
      %225 = vector.extract_strided_slice %219 {offsets = [0, 1, 0], sizes = [2, 7, 128], strides = [1, 1, 1]} : vector<2x8x128xbf16> to vector<2x7x128xbf16>
      %c0_292 = arith.constant 0 : index
      %c0_293 = arith.constant 0 : index
      %c0_294 = arith.constant 0 : index
      %226 = vector.load %arg10[%c0_292, %c0_293, %c0_294] : memref<8x8x128xbf16, #tpu.memory_space<vmem>>, vector<2x7x128xbf16>
      tpu.vector_store %arg10[%c0_292, %c0_293, %c0_294], %225 {strides = array<i32>} : memref<8x8x128xbf16, #tpu.memory_space<vmem>>, vector<2x7x128xbf16>,
      %c0_295 = arith.constant 0 : index
      %c7_296 = arith.constant 7 : index
      %c0_297 = arith.constant 0 : index
      %227 = vector.load %arg10[%c0_295, %c7_296, %c0_297] : memref<8x8x128xbf16, #tpu.memory_space<vmem>>, vector<2x1x128xbf16>
      tpu.vector_store %arg10[%c0_295, %c7_296, %c0_297], %220 {strides = array<i32>} : memref<8x8x128xbf16, #tpu.memory_space<vmem>>, vector<2x1x128xbf16>,
    } else {
    }
    %c0_i32_15 = arith.constant 0 : i32
    %16 = arith.cmpi eq, %arg1, %c0_i32_15 : i32
    %17 = arith.extui %16 : i1 to i32
    %c0_i32_16 = arith.constant 0 : i32
    %18 = arith.cmpi ne, %17, %c0_i32_16 : i32
    scf.if %18 {
      %cst_279 = arith.constant 0.000000e+00 : bf16
      %216 = vector.broadcast %cst_279 : bf16 to vector<2x8x128xbf16>
      %c0_280 = arith.constant 0 : index
      %c0_281 = arith.constant 0 : index
      %c0_282 = arith.constant 0 : index
      %217 = vector.load %arg8[%c0_280, %c0_281, %c0_282] : memref<8x8x128xbf16, #tpu.memory_space<vmem>>, vector<2x8x128xbf16>
      tpu.vector_store %arg8[%c0_280, %c0_281, %c0_282], %216 {strides = array<i32>} : memref<8x8x128xbf16, #tpu.memory_space<vmem>>, vector<2x8x128xbf16>,
      %c0_283 = arith.constant 0 : index
      %c0_284 = arith.constant 0 : index
      %c0_285 = arith.constant 0 : index
      %218 = vector.load %arg9[%c0_283, %c0_284, %c0_285] : memref<8x8x128xbf16, #tpu.memory_space<vmem>>, vector<2x8x128xbf16>
      tpu.vector_store %arg9[%c0_283, %c0_284, %c0_285], %216 {strides = array<i32>} : memref<8x8x128xbf16, #tpu.memory_space<vmem>>, vector<2x8x128xbf16>,
      %c0_286 = arith.constant 0 : index
      %c0_287 = arith.constant 0 : index
      %c0_288 = arith.constant 0 : index
      %219 = vector.load %arg10[%c0_286, %c0_287, %c0_288] : memref<8x8x128xbf16, #tpu.memory_space<vmem>>, vector<2x8x128xbf16>
      tpu.vector_store %arg10[%c0_286, %c0_287, %c0_288], %216 {strides = array<i32>} : memref<8x8x128xbf16, #tpu.memory_space<vmem>>, vector<2x8x128xbf16>,
    } else {
    }
    %c1_i32 = arith.constant 1 : i32
    %19 = arith.cmpi slt, %arg1, %c1_i32 : i32
    %20 = arith.extui %19 : i1 to i32
    %c0_i32_17 = arith.constant 0 : i32
    %21 = arith.cmpi ne, %20, %c0_i32_17 : i32
    scf.if %21 {
      %c4_i32_279 = arith.constant 4 : i32
      %216 = arith.addi %1, %c4_i32_279 : i32
      %c0_280 = arith.constant 0 : index
      %217 = arith.index_cast %216 : i32 to index
      %c0_281 = arith.constant 0 : index
      %c0_282 = arith.constant 0 : index
      %218 = vector.load %arg2[%c0_280, %217, %c0_281, %c0_282] : memref<1x8x8x128xbf16, #tpu.memory_space<vmem>>, vector<1x2x8x128xbf16>
      %219 = vector.shape_cast %218 : vector<1x2x8x128xbf16> to vector<2x8x128xbf16>
      %cst_283 = arith.constant 0.000000e+00 : bf16
      %220 = vector.broadcast %cst_283 : bf16 to vector<2x1x128xbf16>
      %c6 = arith.constant 6 : index
      %c0_284 = arith.constant 0 : index
      %c0_285 = arith.constant 0 : index
      %221 = vector.load %arg9[%c6, %c0_284, %c0_285] : memref<8x8x128xbf16, #tpu.memory_space<vmem>>, vector<2x8x128xbf16>
      tpu.vector_store %arg9[%c6, %c0_284, %c0_285], %219 {strides = array<i32>} : memref<8x8x128xbf16, #tpu.memory_space<vmem>>, vector<2x8x128xbf16>,
      %222 = vector.extract_strided_slice %219 {offsets = [0, 0, 0], sizes = [2, 7, 128], strides = [1, 1, 1]} : vector<2x8x128xbf16> to vector<2x7x128xbf16>
      %c6_286 = arith.constant 6 : index
      %c1_287 = arith.constant 1 : index
      %c0_288 = arith.constant 0 : index
      %223 = vector.load %arg8[%c6_286, %c1_287, %c0_288] : memref<8x8x128xbf16, #tpu.memory_space<vmem>>, vector<2x7x128xbf16>
      tpu.vector_store %arg8[%c6_286, %c1_287, %c0_288], %222 {strides = array<i32>} : memref<8x8x128xbf16, #tpu.memory_space<vmem>>, vector<2x7x128xbf16>,
      %c6_289 = arith.constant 6 : index
      %c0_290 = arith.constant 0 : index
      %c0_291 = arith.constant 0 : index
      %224 = vector.load %arg8[%c6_289, %c0_290, %c0_291] : memref<8x8x128xbf16, #tpu.memory_space<vmem>>, vector<2x1x128xbf16>
      tpu.vector_store %arg8[%c6_289, %c0_290, %c0_291], %220 {strides = array<i32>} : memref<8x8x128xbf16, #tpu.memory_space<vmem>>, vector<2x1x128xbf16>,
      %225 = vector.extract_strided_slice %219 {offsets = [0, 1, 0], sizes = [2, 7, 128], strides = [1, 1, 1]} : vector<2x8x128xbf16> to vector<2x7x128xbf16>
      %c6_292 = arith.constant 6 : index
      %c0_293 = arith.constant 0 : index
      %c0_294 = arith.constant 0 : index
      %226 = vector.load %arg10[%c6_292, %c0_293, %c0_294] : memref<8x8x128xbf16, #tpu.memory_space<vmem>>, vector<2x7x128xbf16>
      tpu.vector_store %arg10[%c6_292, %c0_293, %c0_294], %225 {strides = array<i32>} : memref<8x8x128xbf16, #tpu.memory_space<vmem>>, vector<2x7x128xbf16>,
      %c6_295 = arith.constant 6 : index
      %c7_296 = arith.constant 7 : index
      %c0_297 = arith.constant 0 : index
      %227 = vector.load %arg10[%c6_295, %c7_296, %c0_297] : memref<8x8x128xbf16, #tpu.memory_space<vmem>>, vector<2x1x128xbf16>
      tpu.vector_store %arg10[%c6_295, %c7_296, %c0_297], %220 {strides = array<i32>} : memref<8x8x128xbf16, #tpu.memory_space<vmem>>, vector<2x1x128xbf16>,
    } else {
    }
    %c1_i32_18 = arith.constant 1 : i32
    %22 = arith.cmpi eq, %arg1, %c1_i32_18 : i32
    %23 = arith.extui %22 : i1 to i32
    %c0_i32_19 = arith.constant 0 : i32
    %24 = arith.cmpi ne, %23, %c0_i32_19 : i32
    scf.if %24 {
      %cst_279 = arith.constant 0.000000e+00 : bf16
      %216 = vector.broadcast %cst_279 : bf16 to vector<2x8x128xbf16>
      %c6 = arith.constant 6 : index
      %c0_280 = arith.constant 0 : index
      %c0_281 = arith.constant 0 : index
      %217 = vector.load %arg8[%c6, %c0_280, %c0_281] : memref<8x8x128xbf16, #tpu.memory_space<vmem>>, vector<2x8x128xbf16>
      tpu.vector_store %arg8[%c6, %c0_280, %c0_281], %216 {strides = array<i32>} : memref<8x8x128xbf16, #tpu.memory_space<vmem>>, vector<2x8x128xbf16>,
      %c6_282 = arith.constant 6 : index
      %c0_283 = arith.constant 0 : index
      %c0_284 = arith.constant 0 : index
      %218 = vector.load %arg9[%c6_282, %c0_283, %c0_284] : memref<8x8x128xbf16, #tpu.memory_space<vmem>>, vector<2x8x128xbf16>
      tpu.vector_store %arg9[%c6_282, %c0_283, %c0_284], %216 {strides = array<i32>} : memref<8x8x128xbf16, #tpu.memory_space<vmem>>, vector<2x8x128xbf16>,
      %c6_285 = arith.constant 6 : index
      %c0_286 = arith.constant 0 : index
      %c0_287 = arith.constant 0 : index
      %219 = vector.load %arg10[%c6_285, %c0_286, %c0_287] : memref<8x8x128xbf16, #tpu.memory_space<vmem>>, vector<2x8x128xbf16>
      tpu.vector_store %arg10[%c6_285, %c0_286, %c0_287], %216 {strides = array<i32>} : memref<8x8x128xbf16, #tpu.memory_space<vmem>>, vector<2x8x128xbf16>,
    } else {
    }
    %cst_20 = arith.constant 0.000000e+00 : f32
    %25 = vector.broadcast %cst_20 : f32 to vector<48x128xf32>
    %c0_21 = arith.constant 0 : index
    %c0_22 = arith.constant 0 : index
    %26 = vector.load %arg14[%c0_21, %c0_22] : memref<48x128xf32, #tpu.memory_space<vmem>>, vector<48x128xf32>
    tpu.vector_store %arg14[%c0_21, %c0_22], %25 {strides = array<i32>} : memref<48x128xf32, #tpu.memory_space<vmem>>, vector<48x128xf32>,
    %c0_23 = arith.constant 0 : index
    %c0_24 = arith.constant 0 : index
    %c0_25 = arith.constant 0 : index
    %27 = vector.load %arg8[%c0_23, %c0_24, %c0_25] : memref<8x8x128xbf16, #tpu.memory_space<vmem>>, vector<6x8x128xbf16>
    %28 = vector.shape_cast %27 : vector<6x8x128xbf16> to vector<48x128xbf16>
    %c0_26 = arith.constant 0 : index
    %c0_27 = arith.constant 0 : index
    %29 = vector.load %arg14[%c0_26, %c0_27] : memref<48x128xf32, #tpu.memory_space<vmem>>, vector<48x128xf32>
    %c0_28 = arith.constant 0 : index
    %c0_29 = arith.constant 0 : index
    %c0_30 = arith.constant 0 : index
    %c0_31 = arith.constant 0 : index
    %30 = vector.load %arg3[%c0_28, %c0_29, %c0_30, %c0_31] : memref<3x3x128x128xbf16, #tpu.memory_space<vmem>>, vector<1x1x128x128xbf16>
    %31 = vector.shape_cast %30 : vector<1x1x128x128xbf16> to vector<128x128xbf16>
    %cst_32 = arith.constant dense<0.000000e+00> : vector<48x128xf32>
    %32 = tpu.matmul %28, %31, %cst_32 {dimension_numbers = #tpu.dot_dimension_numbers<[1], [0], [0], [1], [0, 0, 1, 1], [], []>} : vector<48x128xbf16>, vector<128x128xbf16>, vector<48x128xf32> -> vector<48x128xf32>
    %33 = arith.addf %29, %32 : vector<48x128xf32>
    %c0_33 = arith.constant 0 : index
    %c0_34 = arith.constant 0 : index
    %34 = vector.load %arg14[%c0_33, %c0_34] : memref<48x128xf32, #tpu.memory_space<vmem>>, vector<48x128xf32>
    tpu.vector_store %arg14[%c0_33, %c0_34], %33 {strides = array<i32>} : memref<48x128xf32, #tpu.memory_space<vmem>>, vector<48x128xf32>,
    %c0_35 = arith.constant 0 : index
    %c0_36 = arith.constant 0 : index
    %c0_37 = arith.constant 0 : index
    %35 = vector.load %arg9[%c0_35, %c0_36, %c0_37] : memref<8x8x128xbf16, #tpu.memory_space<vmem>>, vector<6x8x128xbf16>
    %36 = vector.shape_cast %35 : vector<6x8x128xbf16> to vector<48x128xbf16>
    %c0_38 = arith.constant 0 : index
    %c0_39 = arith.constant 0 : index
    %37 = vector.load %arg14[%c0_38, %c0_39] : memref<48x128xf32, #tpu.memory_space<vmem>>, vector<48x128xf32>
    %c0_40 = arith.constant 0 : index
    %c1_41 = arith.constant 1 : index
    %c0_42 = arith.constant 0 : index
    %c0_43 = arith.constant 0 : index
    %38 = vector.load %arg3[%c0_40, %c1_41, %c0_42, %c0_43] : memref<3x3x128x128xbf16, #tpu.memory_space<vmem>>, vector<1x1x128x128xbf16>
    %39 = vector.shape_cast %38 : vector<1x1x128x128xbf16> to vector<128x128xbf16>
    %cst_44 = arith.constant dense<0.000000e+00> : vector<48x128xf32>
    %40 = tpu.matmul %36, %39, %cst_44 {dimension_numbers = #tpu.dot_dimension_numbers<[1], [0], [0], [1], [0, 0, 1, 1], [], []>} : vector<48x128xbf16>, vector<128x128xbf16>, vector<48x128xf32> -> vector<48x128xf32>
    %41 = arith.addf %37, %40 : vector<48x128xf32>
    %c0_45 = arith.constant 0 : index
    %c0_46 = arith.constant 0 : index
    %42 = vector.load %arg14[%c0_45, %c0_46] : memref<48x128xf32, #tpu.memory_space<vmem>>, vector<48x128xf32>
    tpu.vector_store %arg14[%c0_45, %c0_46], %41 {strides = array<i32>} : memref<48x128xf32, #tpu.memory_space<vmem>>, vector<48x128xf32>,
    %c0_47 = arith.constant 0 : index
    %c0_48 = arith.constant 0 : index
    %c0_49 = arith.constant 0 : index
    %43 = vector.load %arg10[%c0_47, %c0_48, %c0_49] : memref<8x8x128xbf16, #tpu.memory_space<vmem>>, vector<6x8x128xbf16>
    %44 = vector.shape_cast %43 : vector<6x8x128xbf16> to vector<48x128xbf16>
    %c0_50 = arith.constant 0 : index
    %c0_51 = arith.constant 0 : index
    %45 = vector.load %arg14[%c0_50, %c0_51] : memref<48x128xf32, #tpu.memory_space<vmem>>, vector<48x128xf32>
    %c0_52 = arith.constant 0 : index
    %c2_53 = arith.constant 2 : index
    %c0_54 = arith.constant 0 : index
    %c0_55 = arith.constant 0 : index
    %46 = vector.load %arg3[%c0_52, %c2_53, %c0_54, %c0_55] : memref<3x3x128x128xbf16, #tpu.memory_space<vmem>>, vector<1x1x128x128xbf16>
    %47 = vector.shape_cast %46 : vector<1x1x128x128xbf16> to vector<128x128xbf16>
    %cst_56 = arith.constant dense<0.000000e+00> : vector<48x128xf32>
    %48 = tpu.matmul %44, %47, %cst_56 {dimension_numbers = #tpu.dot_dimension_numbers<[1], [0], [0], [1], [0, 0, 1, 1], [], []>} : vector<48x128xbf16>, vector<128x128xbf16>, vector<48x128xf32> -> vector<48x128xf32>
    %49 = arith.addf %45, %48 : vector<48x128xf32>
    %c0_57 = arith.constant 0 : index
    %c0_58 = arith.constant 0 : index
    %50 = vector.load %arg14[%c0_57, %c0_58] : memref<48x128xf32, #tpu.memory_space<vmem>>, vector<48x128xf32>
    tpu.vector_store %arg14[%c0_57, %c0_58], %49 {strides = array<i32>} : memref<48x128xf32, #tpu.memory_space<vmem>>, vector<48x128xf32>,
    %c1_59 = arith.constant 1 : index
    %c0_60 = arith.constant 0 : index
    %c0_61 = arith.constant 0 : index
    %51 = vector.load %arg8[%c1_59, %c0_60, %c0_61] : memref<8x8x128xbf16, #tpu.memory_space<vmem>>, vector<6x8x128xbf16>
    %52 = vector.shape_cast %51 : vector<6x8x128xbf16> to vector<48x128xbf16>
    %c0_62 = arith.constant 0 : index
    %c0_63 = arith.constant 0 : index
    %53 = vector.load %arg14[%c0_62, %c0_63] : memref<48x128xf32, #tpu.memory_space<vmem>>, vector<48x128xf32>
    %c1_64 = arith.constant 1 : index
    %c0_65 = arith.constant 0 : index
    %c0_66 = arith.constant 0 : index
    %c0_67 = arith.constant 0 : index
    %54 = vector.load %arg3[%c1_64, %c0_65, %c0_66, %c0_67] : memref<3x3x128x128xbf16, #tpu.memory_space<vmem>>, vector<1x1x128x128xbf16>
    %55 = vector.shape_cast %54 : vector<1x1x128x128xbf16> to vector<128x128xbf16>
    %cst_68 = arith.constant dense<0.000000e+00> : vector<48x128xf32>
    %56 = tpu.matmul %52, %55, %cst_68 {dimension_numbers = #tpu.dot_dimension_numbers<[1], [0], [0], [1], [0, 0, 1, 1], [], []>} : vector<48x128xbf16>, vector<128x128xbf16>, vector<48x128xf32> -> vector<48x128xf32>
    %57 = arith.addf %53, %56 : vector<48x128xf32>
    %c0_69 = arith.constant 0 : index
    %c0_70 = arith.constant 0 : index
    %58 = vector.load %arg14[%c0_69, %c0_70] : memref<48x128xf32, #tpu.memory_space<vmem>>, vector<48x128xf32>
    tpu.vector_store %arg14[%c0_69, %c0_70], %57 {strides = array<i32>} : memref<48x128xf32, #tpu.memory_space<vmem>>, vector<48x128xf32>,
    %c1_71 = arith.constant 1 : index
    %c0_72 = arith.constant 0 : index
    %c0_73 = arith.constant 0 : index
    %59 = vector.load %arg9[%c1_71, %c0_72, %c0_73] : memref<8x8x128xbf16, #tpu.memory_space<vmem>>, vector<6x8x128xbf16>
    %60 = vector.shape_cast %59 : vector<6x8x128xbf16> to vector<48x128xbf16>
    %c0_74 = arith.constant 0 : index
    %c0_75 = arith.constant 0 : index
    %61 = vector.load %arg14[%c0_74, %c0_75] : memref<48x128xf32, #tpu.memory_space<vmem>>, vector<48x128xf32>
    %c1_76 = arith.constant 1 : index
    %c1_77 = arith.constant 1 : index
    %c0_78 = arith.constant 0 : index
    %c0_79 = arith.constant 0 : index
    %62 = vector.load %arg3[%c1_76, %c1_77, %c0_78, %c0_79] : memref<3x3x128x128xbf16, #tpu.memory_space<vmem>>, vector<1x1x128x128xbf16>
    %63 = vector.shape_cast %62 : vector<1x1x128x128xbf16> to vector<128x128xbf16>
    %cst_80 = arith.constant dense<0.000000e+00> : vector<48x128xf32>
    %64 = tpu.matmul %60, %63, %cst_80 {dimension_numbers = #tpu.dot_dimension_numbers<[1], [0], [0], [1], [0, 0, 1, 1], [], []>} : vector<48x128xbf16>, vector<128x128xbf16>, vector<48x128xf32> -> vector<48x128xf32>
    %65 = arith.addf %61, %64 : vector<48x128xf32>
    %c0_81 = arith.constant 0 : index
    %c0_82 = arith.constant 0 : index
    %66 = vector.load %arg14[%c0_81, %c0_82] : memref<48x128xf32, #tpu.memory_space<vmem>>, vector<48x128xf32>
    tpu.vector_store %arg14[%c0_81, %c0_82], %65 {strides = array<i32>} : memref<48x128xf32, #tpu.memory_space<vmem>>, vector<48x128xf32>,
    %c1_83 = arith.constant 1 : index
    %c0_84 = arith.constant 0 : index
    %c0_85 = arith.constant 0 : index
    %67 = vector.load %arg10[%c1_83, %c0_84, %c0_85] : memref<8x8x128xbf16, #tpu.memory_space<vmem>>, vector<6x8x128xbf16>
    %68 = vector.shape_cast %67 : vector<6x8x128xbf16> to vector<48x128xbf16>
    %c0_86 = arith.constant 0 : index
    %c0_87 = arith.constant 0 : index
    %69 = vector.load %arg14[%c0_86, %c0_87] : memref<48x128xf32, #tpu.memory_space<vmem>>, vector<48x128xf32>
    %c1_88 = arith.constant 1 : index
    %c2_89 = arith.constant 2 : index
    %c0_90 = arith.constant 0 : index
    %c0_91 = arith.constant 0 : index
    %70 = vector.load %arg3[%c1_88, %c2_89, %c0_90, %c0_91] : memref<3x3x128x128xbf16, #tpu.memory_space<vmem>>, vector<1x1x128x128xbf16>
    %71 = vector.shape_cast %70 : vector<1x1x128x128xbf16> to vector<128x128xbf16>
    %cst_92 = arith.constant dense<0.000000e+00> : vector<48x128xf32>
    %72 = tpu.matmul %68, %71, %cst_92 {dimension_numbers = #tpu.dot_dimension_numbers<[1], [0], [0], [1], [0, 0, 1, 1], [], []>} : vector<48x128xbf16>, vector<128x128xbf16>, vector<48x128xf32> -> vector<48x128xf32>
    %73 = arith.addf %69, %72 : vector<48x128xf32>
    %c0_93 = arith.constant 0 : index
    %c0_94 = arith.constant 0 : index
    %74 = vector.load %arg14[%c0_93, %c0_94] : memref<48x128xf32, #tpu.memory_space<vmem>>, vector<48x128xf32>
    tpu.vector_store %arg14[%c0_93, %c0_94], %73 {strides = array<i32>} : memref<48x128xf32, #tpu.memory_space<vmem>>, vector<48x128xf32>,
    %c2_95 = arith.constant 2 : index
    %c0_96 = arith.constant 0 : index
    %c0_97 = arith.constant 0 : index
    %75 = vector.load %arg8[%c2_95, %c0_96, %c0_97] : memref<8x8x128xbf16, #tpu.memory_space<vmem>>, vector<6x8x128xbf16>
    %76 = vector.shape_cast %75 : vector<6x8x128xbf16> to vector<48x128xbf16>
    %c0_98 = arith.constant 0 : index
    %c0_99 = arith.constant 0 : index
    %77 = vector.load %arg14[%c0_98, %c0_99] : memref<48x128xf32, #tpu.memory_space<vmem>>, vector<48x128xf32>
    %c2_100 = arith.constant 2 : index
    %c0_101 = arith.constant 0 : index
    %c0_102 = arith.constant 0 : index
    %c0_103 = arith.constant 0 : index
    %78 = vector.load %arg3[%c2_100, %c0_101, %c0_102, %c0_103] : memref<3x3x128x128xbf16, #tpu.memory_space<vmem>>, vector<1x1x128x128xbf16>
    %79 = vector.shape_cast %78 : vector<1x1x128x128xbf16> to vector<128x128xbf16>
    %cst_104 = arith.constant dense<0.000000e+00> : vector<48x128xf32>
    %80 = tpu.matmul %76, %79, %cst_104 {dimension_numbers = #tpu.dot_dimension_numbers<[1], [0], [0], [1], [0, 0, 1, 1], [], []>} : vector<48x128xbf16>, vector<128x128xbf16>, vector<48x128xf32> -> vector<48x128xf32>
    %81 = arith.addf %77, %80 : vector<48x128xf32>
    %c0_105 = arith.constant 0 : index
    %c0_106 = arith.constant 0 : index
    %82 = vector.load %arg14[%c0_105, %c0_106] : memref<48x128xf32, #tpu.memory_space<vmem>>, vector<48x128xf32>
    tpu.vector_store %arg14[%c0_105, %c0_106], %81 {strides = array<i32>} : memref<48x128xf32, #tpu.memory_space<vmem>>, vector<48x128xf32>,
    %c2_107 = arith.constant 2 : index
    %c0_108 = arith.constant 0 : index
    %c0_109 = arith.constant 0 : index
    %83 = vector.load %arg9[%c2_107, %c0_108, %c0_109] : memref<8x8x128xbf16, #tpu.memory_space<vmem>>, vector<6x8x128xbf16>
    %84 = vector.shape_cast %83 : vector<6x8x128xbf16> to vector<48x128xbf16>
    %c0_110 = arith.constant 0 : index
    %c0_111 = arith.constant 0 : index
    %85 = vector.load %arg14[%c0_110, %c0_111] : memref<48x128xf32, #tpu.memory_space<vmem>>, vector<48x128xf32>
    %c2_112 = arith.constant 2 : index
    %c1_113 = arith.constant 1 : index
    %c0_114 = arith.constant 0 : index
    %c0_115 = arith.constant 0 : index
    %86 = vector.load %arg3[%c2_112, %c1_113, %c0_114, %c0_115] : memref<3x3x128x128xbf16, #tpu.memory_space<vmem>>, vector<1x1x128x128xbf16>
    %87 = vector.shape_cast %86 : vector<1x1x128x128xbf16> to vector<128x128xbf16>
    %cst_116 = arith.constant dense<0.000000e+00> : vector<48x128xf32>
    %88 = tpu.matmul %84, %87, %cst_116 {dimension_numbers = #tpu.dot_dimension_numbers<[1], [0], [0], [1], [0, 0, 1, 1], [], []>} : vector<48x128xbf16>, vector<128x128xbf16>, vector<48x128xf32> -> vector<48x128xf32>
    %89 = arith.addf %85, %88 : vector<48x128xf32>
    %c0_117 = arith.constant 0 : index
    %c0_118 = arith.constant 0 : index
    %90 = vector.load %arg14[%c0_117, %c0_118] : memref<48x128xf32, #tpu.memory_space<vmem>>, vector<48x128xf32>
    tpu.vector_store %arg14[%c0_117, %c0_118], %89 {strides = array<i32>} : memref<48x128xf32, #tpu.memory_space<vmem>>, vector<48x128xf32>,
    %c2_119 = arith.constant 2 : index
    %c0_120 = arith.constant 0 : index
    %c0_121 = arith.constant 0 : index
    %91 = vector.load %arg10[%c2_119, %c0_120, %c0_121] : memref<8x8x128xbf16, #tpu.memory_space<vmem>>, vector<6x8x128xbf16>
    %92 = vector.shape_cast %91 : vector<6x8x128xbf16> to vector<48x128xbf16>
    %c0_122 = arith.constant 0 : index
    %c0_123 = arith.constant 0 : index
    %93 = vector.load %arg14[%c0_122, %c0_123] : memref<48x128xf32, #tpu.memory_space<vmem>>, vector<48x128xf32>
    %c2_124 = arith.constant 2 : index
    %c2_125 = arith.constant 2 : index
    %c0_126 = arith.constant 0 : index
    %c0_127 = arith.constant 0 : index
    %94 = vector.load %arg3[%c2_124, %c2_125, %c0_126, %c0_127] : memref<3x3x128x128xbf16, #tpu.memory_space<vmem>>, vector<1x1x128x128xbf16>
    %95 = vector.shape_cast %94 : vector<1x1x128x128xbf16> to vector<128x128xbf16>
    %cst_128 = arith.constant dense<0.000000e+00> : vector<48x128xf32>
    %96 = tpu.matmul %92, %95, %cst_128 {dimension_numbers = #tpu.dot_dimension_numbers<[1], [0], [0], [1], [0, 0, 1, 1], [], []>} : vector<48x128xbf16>, vector<128x128xbf16>, vector<48x128xf32> -> vector<48x128xf32>
    %97 = arith.addf %93, %96 : vector<48x128xf32>
    %c0_129 = arith.constant 0 : index
    %c0_130 = arith.constant 0 : index
    %98 = vector.load %arg14[%c0_129, %c0_130] : memref<48x128xf32, #tpu.memory_space<vmem>>, vector<48x128xf32>
    tpu.vector_store %arg14[%c0_129, %c0_130], %97 {strides = array<i32>} : memref<48x128xf32, #tpu.memory_space<vmem>>, vector<48x128xf32>,
    %c0_131 = arith.constant 0 : index
    %c0_132 = arith.constant 0 : index
    %99 = vector.load %arg14[%c0_131, %c0_132] : memref<48x128xf32, #tpu.memory_space<vmem>>, vector<48x128xf32>
    %c0_133 = arith.constant 0 : index
    %c0_134 = arith.constant 0 : index
    %100 = vector.load %arg4[%c0_133, %c0_134] : memref<1x128xf32, #tpu.memory_space<vmem>>, vector<1x128xf32>
    %101 = vector.shape_cast %100 : vector<1x128xf32> to vector<128xf32>
    %102 = vector.shape_cast %101 : vector<128xf32> to vector<1x128xf32>
    %103 = vector.broadcast %102 : vector<1x128xf32> to vector<48x128xf32>
    %104 = arith.addf %99, %103 : vector<48x128xf32>
    %cst_135 = arith.constant 0.000000e+00 : f32
    %105 = vector.broadcast %cst_135 : f32 to vector<48x128xf32>
    %106 = arith.maximumf %104, %105 : vector<48x128xf32>
    %107 = arith.truncf %106 : vector<48x128xf32> to vector<48x128xbf16>
    %108 = vector.shape_cast %107 : vector<48x128xbf16> to vector<6x8x128xbf16>
    %cst_136 = arith.constant 0.000000e+00 : bf16
    %109 = vector.broadcast %cst_136 : bf16 to vector<6x1x128xbf16>
    %c0_137 = arith.constant 0 : index
    %c0_138 = arith.constant 0 : index
    %c0_139 = arith.constant 0 : index
    %110 = vector.load %arg12[%c0_137, %c0_138, %c0_139] : memref<6x8x128xbf16, #tpu.memory_space<vmem>>, vector<6x8x128xbf16>
    tpu.vector_store %arg12[%c0_137, %c0_138, %c0_139], %108 {strides = array<i32>} : memref<6x8x128xbf16, #tpu.memory_space<vmem>>, vector<6x8x128xbf16>,
    %111 = vector.extract_strided_slice %108 {offsets = [0, 0, 0], sizes = [6, 7, 128], strides = [1, 1, 1]} : vector<6x8x128xbf16> to vector<6x7x128xbf16>
    %c0_140 = arith.constant 0 : index
    %c1_141 = arith.constant 1 : index
    %c0_142 = arith.constant 0 : index
    %112 = vector.load %arg11[%c0_140, %c1_141, %c0_142] : memref<6x8x128xbf16, #tpu.memory_space<vmem>>, vector<6x7x128xbf16>
    tpu.vector_store %arg11[%c0_140, %c1_141, %c0_142], %111 {strides = array<i32>} : memref<6x8x128xbf16, #tpu.memory_space<vmem>>, vector<6x7x128xbf16>,
    %c0_143 = arith.constant 0 : index
    %c0_144 = arith.constant 0 : index
    %c0_145 = arith.constant 0 : index
    %113 = vector.load %arg11[%c0_143, %c0_144, %c0_145] : memref<6x8x128xbf16, #tpu.memory_space<vmem>>, vector<6x1x128xbf16>
    tpu.vector_store %arg11[%c0_143, %c0_144, %c0_145], %109 {strides = array<i32>} : memref<6x8x128xbf16, #tpu.memory_space<vmem>>, vector<6x1x128xbf16>,
    %114 = vector.extract_strided_slice %108 {offsets = [0, 1, 0], sizes = [6, 7, 128], strides = [1, 1, 1]} : vector<6x8x128xbf16> to vector<6x7x128xbf16>
    %c0_146 = arith.constant 0 : index
    %c0_147 = arith.constant 0 : index
    %c0_148 = arith.constant 0 : index
    %115 = vector.load %arg13[%c0_146, %c0_147, %c0_148] : memref<6x8x128xbf16, #tpu.memory_space<vmem>>, vector<6x7x128xbf16>
    tpu.vector_store %arg13[%c0_146, %c0_147, %c0_148], %114 {strides = array<i32>} : memref<6x8x128xbf16, #tpu.memory_space<vmem>>, vector<6x7x128xbf16>,
    %c0_149 = arith.constant 0 : index
    %c7_150 = arith.constant 7 : index
    %c0_151 = arith.constant 0 : index
    %116 = vector.load %arg13[%c0_149, %c7_150, %c0_151] : memref<6x8x128xbf16, #tpu.memory_space<vmem>>, vector<6x1x128xbf16>
    tpu.vector_store %arg13[%c0_149, %c7_150, %c0_151], %109 {strides = array<i32>} : memref<6x8x128xbf16, #tpu.memory_space<vmem>>, vector<6x1x128xbf16>,
    %c0_i32_152 = arith.constant 0 : i32
    %117 = arith.cmpi eq, %arg1, %c0_i32_152 : i32
    %118 = arith.extui %117 : i1 to i32
    %c0_i32_153 = arith.constant 0 : i32
    %119 = arith.cmpi ne, %118, %c0_i32_153 : i32
    scf.if %119 {
      %cst_279 = arith.constant 0.000000e+00 : bf16
      %216 = vector.broadcast %cst_279 : bf16 to vector<1x8x128xbf16>
      %c0_280 = arith.constant 0 : index
      %c0_281 = arith.constant 0 : index
      %c0_282 = arith.constant 0 : index
      %217 = vector.load %arg11[%c0_280, %c0_281, %c0_282] : memref<6x8x128xbf16, #tpu.memory_space<vmem>>, vector<1x8x128xbf16>
      tpu.vector_store %arg11[%c0_280, %c0_281, %c0_282], %216 {strides = array<i32>} : memref<6x8x128xbf16, #tpu.memory_space<vmem>>, vector<1x8x128xbf16>,
      %c0_283 = arith.constant 0 : index
      %c0_284 = arith.constant 0 : index
      %c0_285 = arith.constant 0 : index
      %218 = vector.load %arg12[%c0_283, %c0_284, %c0_285] : memref<6x8x128xbf16, #tpu.memory_space<vmem>>, vector<1x8x128xbf16>
      tpu.vector_store %arg12[%c0_283, %c0_284, %c0_285], %216 {strides = array<i32>} : memref<6x8x128xbf16, #tpu.memory_space<vmem>>, vector<1x8x128xbf16>,
      %c0_286 = arith.constant 0 : index
      %c0_287 = arith.constant 0 : index
      %c0_288 = arith.constant 0 : index
      %219 = vector.load %arg13[%c0_286, %c0_287, %c0_288] : memref<6x8x128xbf16, #tpu.memory_space<vmem>>, vector<1x8x128xbf16>
      tpu.vector_store %arg13[%c0_286, %c0_287, %c0_288], %216 {strides = array<i32>} : memref<6x8x128xbf16, #tpu.memory_space<vmem>>, vector<1x8x128xbf16>,
    } else {
    }
    %c1_i32_154 = arith.constant 1 : i32
    %120 = arith.cmpi eq, %arg1, %c1_i32_154 : i32
    %121 = arith.extui %120 : i1 to i32
    %c0_i32_155 = arith.constant 0 : i32
    %122 = arith.cmpi ne, %121, %c0_i32_155 : i32
    scf.if %122 {
      %cst_279 = arith.constant 0.000000e+00 : bf16
      %216 = vector.broadcast %cst_279 : bf16 to vector<1x8x128xbf16>
      %c5 = arith.constant 5 : index
      %c0_280 = arith.constant 0 : index
      %c0_281 = arith.constant 0 : index
      %217 = vector.load %arg11[%c5, %c0_280, %c0_281] : memref<6x8x128xbf16, #tpu.memory_space<vmem>>, vector<1x8x128xbf16>
      tpu.vector_store %arg11[%c5, %c0_280, %c0_281], %216 {strides = array<i32>} : memref<6x8x128xbf16, #tpu.memory_space<vmem>>, vector<1x8x128xbf16>,
      %c5_282 = arith.constant 5 : index
      %c0_283 = arith.constant 0 : index
      %c0_284 = arith.constant 0 : index
      %218 = vector.load %arg12[%c5_282, %c0_283, %c0_284] : memref<6x8x128xbf16, #tpu.memory_space<vmem>>, vector<1x8x128xbf16>
      tpu.vector_store %arg12[%c5_282, %c0_283, %c0_284], %216 {strides = array<i32>} : memref<6x8x128xbf16, #tpu.memory_space<vmem>>, vector<1x8x128xbf16>,
      %c5_285 = arith.constant 5 : index
      %c0_286 = arith.constant 0 : index
      %c0_287 = arith.constant 0 : index
      %219 = vector.load %arg13[%c5_285, %c0_286, %c0_287] : memref<6x8x128xbf16, #tpu.memory_space<vmem>>, vector<1x8x128xbf16>
      tpu.vector_store %arg13[%c5_285, %c0_286, %c0_287], %216 {strides = array<i32>} : memref<6x8x128xbf16, #tpu.memory_space<vmem>>, vector<1x8x128xbf16>,
    } else {
    }
    %cst_156 = arith.constant 0.000000e+00 : f32
    %123 = vector.broadcast %cst_156 : f32 to vector<32x128xf32>
    %c0_157 = arith.constant 0 : index
    %c0_158 = arith.constant 0 : index
    %124 = vector.load %arg15[%c0_157, %c0_158] : memref<32x128xf32, #tpu.memory_space<vmem>>, vector<32x128xf32>
    tpu.vector_store %arg15[%c0_157, %c0_158], %123 {strides = array<i32>} : memref<32x128xf32, #tpu.memory_space<vmem>>, vector<32x128xf32>,
    %c0_159 = arith.constant 0 : index
    %c0_160 = arith.constant 0 : index
    %c0_161 = arith.constant 0 : index
    %125 = vector.load %arg11[%c0_159, %c0_160, %c0_161] : memref<6x8x128xbf16, #tpu.memory_space<vmem>>, vector<4x8x128xbf16>
    %126 = vector.shape_cast %125 : vector<4x8x128xbf16> to vector<32x128xbf16>
    %c0_162 = arith.constant 0 : index
    %c0_163 = arith.constant 0 : index
    %127 = vector.load %arg15[%c0_162, %c0_163] : memref<32x128xf32, #tpu.memory_space<vmem>>, vector<32x128xf32>
    %c0_164 = arith.constant 0 : index
    %c0_165 = arith.constant 0 : index
    %c0_166 = arith.constant 0 : index
    %c0_167 = arith.constant 0 : index
    %128 = vector.load %arg5[%c0_164, %c0_165, %c0_166, %c0_167] : memref<3x3x128x128xbf16, #tpu.memory_space<vmem>>, vector<1x1x128x128xbf16>
    %129 = vector.shape_cast %128 : vector<1x1x128x128xbf16> to vector<128x128xbf16>
    %cst_168 = arith.constant dense<0.000000e+00> : vector<32x128xf32>
    %130 = tpu.matmul %126, %129, %cst_168 {dimension_numbers = #tpu.dot_dimension_numbers<[1], [0], [0], [1], [0, 0, 1, 1], [], []>} : vector<32x128xbf16>, vector<128x128xbf16>, vector<32x128xf32> -> vector<32x128xf32>
    %131 = arith.addf %127, %130 : vector<32x128xf32>
    %c0_169 = arith.constant 0 : index
    %c0_170 = arith.constant 0 : index
    %132 = vector.load %arg15[%c0_169, %c0_170] : memref<32x128xf32, #tpu.memory_space<vmem>>, vector<32x128xf32>
    tpu.vector_store %arg15[%c0_169, %c0_170], %131 {strides = array<i32>} : memref<32x128xf32, #tpu.memory_space<vmem>>, vector<32x128xf32>,
    %c0_171 = arith.constant 0 : index
    %c0_172 = arith.constant 0 : index
    %c0_173 = arith.constant 0 : index
    %133 = vector.load %arg12[%c0_171, %c0_172, %c0_173] : memref<6x8x128xbf16, #tpu.memory_space<vmem>>, vector<4x8x128xbf16>
    %134 = vector.shape_cast %133 : vector<4x8x128xbf16> to vector<32x128xbf16>
    %c0_174 = arith.constant 0 : index
    %c0_175 = arith.constant 0 : index
    %135 = vector.load %arg15[%c0_174, %c0_175] : memref<32x128xf32, #tpu.memory_space<vmem>>, vector<32x128xf32>
    %c0_176 = arith.constant 0 : index
    %c1_177 = arith.constant 1 : index
    %c0_178 = arith.constant 0 : index
    %c0_179 = arith.constant 0 : index
    %136 = vector.load %arg5[%c0_176, %c1_177, %c0_178, %c0_179] : memref<3x3x128x128xbf16, #tpu.memory_space<vmem>>, vector<1x1x128x128xbf16>
    %137 = vector.shape_cast %136 : vector<1x1x128x128xbf16> to vector<128x128xbf16>
    %cst_180 = arith.constant dense<0.000000e+00> : vector<32x128xf32>
    %138 = tpu.matmul %134, %137, %cst_180 {dimension_numbers = #tpu.dot_dimension_numbers<[1], [0], [0], [1], [0, 0, 1, 1], [], []>} : vector<32x128xbf16>, vector<128x128xbf16>, vector<32x128xf32> -> vector<32x128xf32>
    %139 = arith.addf %135, %138 : vector<32x128xf32>
    %c0_181 = arith.constant 0 : index
    %c0_182 = arith.constant 0 : index
    %140 = vector.load %arg15[%c0_181, %c0_182] : memref<32x128xf32, #tpu.memory_space<vmem>>, vector<32x128xf32>
    tpu.vector_store %arg15[%c0_181, %c0_182], %139 {strides = array<i32>} : memref<32x128xf32, #tpu.memory_space<vmem>>, vector<32x128xf32>,
    %c0_183 = arith.constant 0 : index
    %c0_184 = arith.constant 0 : index
    %c0_185 = arith.constant 0 : index
    %141 = vector.load %arg13[%c0_183, %c0_184, %c0_185] : memref<6x8x128xbf16, #tpu.memory_space<vmem>>, vector<4x8x128xbf16>
    %142 = vector.shape_cast %141 : vector<4x8x128xbf16> to vector<32x128xbf16>
    %c0_186 = arith.constant 0 : index
    %c0_187 = arith.constant 0 : index
    %143 = vector.load %arg15[%c0_186, %c0_187] : memref<32x128xf32, #tpu.memory_space<vmem>>, vector<32x128xf32>
    %c0_188 = arith.constant 0 : index
    %c2_189 = arith.constant 2 : index
    %c0_190 = arith.constant 0 : index
    %c0_191 = arith.constant 0 : index
    %144 = vector.load %arg5[%c0_188, %c2_189, %c0_190, %c0_191] : memref<3x3x128x128xbf16, #tpu.memory_space<vmem>>, vector<1x1x128x128xbf16>
    %145 = vector.shape_cast %144 : vector<1x1x128x128xbf16> to vector<128x128xbf16>
    %cst_192 = arith.constant dense<0.000000e+00> : vector<32x128xf32>
    %146 = tpu.matmul %142, %145, %cst_192 {dimension_numbers = #tpu.dot_dimension_numbers<[1], [0], [0], [1], [0, 0, 1, 1], [], []>} : vector<32x128xbf16>, vector<128x128xbf16>, vector<32x128xf32> -> vector<32x128xf32>
    %147 = arith.addf %143, %146 : vector<32x128xf32>
    %c0_193 = arith.constant 0 : index
    %c0_194 = arith.constant 0 : index
    %148 = vector.load %arg15[%c0_193, %c0_194] : memref<32x128xf32, #tpu.memory_space<vmem>>, vector<32x128xf32>
    tpu.vector_store %arg15[%c0_193, %c0_194], %147 {strides = array<i32>} : memref<32x128xf32, #tpu.memory_space<vmem>>, vector<32x128xf32>,
    %c1_195 = arith.constant 1 : index
    %c0_196 = arith.constant 0 : index
    %c0_197 = arith.constant 0 : index
    %149 = vector.load %arg11[%c1_195, %c0_196, %c0_197] : memref<6x8x128xbf16, #tpu.memory_space<vmem>>, vector<4x8x128xbf16>
    %150 = vector.shape_cast %149 : vector<4x8x128xbf16> to vector<32x128xbf16>
    %c0_198 = arith.constant 0 : index
    %c0_199 = arith.constant 0 : index
    %151 = vector.load %arg15[%c0_198, %c0_199] : memref<32x128xf32, #tpu.memory_space<vmem>>, vector<32x128xf32>
    %c1_200 = arith.constant 1 : index
    %c0_201 = arith.constant 0 : index
    %c0_202 = arith.constant 0 : index
    %c0_203 = arith.constant 0 : index
    %152 = vector.load %arg5[%c1_200, %c0_201, %c0_202, %c0_203] : memref<3x3x128x128xbf16, #tpu.memory_space<vmem>>, vector<1x1x128x128xbf16>
    %153 = vector.shape_cast %152 : vector<1x1x128x128xbf16> to vector<128x128xbf16>
    %cst_204 = arith.constant dense<0.000000e+00> : vector<32x128xf32>
    %154 = tpu.matmul %150, %153, %cst_204 {dimension_numbers = #tpu.dot_dimension_numbers<[1], [0], [0], [1], [0, 0, 1, 1], [], []>} : vector<32x128xbf16>, vector<128x128xbf16>, vector<32x128xf32> -> vector<32x128xf32>
    %155 = arith.addf %151, %154 : vector<32x128xf32>
    %c0_205 = arith.constant 0 : index
    %c0_206 = arith.constant 0 : index
    %156 = vector.load %arg15[%c0_205, %c0_206] : memref<32x128xf32, #tpu.memory_space<vmem>>, vector<32x128xf32>
    tpu.vector_store %arg15[%c0_205, %c0_206], %155 {strides = array<i32>} : memref<32x128xf32, #tpu.memory_space<vmem>>, vector<32x128xf32>,
    %c1_207 = arith.constant 1 : index
    %c0_208 = arith.constant 0 : index
    %c0_209 = arith.constant 0 : index
    %157 = vector.load %arg12[%c1_207, %c0_208, %c0_209] : memref<6x8x128xbf16, #tpu.memory_space<vmem>>, vector<4x8x128xbf16>
    %158 = vector.shape_cast %157 : vector<4x8x128xbf16> to vector<32x128xbf16>
    %c0_210 = arith.constant 0 : index
    %c0_211 = arith.constant 0 : index
    %159 = vector.load %arg15[%c0_210, %c0_211] : memref<32x128xf32, #tpu.memory_space<vmem>>, vector<32x128xf32>
    %c1_212 = arith.constant 1 : index
    %c1_213 = arith.constant 1 : index
    %c0_214 = arith.constant 0 : index
    %c0_215 = arith.constant 0 : index
    %160 = vector.load %arg5[%c1_212, %c1_213, %c0_214, %c0_215] : memref<3x3x128x128xbf16, #tpu.memory_space<vmem>>, vector<1x1x128x128xbf16>
    %161 = vector.shape_cast %160 : vector<1x1x128x128xbf16> to vector<128x128xbf16>
    %cst_216 = arith.constant dense<0.000000e+00> : vector<32x128xf32>
    %162 = tpu.matmul %158, %161, %cst_216 {dimension_numbers = #tpu.dot_dimension_numbers<[1], [0], [0], [1], [0, 0, 1, 1], [], []>} : vector<32x128xbf16>, vector<128x128xbf16>, vector<32x128xf32> -> vector<32x128xf32>
    %163 = arith.addf %159, %162 : vector<32x128xf32>
    %c0_217 = arith.constant 0 : index
    %c0_218 = arith.constant 0 : index
    %164 = vector.load %arg15[%c0_217, %c0_218] : memref<32x128xf32, #tpu.memory_space<vmem>>, vector<32x128xf32>
    tpu.vector_store %arg15[%c0_217, %c0_218], %163 {strides = array<i32>} : memref<32x128xf32, #tpu.memory_space<vmem>>, vector<32x128xf32>,
    %c1_219 = arith.constant 1 : index
    %c0_220 = arith.constant 0 : index
    %c0_221 = arith.constant 0 : index
    %165 = vector.load %arg13[%c1_219, %c0_220, %c0_221] : memref<6x8x128xbf16, #tpu.memory_space<vmem>>, vector<4x8x128xbf16>
    %166 = vector.shape_cast %165 : vector<4x8x128xbf16> to vector<32x128xbf16>
    %c0_222 = arith.constant 0 : index
    %c0_223 = arith.constant 0 : index
    %167 = vector.load %arg15[%c0_222, %c0_223] : memref<32x128xf32, #tpu.memory_space<vmem>>, vector<32x128xf32>
    %c1_224 = arith.constant 1 : index
    %c2_225 = arith.constant 2 : index
    %c0_226 = arith.constant 0 : index
    %c0_227 = arith.constant 0 : index
    %168 = vector.load %arg5[%c1_224, %c2_225, %c0_226, %c0_227] : memref<3x3x128x128xbf16, #tpu.memory_space<vmem>>, vector<1x1x128x128xbf16>
    %169 = vector.shape_cast %168 : vector<1x1x128x128xbf16> to vector<128x128xbf16>
    %cst_228 = arith.constant dense<0.000000e+00> : vector<32x128xf32>
    %170 = tpu.matmul %166, %169, %cst_228 {dimension_numbers = #tpu.dot_dimension_numbers<[1], [0], [0], [1], [0, 0, 1, 1], [], []>} : vector<32x128xbf16>, vector<128x128xbf16>, vector<32x128xf32> -> vector<32x128xf32>
    %171 = arith.addf %167, %170 : vector<32x128xf32>
    %c0_229 = arith.constant 0 : index
    %c0_230 = arith.constant 0 : index
    %172 = vector.load %arg15[%c0_229, %c0_230] : memref<32x128xf32, #tpu.memory_space<vmem>>, vector<32x128xf32>
    tpu.vector_store %arg15[%c0_229, %c0_230], %171 {strides = array<i32>} : memref<32x128xf32, #tpu.memory_space<vmem>>, vector<32x128xf32>,
    %c2_231 = arith.constant 2 : index
    %c0_232 = arith.constant 0 : index
    %c0_233 = arith.constant 0 : index
    %173 = vector.load %arg11[%c2_231, %c0_232, %c0_233] : memref<6x8x128xbf16, #tpu.memory_space<vmem>>, vector<4x8x128xbf16>
    %174 = vector.shape_cast %173 : vector<4x8x128xbf16> to vector<32x128xbf16>
    %c0_234 = arith.constant 0 : index
    %c0_235 = arith.constant 0 : index
    %175 = vector.load %arg15[%c0_234, %c0_235] : memref<32x128xf32, #tpu.memory_space<vmem>>, vector<32x128xf32>
    %c2_236 = arith.constant 2 : index
    %c0_237 = arith.constant 0 : index
    %c0_238 = arith.constant 0 : index
    %c0_239 = arith.constant 0 : index
    %176 = vector.load %arg5[%c2_236, %c0_237, %c0_238, %c0_239] : memref<3x3x128x128xbf16, #tpu.memory_space<vmem>>, vector<1x1x128x128xbf16>
    %177 = vector.shape_cast %176 : vector<1x1x128x128xbf16> to vector<128x128xbf16>
    %cst_240 = arith.constant dense<0.000000e+00> : vector<32x128xf32>
    %178 = tpu.matmul %174, %177, %cst_240 {dimension_numbers = #tpu.dot_dimension_numbers<[1], [0], [0], [1], [0, 0, 1, 1], [], []>} : vector<32x128xbf16>, vector<128x128xbf16>, vector<32x128xf32> -> vector<32x128xf32>
    %179 = arith.addf %175, %178 : vector<32x128xf32>
    %c0_241 = arith.constant 0 : index
    %c0_242 = arith.constant 0 : index
    %180 = vector.load %arg15[%c0_241, %c0_242] : memref<32x128xf32, #tpu.memory_space<vmem>>, vector<32x128xf32>
    tpu.vector_store %arg15[%c0_241, %c0_242], %179 {strides = array<i32>} : memref<32x128xf32, #tpu.memory_space<vmem>>, vector<32x128xf32>,
    %c2_243 = arith.constant 2 : index
    %c0_244 = arith.constant 0 : index
    %c0_245 = arith.constant 0 : index
    %181 = vector.load %arg12[%c2_243, %c0_244, %c0_245] : memref<6x8x128xbf16, #tpu.memory_space<vmem>>, vector<4x8x128xbf16>
    %182 = vector.shape_cast %181 : vector<4x8x128xbf16> to vector<32x128xbf16>
    %c0_246 = arith.constant 0 : index
    %c0_247 = arith.constant 0 : index
    %183 = vector.load %arg15[%c0_246, %c0_247] : memref<32x128xf32, #tpu.memory_space<vmem>>, vector<32x128xf32>
    %c2_248 = arith.constant 2 : index
    %c1_249 = arith.constant 1 : index
    %c0_250 = arith.constant 0 : index
    %c0_251 = arith.constant 0 : index
    %184 = vector.load %arg5[%c2_248, %c1_249, %c0_250, %c0_251] : memref<3x3x128x128xbf16, #tpu.memory_space<vmem>>, vector<1x1x128x128xbf16>
    %185 = vector.shape_cast %184 : vector<1x1x128x128xbf16> to vector<128x128xbf16>
    %cst_252 = arith.constant dense<0.000000e+00> : vector<32x128xf32>
    %186 = tpu.matmul %182, %185, %cst_252 {dimension_numbers = #tpu.dot_dimension_numbers<[1], [0], [0], [1], [0, 0, 1, 1], [], []>} : vector<32x128xbf16>, vector<128x128xbf16>, vector<32x128xf32> -> vector<32x128xf32>
    %187 = arith.addf %183, %186 : vector<32x128xf32>
    %c0_253 = arith.constant 0 : index
    %c0_254 = arith.constant 0 : index
    %188 = vector.load %arg15[%c0_253, %c0_254] : memref<32x128xf32, #tpu.memory_space<vmem>>, vector<32x128xf32>
    tpu.vector_store %arg15[%c0_253, %c0_254], %187 {strides = array<i32>} : memref<32x128xf32, #tpu.memory_space<vmem>>, vector<32x128xf32>,
    %c2_255 = arith.constant 2 : index
    %c0_256 = arith.constant 0 : index
    %c0_257 = arith.constant 0 : index
    %189 = vector.load %arg13[%c2_255, %c0_256, %c0_257] : memref<6x8x128xbf16, #tpu.memory_space<vmem>>, vector<4x8x128xbf16>
    %190 = vector.shape_cast %189 : vector<4x8x128xbf16> to vector<32x128xbf16>
    %c0_258 = arith.constant 0 : index
    %c0_259 = arith.constant 0 : index
    %191 = vector.load %arg15[%c0_258, %c0_259] : memref<32x128xf32, #tpu.memory_space<vmem>>, vector<32x128xf32>
    %c2_260 = arith.constant 2 : index
    %c2_261 = arith.constant 2 : index
    %c0_262 = arith.constant 0 : index
    %c0_263 = arith.constant 0 : index
    %192 = vector.load %arg5[%c2_260, %c2_261, %c0_262, %c0_263] : memref<3x3x128x128xbf16, #tpu.memory_space<vmem>>, vector<1x1x128x128xbf16>
    %193 = vector.shape_cast %192 : vector<1x1x128x128xbf16> to vector<128x128xbf16>
    %cst_264 = arith.constant dense<0.000000e+00> : vector<32x128xf32>
    %194 = tpu.matmul %190, %193, %cst_264 {dimension_numbers = #tpu.dot_dimension_numbers<[1], [0], [0], [1], [0, 0, 1, 1], [], []>} : vector<32x128xbf16>, vector<128x128xbf16>, vector<32x128xf32> -> vector<32x128xf32>
    %195 = arith.addf %191, %194 : vector<32x128xf32>
    %c0_265 = arith.constant 0 : index
    %c0_266 = arith.constant 0 : index
    %196 = vector.load %arg15[%c0_265, %c0_266] : memref<32x128xf32, #tpu.memory_space<vmem>>, vector<32x128xf32>
    tpu.vector_store %arg15[%c0_265, %c0_266], %195 {strides = array<i32>} : memref<32x128xf32, #tpu.memory_space<vmem>>, vector<32x128xf32>,
    %c0_267 = arith.constant 0 : index
    %197 = arith.index_cast %1 : i32 to index
    %c0_268 = arith.constant 0 : index
    %c0_269 = arith.constant 0 : index
    %198 = vector.load %arg2[%c0_267, %197, %c0_268, %c0_269] : memref<1x8x8x128xbf16, #tpu.memory_space<vmem>>, vector<1x4x8x128xbf16>
    %199 = vector.shape_cast %198 : vector<1x4x8x128xbf16> to vector<4x8x128xbf16>
    %200 = vector.shape_cast %199 : vector<4x8x128xbf16> to vector<32x128xbf16>
    %c0_270 = arith.constant 0 : index
    %c0_271 = arith.constant 0 : index
    %201 = vector.load %arg15[%c0_270, %c0_271] : memref<32x128xf32, #tpu.memory_space<vmem>>, vector<32x128xf32>
    %c0_272 = arith.constant 0 : index
    %c0_273 = arith.constant 0 : index
    %202 = vector.load %arg6[%c0_272, %c0_273] : memref<1x128xf32, #tpu.memory_space<vmem>>, vector<1x128xf32>
    %203 = vector.shape_cast %202 : vector<1x128xf32> to vector<128xf32>
    %204 = vector.shape_cast %203 : vector<128xf32> to vector<1x128xf32>
    %205 = vector.broadcast %204 : vector<1x128xf32> to vector<32x128xf32>
    %206 = arith.addf %201, %205 : vector<32x128xf32>
    %207 = arith.extf %200 : vector<32x128xbf16> to vector<32x128xf32>
    %208 = arith.addf %206, %207 : vector<32x128xf32>
    %cst_274 = arith.constant 0.000000e+00 : f32
    %209 = vector.broadcast %cst_274 : f32 to vector<32x128xf32>
    %210 = arith.maximumf %208, %209 : vector<32x128xf32>
    %211 = vector.shape_cast %210 : vector<32x128xf32> to vector<4x8x128xf32>
    %212 = arith.truncf %211 : vector<4x8x128xf32> to vector<4x8x128xbf16>
    %c0_275 = arith.constant 0 : index
    %c0_276 = arith.constant 0 : index
    %c0_277 = arith.constant 0 : index
    %c0_278 = arith.constant 0 : index
    %213 = vector.load %arg7[%c0_275, %c0_276, %c0_277, %c0_278] : memref<1x4x8x128xbf16, #tpu.memory_space<vmem>>, vector<1x4x8x128xbf16>
    %214 = vector.shape_cast %213 : vector<1x4x8x128xbf16> to vector<4x8x128xbf16>
    %215 = vector.shape_cast %212 : vector<4x8x128xbf16> to vector<1x4x8x128xbf16>
    tpu.vector_store %arg7[%c0_275, %c0_276, %c0_277, %c0_278], %215 {strides = array<i32>} : memref<1x4x8x128xbf16, #tpu.memory_space<vmem>>, vector<1x4x8x128xbf16>,
    return
  }
  func.func @transform_0(%arg0: i32, %arg1: i32) -> (i32, i32, i32, i32) {
    %c0_i32 = arith.constant 0 : i32
    %c0_i32_0 = arith.constant 0 : i32
    %c0_i32_1 = arith.constant 0 : i32
    %c0_i32_2 = arith.constant 0 : i32
    return %arg0, %c0_i32, %c0_i32_0, %c0_i32_1 : i32, i32, i32, i32
  }
  func.func @transform_1(%arg0: i32, %arg1: i32) -> (i32, i32, i32, i32) {
    %c0_i32 = arith.constant 0 : i32
    %c0_i32_0 = arith.constant 0 : i32
    %c0_i32_1 = arith.constant 0 : i32
    %c0_i32_2 = arith.constant 0 : i32
    %c0_i32_3 = arith.constant 0 : i32
    return %c0_i32, %c0_i32_0, %c0_i32_1, %c0_i32_2 : i32, i32, i32, i32
  }
  func.func @transform_2(%arg0: i32, %arg1: i32) -> (i32, i32) {
    %c0_i32 = arith.constant 0 : i32
    %c0_i32_0 = arith.constant 0 : i32
    %c0_i32_1 = arith.constant 0 : i32
    return %c0_i32, %c0_i32_0 : i32, i32
  }
  func.func @transform_3(%arg0: i32, %arg1: i32) -> (i32, i32, i32, i32) {
    %c0_i32 = arith.constant 0 : i32
    %c0_i32_0 = arith.constant 0 : i32
    %c0_i32_1 = arith.constant 0 : i32
    %c0_i32_2 = arith.constant 0 : i32
    %c0_i32_3 = arith.constant 0 : i32
    return %c0_i32, %c0_i32_0, %c0_i32_1, %c0_i32_2 : i32, i32, i32, i32
  }
  func.func @transform_4(%arg0: i32, %arg1: i32) -> (i32, i32) {
    %c0_i32 = arith.constant 0 : i32
    %c0_i32_0 = arith.constant 0 : i32
    %c0_i32_1 = arith.constant 0 : i32
    return %c0_i32, %c0_i32_0 : i32, i32
  }
  func.func @transform_5(%arg0: i32, %arg1: i32) -> (i32, i32, i32, i32) {
    %c0_i32 = arith.constant 0 : i32
    %c0_i32_0 = arith.constant 0 : i32
    %c0_i32_1 = arith.constant 0 : i32
    return %arg0, %arg1, %c0_i32, %c0_i32_0 : i32, i32, i32, i32
  }
}

</mosaic_0001>

<llo_original>
// kernel: tile.13
$region0: #{tile.13}
  #allocation0 [shape = 's32[1]{0}', space=sflag, size = 0x4, scoped, tag = 'scoped memory for tile.13']
  %s0 = inlined_call_operand.vmem [shape: f32[16], index: 0, kind: input, shape index: {}]
  %s1 = inlined_call_operand.vmem [shape: f32[8,16], index: 1, kind: output, shape index: {}]
  // Predicated region
  $region2: #{tile.13} parent=0 // pred_check
    _
  $region3: #{tile.13} parent=0 // pred_check_branch
    %3 = sbr.rel (0) target = $region5
  $region4: #{tile.13} parent=0 // pred_region
    _
  $region5: #{tile.13} parent=0 // pred_fallthru
    _
  %v4 = vld [vmem:[%s0] ss:$0 sm:$0xff]
  %5 = vst [vmem:[%s1] sm:$0xff] %v4

// kernel: tile.14
$region0: #{tile.14}
  %s0 = inlined_call_operand.vmem [shape: f32[8,16], index: 0, kind: input, shape index: {}]
  %s1 = inlined_call_operand.vmem [shape: f32[1,128], index: 1, kind: output, shape index: {}]
  $region1: #{tile.14} parent=0
    #allocation0 [shape = 'u8[4096]{0}', space=vmem, size = 0x1000, scoped, tag = 'scoped mem for output reshape']
    %v2 = vld [vmem:[%s0] sm:$0x1]
    %vm3 = vcmask 130048
    %4 = vst.msk [vmem:[#allocation0] sm:$0x1] %vm3, %v2
    %s5 = scalar_lea.vmem %s0, 7
    %v6 = vld [vmem:[%s5] sm:$0x1]
    %7 = vrot.lane.b32.xlu0 %v6, 112
    %v8 = vpop.permute.xlu0 %7
    %vm9 = vcmask 1048448
    %10 = vst.msk [vmem:[#allocation0] sm:$0x1] %vm9, %v8
    %s11 = scalar_lea.vmem %s0, 6
    %v12 = vld [vmem:[%s11] sm:$0x1]
    %13 = vrot.lane.b32.xlu0 %v12, 96
    %v14 = vpop.permute.xlu0 %13
    %vm15 = vcmask 917248
    %16 = vst.msk [vmem:[#allocation0] sm:$0x1] %vm15, %v14
    %s17 = scalar_lea.vmem %s0, 5
    %v18 = vld [vmem:[%s17] sm:$0x1]
    %19 = vrot.lane.b32.xlu0 %v18, 80
    %v20 = vpop.permute.xlu0 %19
    %vm21 = vcmask 786048
    %22 = vst.msk [vmem:[#allocation0] sm:$0x1] %vm21, %v20
    %s23 = scalar_lea.vmem %s0, 4
    %v24 = vld [vmem:[%s23] sm:$0x1]
    %25 = vrot.lane.b32.xlu0 %v24, 64
    %v26 = vpop.permute.xlu0 %25
    %vm27 = vcmask 654848
    %28 = vst.msk [vmem:[#allocation0] sm:$0x1] %vm27, %v26
    %s29 = scalar_lea.vmem %s0, 3
    %v30 = vld [vmem:[%s29] sm:$0x1]
    %31 = vrot.lane.b32.xlu0 %v30, 48
    %v32 = vpop.permute.xlu0 %31
    %vm33 = vcmask 523648
    %34 = vst.msk [vmem:[#allocation0] sm:$0x1] %vm33, %v32
    %s35 = scalar_lea.vmem %s0, 2
    %v36 = vld [vmem:[%s35] sm:$0x1]
    %37 = vrot.lane.b32.xlu0 %v36, 32
    %v38 = vpop.permute.xlu0 %37
    %vm39 = vcmask 392448
    %40 = vst.msk [vmem:[#allocation0] sm:$0x1] %vm39, %v38
    %s41 = scalar_lea.vmem %s0, 1
    %v42 = vld [vmem:[%s41] sm:$0x1]
    %43 = vrot.lane.b32.xlu0 %v42, 16
    %v44 = vpop.permute.xlu0 %43
    %vm45 = vcmask 261248
    %46 = vst.msk [vmem:[#allocation0] sm:$0x1] %vm45, %v44
    %s48 = sshllo.u32 0, 1
    %v50 = vld [vmem:[#allocation0] sm:%s48]
    %s51 = sshllo.u32 0, 1
    %52 = vst [vmem:[%s1] sm:%s51] %v50

// kernel: _forward_impl.1
$region0: #{_forward_impl.1}
  #allocation0 [shape = 'u32[]', space=smem, size = 0x4, offset = 0x4, fixed_abs, tag = 'smem constant byte address 0x4 - core index']
  #allocation1 [shape = 'u32[144,128]{1,0:T(1,128)}', space=vmem, size = 0x12000, scoped, tag = 'internal scratch']
  #allocation2 [shape = 'bf16[8,8,128]{2,1,0:T(8,128)(2,1)}', space=vmem, size = 0x4000, scoped, tag = 'scratch operand']
  #allocation3 [shape = 'bf16[8,8,128]{2,1,0:T(8,128)(2,1)}', space=vmem, size = 0x4000, scoped, tag = 'scratch operand']
  #allocation4 [shape = 'bf16[8,8,128]{2,1,0:T(8,128)(2,1)}', space=vmem, size = 0x4000, scoped, tag = 'scratch operand']
  #allocation5 [shape = 'bf16[6,8,128]{2,1,0:T(8,128)(2,1)}', space=vmem, size = 0x3000, scoped, tag = 'scratch operand']
  #allocation6 [shape = 'bf16[6,8,128]{2,1,0:T(8,128)(2,1)}', space=vmem, size = 0x3000, scoped, tag = 'scratch operand']
  #allocation7 [shape = 'bf16[6,8,128]{2,1,0:T(8,128)(2,1)}', space=vmem, size = 0x3000, scoped, tag = 'scratch operand']
  #allocation8 [shape = 'f32[48,128]{1,0:T(8,128)}', space=vmem, size = 0x6000, scoped, tag = 'scratch operand']
  #allocation9 [shape = 'f32[32,128]{1,0:T(8,128)}', space=vmem, size = 0x4000, scoped, tag = 'scratch operand']
  %s0 = inlined_call_operand.vmem [shape: bf16[2,8,8,128], index: 0, kind: input, shape index: {}]
  %s1 = inlined_call_operand.vmem [shape: bf16[3,3,128,128], index: 1, kind: input, shape index: {}]
  %s2 = inlined_call_operand.vmem [shape: f32[1,128], index: 2, kind: input, shape index: {}]
  %s3 = inlined_call_operand.vmem [shape: bf16[3,3,128,128], index: 3, kind: input, shape index: {}]
  %s4 = inlined_call_operand.vmem [shape: f32[1,128], index: 4, kind: input, shape index: {}]
  %s5 = inlined_call_operand.vmem [shape: bf16[2,8,8,128], index: 5, kind: output, shape index: {}]
  %s6 = sld [smem:[#allocation0]]
  $region77: #{_forward_impl.1} parent=0
    _
  %s8 = ssub.s32 1, %s6
  %s9 = scalar_select 0, %s8, %s6
  loop: start=0, step=1, limit=6
  $region2: #{_forward_impl.1} parent=0 // loop_pre_header
    _
  $region3: #{_forward_impl.1} parent=0 // loop_header
    %s11 = sphi 0, %s15
    %p12 = scmp.ge.s32.totalorder %s11, 6
    %s18 = sphi 0, %s30
    %s19 = sphi 0, %s26
    %s20 = sphi 0, %s18
    %s21 = sphi 0, %s19
    %s22 = sphi 0, %s20
    %s23 = sphi 0, %s21
    %s33 = sphi 0, %s35
    %s36 = sphi 0, %s33
    %s37 = sphi 0, %s36
    %s53 = sphi 0, %s37
    %s57 = sphi 0, %s57
    %s59 = sphi 0, %s57
    %s60 = sphi 0, %s59
    %s74 = sphi 0, %s60
    %s78 = sphi 0, %s78
    %s80 = sphi 0, %s78
    %s81 = sphi 0, %s80
    %s95 = sphi 0, %s81
    %s99 = sphi 0, %s99
    %s101 = sphi 0, %s99
    %s102 = sphi 0, %s101
    %s116 = sphi 0, %s102
    %s120 = sphi 0, %s120
    %s122 = sphi 0, %s120
    %s123 = sphi 0, %s122
    %s137 = sphi 0, %s123
    %s145 = sphi 0, %s147
    %s148 = sphi 0, %s145
    %s149 = sphi 0, %s148
    %s165 = sphi 0, %s149
  $region4: #{_forward_impl.1} parent=0 // loop_header_branch
    %14 = sbr.rel (%p12) target = $region8
  $region5: #{_forward_impl.1} parent=0 // loop_body
    %s16 = ssub.s32 %s11, 1
    %s17 = ssub.s32 %s11, 2
    %s24 = sadd.s32 1, %s19
    %p25 = scmp.ge.s32.totalorder %s24, 2
    %s26 = scalar_select %p25, 0, %s24
    %s27 = sadd.s32 1, %s18
    %s28 = scalar_select %p25, %s27, %s18
    %p29 = scmp.ge.s32.totalorder %s28, 2
    %s30 = scalar_select %p29, 0, %s28
    %s31 = ssub.s32 %s18, %s30
    %p32 = scmp.eq.s32.totalorder %s31, 0
    %s34 = sadd.s32 %s33, 1
    %s35 = scalar_select %p32, %s33, %s34
    %p38 = pneg %p32
    %p39 = scmp.eq.s32.totalorder %s11, 3
    %p40 = por %p38, %p39
    %p41 = scmp.ne.s32.totalorder %s33, %s36
    %p42 = scmp.eq.s32.totalorder %s11, 0
    %p43 = por %p41, %p42
    %p44 = scmp.ne.s32.totalorder %s33, %s36
    %p45 = scmp.eq.s32.totalorder %s16, 3
    %p46 = por %p44, %p45
    %p47 = scmp.ne.s32.totalorder %s36, %s37
    %p48 = scmp.eq.s32.totalorder %s16, 0
    %p49 = por %p47, %p48
    %p50 = scmp.ne.s32.totalorder %s36, %s37
    %p51 = scmp.eq.s32.totalorder %s17, 3
    %p52 = por %p50, %p51
    %p54 = scmp.ne.s32.totalorder %s37, %s53
    %p55 = scmp.eq.s32.totalorder %s17, 0
    %p56 = por %p54, %p55
    %s58 = sadd.s32 %s57, 1
    %p61 = scmp.eq.s32.totalorder %s11, 3
    %p62 = scmp.ne.s32.totalorder %s57, %s59
    %p63 = scmp.eq.s32.totalorder %s11, 0
    %p64 = por %p62, %p63
    %p65 = scmp.ne.s32.totalorder %s57, %s59
    %p66 = scmp.eq.s32.totalorder %s16, 3
    %p67 = por %p65, %p66
    %p68 = scmp.ne.s32.totalorder %s59, %s60
    %p69 = scmp.eq.s32.totalorder %s16, 0
    %p70 = por %p68, %p69
    %p71 = scmp.ne.s32.totalorder %s59, %s60
    %p72 = scmp.eq.s32.totalorder %s17, 3
    %p73 = por %p71, %p72
    %p75 = scmp.ne.s32.totalorder %s60, %s74
    %p76 = scmp.eq.s32.totalorder %s17, 0
    %p77 = por %p75, %p76
    %s79 = sadd.s32 %s78, 1
    %p82 = scmp.eq.s32.totalorder %s11, 3
    %p83 = scmp.ne.s32.totalorder %s78, %s80
    %p84 = scmp.eq.s32.totalorder %s11, 0
    %p85 = por %p83, %p84
    %p86 = scmp.ne.s32.totalorder %s78, %s80
    %p87 = scmp.eq.s32.totalorder %s16, 3
    %p88 = por %p86, %p87
    %p89 = scmp.ne.s32.totalorder %s80, %s81
    %p90 = scmp.eq.s32.totalorder %s16, 0
    %p91 = por %p89, %p90
    %p92 = scmp.ne.s32.totalorder %s80, %s81
    %p93 = scmp.eq.s32.totalorder %s17, 3
    %p94 = por %p92, %p93
    %p96 = scmp.ne.s32.totalorder %s81, %s95
    %p97 = scmp.eq.s32.totalorder %s17, 0
    %p98 = por %p96, %p97
    %s100 = sadd.s32 %s99, 1
    %p103 = scmp.eq.s32.totalorder %s11, 3
    %p104 = scmp.ne.s32.totalorder %s99, %s101
    %p105 = scmp.eq.s32.totalorder %s11, 0
    %p106 = por %p104, %p105
    %p107 = scmp.ne.s32.totalorder %s99, %s101
    %p108 = scmp.eq.s32.totalorder %s16, 3
    %p109 = por %p107, %p108
    %p110 = scmp.ne.s32.totalorder %s101, %s102
    %p111 = scmp.eq.s32.totalorder %s16, 0
    %p112 = por %p110, %p111
    %p113 = scmp.ne.s32.totalorder %s101, %s102
    %p114 = scmp.eq.s32.totalorder %s17, 3
    %p115 = por %p113, %p114
    %p117 = scmp.ne.s32.totalorder %s102, %s116
    %p118 = scmp.eq.s32.totalorder %s17, 0
    %p119 = por %p117, %p118
    %s121 = sadd.s32 %s120, 1
    %p124 = scmp.eq.s32.totalorder %s11, 3
    %p125 = scmp.ne.s32.totalorder %s120, %s122
    %p126 = scmp.eq.s32.totalorder %s11, 0
    %p127 = por %p125, %p126
    %p128 = scmp.ne.s32.totalorder %s120, %s122
    %p129 = scmp.eq.s32.totalorder %s16, 3
    %p130 = por %p128, %p129
    %p131 = scmp.ne.s32.totalorder %s122, %s123
    %p132 = scmp.eq.s32.totalorder %s16, 0
    %p133 = por %p131, %p132
    %p134 = scmp.ne.s32.totalorder %s122, %s123
    %p135 = scmp.eq.s32.totalorder %s17, 3
    %p136 = por %p134, %p135
    %p138 = scmp.ne.s32.totalorder %s123, %s137
    %p139 = scmp.eq.s32.totalorder %s17, 0
    %p140 = por %p138, %p139
    %s141 = ssub.s32 %s18, %s30
    %s142 = ssub.s32 %s19, %s26
    %s143 = sor.u32 %s141, %s142
    %p144 = scmp.eq.s32.totalorder %s143, 0
    %s146 = sadd.s32 %s145, 1
    %s147 = scalar_select %p144, %s145, %s146
    %p150 = pneg %p144
    %p151 = scmp.eq.s32.totalorder %s11, 3
    %p152 = por %p150, %p151
    %p153 = scmp.ne.s32.totalorder %s145, %s148
    %p154 = scmp.eq.s32.totalorder %s11, 0
    %p155 = por %p153, %p154
    %p156 = scmp.ne.s32.totalorder %s145, %s148
    %p157 = scmp.eq.s32.totalorder %s16, 3
    %p158 = por %p156, %p157
    %p159 = scmp.ne.s32.totalorder %s148, %s149
    %p160 = scmp.eq.s32.totalorder %s16, 0
    %p161 = por %p159, %p160
    %p162 = scmp.ne.s32.totalorder %s148, %s149
    %p163 = scmp.eq.s32.totalorder %s17, 3
    %p164 = por %p162, %p163
    %p166 = scmp.ne.s32.totalorder %s149, %s165
    %p167 = scmp.eq.s32.totalorder %s17, 0
    %p168 = por %p166, %p167
    %p169 = scmp.le.s32.totalorder 1, %s11
    %p170 = scmp.lt.s32.totalorder %s11, 5
    %p171 = pnand %p169, %p170
    %p172 = pneg %p171
    // Predicated region
    $region9: #{_forward_impl.1} parent=5 // pred_check
      _
    $region10: #{_forward_impl.1} parent=5 // pred_check_branch
      %174 = sbr.rel (%p171) target = $region12
    $region11: #{_forward_impl.1} parent=5 // pred_region
      %s175 = ssub.s32 %s11, 1
      // Predicated region
      $region13: #{_forward_impl.1} parent=11 // pred_check
        %p176 = pneg %p70
      $region14: #{_forward_impl.1} parent=11 // pred_check_branch
        %178 = sbr.rel (%p176) target = $region16
      $region15: #{_forward_impl.1} parent=11 // pred_region
        _
      $region16: #{_forward_impl.1} parent=11 // pred_fallthru
        _
      // Predicated region
      $region17: #{_forward_impl.1} parent=11 // pred_check
        %p179 = pneg %p91
      $region18: #{_forward_impl.1} parent=11 // pred_check_branch
        %181 = sbr.rel (%p179) target = $region20
      $region19: #{_forward_impl.1} parent=11 // pred_region
        _
      $region20: #{_forward_impl.1} parent=11 // pred_fallthru
        _
      // Predicated region
      $region21: #{_forward_impl.1} parent=11 // pred_check
        %p182 = pneg %p112
      $region22: #{_forward_impl.1} parent=11 // pred_check_branch
        %184 = sbr.rel (%p182) target = $region24
      $region23: #{_forward_impl.1} parent=11 // pred_region
        _
      $region24: #{_forward_impl.1} parent=11 // pred_fallthru
        _
      // Predicated region
      $region25: #{_forward_impl.1} parent=11 // pred_check
        %p185 = pneg %p133
      $region26: #{_forward_impl.1} parent=11 // pred_check_branch
        %187 = sbr.rel (%p185) target = $region28
      $region27: #{_forward_impl.1} parent=11 // pred_region
        _
      $region28: #{_forward_impl.1} parent=11 // pred_fallthru
        _
    $region12: #{_forward_impl.1} parent=5 // pred_fallthru
      _
    %p188 = scmp.lt.s32.totalorder %s11, 4
    // Predicated region
    $region29: #{_forward_impl.1} parent=5 // pred_check
      %p189 = pneg %p188
    $region30: #{_forward_impl.1} parent=5 // pred_check_branch
      %191 = sbr.rel (%p189) target = $region32
    $region31: #{_forward_impl.1} parent=5 // pred_region
      // Predicated region
      $region33: #{_forward_impl.1} parent=31 // pred_check
        %p192 = pneg %p43
      $region34: #{_forward_impl.1} parent=31 // pred_check_branch
        %194 = sbr.rel (%p192) target = $region36
      $region35: #{_forward_impl.1} parent=31 // pred_region
        %p195 = scmp.lt.s32.totalorder %s18, 1
        %s196 = scalar_select %p195, %s18, 1
        %s197 = smul.addr %s196, 8
        %s198 = smul.addr %s197, 4
        %s199 = scalar_lea.vmem %s0, %s198
      $region36: #{_forward_impl.1} parent=31 // pred_fallthru
        _
    $region32: #{_forward_impl.1} parent=5 // pred_fallthru
      _
    %p200 = scmp.le.s32.totalorder 1, %s11
    %p201 = scmp.lt.s32.totalorder %s11, 5
    %p202 = pnand %p200, %p201
    %p203 = pneg %p202
    // Predicated region
    $region37: #{_forward_impl.1} parent=5 // pred_check
      _
    $region38: #{_forward_impl.1} parent=5 // pred_check_branch
      %205 = sbr.rel (%p202) target = $region40
    $region39: #{_forward_impl.1} parent=5 // pred_region
      %s206 = ssub.s32 %s11, 1
      %p207 = scmp.lt.s32.totalorder %s20, 1
      %s208 = scalar_select %p207, %s20, 1
      %s209 = smul.addr %s208, 8
      %s210 = smul.addr %s209, 4
      %s211 = scalar_lea.vmem %s0, %s210
      %p212 = pneg %p49
      %p213 = pneg %p46
      %p214 = pneg %p70
      %p215 = pneg %p67
      %p216 = pneg %p91
      %p217 = pneg %p88
      %p218 = pneg %p112
      %p219 = pneg %p109
      %p220 = pneg %p133
      %p221 = pneg %p130
      %p222 = pneg %p161
      %p223 = pneg %p158
      %s224 = smul.u32 4, %s21
      %p225 = scmp.lt.s32.totalorder %s20, 1
      %s226 = scalar_select %p225, %s20, 1
      %p227 = scmp.lt.s32.totalorder %s224, 7
      %s228 = scalar_select %p227, %s224, 7
      %s229 = smul.addr %s226, 8
      %s230 = sadd.s32 %s228, %s229
      %s231 = smul.addr %s230, 4
      %s232 = scalar_lea.vmem %s5, %s231
      %p233 = scmp.lt.s32.totalorder %s20, 1
      %s234 = scalar_select %p233, %s20, 1
      %s235 = smul.addr %s234, 8
      %s236 = smul.addr %s235, 4
      %s237 = scalar_lea.vmem %s0, %s236
      %s238 = smul.u32 4, %s21
      %p239 = scmp.lt.s32.totalorder %s20, 1
      %s240 = scalar_select %p239, %s20, 1
      %p241 = scmp.lt.s32.totalorder %s238, 7
      %s242 = scalar_select %p241, %s238, 7
      %s243 = smul.addr %s240, 8
      %s244 = sadd.s32 %s242, %s243
      %s245 = smul.addr %s244, 4
      %s246 = scalar_lea.vmem %s5, %s245
      %s247 = smul.u32 4, %s21
      %s249 = smul.u32 %s21, 4
      %s250 = smul.addr %s249, 4
      %s251 = scalar_lea.vmem %s237, %s250
      %v252 = vld [vmem:[%s251] sm:$0xf]
      %v253 = vld [vmem:[%s251 + $0x4] sm:$0xf]
      %v254 = vld [vmem:[%s251 + $0x8] sm:$0xf]
      %v255 = vld [vmem:[%s251 + $0xc] sm:$0xf]
      %s256 = scalar_lea.vmem [#allocation3], 8
      %257 = vst [vmem:[%s256] sm:$0xf] %v252
      %258 = vst [vmem:[%s256 + $0x4] sm:$0xf] %v253
      %259 = vst [vmem:[%s256 + $0x8] sm:$0xf] %v254
      %260 = vst [vmem:[%s256 + $0xc] sm:$0xf] %v255
      %v262 = vshrl.u32 %v252, 16
      %v264 = vrot.slane %v262, 7
      %v265 = vshll.u32 %v252, 16
      %v267 = vor.u32 %v264, %v265
      %v269 = vshrl.u32 %v253, 16
      %v271 = vrot.slane %v269, 7
      %v272 = vshll.u32 %v253, 16
      %v274 = vor.u32 %v271, %v272
      %v276 = vshrl.u32 %v254, 16
      %v278 = vrot.slane %v276, 7
      %v279 = vshll.u32 %v254, 16
      %v281 = vor.u32 %v278, %v279
      %v283 = vshrl.u32 %v255, 16
      %v285 = vrot.slane %v283, 7
      %v286 = vshll.u32 %v255, 16
      %v288 = vor.u32 %v285, %v286
      %s293 = scalar_lea.vmem [#allocation2], 8
      %vm294 = vcmask 1043456
      %vm295 = vsmask.f32 7938
      %vm296 = vmand %vm294, %vm295
      %v297 = vld [vmem:[%s293] sm:$0xf]
      %v298 = vsel %vm296, %v267, %v297
      %299 = vst [vmem:[%s293] sm:$0xf] %v298
      %v300 = vld [vmem:[%s293 + $0x4] sm:$0xf]
      %v301 = vsel %vm296, %v274, %v300
      %302 = vst [vmem:[%s293 + $0x4] sm:$0xf] %v301
      %v303 = vld [vmem:[%s293 + $0x8] sm:$0xf]
      %v304 = vsel %vm296, %v281, %v303
      %305 = vst [vmem:[%s293 + $0x8] sm:$0xf] %v304
      %v306 = vld [vmem:[%s293 + $0xc] sm:$0xf]
      %v307 = vsel %vm296, %v288, %v306
      %308 = vst [vmem:[%s293 + $0xc] sm:$0xf] %v307
      %vm309 = vcmask 1040384
      %vm310 = vsmask.f32 256
      %vm311 = vmand %vm309, %vm310
      %v312 = vld [vmem:[%s293] sm:$0x1]
      %v313 = vsel %vm311, 0, %v312
      %314 = vst [vmem:[%s293] sm:$0x1] %v313
      %v315 = vld [vmem:[%s293 + $0x4] sm:$0x1]
      %v316 = vsel %vm311, 0, %v315
      %317 = vst [vmem:[%s293 + $0x4] sm:$0x1] %v316
      %v318 = vld [vmem:[%s293 + $0x8] sm:$0x1]
      %v319 = vsel %vm311, 0, %v318
      %320 = vst [vmem:[%s293 + $0x8] sm:$0x1] %v319
      %v321 = vld [vmem:[%s293 + $0xc] sm:$0x1]
      %v322 = vsel %vm311, 0, %v321
      %323 = vst [vmem:[%s293 + $0xc] sm:$0x1] %v322
      %v324 = vrot.slane %v262, 4
      %v325 = vrot.slane %v265, 5
      %v326 = vor.u32 %v324, %v325
      %v327 = vrot.slane %v326, 4
      %v328 = vrot.slane %v269, 4
      %v329 = vrot.slane %v272, 5
      %v330 = vor.u32 %v328, %v329
      %v331 = vrot.slane %v330, 4
      %v332 = vrot.slane %v276, 4
      %v333 = vrot.slane %v279, 5
      %v334 = vor.u32 %v332, %v333
      %v335 = vrot.slane %v334, 4
      %v336 = vrot.slane %v283, 4
      %v337 = vrot.slane %v286, 5
      %v338 = vor.u32 %v336, %v337
      %v339 = vrot.slane %v338, 4
      %s344 = scalar_lea.vmem [#allocation4], 8
      %vm345 = vsmask.f32 3328
      %vm346 = vmand %vm294, %vm345
      %v347 = vld [vmem:[%s344] sm:$0xf]
      %v348 = vsel %vm346, %v327, %v347
      %349 = vst [vmem:[%s344] sm:$0xf] %v348
      %v350 = vld [vmem:[%s344 + $0x4] sm:$0xf]
      %v351 = vsel %vm346, %v331, %v350
      %352 = vst [vmem:[%s344 + $0x4] sm:$0xf] %v351
      %v353 = vld [vmem:[%s344 + $0x8] sm:$0xf]
      %v354 = vsel %vm346, %v335, %v353
      %355 = vst [vmem:[%s344 + $0x8] sm:$0xf] %v354
      %v356 = vld [vmem:[%s344 + $0xc] sm:$0xf]
      %v357 = vsel %vm346, %v339, %v356
      %358 = vst [vmem:[%s344 + $0xc] sm:$0xf] %v357
      %vm359 = vcmask 1043459
      %vm360 = vsmask.f32 7950
      %vm361 = vmand %vm359, %vm360
      %v362 = vld [vmem:[%s344] sm:$0x8]
      %v363 = vsel %vm361, 0, %v362
      %364 = vst [vmem:[%s344] sm:$0x8] %v363
      %v365 = vld [vmem:[%s344 + $0x4] sm:$0x8]
      %v366 = vsel %vm361, 0, %v365
      %367 = vst [vmem:[%s344 + $0x4] sm:$0x8] %v366
      %v368 = vld [vmem:[%s344 + $0x8] sm:$0x8]
      %v369 = vsel %vm361, 0, %v368
      %370 = vst [vmem:[%s344 + $0x8] sm:$0x8] %v369
      %v371 = vld [vmem:[%s344 + $0xc] sm:$0x8]
      %v372 = vsel %vm361, 0, %v371
      %373 = vst [vmem:[%s344 + $0xc] sm:$0x8] %v372
      %p374 = scmp.gt.s32.totalorder %s21, 0
      // Predicated region
      $region41: #{_forward_impl.1} parent=39 // pred_check
        %p375 = pneg %p374
      $region42: #{_forward_impl.1} parent=39 // pred_check_branch
        %377 = sbr.rel (%p375) target = $region44
      $region43: #{_forward_impl.1} parent=39 // pred_region
        %s378 = ssub.s32 %s249, 2
        %s379 = smul.addr %s378, 4
        %s380 = scalar_lea.vmem %s237, %s379
        %v381 = vld [vmem:[%s380] sm:$0xf]
        %v382 = vld [vmem:[%s380 + $0x4] sm:$0xf]
        %383 = vst [vmem:[#allocation3] sm:$0xf] %v381
        %384 = vst [vmem:[#allocation3 + $0x4] sm:$0xf] %v382
        %v386 = vshrl.u32 %v381, 16
        %v388 = vrot.slane %v386, 7
        %v389 = vshll.u32 %v381, 16
        %v391 = vor.u32 %v388, %v389
        %v393 = vshrl.u32 %v382, 16
        %v395 = vrot.slane %v393, 7
        %v396 = vshll.u32 %v382, 16
        %v398 = vor.u32 %v395, %v396
        %v401 = vld [vmem:[#allocation2] sm:$0xf]
        %v402 = vsel %vm296, %v391, %v401
        %403 = vst [vmem:[#allocation2] sm:$0xf] %v402
        %v404 = vld [vmem:[#allocation2 + $0x4] sm:$0xf]
        %v405 = vsel %vm296, %v398, %v404
        %406 = vst [vmem:[#allocation2 + $0x4] sm:$0xf] %v405
        %v407 = vld [vmem:[#allocation2] sm:$0x1]
        %v408 = vsel %vm311, 0, %v407
        %409 = vst [vmem:[#allocation2] sm:$0x1] %v408
        %v410 = vld [vmem:[#allocation2 + $0x4] sm:$0x1]
        %v411 = vsel %vm311, 0, %v410
        %412 = vst [vmem:[#allocation2 + $0x4] sm:$0x1] %v411
        %v413 = vrot.slane %v386, 4
        %v414 = vrot.slane %v389, 5
        %v415 = vor.u32 %v413, %v414
        %v416 = vrot.slane %v415, 4
        %v417 = vrot.slane %v393, 4
        %v418 = vrot.slane %v396, 5
        %v419 = vor.u32 %v417, %v418
        %v420 = vrot.slane %v419, 4
        %v423 = vld [vmem:[#allocation4] sm:$0xf]
        %v424 = vsel %vm346, %v416, %v423
        %425 = vst [vmem:[#allocation4] sm:$0xf] %v424
        %v426 = vld [vmem:[#allocation4 + $0x4] sm:$0xf]
        %v427 = vsel %vm346, %v420, %v426
        %428 = vst [vmem:[#allocation4 + $0x4] sm:$0xf] %v427
        %v429 = vld [vmem:[#allocation4] sm:$0x8]
        %v430 = vsel %vm361, 0, %v429
        %431 = vst [vmem:[#allocation4] sm:$0x8] %v430
        %v432 = vld [vmem:[#allocation4 + $0x4] sm:$0x8]
        %v433 = vsel %vm361, 0, %v432
        %434 = vst [vmem:[#allocation4 + $0x4] sm:$0x8] %v433
      $region44: #{_forward_impl.1} parent=39 // pred_fallthru
        _
      %p435 = scmp.eq.s32.totalorder %s21, 0
      // Predicated region
      $region45: #{_forward_impl.1} parent=39 // pred_check
        %p436 = pneg %p435
      $region46: #{_forward_impl.1} parent=39 // pred_check_branch
        %438 = sbr.rel (%p436) target = $region48
      $region47: #{_forward_impl.1} parent=39 // pred_region
        %439 = vst [vmem:[#allocation2] sm:$0xf] 0
        %440 = vst [vmem:[#allocation2 + $0x4] sm:$0xf] 0
        %441 = vst [vmem:[#allocation3] sm:$0xf] 0
        %442 = vst [vmem:[#allocation3 + $0x4] sm:$0xf] 0
        %443 = vst [vmem:[#allocation4] sm:$0xf] 0
        %444 = vst [vmem:[#allocation4 + $0x4] sm:$0xf] 0
      $region48: #{_forward_impl.1} parent=39 // pred_fallthru
        _
      %p445 = scmp.lt.s32.totalorder %s21, 1
      // Predicated region
      $region49: #{_forward_impl.1} parent=39 // pred_check
        %p446 = pneg %p445
      $region50: #{_forward_impl.1} parent=39 // pred_check_branch
        %448 = sbr.rel (%p446) target = $region52
      $region51: #{_forward_impl.1} parent=39 // pred_region
        %s449 = sadd.s32 %s249, 4
        %s450 = smul.addr %s449, 4
        %s451 = scalar_lea.vmem %s237, %s450
        %v452 = vld [vmem:[%s451] sm:$0xf]
        %v453 = vld [vmem:[%s451 + $0x4] sm:$0xf]
        %s454 = scalar_lea.vmem [#allocation3], 24
        %455 = vst [vmem:[%s454] sm:$0xf] %v452
        %456 = vst [vmem:[%s454 + $0x4] sm:$0xf] %v453
        %v458 = vshrl.u32 %v452, 16
        %v460 = vrot.slane %v458, 7
        %v461 = vshll.u32 %v452, 16
        %v463 = vor.u32 %v460, %v461
        %v465 = vshrl.u32 %v453, 16
        %v467 = vrot.slane %v465, 7
        %v468 = vshll.u32 %v453, 16
        %v470 = vor.u32 %v467, %v468
        %s473 = scalar_lea.vmem [#allocation2], 24
        %v474 = vld [vmem:[%s473] sm:$0xf]
        %v475 = vsel %vm296, %v463, %v474
        %476 = vst [vmem:[%s473] sm:$0xf] %v475
        %v477 = vld [vmem:[%s473 + $0x4] sm:$0xf]
        %v478 = vsel %vm296, %v470, %v477
        %479 = vst [vmem:[%s473 + $0x4] sm:$0xf] %v478
        %v480 = vld [vmem:[%s473] sm:$0x1]
        %v481 = vsel %vm311, 0, %v480
        %482 = vst [vmem:[%s473] sm:$0x1] %v481
        %v483 = vld [vmem:[%s473 + $0x4] sm:$0x1]
        %v484 = vsel %vm311, 0, %v483
        %485 = vst [vmem:[%s473 + $0x4] sm:$0x1] %v484
        %v486 = vrot.slane %v458, 4
        %v487 = vrot.slane %v461, 5
        %v488 = vor.u32 %v486, %v487
        %v489 = vrot.slane %v488, 4
        %v490 = vrot.slane %v465, 4
        %v491 = vrot.slane %v468, 5
        %v492 = vor.u32 %v490, %v491
        %v493 = vrot.slane %v492, 4
        %s496 = scalar_lea.vmem [#allocation4], 24
        %v497 = vld [vmem:[%s496] sm:$0xf]
        %v498 = vsel %vm346, %v489, %v497
        %499 = vst [vmem:[%s496] sm:$0xf] %v498
        %v500 = vld [vmem:[%s496 + $0x4] sm:$0xf]
        %v501 = vsel %vm346, %v493, %v500
        %502 = vst [vmem:[%s496 + $0x4] sm:$0xf] %v501
        %v503 = vld [vmem:[%s496] sm:$0x8]
        %v504 = vsel %vm361, 0, %v503
        %505 = vst [vmem:[%s496] sm:$0x8] %v504
        %v506 = vld [vmem:[%s496 + $0x4] sm:$0x8]
        %v507 = vsel %vm361, 0, %v506
        %508 = vst [vmem:[%s496 + $0x4] sm:$0x8] %v507
      $region52: #{_forward_impl.1} parent=39 // pred_fallthru
        _
      %p509 = scmp.eq.s32.totalorder %s21, 1
      // Predicated region
      $region53: #{_forward_impl.1} parent=39 // pred_check
        %p510 = pneg %p509
      $region54: #{_forward_impl.1} parent=39 // pred_check_branch
        %512 = sbr.rel (%p510) target = $region56
      $region55: #{_forward_impl.1} parent=39 // pred_region
        %s513 = scalar_lea.vmem [#allocation2], 24
        %514 = vst [vmem:[%s513] sm:$0xf] 0
        %515 = vst [vmem:[%s513 + $0x4] sm:$0xf] 0
        %s516 = scalar_lea.vmem [#allocation3], 24
        %517 = vst [vmem:[%s516] sm:$0xf] 0
        %518 = vst [vmem:[%s516 + $0x4] sm:$0xf] 0
        %s519 = scalar_lea.vmem [#allocation4], 24
        %520 = vst [vmem:[%s519] sm:$0xf] 0
        %521 = vst [vmem:[%s519 + $0x4] sm:$0xf] 0
      $region56: #{_forward_impl.1} parent=39 // pred_fallthru
        _
      %522 = vst [vmem:[#allocation8] sm:$0xff] 0.0
      %523 = vst [vmem:[#allocation8 + $0x8] sm:$0xff] 0.0
      %524 = vst [vmem:[#allocation8 + $0x10] sm:$0xff] 0.0
      %525 = vst [vmem:[#allocation8 + $0x18] sm:$0xff] 0.0
      %526 = vst [vmem:[#allocation8 + $0x20] sm:$0xff] 0.0
      %527 = vst [vmem:[#allocation8 + $0x28] sm:$0xff] 0.0
      %v528 = vld [vmem:[#allocation2] sm:$0xf]
      %v529 = vld [vmem:[#allocation2 + $0x4] sm:$0xf]
      %v530 = vld [vmem:[#allocation2 + $0x8] sm:$0xf]
      %v531 = vld [vmem:[#allocation2 + $0xc] sm:$0xf]
      %v532 = vld [vmem:[#allocation2 + $0x10] sm:$0xf]
      %v533 = vld [vmem:[#allocation2 + $0x14] sm:$0xf]
      %v534 = vld [vmem:[#allocation8] sm:$0xff]
      %v535 = vld [vmem:[#allocation8 + $0x8] sm:$0xff]
      %v536 = vld [vmem:[#allocation8 + $0x10] sm:$0xff]
      %v537 = vld [vmem:[#allocation8 + $0x18] sm:$0xff]
      %v538 = vld [vmem:[#allocation8 + $0x20] sm:$0xff]
      %v539 = vld [vmem:[#allocation8 + $0x28] sm:$0xff]
      %v540 = vld [vmem:[%s1] sm:$0xf]
      %v541 = vld [vmem:[%s1 + $0x4] sm:$0xf]
      %v542 = vld [vmem:[%s1 + $0x8] sm:$0xf]
      %v543 = vld [vmem:[%s1 + $0xc] sm:$0xf]
      %v544 = vld [vmem:[%s1 + $0x10] sm:$0xf]
      %v545 = vld [vmem:[%s1 + $0x14] sm:$0xf]
      %v546 = vld [vmem:[%s1 + $0x18] sm:$0xf]
      %v547 = vld [vmem:[%s1 + $0x1c] sm:$0xf]
      %v548 = vld [vmem:[%s1 + $0x20] sm:$0xf]
      %v549 = vld [vmem:[%s1 + $0x24] sm:$0xf]
      %v550 = vld [vmem:[%s1 + $0x28] sm:$0xf]
      %v551 = vld [vmem:[%s1 + $0x2c] sm:$0xf]
      %v552 = vld [vmem:[%s1 + $0x30] sm:$0xf]
      %v553 = vld [vmem:[%s1 + $0x34] sm:$0xf]
      %v554 = vld [vmem:[%s1 + $0x38] sm:$0xf]
      %v555 = vld [vmem:[%s1 + $0x3c] sm:$0xf]
      %v562 = vunpack.c.l.b16 %v528
      %v563 = vunpack.c.l.b16 %v529
      %v564 = vunpack.c.l.b16 %v530
      %v565 = vunpack.c.l.b16 %v531
      %v566 = vunpack.c.l.b16 %v532
      %v567 = vunpack.c.l.b16 %v533
      %v568 = vpack.c.b16 %v563, %v562
      %v569 = vpack.c.b16 %v565, %v564
      %v570 = vpack.c.b16 %v567, %v566
      %v590 = vunpack.c.l.b16 %v540
      %v591 = vunpack.c.l.b16 %v541
      %v592 = vunpack.c.l.b16 %v542
      %v593 = vunpack.c.l.b16 %v543
      %v594 = vunpack.c.l.b16 %v544
      %v595 = vunpack.c.l.b16 %v545
      %v596 = vunpack.c.l.b16 %v546
      %v597 = vunpack.c.l.b16 %v547
      %v598 = vunpack.c.l.b16 %v548
      %v599 = vunpack.c.l.b16 %v549
      %v600 = vunpack.c.l.b16 %v550
      %v601 = vunpack.c.l.b16 %v551
      %v602 = vunpack.c.l.b16 %v552
      %v603 = vunpack.c.l.b16 %v553
      %v604 = vunpack.c.l.b16 %v554
      %v605 = vunpack.c.l.b16 %v555
      %v606 = vpack.c.b16 %v591, %v590
      %v607 = vpack.c.b16 %v593, %v592
      %v608 = vpack.c.b16 %v595, %v594
      %v609 = vpack.c.b16 %v597, %v596
      %v610 = vpack.c.b16 %v599, %v598
      %v611 = vpack.c.b16 %v601, %v600
      %v612 = vpack.c.b16 %v603, %v602
      %v613 = vpack.c.b16 %v605, %v604
      %622 = vmatprep.subr.bf16.mxu0 0
      %623 = vmatpush1.bf16.msra.mxu0 %v606
      %624 = vmatprep.subr.bf16.mxu0 0
      %625 = vmatpush1.bf16.msra.mxu0 %v607
      %626 = vmatprep.subr.bf16.mxu0 0
      %627 = vmatpush1.bf16.msra.mxu0 %v608
      %628 = vmatprep.subr.bf16.mxu0 0
      %629 = vmatpush1.bf16.msra.mxu0 %v609
      %630 = vmatprep.subr.bf16.mxu0 0
      %631 = vmatpush1.bf16.msra.mxu0 %v610
      %632 = vmatprep.subr.bf16.mxu0 0
      %633 = vmatpush1.bf16.msra.mxu0 %v611
      %634 = vmatprep.subr.bf16.mxu0 0
      %635 = vmatpush1.bf16.msra.mxu0 %v612
      %636 = vmatprep.subr.bf16.mxu0 0
      %637 = vmatpush1.bf16.msra.mxu0 %v613
      %638 = vmatprep.subr.bf16.mxu0 0
      %639 = vmatpush1.bf16.msra.mxu0 0
      %640 = vmatprep.subr.bf16.mxu0 0
      %641 = vmatpush1.bf16.msra.mxu0 0
      %642 = vmatprep.subr.bf16.mxu0 0
      %643 = vmatpush1.bf16.msra.mxu0 0
      %644 = vmatprep.subr.bf16.mxu0 0
      %645 = vmatpush1.bf16.msra.mxu0 0
      %646 = vmatprep.subr.bf16.mxu0 0
      %647 = vmatpush1.bf16.msra.mxu0 0
      %648 = vmatprep.subr.bf16.mxu0 0
      %649 = vmatpush1.bf16.msra.mxu0 0
      %650 = vmatprep.subr.bf16.mxu0 0
      %651 = vmatpush1.bf16.msra.mxu0 0
      %652 = vmatprep.subr.bf16.mxu0 0
      %653 = vmatpush1.bf16.msra.mxu0 0
      %654 = vmatprep.mubr.bf16.mxu0 0
      %655 = vmatmul.mubr.bf16.gmra.mrb[0].mxu0 %v568
      %v656 = vpop.f32.mrb[0].mxu0
      %v657 = vadd.f32 0.0, %v656
      %v658 = vpop.f32.mrb[0].mxu0
      %v659 = vpop.f32.mrb[0].mxu0
      %v660 = vadd.f32 0.0, %v659
      %v661 = vpop.f32.mrb[0].mxu0
      %662 = vmatprep.mubr.bf16.mxu0 0
      %663 = vmatmul.mubr.bf16.gmra.mrb[0].mxu0 %v569
      %v664 = vpop.f32.mrb[0].mxu0
      %v665 = vadd.f32 0.0, %v664
      %v666 = vpop.f32.mrb[0].mxu0
      %v667 = vpop.f32.mrb[0].mxu0
      %v668 = vadd.f32 0.0, %v667
      %v669 = vpop.f32.mrb[0].mxu0
      %670 = vmatprep.mubr.bf16.mxu0 0
      %671 = vmatmul.mubr.bf16.gmra.mrb[0].mxu0 %v570
      %v672 = vpop.f32.mrb[0].mxu0
      %v673 = vadd.f32 0.0, %v672
      %v674 = vpop.f32.mrb[0].mxu0
      %v675 = vpop.f32.mrb[0].mxu0
      %v676 = vadd.f32 0.0, %v675
      %v677 = vpop.f32.mrb[0].mxu0
      %678 = vdwg.mxu0
      %v679 = vadd.f32 %v534, %v657
      %v680 = vadd.f32 %v535, %v660
      %v681 = vadd.f32 %v536, %v665
      %v682 = vadd.f32 %v537, %v668
      %v683 = vadd.f32 %v538, %v673
      %v684 = vadd.f32 %v539, %v676
      %685 = vst [vmem:[#allocation8] sm:$0xff] %v679
      %686 = vst [vmem:[#allocation8 + $0x8] sm:$0xff] %v680
      %687 = vst [vmem:[#allocation8 + $0x10] sm:$0xff] %v681
      %688 = vst [vmem:[#allocation8 + $0x18] sm:$0xff] %v682
      %689 = vst [vmem:[#allocation8 + $0x20] sm:$0xff] %v683
      %690 = vst [vmem:[#allocation8 + $0x28] sm:$0xff] %v684
      %v691 = vld [vmem:[#allocation3] sm:$0xf]
      %v692 = vld [vmem:[#allocation3 + $0x4] sm:$0xf]
      %v693 = vld [vmem:[#allocation3 + $0x8] sm:$0xf]
      %v694 = vld [vmem:[#allocation3 + $0xc] sm:$0xf]
      %v695 = vld [vmem:[#allocation3 + $0x10] sm:$0xf]
      %v696 = vld [vmem:[#allocation3 + $0x14] sm:$0xf]
      %v697 = vld [vmem:[#allocation8] sm:$0xff]
      %v698 = vld [vmem:[#allocation8 + $0x8] sm:$0xff]
      %v699 = vld [vmem:[#allocation8 + $0x10] sm:$0xff]
      %v700 = vld [vmem:[#allocation8 + $0x18] sm:$0xff]
      %v701 = vld [vmem:[#allocation8 + $0x20] sm:$0xff]
      %v702 = vld [vmem:[#allocation8 + $0x28] sm:$0xff]
      %s703 = scalar_lea.vmem %s1, 64
      %v704 = vld [vmem:[%s703] sm:$0xf]
      %v705 = vld [vmem:[%s703 + $0x4] sm:$0xf]
      %v706 = vld [vmem:[%s703 + $0x8] sm:$0xf]
      %v707 = vld [vmem:[%s703 + $0xc] sm:$0xf]
      %v708 = vld [vmem:[%s703 + $0x10] sm:$0xf]
      %v709 = vld [vmem:[%s703 + $0x14] sm:$0xf]
      %v710 = vld [vmem:[%s703 + $0x18] sm:$0xf]
      %v711 = vld [vmem:[%s703 + $0x1c] sm:$0xf]
      %v712 = vld [vmem:[%s703 + $0x20] sm:$0xf]
      %v713 = vld [vmem:[%s703 + $0x24] sm:$0xf]
      %v714 = vld [vmem:[%s703 + $0x28] sm:$0xf]
      %v715 = vld [vmem:[%s703 + $0x2c] sm:$0xf]
      %v716 = vld [vmem:[%s703 + $0x30] sm:$0xf]
      %v717 = vld [vmem:[%s703 + $0x34] sm:$0xf]
      %v718 = vld [vmem:[%s703 + $0x38] sm:$0xf]
      %v719 = vld [vmem:[%s703 + $0x3c] sm:$0xf]
      %v726 = vunpack.c.l.b16 %v691
      %v727 = vunpack.c.l.b16 %v692
      %v728 = vunpack.c.l.b16 %v693
      %v729 = vunpack.c.l.b16 %v694
      %v730 = vunpack.c.l.b16 %v695
      %v731 = vunpack.c.l.b16 %v696
      %v732 = vpack.c.b16 %v727, %v726
      %v733 = vpack.c.b16 %v729, %v728
      %v734 = vpack.c.b16 %v731, %v730
      %v754 = vunpack.c.l.b16 %v704
      %v755 = vunpack.c.l.b16 %v705
      %v756 = vunpack.c.l.b16 %v706
      %v757 = vunpack.c.l.b16 %v707
      %v758 = vunpack.c.l.b16 %v708
      %v759 = vunpack.c.l.b16 %v709
      %v760 = vunpack.c.l.b16 %v710
      %v761 = vunpack.c.l.b16 %v711
      %v762 = vunpack.c.l.b16 %v712
      %v763 = vunpack.c.l.b16 %v713
      %v764 = vunpack.c.l.b16 %v714
      %v765 = vunpack.c.l.b16 %v715
      %v766 = vunpack.c.l.b16 %v716
      %v767 = vunpack.c.l.b16 %v717
      %v768 = vunpack.c.l.b16 %v718
      %v769 = vunpack.c.l.b16 %v719
      %v770 = vpack.c.b16 %v755, %v754
      %v771 = vpack.c.b16 %v757, %v756
      %v772 = vpack.c.b16 %v759, %v758
      %v773 = vpack.c.b16 %v761, %v760
      %v774 = vpack.c.b16 %v763, %v762
      %v775 = vpack.c.b16 %v765, %v764
      %v776 = vpack.c.b16 %v767, %v766
      %v777 = vpack.c.b16 %v769, %v768
      %786 = vmatprep.subr.bf16.mxu0 0
      %787 = vmatpush1.bf16.msra.mxu0 %v770
      %788 = vmatprep.subr.bf16.mxu0 0
      %789 = vmatpush1.bf16.msra.mxu0 %v771
      %790 = vmatprep.subr.bf16.mxu0 0
      %791 = vmatpush1.bf16.msra.mxu0 %v772
      %792 = vmatprep.subr.bf16.mxu0 0
      %793 = vmatpush1.bf16.msra.mxu0 %v773
      %794 = vmatprep.subr.bf16.mxu0 0
      %795 = vmatpush1.bf16.msra.mxu0 %v774
      %796 = vmatprep.subr.bf16.mxu0 0
      %797 = vmatpush1.bf16.msra.mxu0 %v775
      %798 = vmatprep.subr.bf16.mxu0 0
      %799 = vmatpush1.bf16.msra.mxu0 %v776
      %800 = vmatprep.subr.bf16.mxu0 0
      %801 = vmatpush1.bf16.msra.mxu0 %v777
      %802 = vmatprep.subr.bf16.mxu0 0
      %803 = vmatpush1.bf16.msra.mxu0 0
      %804 = vmatprep.subr.bf16.mxu0 0
      %805 = vmatpush1.bf16.msra.mxu0 0
      %806 = vmatprep.subr.bf16.mxu0 0
      %807 = vmatpush1.bf16.msra.mxu0 0
      %808 = vmatprep.subr.bf16.mxu0 0
      %809 = vmatpush1.bf16.msra.mxu0 0
      %810 = vmatprep.subr.bf16.mxu0 0
      %811 = vmatpush1.bf16.msra.mxu0 0
      %812 = vmatprep.subr.bf16.mxu0 0
      %813 = vmatpush1.bf16.msra.mxu0 0
      %814 = vmatprep.subr.bf16.mxu0 0
      %815 = vmatpush1.bf16.msra.mxu0 0
      %816 = vmatprep.subr.bf16.mxu0 0
      %817 = vmatpush1.bf16.msra.mxu0 0
      %818 = vmatprep.mubr.bf16.mxu0 0
      %819 = vmatmul.mubr.bf16.gmra.mrb[0].mxu0 %v732
      %v820 = vpop.f32.mrb[0].mxu0
      %v821 = vadd.f32 0.0, %v820
      %v822 = vpop.f32.mrb[0].mxu0
      %v823 = vpop.f32.mrb[0].mxu0
      %v824 = vadd.f32 0.0, %v823
      %v825 = vpop.f32.mrb[0].mxu0
      %826 = vmatprep.mubr.bf16.mxu0 0
      %827 = vmatmul.mubr.bf16.gmra.mrb[0].mxu0 %v733
      %v828 = vpop.f32.mrb[0].mxu0
      %v829 = vadd.f32 0.0, %v828
      %v830 = vpop.f32.mrb[0].mxu0
      %v831 = vpop.f32.mrb[0].mxu0
      %v832 = vadd.f32 0.0, %v831
      %v833 = vpop.f32.mrb[0].mxu0
      %834 = vmatprep.mubr.bf16.mxu0 0
      %835 = vmatmul.mubr.bf16.gmra.mrb[0].mxu0 %v734
      %v836 = vpop.f32.mrb[0].mxu0
      %v837 = vadd.f32 0.0, %v836
      %v838 = vpop.f32.mrb[0].mxu0
      %v839 = vpop.f32.mrb[0].mxu0
      %v840 = vadd.f32 0.0, %v839
      %v841 = vpop.f32.mrb[0].mxu0
      %842 = vdwg.mxu0
      %v843 = vadd.f32 %v697, %v821
      %v844 = vadd.f32 %v698, %v824
      %v845 = vadd.f32 %v699, %v829
      %v846 = vadd.f32 %v700, %v832
      %v847 = vadd.f32 %v701, %v837
      %v848 = vadd.f32 %v702, %v840
      %849 = vst [vmem:[#allocation8] sm:$0xff] %v843
      %850 = vst [vmem:[#allocation8 + $0x8] sm:$0xff] %v844
      %851 = vst [vmem:[#allocation8 + $0x10] sm:$0xff] %v845
      %852 = vst [vmem:[#allocation8 + $0x18] sm:$0xff] %v846
      %853 = vst [vmem:[#allocation8 + $0x20] sm:$0xff] %v847
      %854 = vst [vmem:[#allocation8 + $0x28] sm:$0xff] %v848
      %v855 = vld [vmem:[#allocation4] sm:$0xf]
      %v856 = vld [vmem:[#allocation4 + $0x4] sm:$0xf]
      %v857 = vld [vmem:[#allocation4 + $0x8] sm:$0xf]
      %v858 = vld [vmem:[#allocation4 + $0xc] sm:$0xf]
      %v859 = vld [vmem:[#allocation4 + $0x10] sm:$0xf]
      %v860 = vld [vmem:[#allocation4 + $0x14] sm:$0xf]
      %v861 = vld [vmem:[#allocation8] sm:$0xff]
      %v862 = vld [vmem:[#allocation8 + $0x8] sm:$0xff]
      %v863 = vld [vmem:[#allocation8 + $0x10] sm:$0xff]
      %v864 = vld [vmem:[#allocation8 + $0x18] sm:$0xff]
      %v865 = vld [vmem:[#allocation8 + $0x20] sm:$0xff]
      %v866 = vld [vmem:[#allocation8 + $0x28] sm:$0xff]
      %s867 = scalar_lea.vmem %s1, 128
      %v868 = vld [vmem:[%s867] sm:$0xf]
      %v869 = vld [vmem:[%s867 + $0x4] sm:$0xf]
      %v870 = vld [vmem:[%s867 + $0x8] sm:$0xf]
      %v871 = vld [vmem:[%s867 + $0xc] sm:$0xf]
      %v872 = vld [vmem:[%s867 + $0x10] sm:$0xf]
      %v873 = vld [vmem:[%s867 + $0x14] sm:$0xf]
      %v874 = vld [vmem:[%s867 + $0x18] sm:$0xf]
      %v875 = vld [vmem:[%s867 + $0x1c] sm:$0xf]
      %v876 = vld [vmem:[%s867 + $0x20] sm:$0xf]
      %v877 = vld [vmem:[%s867 + $0x24] sm:$0xf]
      %v878 = vld [vmem:[%s867 + $0x28] sm:$0xf]
      %v879 = vld [vmem:[%s867 + $0x2c] sm:$0xf]
      %v880 = vld [vmem:[%s867 + $0x30] sm:$0xf]
      %v881 = vld [vmem:[%s867 + $0x34] sm:$0xf]
      %v882 = vld [vmem:[%s867 + $0x38] sm:$0xf]
      %v883 = vld [vmem:[%s867 + $0x3c] sm:$0xf]
      %v890 = vunpack.c.l.b16 %v855
      %v891 = vunpack.c.l.b16 %v856
      %v892 = vunpack.c.l.b16 %v857
      %v893 = vunpack.c.l.b16 %v858
      %v894 = vunpack.c.l.b16 %v859
      %v895 = vunpack.c.l.b16 %v860
      %v896 = vpack.c.b16 %v891, %v890
      %v897 = vpack.c.b16 %v893, %v892
      %v898 = vpack.c.b16 %v895, %v894
      %v918 = vunpack.c.l.b16 %v868
      %v919 = vunpack.c.l.b16 %v869
      %v920 = vunpack.c.l.b16 %v870
      %v921 = vunpack.c.l.b16 %v871
      %v922 = vunpack.c.l.b16 %v872
      %v923 = vunpack.c.l.b16 %v873
      %v924 = vunpack.c.l.b16 %v874
      %v925 = vunpack.c.l.b16 %v875
      %v926 = vunpack.c.l.b16 %v876
      %v927 = vunpack.c.l.b16 %v877
      %v928 = vunpack.c.l.b16 %v878
      %v929 = vunpack.c.l.b16 %v879
      %v930 = vunpack.c.l.b16 %v880
      %v931 = vunpack.c.l.b16 %v881
      %v932 = vunpack.c.l.b16 %v882
      %v933 = vunpack.c.l.b16 %v883
      %v934 = vpack.c.b16 %v919, %v918
      %v935 = vpack.c.b16 %v921, %v920
      %v936 = vpack.c.b16 %v923, %v922
      %v937 = vpack.c.b16 %v925, %v924
      %v938 = vpack.c.b16 %v927, %v926
      %v939 = vpack.c.b16 %v929, %v928
      %v940 = vpack.c.b16 %v931, %v930
      %v941 = vpack.c.b16 %v933, %v932
      %950 = vmatprep.subr.bf16.mxu0 0
      %951 = vmatpush1.bf16.msra.mxu0 %v934
      %952 = vmatprep.subr.bf16.mxu0 0
      %953 = vmatpush1.bf16.msra.mxu0 %v935
      %954 = vmatprep.subr.bf16.mxu0 0
      %955 = vmatpush1.bf16.msra.mxu0 %v936
      %956 = vmatprep.subr.bf16.mxu0 0
      %957 = vmatpush1.bf16.msra.mxu0 %v937
      %958 = vmatprep.subr.bf16.mxu0 0
      %959 = vmatpush1.bf16.msra.mxu0 %v938
      %960 = vmatprep.subr.bf16.mxu0 0
      %961 = vmatpush1.bf16.msra.mxu0 %v939
      %962 = vmatprep.subr.bf16.mxu0 0
      %963 = vmatpush1.bf16.msra.mxu0 %v940
      %964 = vmatprep.subr.bf16.mxu0 0
      %965 = vmatpush1.bf16.msra.mxu0 %v941
      %966 = vmatprep.subr.bf16.mxu0 0
      %967 = vmatpush1.bf16.msra.mxu0 0
      %968 = vmatprep.subr.bf16.mxu0 0
      %969 = vmatpush1.bf16.msra.mxu0 0
      %970 = vmatprep.subr.bf16.mxu0 0
      %971 = vmatpush1.bf16.msra.mxu0 0
      %972 = vmatprep.subr.bf16.mxu0 0
      %973 = vmatpush1.bf16.msra.mxu0 0
      %974 = vmatprep.subr.bf16.mxu0 0
      %975 = vmatpush1.bf16.msra.mxu0 0
      %976 = vmatprep.subr.bf16.mxu0 0
      %977 = vmatpush1.bf16.msra.mxu0 0
      %978 = vmatprep.subr.bf16.mxu0 0
      %979 = vmatpush1.bf16.msra.mxu0 0
      %980 = vmatprep.subr.bf16.mxu0 0
      %981 = vmatpush1.bf16.msra.mxu0 0
      %982 = vmatprep.mubr.bf16.mxu0 0
      %983 = vmatmul.mubr.bf16.gmra.mrb[0].mxu0 %v896
      %v984 = vpop.f32.mrb[0].mxu0
      %v985 = vadd.f32 0.0, %v984
      %v986 = vpop.f32.mrb[0].mxu0
      %v987 = vpop.f32.mrb[0].mxu0
      %v988 = vadd.f32 0.0, %v987
      %v989 = vpop.f32.mrb[0].mxu0
      %990 = vmatprep.mubr.bf16.mxu0 0
      %991 = vmatmul.mubr.bf16.gmra.mrb[0].mxu0 %v897
      %v992 = vpop.f32.mrb[0].mxu0
      %v993 = vadd.f32 0.0, %v992
      %v994 = vpop.f32.mrb[0].mxu0
      %v995 = vpop.f32.mrb[0].mxu0
      %v996 = vadd.f32 0.0, %v995
      %v997 = vpop.f32.mrb[0].mxu0
      %998 = vmatprep.mubr.bf16.mxu0 0
      %999 = vmatmul.mubr.bf16.gmra.mrb[0].mxu0 %v898
      %v1000 = vpop.f32.mrb[0].mxu0
      %v1001 = vadd.f32 0.0, %v1000
      %v1002 = vpop.f32.mrb[0].mxu0
      %v1003 = vpop.f32.mrb[0].mxu0
      %v1004 = vadd.f32 0.0, %v1003
      %v1005 = vpop.f32.mrb[0].mxu0
      %1006 = vdwg.mxu0
      %v1007 = vadd.f32 %v861, %v985
      %v1008 = vadd.f32 %v862, %v988
      %v1009 = vadd.f32 %v863, %v993
      %v1010 = vadd.f32 %v864, %v996
      %v1011 = vadd.f32 %v865, %v1001
      %v1012 = vadd.f32 %v866, %v1004
      %1013 = vst [vmem:[#allocation8] sm:$0xff] %v1007
      %1014 = vst [vmem:[#allocation8 + $0x8] sm:$0xff] %v1008
      %1015 = vst [vmem:[#allocation8 + $0x10] sm:$0xff] %v1009
      %1016 = vst [vmem:[#allocation8 + $0x18] sm:$0xff] %v1010
      %1017 = vst [vmem:[#allocation8 + $0x20] sm:$0xff] %v1011
      %1018 = vst [vmem:[#allocation8 + $0x28] sm:$0xff] %v1012
      %s1019 = scalar_lea.vmem [#allocation2], 4
      %v1020 = vld [vmem:[%s1019] sm:$0xf]
      %v1021 = vld [vmem:[%s1019 + $0x4] sm:$0xf]
      %v1022 = vld [vmem:[%s1019 + $0x8] sm:$0xf]
      %v1023 = vld [vmem:[%s1019 + $0xc] sm:$0xf]
      %v1024 = vld [vmem:[%s1019 + $0x10] sm:$0xf]
      %v1025 = vld [vmem:[%s1019 + $0x14] sm:$0xf]
      %v1026 = vld [vmem:[#allocation8] sm:$0xff]
      %v1027 = vld [vmem:[#allocation8 + $0x8] sm:$0xff]
      %v1028 = vld [vmem:[#allocation8 + $0x10] sm:$0xff]
      %v1029 = vld [vmem:[#allocation8 + $0x18] sm:$0xff]
      %v1030 = vld [vmem:[#allocation8 + $0x20] sm:$0xff]
      %v1031 = vld [vmem:[#allocation8 + $0x28] sm:$0xff]
      %s1032 = scalar_lea.vmem %s1, 192
      %v1033 = vld [vmem:[%s1032] sm:$0xf]
      %v1034 = vld [vmem:[%s1032 + $0x4] sm:$0xf]
      %v1035 = vld [vmem:[%s1032 + $0x8] sm:$0xf]
      %v1036 = vld [vmem:[%s1032 + $0xc] sm:$0xf]
      %v1037 = vld [vmem:[%s1032 + $0x10] sm:$0xf]
      %v1038 = vld [vmem:[%s1032 + $0x14] sm:$0xf]
      %v1039 = vld [vmem:[%s1032 + $0x18] sm:$0xf]
      %v1040 = vld [vmem:[%s1032 + $0x1c] sm:$0xf]
      %v1041 = vld [vmem:[%s1032 + $0x20] sm:$0xf]
      %v1042 = vld [vmem:[%s1032 + $0x24] sm:$0xf]
      %v1043 = vld [vmem:[%s1032 + $0x28] sm:$0xf]
      %v1044 = vld [vmem:[%s1032 + $0x2c] sm:$0xf]
      %v1045 = vld [vmem:[%s1032 + $0x30] sm:$0xf]
      %v1046 = vld [vmem:[%s1032 + $0x34] sm:$0xf]
      %v1047 = vld [vmem:[%s1032 + $0x38] sm:$0xf]
      %v1048 = vld [vmem:[%s1032 + $0x3c] sm:$0xf]
      %v1055 = vunpack.c.l.b16 %v1020
      %v1056 = vunpack.c.l.b16 %v1021
      %v1057 = vunpack.c.l.b16 %v1022
      %v1058 = vunpack.c.l.b16 %v1023
      %v1059 = vunpack.c.l.b16 %v1024
      %v1060 = vunpack.c.l.b16 %v1025
      %v1061 = vpack.c.b16 %v1056, %v1055
      %v1062 = vpack.c.b16 %v1058, %v1057
      %v1063 = vpack.c.b16 %v1060, %v1059
      %v1083 = vunpack.c.l.b16 %v1033
      %v1084 = vunpack.c.l.b16 %v1034
      %v1085 = vunpack.c.l.b16 %v1035
      %v1086 = vunpack.c.l.b16 %v1036
      %v1087 = vunpack.c.l.b16 %v1037
      %v1088 = vunpack.c.l.b16 %v1038
      %v1089 = vunpack.c.l.b16 %v1039
      %v1090 = vunpack.c.l.b16 %v1040
      %v1091 = vunpack.c.l.b16 %v1041
      %v1092 = vunpack.c.l.b16 %v1042
      %v1093 = vunpack.c.l.b16 %v1043
      %v1094 = vunpack.c.l.b16 %v1044
      %v1095 = vunpack.c.l.b16 %v1045
      %v1096 = vunpack.c.l.b16 %v1046
      %v1097 = vunpack.c.l.b16 %v1047
      %v1098 = vunpack.c.l.b16 %v1048
      %v1099 = vpack.c.b16 %v1084, %v1083
      %v1100 = vpack.c.b16 %v1086, %v1085
      %v1101 = vpack.c.b16 %v1088, %v1087
      %v1102 = vpack.c.b16 %v1090, %v1089
      %v1103 = vpack.c.b16 %v1092, %v1091
      %v1104 = vpack.c.b16 %v1094, %v1093
      %v1105 = vpack.c.b16 %v1096, %v1095
      %v1106 = vpack.c.b16 %v1098, %v1097
      %1115 = vmatprep.subr.bf16.mxu0 0
      %1116 = vmatpush1.bf16.msra.mxu0 %v1099
      %1117 = vmatprep.subr.bf16.mxu0 0
      %1118 = vmatpush1.bf16.msra.mxu0 %v1100
      %1119 = vmatprep.subr.bf16.mxu0 0
      %1120 = vmatpush1.bf16.msra.mxu0 %v1101
      %1121 = vmatprep.subr.bf16.mxu0 0
      %1122 = vmatpush1.bf16.msra.mxu0 %v1102
      %1123 = vmatprep.subr.bf16.mxu0 0
      %1124 = vmatpush1.bf16.msra.mxu0 %v1103
      %1125 = vmatprep.subr.bf16.mxu0 0
      %1126 = vmatpush1.bf16.msra.mxu0 %v1104
      %1127 = vmatprep.subr.bf16.mxu0 0
      %1128 = vmatpush1.bf16.msra.mxu0 %v1105
      %1129 = vmatprep.subr.bf16.mxu0 0
      %1130 = vmatpush1.bf16.msra.mxu0 %v1106
      %1131 = vmatprep.subr.bf16.mxu0 0
      %1132 = vmatpush1.bf16.msra.mxu0 0
      %1133 = vmatprep.subr.bf16.mxu0 0
      %1134 = vmatpush1.bf16.msra.mxu0 0
      %1135 = vmatprep.subr.bf16.mxu0 0
      %1136 = vmatpush1.bf16.msra.mxu0 0
      %1137 = vmatprep.subr.bf16.mxu0 0
      %1138 = vmatpush1.bf16.msra.mxu0 0
      %1139 = vmatprep.subr.bf16.mxu0 0
      %1140 = vmatpush1.bf16.msra.mxu0 0
      %1141 = vmatprep.subr.bf16.mxu0 0
      %1142 = vmatpush1.bf16.msra.mxu0 0
      %1143 = vmatprep.subr.bf16.mxu0 0
      %1144 = vmatpush1.bf16.msra.mxu0 0
      %1145 = vmatprep.subr.bf16.mxu0 0
      %1146 = vmatpush1.bf16.msra.mxu0 0
      %1147 = vmatprep.mubr.bf16.mxu0 0
      %1148 = vmatmul.mubr.bf16.gmra.mrb[0].mxu0 %v1061
      %v1149 = vpop.f32.mrb[0].mxu0
      %v1150 = vadd.f32 0.0, %v1149
      %v1151 = vpop.f32.mrb[0].mxu0
      %v1152 = vpop.f32.mrb[0].mxu0
      %v1153 = vadd.f32 0.0, %v1152
      %v1154 = vpop.f32.mrb[0].mxu0
      %1155 = vmatprep.mubr.bf16.mxu0 0
      %1156 = vmatmul.mubr.bf16.gmra.mrb[0].mxu0 %v1062
      %v1157 = vpop.f32.mrb[0].mxu0
      %v1158 = vadd.f32 0.0, %v1157
      %v1159 = vpop.f32.mrb[0].mxu0
      %v1160 = vpop.f32.mrb[0].mxu0
      %v1161 = vadd.f32 0.0, %v1160
      %v1162 = vpop.f32.mrb[0].mxu0
      %1163 = vmatprep.mubr.bf16.mxu0 0
      %1164 = vmatmul.mubr.bf16.gmra.mrb[0].mxu0 %v1063
      %v1165 = vpop.f32.mrb[0].mxu0
      %v1166 = vadd.f32 0.0, %v1165
      %v1167 = vpop.f32.mrb[0].mxu0
      %v1168 = vpop.f32.mrb[0].mxu0
      %v1169 = vadd.f32 0.0, %v1168
      %v1170 = vpop.f32.mrb[0].mxu0
      %1171 = vdwg.mxu0
      %v1172 = vadd.f32 %v1026, %v1150
      %v1173 = vadd.f32 %v1027, %v1153
      %v1174 = vadd.f32 %v1028, %v1158
      %v1175 = vadd.f32 %v1029, %v1161
      %v1176 = vadd.f32 %v1030, %v1166
      %v1177 = vadd.f32 %v1031, %v1169
      %1178 = vst [vmem:[#allocation8] sm:$0xff] %v1172
      %1179 = vst [vmem:[#allocation8 + $0x8] sm:$0xff] %v1173
      %1180 = vst [vmem:[#allocation8 + $0x10] sm:$0xff] %v1174
      %1181 = vst [vmem:[#allocation8 + $0x18] sm:$0xff] %v1175
      %1182 = vst [vmem:[#allocation8 + $0x20] sm:$0xff] %v1176
      %1183 = vst [vmem:[#allocation8 + $0x28] sm:$0xff] %v1177
      %s1184 = scalar_lea.vmem [#allocation3], 4
      %v1185 = vld [vmem:[%s1184] sm:$0xf]
      %v1186 = vld [vmem:[%s1184 + $0x4] sm:$0xf]
      %v1187 = vld [vmem:[%s1184 + $0x8] sm:$0xf]
      %v1188 = vld [vmem:[%s1184 + $0xc] sm:$0xf]
      %v1189 = vld [vmem:[%s1184 + $0x10] sm:$0xf]
      %v1190 = vld [vmem:[%s1184 + $0x14] sm:$0xf]
      %v1191 = vld [vmem:[#allocation8] sm:$0xff]
      %v1192 = vld [vmem:[#allocation8 + $0x8] sm:$0xff]
      %v1193 = vld [vmem:[#allocation8 + $0x10] sm:$0xff]
      %v1194 = vld [vmem:[#allocation8 + $0x18] sm:$0xff]
      %v1195 = vld [vmem:[#allocation8 + $0x20] sm:$0xff]
      %v1196 = vld [vmem:[#allocation8 + $0x28] sm:$0xff]
      %s1197 = scalar_lea.vmem %s1, 256
      %v1198 = vld [vmem:[%s1197] sm:$0xf]
      %v1199 = vld [vmem:[%s1197 + $0x4] sm:$0xf]
      %v1200 = vld [vmem:[%s1197 + $0x8] sm:$0xf]
      %v1201 = vld [vmem:[%s1197 + $0xc] sm:$0xf]
      %v1202 = vld [vmem:[%s1197 + $0x10] sm:$0xf]
      %v1203 = vld [vmem:[%s1197 + $0x14] sm:$0xf]
      %v1204 = vld [vmem:[%s1197 + $0x18] sm:$0xf]
      %v1205 = vld [vmem:[%s1197 + $0x1c] sm:$0xf]
      %v1206 = vld [vmem:[%s1197 + $0x20] sm:$0xf]
      %v1207 = vld [vmem:[%s1197 + $0x24] sm:$0xf]
      %v1208 = vld [vmem:[%s1197 + $0x28] sm:$0xf]
      %v1209 = vld [vmem:[%s1197 + $0x2c] sm:$0xf]
      %v1210 = vld [vmem:[%s1197 + $0x30] sm:$0xf]
      %v1211 = vld [vmem:[%s1197 + $0x34] sm:$0xf]
      %v1212 = vld [vmem:[%s1197 + $0x38] sm:$0xf]
      %v1213 = vld [vmem:[%s1197 + $0x3c] sm:$0xf]
      %v1220 = vunpack.c.l.b16 %v1185
      %v1221 = vunpack.c.l.b16 %v1186
      %v1222 = vunpack.c.l.b16 %v1187
      %v1223 = vunpack.c.l.b16 %v1188
      %v1224 = vunpack.c.l.b16 %v1189
      %v1225 = vunpack.c.l.b16 %v1190
      %v1226 = vpack.c.b16 %v1221, %v1220
      %v1227 = vpack.c.b16 %v1223, %v1222
      %v1228 = vpack.c.b16 %v1225, %v1224
      %v1248 = vunpack.c.l.b16 %v1198
      %v1249 = vunpack.c.l.b16 %v1199
      %v1250 = vunpack.c.l.b16 %v1200
      %v1251 = vunpack.c.l.b16 %v1201
      %v1252 = vunpack.c.l.b16 %v1202
      %v1253 = vunpack.c.l.b16 %v1203
      %v1254 = vunpack.c.l.b16 %v1204
      %v1255 = vunpack.c.l.b16 %v1205
      %v1256 = vunpack.c.l.b16 %v1206
      %v1257 = vunpack.c.l.b16 %v1207
      %v1258 = vunpack.c.l.b16 %v1208
      %v1259 = vunpack.c.l.b16 %v1209
      %v1260 = vunpack.c.l.b16 %v1210
      %v1261 = vunpack.c.l.b16 %v1211
      %v1262 = vunpack.c.l.b16 %v1212
      %v1263 = vunpack.c.l.b16 %v1213
      %v1264 = vpack.c.b16 %v1249, %v1248
      %v1265 = vpack.c.b16 %v1251, %v1250
      %v1266 = vpack.c.b16 %v1253, %v1252
      %v1267 = vpack.c.b16 %v1255, %v1254
      %v1268 = vpack.c.b16 %v1257, %v1256
      %v1269 = vpack.c.b16 %v1259, %v1258
      %v1270 = vpack.c.b16 %v1261, %v1260
      %v1271 = vpack.c.b16 %v1263, %v1262
      %1280 = vmatprep.subr.bf16.mxu0 0
      %1281 = vmatpush1.bf16.msra.mxu0 %v1264
      %1282 = vmatprep.subr.bf16.mxu0 0
      %1283 = vmatpush1.bf16.msra.mxu0 %v1265
      %1284 = vmatprep.subr.bf16.mxu0 0
      %1285 = vmatpush1.bf16.msra.mxu0 %v1266
      %1286 = vmatprep.subr.bf16.mxu0 0
      %1287 = vmatpush1.bf16.msra.mxu0 %v1267
      %1288 = vmatprep.subr.bf16.mxu0 0
      %1289 = vmatpush1.bf16.msra.mxu0 %v1268
      %1290 = vmatprep.subr.bf16.mxu0 0
      %1291 = vmatpush1.bf16.msra.mxu0 %v1269
      %1292 = vmatprep.subr.bf16.mxu0 0
      %1293 = vmatpush1.bf16.msra.mxu0 %v1270
      %1294 = vmatprep.subr.bf16.mxu0 0
      %1295 = vmatpush1.bf16.msra.mxu0 %v1271
      %1296 = vmatprep.subr.bf16.mxu0 0
      %1297 = vmatpush1.bf16.msra.mxu0 0
      %1298 = vmatprep.subr.bf16.mxu0 0
      %1299 = vmatpush1.bf16.msra.mxu0 0
      %1300 = vmatprep.subr.bf16.mxu0 0
      %1301 = vmatpush1.bf16.msra.mxu0 0
      %1302 = vmatprep.subr.bf16.mxu0 0
      %1303 = vmatpush1.bf16.msra.mxu0 0
      %1304 = vmatprep.subr.bf16.mxu0 0
      %1305 = vmatpush1.bf16.msra.mxu0 0
      %1306 = vmatprep.subr.bf16.mxu0 0
      %1307 = vmatpush1.bf16.msra.mxu0 0
      %1308 = vmatprep.subr.bf16.mxu0 0
      %1309 = vmatpush1.bf16.msra.mxu0 0
      %1310 = vmatprep.subr.bf16.mxu0 0
      %1311 = vmatpush1.bf16.msra.mxu0 0
      %1312 = vmatprep.mubr.bf16.mxu0 0
      %1313 = vmatmul.mubr.bf16.gmra.mrb[0].mxu0 %v1226
      %v1314 = vpop.f32.mrb[0].mxu0
      %v1315 = vadd.f32 0.0, %v1314
      %v1316 = vpop.f32.mrb[0].mxu0
      %v1317 = vpop.f32.mrb[0].mxu0
      %v1318 = vadd.f32 0.0, %v1317
      %v1319 = vpop.f32.mrb[0].mxu0
      %1320 = vmatprep.mubr.bf16.mxu0 0
      %1321 = vmatmul.mubr.bf16.gmra.mrb[0].mxu0 %v1227
      %v1322 = vpop.f32.mrb[0].mxu0
      %v1323 = vadd.f32 0.0, %v1322
      %v1324 = vpop.f32.mrb[0].mxu0
      %v1325 = vpop.f32.mrb[0].mxu0
      %v1326 = vadd.f32 0.0, %v1325
      %v1327 = vpop.f32.mrb[0].mxu0
      %1328 = vmatprep.mubr.bf16.mxu0 0
      %1329 = vmatmul.mubr.bf16.gmra.mrb[0].mxu0 %v1228
      %v1330 = vpop.f32.mrb[0].mxu0
      %v1331 = vadd.f32 0.0, %v1330
      %v1332 = vpop.f32.mrb[0].mxu0
      %v1333 = vpop.f32.mrb[0].mxu0
      %v1334 = vadd.f32 0.0, %v1333
      %v1335 = vpop.f32.mrb[0].mxu0
      %1336 = vdwg.mxu0
      %v1337 = vadd.f32 %v1191, %v1315
      %v1338 = vadd.f32 %v1192, %v1318
      %v1339 = vadd.f32 %v1193, %v1323
      %v1340 = vadd.f32 %v1194, %v1326
      %v1341 = vadd.f32 %v1195, %v1331
      %v1342 = vadd.f32 %v1196, %v1334
      %1343 = vst [vmem:[#allocation8] sm:$0xff] %v1337
      %1344 = vst [vmem:[#allocation8 + $0x8] sm:$0xff] %v1338
      %1345 = vst [vmem:[#allocation8 + $0x10] sm:$0xff] %v1339
      %1346 = vst [vmem:[#allocation8 + $0x18] sm:$0xff] %v1340
      %1347 = vst [vmem:[#allocation8 + $0x20] sm:$0xff] %v1341
      %1348 = vst [vmem:[#allocation8 + $0x28] sm:$0xff] %v1342
      %s1349 = scalar_lea.vmem [#allocation4], 4
      %v1350 = vld [vmem:[%s1349] sm:$0xf]
      %v1351 = vld [vmem:[%s1349 + $0x4] sm:$0xf]
      %v1352 = vld [vmem:[%s1349 + $0x8] sm:$0xf]
      %v1353 = vld [vmem:[%s1349 + $0xc] sm:$0xf]
      %v1354 = vld [vmem:[%s1349 + $0x10] sm:$0xf]
      %v1355 = vld [vmem:[%s1349 + $0x14] sm:$0xf]
      %v1356 = vld [vmem:[#allocation8] sm:$0xff]
      %v1357 = vld [vmem:[#allocation8 + $0x8] sm:$0xff]
      %v1358 = vld [vmem:[#allocation8 + $0x10] sm:$0xff]
      %v1359 = vld [vmem:[#allocation8 + $0x18] sm:$0xff]
      %v1360 = vld [vmem:[#allocation8 + $0x20] sm:$0xff]
      %v1361 = vld [vmem:[#allocation8 + $0x28] sm:$0xff]
      %s1362 = scalar_lea.vmem %s1, 320
      %v1363 = vld [vmem:[%s1362] sm:$0xf]
      %v1364 = vld [vmem:[%s1362 + $0x4] sm:$0xf]
      %v1365 = vld [vmem:[%s1362 + $0x8] sm:$0xf]
      %v1366 = vld [vmem:[%s1362 + $0xc] sm:$0xf]
      %v1367 = vld [vmem:[%s1362 + $0x10] sm:$0xf]
      %v1368 = vld [vmem:[%s1362 + $0x14] sm:$0xf]
      %v1369 = vld [vmem:[%s1362 + $0x18] sm:$0xf]
      %v1370 = vld [vmem:[%s1362 + $0x1c] sm:$0xf]
      %v1371 = vld [vmem:[%s1362 + $0x20] sm:$0xf]
      %v1372 = vld [vmem:[%s1362 + $0x24] sm:$0xf]
      %v1373 = vld [vmem:[%s1362 + $0x28] sm:$0xf]
      %v1374 = vld [vmem:[%s1362 + $0x2c] sm:$0xf]
      %v1375 = vld [vmem:[%s1362 + $0x30] sm:$0xf]
      %v1376 = vld [vmem:[%s1362 + $0x34] sm:$0xf]
      %v1377 = vld [vmem:[%s1362 + $0x38] sm:$0xf]
      %v1378 = vld [vmem:[%s1362 + $0x3c] sm:$0xf]
      %v1385 = vunpack.c.l.b16 %v1350
      %v1386 = vunpack.c.l.b16 %v1351
      %v1387 = vunpack.c.l.b16 %v1352
      %v1388 = vunpack.c.l.b16 %v1353
      %v1389 = vunpack.c.l.b16 %v1354
      %v1390 = vunpack.c.l.b16 %v1355
      %v1391 = vpack.c.b16 %v1386, %v1385
      %v1392 = vpack.c.b16 %v1388, %v1387
      %v1393 = vpack.c.b16 %v1390, %v1389
      %v1413 = vunpack.c.l.b16 %v1363
      %v1414 = vunpack.c.l.b16 %v1364
      %v1415 = vunpack.c.l.b16 %v1365
      %v1416 = vunpack.c.l.b16 %v1366
      %v1417 = vunpack.c.l.b16 %v1367
      %v1418 = vunpack.c.l.b16 %v1368
      %v1419 = vunpack.c.l.b16 %v1369
      %v1420 = vunpack.c.l.b16 %v1370
      %v1421 = vunpack.c.l.b16 %v1371
      %v1422 = vunpack.c.l.b16 %v1372
      %v1423 = vunpack.c.l.b16 %v1373
      %v1424 = vunpack.c.l.b16 %v1374
      %v1425 = vunpack.c.l.b16 %v1375
      %v1426 = vunpack.c.l.b16 %v1376
      %v1427 = vunpack.c.l.b16 %v1377
      %v1428 = vunpack.c.l.b16 %v1378
      %v1429 = vpack.c.b16 %v1414, %v1413
      %v1430 = vpack.c.b16 %v1416, %v1415
      %v1431 = vpack.c.b16 %v1418, %v1417
      %v1432 = vpack.c.b16 %v1420, %v1419
      %v1433 = vpack.c.b16 %v1422, %v1421
      %v1434 = vpack.c.b16 %v1424, %v1423
      %v1435 = vpack.c.b16 %v1426, %v1425
      %v1436 = vpack.c.b16 %v1428, %v1427
      %1445 = vmatprep.subr.bf16.mxu0 0
      %1446 = vmatpush1.bf16.msra.mxu0 %v1429
      %1447 = vmatprep.subr.bf16.mxu0 0
      %1448 = vmatpush1.bf16.msra.mxu0 %v1430
      %1449 = vmatprep.subr.bf16.mxu0 0
      %1450 = vmatpush1.bf16.msra.mxu0 %v1431
      %1451 = vmatprep.subr.bf16.mxu0 0
      %1452 = vmatpush1.bf16.msra.mxu0 %v1432
      %1453 = vmatprep.subr.bf16.mxu0 0
      %1454 = vmatpush1.bf16.msra.mxu0 %v1433
      %1455 = vmatprep.subr.bf16.mxu0 0
      %1456 = vmatpush1.bf16.msra.mxu0 %v1434
      %1457 = vmatprep.subr.bf16.mxu0 0
      %1458 = vmatpush1.bf16.msra.mxu0 %v1435
      %1459 = vmatprep.subr.bf16.mxu0 0
      %1460 = vmatpush1.bf16.msra.mxu0 %v1436
      %1461 = vmatprep.subr.bf16.mxu0 0
      %1462 = vmatpush1.bf16.msra.mxu0 0
      %1463 = vmatprep.subr.bf16.mxu0 0
      %1464 = vmatpush1.bf16.msra.mxu0 0
      %1465 = vmatprep.subr.bf16.mxu0 0
      %1466 = vmatpush1.bf16.msra.mxu0 0
      %1467 = vmatprep.subr.bf16.mxu0 0
      %1468 = vmatpush1.bf16.msra.mxu0 0
      %1469 = vmatprep.subr.bf16.mxu0 0
      %1470 = vmatpush1.bf16.msra.mxu0 0
      %1471 = vmatprep.subr.bf16.mxu0 0
      %1472 = vmatpush1.bf16.msra.mxu0 0
      %1473 = vmatprep.subr.bf16.mxu0 0
      %1474 = vmatpush1.bf16.msra.mxu0 0
      %1475 = vmatprep.subr.bf16.mxu0 0
      %1476 = vmatpush1.bf16.msra.mxu0 0
      %1477 = vmatprep.mubr.bf16.mxu0 0
      %1478 = vmatmul.mubr.bf16.gmra.mrb[0].mxu0 %v1391
      %v1479 = vpop.f32.mrb[0].mxu0
      %v1480 = vadd.f32 0.0, %v1479
      %v1481 = vpop.f32.mrb[0].mxu0
      %v1482 = vpop.f32.mrb[0].mxu0
      %v1483 = vadd.f32 0.0, %v1482
      %v1484 = vpop.f32.mrb[0].mxu0
      %1485 = vmatprep.mubr.bf16.mxu0 0
      %1486 = vmatmul.mubr.bf16.gmra.mrb[0].mxu0 %v1392
      %v1487 = vpop.f32.mrb[0].mxu0
      %v1488 = vadd.f32 0.0, %v1487
      %v1489 = vpop.f32.mrb[0].mxu0
      %v1490 = vpop.f32.mrb[0].mxu0
      %v1491 = vadd.f32 0.0, %v1490
      %v1492 = vpop.f32.mrb[0].mxu0
      %1493 = vmatprep.mubr.bf16.mxu0 0
      %1494 = vmatmul.mubr.bf16.gmra.mrb[0].mxu0 %v1393
      %v1495 = vpop.f32.mrb[0].mxu0
      %v1496 = vadd.f32 0.0, %v1495
      %v1497 = vpop.f32.mrb[0].mxu0
      %v1498 = vpop.f32.mrb[0].mxu0
      %v1499 = vadd.f32 0.0, %v1498
      %v1500 = vpop.f32.mrb[0].mxu0
      %1501 = vdwg.mxu0
      %v1502 = vadd.f32 %v1356, %v1480
      %v1503 = vadd.f32 %v1357, %v1483
      %v1504 = vadd.f32 %v1358, %v1488
      %v1505 = vadd.f32 %v1359, %v1491
      %v1506 = vadd.f32 %v1360, %v1496
      %v1507 = vadd.f32 %v1361, %v1499
      %1508 = vst [vmem:[#allocation8] sm:$0xff] %v1502
      %1509 = vst [vmem:[#allocation8 + $0x8] sm:$0xff] %v1503
      %1510 = vst [vmem:[#allocation8 + $0x10] sm:$0xff] %v1504
      %1511 = vst [vmem:[#allocation8 + $0x18] sm:$0xff] %v1505
      %1512 = vst [vmem:[#allocation8 + $0x20] sm:$0xff] %v1506
      %1513 = vst [vmem:[#allocation8 + $0x28] sm:$0xff] %v1507
      %v1514 = vld [vmem:[%s293] sm:$0xf]
      %v1515 = vld [vmem:[%s293 + $0x4] sm:$0xf]
      %v1516 = vld [vmem:[%s293 + $0x8] sm:$0xf]
      %v1517 = vld [vmem:[%s293 + $0xc] sm:$0xf]
      %v1518 = vld [vmem:[%s293 + $0x10] sm:$0xf]
      %v1519 = vld [vmem:[%s293 + $0x14] sm:$0xf]
      %v1520 = vld [vmem:[#allocation8] sm:$0xff]
      %v1521 = vld [vmem:[#allocation8 + $0x8] sm:$0xff]
      %v1522 = vld [vmem:[#allocation8 + $0x10] sm:$0xff]
      %v1523 = vld [vmem:[#allocation8 + $0x18] sm:$0xff]
      %v1524 = vld [vmem:[#allocation8 + $0x20] sm:$0xff]
      %v1525 = vld [vmem:[#allocation8 + $0x28] sm:$0xff]
      %s1526 = scalar_lea.vmem %s1, 384
      %v1527 = vld [vmem:[%s1526] sm:$0xf]
      %v1528 = vld [vmem:[%s1526 + $0x4] sm:$0xf]
      %v1529 = vld [vmem:[%s1526 + $0x8] sm:$0xf]
      %v1530 = vld [vmem:[%s1526 + $0xc] sm:$0xf]
      %v1531 = vld [vmem:[%s1526 + $0x10] sm:$0xf]
      %v1532 = vld [vmem:[%s1526 + $0x14] sm:$0xf]
      %v1533 = vld [vmem:[%s1526 + $0x18] sm:$0xf]
      %v1534 = vld [vmem:[%s1526 + $0x1c] sm:$0xf]
      %v1535 = vld [vmem:[%s1526 + $0x20] sm:$0xf]
      %v1536 = vld [vmem:[%s1526 + $0x24] sm:$0xf]
      %v1537 = vld [vmem:[%s1526 + $0x28] sm:$0xf]
      %v1538 = vld [vmem:[%s1526 + $0x2c] sm:$0xf]
      %v1539 = vld [vmem:[%s1526 + $0x30] sm:$0xf]
      %v1540 = vld [vmem:[%s1526 + $0x34] sm:$0xf]
      %v1541 = vld [vmem:[%s1526 + $0x38] sm:$0xf]
      %v1542 = vld [vmem:[%s1526 + $0x3c] sm:$0xf]
      %v1549 = vunpack.c.l.b16 %v1514
      %v1550 = vunpack.c.l.b16 %v1515
      %v1551 = vunpack.c.l.b16 %v1516
      %v1552 = vunpack.c.l.b16 %v1517
      %v1553 = vunpack.c.l.b16 %v1518
      %v1554 = vunpack.c.l.b16 %v1519
      %v1555 = vpack.c.b16 %v1550, %v1549
      %v1556 = vpack.c.b16 %v1552, %v1551
      %v1557 = vpack.c.b16 %v1554, %v1553
      %v1577 = vunpack.c.l.b16 %v1527
      %v1578 = vunpack.c.l.b16 %v1528
      %v1579 = vunpack.c.l.b16 %v1529
      %v1580 = vunpack.c.l.b16 %v1530
      %v1581 = vunpack.c.l.b16 %v1531
      %v1582 = vunpack.c.l.b16 %v1532
      %v1583 = vunpack.c.l.b16 %v1533
      %v1584 = vunpack.c.l.b16 %v1534
      %v1585 = vunpack.c.l.b16 %v1535
      %v1586 = vunpack.c.l.b16 %v1536
      %v1587 = vunpack.c.l.b16 %v1537
      %v1588 = vunpack.c.l.b16 %v1538
      %v1589 = vunpack.c.l.b16 %v1539
      %v1590 = vunpack.c.l.b16 %v1540
      %v1591 = vunpack.c.l.b16 %v1541
      %v1592 = vunpack.c.l.b16 %v1542
      %v1593 = vpack.c.b16 %v1578, %v1577
      %v1594 = vpack.c.b16 %v1580, %v1579
      %v1595 = vpack.c.b16 %v1582, %v1581
      %v1596 = vpack.c.b16 %v1584, %v1583
      %v1597 = vpack.c.b16 %v1586, %v1585
      %v1598 = vpack.c.b16 %v1588, %v1587
      %v1599 = vpack.c.b16 %v1590, %v1589
      %v1600 = vpack.c.b16 %v1592, %v1591
      %1609 = vmatprep.subr.bf16.mxu0 0
      %1610 = vmatpush1.bf16.msra.mxu0 %v1593
      %1611 = vmatprep.subr.bf16.mxu0 0
      %1612 = vmatpush1.bf16.msra.mxu0 %v1594
      %1613 = vmatprep.subr.bf16.mxu0 0
      %1614 = vmatpush1.bf16.msra.mxu0 %v1595
      %1615 = vmatprep.subr.bf16.mxu0 0
      %1616 = vmatpush1.bf16.msra.mxu0 %v1596
      %1617 = vmatprep.subr.bf16.mxu0 0
      %1618 = vmatpush1.bf16.msra.mxu0 %v1597
      %1619 = vmatprep.subr.bf16.mxu0 0
      %1620 = vmatpush1.bf16.msra.mxu0 %v1598
      %1621 = vmatprep.subr.bf16.mxu0 0
      %1622 = vmatpush1.bf16.msra.mxu0 %v1599
      %1623 = vmatprep.subr.bf16.mxu0 0
      %1624 = vmatpush1.bf16.msra.mxu0 %v1600
      %1625 = vmatprep.subr.bf16.mxu0 0
      %1626 = vmatpush1.bf16.msra.mxu0 0
      %1627 = vmatprep.subr.bf16.mxu0 0
      %1628 = vmatpush1.bf16.msra.mxu0 0
      %1629 = vmatprep.subr.bf16.mxu0 0
      %1630 = vmatpush1.bf16.msra.mxu0 0
      %1631 = vmatprep.subr.bf16.mxu0 0
      %1632 = vmatpush1.bf16.msra.mxu0 0
      %1633 = vmatprep.subr.bf16.mxu0 0
      %1634 = vmatpush1.bf16.msra.mxu0 0
      %1635 = vmatprep.subr.bf16.mxu0 0
      %1636 = vmatpush1.bf16.msra.mxu0 0
      %1637 = vmatprep.subr.bf16.mxu0 0
      %1638 = vmatpush1.bf16.msra.mxu0 0
      %1639 = vmatprep.subr.bf16.mxu0 0
      %1640 = vmatpush1.bf16.msra.mxu0 0
      %1641 = vmatprep.mubr.bf16.mxu0 0
      %1642 = vmatmul.mubr.bf16.gmra.mrb[0].mxu0 %v1555
      %v1643 = vpop.f32.mrb[0].mxu0
      %v1644 = vadd.f32 0.0, %v1643
      %v1645 = vpop.f32.mrb[0].mxu0
      %v1646 = vpop.f32.mrb[0].mxu0
      %v1647 = vadd.f32 0.0, %v1646
      %v1648 = vpop.f32.mrb[0].mxu0
      %1649 = vmatprep.mubr.bf16.mxu0 0
      %1650 = vmatmul.mubr.bf16.gmra.mrb[0].mxu0 %v1556
      %v1651 = vpop.f32.mrb[0].mxu0
      %v1652 = vadd.f32 0.0, %v1651
      %v1653 = vpop.f32.mrb[0].mxu0
      %v1654 = vpop.f32.mrb[0].mxu0
      %v1655 = vadd.f32 0.0, %v1654
      %v1656 = vpop.f32.mrb[0].mxu0
      %1657 = vmatprep.mubr.bf16.mxu0 0
      %1658 = vmatmul.mubr.bf16.gmra.mrb[0].mxu0 %v1557
      %v1659 = vpop.f32.mrb[0].mxu0
      %v1660 = vadd.f32 0.0, %v1659
      %v1661 = vpop.f32.mrb[0].mxu0
      %v1662 = vpop.f32.mrb[0].mxu0
      %v1663 = vadd.f32 0.0, %v1662
      %v1664 = vpop.f32.mrb[0].mxu0
      %1665 = vdwg.mxu0
      %v1666 = vadd.f32 %v1520, %v1644
      %v1667 = vadd.f32 %v1521, %v1647
      %v1668 = vadd.f32 %v1522, %v1652
      %v1669 = vadd.f32 %v1523, %v1655
      %v1670 = vadd.f32 %v1524, %v1660
      %v1671 = vadd.f32 %v1525, %v1663
      %1672 = vst [vmem:[#allocation8] sm:$0xff] %v1666
      %1673 = vst [vmem:[#allocation8 + $0x8] sm:$0xff] %v1667
      %1674 = vst [vmem:[#allocation8 + $0x10] sm:$0xff] %v1668
      %1675 = vst [vmem:[#allocation8 + $0x18] sm:$0xff] %v1669
      %1676 = vst [vmem:[#allocation8 + $0x20] sm:$0xff] %v1670
      %1677 = vst [vmem:[#allocation8 + $0x28] sm:$0xff] %v1671
      %v1678 = vld [vmem:[%s256] sm:$0xf]
      %v1679 = vld [vmem:[%s256 + $0x4] sm:$0xf]
      %v1680 = vld [vmem:[%s256 + $0x8] sm:$0xf]
      %v1681 = vld [vmem:[%s256 + $0xc] sm:$0xf]
      %v1682 = vld [vmem:[%s256 + $0x10] sm:$0xf]
      %v1683 = vld [vmem:[%s256 + $0x14] sm:$0xf]
      %v1684 = vld [vmem:[#allocation8] sm:$0xff]
      %v1685 = vld [vmem:[#allocation8 + $0x8] sm:$0xff]
      %v1686 = vld [vmem:[#allocation8 + $0x10] sm:$0xff]
      %v1687 = vld [vmem:[#allocation8 + $0x18] sm:$0xff]
      %v1688 = vld [vmem:[#allocation8 + $0x20] sm:$0xff]
      %v1689 = vld [vmem:[#allocation8 + $0x28] sm:$0xff]
      %s1690 = scalar_lea.vmem %s1, 448
      %v1691 = vld [vmem:[%s1690] sm:$0xf]
      %v1692 = vld [vmem:[%s1690 + $0x4] sm:$0xf]
      %v1693 = vld [vmem:[%s1690 + $0x8] sm:$0xf]
      %v1694 = vld [vmem:[%s1690 + $0xc] sm:$0xf]
      %v1695 = vld [vmem:[%s1690 + $0x10] sm:$0xf]
      %v1696 = vld [vmem:[%s1690 + $0x14] sm:$0xf]
      %v1697 = vld [vmem:[%s1690 + $0x18] sm:$0xf]
      %v1698 = vld [vmem:[%s1690 + $0x1c] sm:$0xf]
      %v1699 = vld [vmem:[%s1690 + $0x20] sm:$0xf]
      %v1700 = vld [vmem:[%s1690 + $0x24] sm:$0xf]
      %v1701 = vld [vmem:[%s1690 + $0x28] sm:$0xf]
      %v1702 = vld [vmem:[%s1690 + $0x2c] sm:$0xf]
      %v1703 = vld [vmem:[%s1690 + $0x30] sm:$0xf]
      %v1704 = vld [vmem:[%s1690 + $0x34] sm:$0xf]
      %v1705 = vld [vmem:[%s1690 + $0x38] sm:$0xf]
      %v1706 = vld [vmem:[%s1690 + $0x3c] sm:$0xf]
      %v1713 = vunpack.c.l.b16 %v1678
      %v1714 = vunpack.c.l.b16 %v1679
      %v1715 = vunpack.c.l.b16 %v1680
      %v1716 = vunpack.c.l.b16 %v1681
      %v1717 = vunpack.c.l.b16 %v1682
      %v1718 = vunpack.c.l.b16 %v1683
      %v1719 = vpack.c.b16 %v1714, %v1713
      %v1720 = vpack.c.b16 %v1716, %v1715
      %v1721 = vpack.c.b16 %v1718, %v1717
      %v1741 = vunpack.c.l.b16 %v1691
      %v1742 = vunpack.c.l.b16 %v1692
      %v1743 = vunpack.c.l.b16 %v1693
      %v1744 = vunpack.c.l.b16 %v1694
      %v1745 = vunpack.c.l.b16 %v1695
      %v1746 = vunpack.c.l.b16 %v1696
      %v1747 = vunpack.c.l.b16 %v1697
      %v1748 = vunpack.c.l.b16 %v1698
      %v1749 = vunpack.c.l.b16 %v1699
      %v1750 = vunpack.c.l.b16 %v1700
      %v1751 = vunpack.c.l.b16 %v1701
      %v1752 = vunpack.c.l.b16 %v1702
      %v1753 = vunpack.c.l.b16 %v1703
      %v1754 = vunpack.c.l.b16 %v1704
      %v1755 = vunpack.c.l.b16 %v1705
      %v1756 = vunpack.c.l.b16 %v1706
      %v1757 = vpack.c.b16 %v1742, %v1741
      %v1758 = vpack.c.b16 %v1744, %v1743
      %v1759 = vpack.c.b16 %v1746, %v1745
      %v1760 = vpack.c.b16 %v1748, %v1747
      %v1761 = vpack.c.b16 %v1750, %v1749
      %v1762 = vpack.c.b16 %v1752, %v1751
      %v1763 = vpack.c.b16 %v1754, %v1753
      %v1764 = vpack.c.b16 %v1756, %v1755
      %1773 = vmatprep.subr.bf16.mxu0 0
      %1774 = vmatpush1.bf16.msra.mxu0 %v1757
      %1775 = vmatprep.subr.bf16.mxu0 0
      %1776 = vmatpush1.bf16.msra.mxu0 %v1758
      %1777 = vmatprep.subr.bf16.mxu0 0
      %1778 = vmatpush1.bf16.msra.mxu0 %v1759
      %1779 = vmatprep.subr.bf16.mxu0 0
      %1780 = vmatpush1.bf16.msra.mxu0 %v1760
      %1781 = vmatprep.subr.bf16.mxu0 0
      %1782 = vmatpush1.bf16.msra.mxu0 %v1761
      %1783 = vmatprep.subr.bf16.mxu0 0
      %1784 = vmatpush1.bf16.msra.mxu0 %v1762
      %1785 = vmatprep.subr.bf16.mxu0 0
      %1786 = vmatpush1.bf16.msra.mxu0 %v1763
      %1787 = vmatprep.subr.bf16.mxu0 0
      %1788 = vmatpush1.bf16.msra.mxu0 %v1764
      %1789 = vmatprep.subr.bf16.mxu0 0
      %1790 = vmatpush1.bf16.msra.mxu0 0
      %1791 = vmatprep.subr.bf16.mxu0 0
      %1792 = vmatpush1.bf16.msra.mxu0 0
      %1793 = vmatprep.subr.bf16.mxu0 0
      %1794 = vmatpush1.bf16.msra.mxu0 0
      %1795 = vmatprep.subr.bf16.mxu0 0
      %1796 = vmatpush1.bf16.msra.mxu0 0
      %1797 = vmatprep.subr.bf16.mxu0 0
      %1798 = vmatpush1.bf16.msra.mxu0 0
      %1799 = vmatprep.subr.bf16.mxu0 0
      %1800 = vmatpush1.bf16.msra.mxu0 0
      %1801 = vmatprep.subr.bf16.mxu0 0
      %1802 = vmatpush1.bf16.msra.mxu0 0
      %1803 = vmatprep.subr.bf16.mxu0 0
      %1804 = vmatpush1.bf16.msra.mxu0 0
      %1805 = vmatprep.mubr.bf16.mxu0 0
      %1806 = vmatmul.mubr.bf16.gmra.mrb[0].mxu0 %v1719
      %v1807 = vpop.f32.mrb[0].mxu0
      %v1808 = vadd.f32 0.0, %v1807
      %v1809 = vpop.f32.mrb[0].mxu0
      %v1810 = vpop.f32.mrb[0].mxu0
      %v1811 = vadd.f32 0.0, %v1810
      %v1812 = vpop.f32.mrb[0].mxu0
      %1813 = vmatprep.mubr.bf16.mxu0 0
      %1814 = vmatmul.mubr.bf16.gmra.mrb[0].mxu0 %v1720
      %v1815 = vpop.f32.mrb[0].mxu0
      %v1816 = vadd.f32 0.0, %v1815
      %v1817 = vpop.f32.mrb[0].mxu0
      %v1818 = vpop.f32.mrb[0].mxu0
      %v1819 = vadd.f32 0.0, %v1818
      %v1820 = vpop.f32.mrb[0].mxu0
      %1821 = vmatprep.mubr.bf16.mxu0 0
      %1822 = vmatmul.mubr.bf16.gmra.mrb[0].mxu0 %v1721
      %v1823 = vpop.f32.mrb[0].mxu0
      %v1824 = vadd.f32 0.0, %v1823
      %v1825 = vpop.f32.mrb[0].mxu0
      %v1826 = vpop.f32.mrb[0].mxu0
      %v1827 = vadd.f32 0.0, %v1826
      %v1828 = vpop.f32.mrb[0].mxu0
      %1829 = vdwg.mxu0
      %v1830 = vadd.f32 %v1684, %v1808
      %v1831 = vadd.f32 %v1685, %v1811
      %v1832 = vadd.f32 %v1686, %v1816
      %v1833 = vadd.f32 %v1687, %v1819
      %v1834 = vadd.f32 %v1688, %v1824
      %v1835 = vadd.f32 %v1689, %v1827
      %1836 = vst [vmem:[#allocation8] sm:$0xff] %v1830
      %1837 = vst [vmem:[#allocation8 + $0x8] sm:$0xff] %v1831
      %1838 = vst [vmem:[#allocation8 + $0x10] sm:$0xff] %v1832
      %1839 = vst [vmem:[#allocation8 + $0x18] sm:$0xff] %v1833
      %1840 = vst [vmem:[#allocation8 + $0x20] sm:$0xff] %v1834
      %1841 = vst [vmem:[#allocation8 + $0x28] sm:$0xff] %v1835
      %v1842 = vld [vmem:[%s344] sm:$0xf]
      %v1843 = vld [vmem:[%s344 + $0x4] sm:$0xf]
      %v1844 = vld [vmem:[%s344 + $0x8] sm:$0xf]
      %v1845 = vld [vmem:[%s344 + $0xc] sm:$0xf]
      %v1846 = vld [vmem:[%s344 + $0x10] sm:$0xf]
      %v1847 = vld [vmem:[%s344 + $0x14] sm:$0xf]
      %v1848 = vld [vmem:[#allocation8] sm:$0xff]
      %v1849 = vld [vmem:[#allocation8 + $0x8] sm:$0xff]
      %v1850 = vld [vmem:[#allocation8 + $0x10] sm:$0xff]
      %v1851 = vld [vmem:[#allocation8 + $0x18] sm:$0xff]
      %v1852 = vld [vmem:[#allocation8 + $0x20] sm:$0xff]
      %v1853 = vld [vmem:[#allocation8 + $0x28] sm:$0xff]
      %s1854 = scalar_lea.vmem %s1, 512
      %v1855 = vld [vmem:[%s1854] sm:$0xf]
      %v1856 = vld [vmem:[%s1854 + $0x4] sm:$0xf]
      %v1857 = vld [vmem:[%s1854 + $0x8] sm:$0xf]
      %v1858 = vld [vmem:[%s1854 + $0xc] sm:$0xf]
      %v1859 = vld [vmem:[%s1854 + $0x10] sm:$0xf]
      %v1860 = vld [vmem:[%s1854 + $0x14] sm:$0xf]
      %v1861 = vld [vmem:[%s1854 + $0x18] sm:$0xf]
      %v1862 = vld [vmem:[%s1854 + $0x1c] sm:$0xf]
      %v1863 = vld [vmem:[%s1854 + $0x20] sm:$0xf]
      %v1864 = vld [vmem:[%s1854 + $0x24] sm:$0xf]
      %v1865 = vld [vmem:[%s1854 + $0x28] sm:$0xf]
      %v1866 = vld [vmem:[%s1854 + $0x2c] sm:$0xf]
      %v1867 = vld [vmem:[%s1854 + $0x30] sm:$0xf]
      %v1868 = vld [vmem:[%s1854 + $0x34] sm:$0xf]
      %v1869 = vld [vmem:[%s1854 + $0x38] sm:$0xf]
      %v1870 = vld [vmem:[%s1854 + $0x3c] sm:$0xf]
      %v1877 = vunpack.c.l.b16 %v1842
      %v1878 = vunpack.c.l.b16 %v1843
      %v1879 = vunpack.c.l.b16 %v1844
      %v1880 = vunpack.c.l.b16 %v1845
      %v1881 = vunpack.c.l.b16 %v1846
      %v1882 = vunpack.c.l.b16 %v1847
      %v1883 = vpack.c.b16 %v1878, %v1877
      %v1884 = vpack.c.b16 %v1880, %v1879
      %v1885 = vpack.c.b16 %v1882, %v1881
      %v1905 = vunpack.c.l.b16 %v1855
      %v1906 = vunpack.c.l.b16 %v1856
      %v1907 = vunpack.c.l.b16 %v1857
      %v1908 = vunpack.c.l.b16 %v1858
      %v1909 = vunpack.c.l.b16 %v1859
      %v1910 = vunpack.c.l.b16 %v1860
      %v1911 = vunpack.c.l.b16 %v1861
      %v1912 = vunpack.c.l.b16 %v1862
      %v1913 = vunpack.c.l.b16 %v1863
      %v1914 = vunpack.c.l.b16 %v1864
      %v1915 = vunpack.c.l.b16 %v1865
      %v1916 = vunpack.c.l.b16 %v1866
      %v1917 = vunpack.c.l.b16 %v1867
      %v1918 = vunpack.c.l.b16 %v1868
      %v1919 = vunpack.c.l.b16 %v1869
      %v1920 = vunpack.c.l.b16 %v1870
      %v1921 = vpack.c.b16 %v1906, %v1905
      %v1922 = vpack.c.b16 %v1908, %v1907
      %v1923 = vpack.c.b16 %v1910, %v1909
      %v1924 = vpack.c.b16 %v1912, %v1911
      %v1925 = vpack.c.b16 %v1914, %v1913
      %v1926 = vpack.c.b16 %v1916, %v1915
      %v1927 = vpack.c.b16 %v1918, %v1917
      %v1928 = vpack.c.b16 %v1920, %v1919
      %1937 = vmatprep.subr.bf16.mxu0 0
      %1938 = vmatpush1.bf16.msra.mxu0 %v1921
      %1939 = vmatprep.subr.bf16.mxu0 0
      %1940 = vmatpush1.bf16.msra.mxu0 %v1922
      %1941 = vmatprep.subr.bf16.mxu0 0
      %1942 = vmatpush1.bf16.msra.mxu0 %v1923
      %1943 = vmatprep.subr.bf16.mxu0 0
      %1944 = vmatpush1.bf16.msra.mxu0 %v1924
      %1945 = vmatprep.subr.bf16.mxu0 0
      %1946 = vmatpush1.bf16.msra.mxu0 %v1925
      %1947 = vmatprep.subr.bf16.mxu0 0
      %1948 = vmatpush1.bf16.msra.mxu0 %v1926
      %1949 = vmatprep.subr.bf16.mxu0 0
      %1950 = vmatpush1.bf16.msra.mxu0 %v1927
      %1951 = vmatprep.subr.bf16.mxu0 0
      %1952 = vmatpush1.bf16.msra.mxu0 %v1928
      %1953 = vmatprep.subr.bf16.mxu0 0
      %1954 = vmatpush1.bf16.msra.mxu0 0
      %1955 = vmatprep.subr.bf16.mxu0 0
      %1956 = vmatpush1.bf16.msra.mxu0 0
      %1957 = vmatprep.subr.bf16.mxu0 0
      %1958 = vmatpush1.bf16.msra.mxu0 0
      %1959 = vmatprep.subr.bf16.mxu0 0
      %1960 = vmatpush1.bf16.msra.mxu0 0
      %1961 = vmatprep.subr.bf16.mxu0 0
      %1962 = vmatpush1.bf16.msra.mxu0 0
      %1963 = vmatprep.subr.bf16.mxu0 0
      %1964 = vmatpush1.bf16.msra.mxu0 0
      %1965 = vmatprep.subr.bf16.mxu0 0
      %1966 = vmatpush1.bf16.msra.mxu0 0
      %1967 = vmatprep.subr.bf16.mxu0 0
      %1968 = vmatpush1.bf16.msra.mxu0 0
      %1969 = vmatprep.mubr.bf16.mxu0 0
      %1970 = vmatmul.mubr.bf16.gmra.mrb[0].mxu0 %v1883
      %v1971 = vpop.f32.mrb[0].mxu0
      %v1972 = vadd.f32 0.0, %v1971
      %v1973 = vpop.f32.mrb[0].mxu0
      %v1974 = vpop.f32.mrb[0].mxu0
      %v1975 = vadd.f32 0.0, %v1974
      %v1976 = vpop.f32.mrb[0].mxu0
      %1977 = vmatprep.mubr.bf16.mxu0 0
      %1978 = vmatmul.mubr.bf16.gmra.mrb[0].mxu0 %v1884
      %v1979 = vpop.f32.mrb[0].mxu0
      %v1980 = vadd.f32 0.0, %v1979
      %v1981 = vpop.f32.mrb[0].mxu0
      %v1982 = vpop.f32.mrb[0].mxu0
      %v1983 = vadd.f32 0.0, %v1982
      %v1984 = vpop.f32.mrb[0].mxu0
      %1985 = vmatprep.mubr.bf16.mxu0 0
      %1986 = vmatmul.mubr.bf16.gmra.mrb[0].mxu0 %v1885
      %v1987 = vpop.f32.mrb[0].mxu0
      %v1988 = vadd.f32 0.0, %v1987
      %v1989 = vpop.f32.mrb[0].mxu0
      %v1990 = vpop.f32.mrb[0].mxu0
      %v1991 = vadd.f32 0.0, %v1990
      %v1992 = vpop.f32.mrb[0].mxu0
      %1993 = vdwg.mxu0
      %v1994 = vadd.f32 %v1848, %v1972
      %v1995 = vadd.f32 %v1849, %v1975
      %v1996 = vadd.f32 %v1850, %v1980
      %v1997 = vadd.f32 %v1851, %v1983
      %v1998 = vadd.f32 %v1852, %v1988
      %v1999 = vadd.f32 %v1853, %v1991
      %2000 = vst [vmem:[#allocation8] sm:$0xff] %v1994
      %2001 = vst [vmem:[#allocation8 + $0x8] sm:$0xff] %v1995
      %2002 = vst [vmem:[#allocation8 + $0x10] sm:$0xff] %v1996
      %2003 = vst [vmem:[#allocation8 + $0x18] sm:$0xff] %v1997
      %2004 = vst [vmem:[#allocation8 + $0x20] sm:$0xff] %v1998
      %2005 = vst [vmem:[#allocation8 + $0x28] sm:$0xff] %v1999
      %v2006 = vld [vmem:[#allocation8] sm:$0xff]
      %v2007 = vld [vmem:[#allocation8 + $0x8] sm:$0xff]
      %v2008 = vld [vmem:[#allocation8 + $0x10] sm:$0xff]
      %v2009 = vld [vmem:[#allocation8 + $0x18] sm:$0xff]
      %v2010 = vld [vmem:[#allocation8 + $0x20] sm:$0xff]
      %v2011 = vld [vmem:[#allocation8 + $0x28] sm:$0xff]
      %v2012 = vld [vmem:[%s2] sm:$0x1]
      %v2014 = vlaneseq
      %v2015 = vshrl.u32 %v2014, 7
      %v2016 = vsub.s32 0, %v2015
      %v2017 = vrot.slane %v2012, %v2016
      %v2019 = vadd.f32 %v2006, %v2017
      %v2020 = vadd.f32 %v2007, %v2017
      %v2021 = vadd.f32 %v2008, %v2017
      %v2022 = vadd.f32 %v2009, %v2017
      %v2023 = vadd.f32 %v2010, %v2017
      %v2024 = vadd.f32 %v2011, %v2017
      %v2025 = vmax.f32 %v2019, 0.0
      %v2026 = vmax.f32 %v2020, 0.0
      %v2027 = vmax.f32 %v2021, 0.0
      %v2028 = vmax.f32 %v2022, 0.0
      %v2029 = vmax.f32 %v2023, 0.0
      %v2030 = vmax.f32 %v2024, 0.0
      %v2031 = vpack.c.bf16 %v2026, %v2025
      %v2032 = vpack.c.bf16 %v2028, %v2027
      %v2033 = vpack.c.bf16 %v2030, %v2029
      %v2037 = vunpack.c.l.b16 %v2031
      %v2038 = vunpack.c.h.b16 %v2031
      %v2039 = vunpack.c.l.b16 %v2032
      %v2040 = vunpack.c.h.b16 %v2032
      %v2041 = vunpack.c.l.b16 %v2033
      %v2042 = vunpack.c.h.b16 %v2033
      %v2043 = vpack.c.b16 %v2037, %v2037
      %v2044 = vpack.c.b16 %v2038, %v2038
      %v2045 = vpack.c.b16 %v2039, %v2039
      %v2046 = vpack.c.b16 %v2040, %v2040
      %v2047 = vpack.c.b16 %v2041, %v2041
      %v2048 = vpack.c.b16 %v2042, %v2042
      %2055 = vst [vmem:[#allocation6] sm:$0xf] %v2043
      %2056 = vst [vmem:[#allocation6 + $0x4] sm:$0xf] %v2044
      %2057 = vst [vmem:[#allocation6 + $0x8] sm:$0xf] %v2045
      %2058 = vst [vmem:[#allocation6 + $0xc] sm:$0xf] %v2046
      %2059 = vst [vmem:[#allocation6 + $0x10] sm:$0xf] %v2047
      %2060 = vst [vmem:[#allocation6 + $0x14] sm:$0xf] %v2048
      %v2062 = vshrl.u32 %v2043, 16
      %v2064 = vrot.slane %v2062, 7
      %v2065 = vshll.u32 %v2043, 16
      %v2067 = vor.u32 %v2064, %v2065
      %v2069 = vshrl.u32 %v2044, 16
      %v2071 = vrot.slane %v2069, 7
      %v2072 = vshll.u32 %v2044, 16
      %v2074 = vor.u32 %v2071, %v2072
      %v2076 = vshrl.u32 %v2045, 16
      %v2078 = vrot.slane %v2076, 7
      %v2079 = vshll.u32 %v2045, 16
      %v2081 = vor.u32 %v2078, %v2079
      %v2083 = vshrl.u32 %v2046, 16
      %v2085 = vrot.slane %v2083, 7
      %v2086 = vshll.u32 %v2046, 16
      %v2088 = vor.u32 %v2085, %v2086
      %v2090 = vshrl.u32 %v2047, 16
      %v2092 = vrot.slane %v2090, 7
      %v2093 = vshll.u32 %v2047, 16
      %v2095 = vor.u32 %v2092, %v2093
      %v2097 = vshrl.u32 %v2048, 16
      %v2099 = vrot.slane %v2097, 7
      %v2100 = vshll.u32 %v2048, 16
      %v2102 = vor.u32 %v2099, %v2100
      %v2109 = vld [vmem:[#allocation5] sm:$0xf]
      %v2110 = vsel %vm296, %v2067, %v2109
      %2111 = vst [vmem:[#allocation5] sm:$0xf] %v2110
      %v2112 = vld [vmem:[#allocation5 + $0x4] sm:$0xf]
      %v2113 = vsel %vm296, %v2074, %v2112
      %2114 = vst [vmem:[#allocation5 + $0x4] sm:$0xf] %v2113
      %v2115 = vld [vmem:[#allocation5 + $0x8] sm:$0xf]
      %v2116 = vsel %vm296, %v2081, %v2115
      %2117 = vst [vmem:[#allocation5 + $0x8] sm:$0xf] %v2116
      %v2118 = vld [vmem:[#allocation5 + $0xc] sm:$0xf]
      %v2119 = vsel %vm296, %v2088, %v2118
      %2120 = vst [vmem:[#allocation5 + $0xc] sm:$0xf] %v2119
      %v2121 = vld [vmem:[#allocation5 + $0x10] sm:$0xf]
      %v2122 = vsel %vm296, %v2095, %v2121
      %2123 = vst [vmem:[#allocation5 + $0x10] sm:$0xf] %v2122
      %v2124 = vld [vmem:[#allocation5 + $0x14] sm:$0xf]
      %v2125 = vsel %vm296, %v2102, %v2124
      %2126 = vst [vmem:[#allocation5 + $0x14] sm:$0xf] %v2125
      %v2127 = vld [vmem:[#allocation5] sm:$0x1]
      %v2128 = vsel %vm311, 0, %v2127
      %2129 = vst [vmem:[#allocation5] sm:$0x1] %v2128
      %v2130 = vld [vmem:[#allocation5 + $0x4] sm:$0x1]
      %v2131 = vsel %vm311, 0, %v2130
      %2132 = vst [vmem:[#allocation5 + $0x4] sm:$0x1] %v2131
      %v2133 = vld [vmem:[#allocation5 + $0x8] sm:$0x1]
      %v2134 = vsel %vm311, 0, %v2133
      %2135 = vst [vmem:[#allocation5 + $0x8] sm:$0x1] %v2134
      %v2136 = vld [vmem:[#allocation5 + $0xc] sm:$0x1]
      %v2137 = vsel %vm311, 0, %v2136
      %2138 = vst [vmem:[#allocation5 + $0xc] sm:$0x1] %v2137
      %v2139 = vld [vmem:[#allocation5 + $0x10] sm:$0x1]
      %v2140 = vsel %vm311, 0, %v2139
      %2141 = vst [vmem:[#allocation5 + $0x10] sm:$0x1] %v2140
      %v2142 = vld [vmem:[#allocation5 + $0x14] sm:$0x1]
      %v2143 = vsel %vm311, 0, %v2142
      %2144 = vst [vmem:[#allocation5 + $0x14] sm:$0x1] %v2143
      %v2145 = vrot.slane %v2062, 4
      %v2146 = vrot.slane %v2065, 5
      %v2147 = vor.u32 %v2145, %v2146
      %v2148 = vrot.slane %v2147, 4
      %v2149 = vrot.slane %v2069, 4
      %v2150 = vrot.slane %v2072, 5
      %v2151 = vor.u32 %v2149, %v2150
      %v2152 = vrot.slane %v2151, 4
      %v2153 = vrot.slane %v2076, 4
      %v2154 = vrot.slane %v2079, 5
      %v2155 = vor.u32 %v2153, %v2154
      %v2156 = vrot.slane %v2155, 4
      %v2157 = vrot.slane %v2083, 4
      %v2158 = vrot.slane %v2086, 5
      %v2159 = vor.u32 %v2157, %v2158
      %v2160 = vrot.slane %v2159, 4
      %v2161 = vrot.slane %v2090, 4
      %v2162 = vrot.slane %v2093, 5
      %v2163 = vor.u32 %v2161, %v2162
      %v2164 = vrot.slane %v2163, 4
      %v2165 = vrot.slane %v2097, 4
      %v2166 = vrot.slane %v2100, 5
      %v2167 = vor.u32 %v2165, %v2166
      %v2168 = vrot.slane %v2167, 4
      %v2175 = vld [vmem:[#allocation7] sm:$0xf]
      %v2176 = vsel %vm346, %v2148, %v2175
      %2177 = vst [vmem:[#allocation7] sm:$0xf] %v2176
      %v2178 = vld [vmem:[#allocation7 + $0x4] sm:$0xf]
      %v2179 = vsel %vm346, %v2152, %v2178
      %2180 = vst [vmem:[#allocation7 + $0x4] sm:$0xf] %v2179
      %v2181 = vld [vmem:[#allocation7 + $0x8] sm:$0xf]
      %v2182 = vsel %vm346, %v2156, %v2181
      %2183 = vst [vmem:[#allocation7 + $0x8] sm:$0xf] %v2182
      %v2184 = vld [vmem:[#allocation7 + $0xc] sm:$0xf]
      %v2185 = vsel %vm346, %v2160, %v2184
      %2186 = vst [vmem:[#allocation7 + $0xc] sm:$0xf] %v2185
      %v2187 = vld [vmem:[#allocation7 + $0x10] sm:$0xf]
      %v2188 = vsel %vm346, %v2164, %v2187
      %2189 = vst [vmem:[#allocation7 + $0x10] sm:$0xf] %v2188
      %v2190 = vld [vmem:[#allocation7 + $0x14] sm:$0xf]
      %v2191 = vsel %vm346, %v2168, %v2190
      %2192 = vst [vmem:[#allocation7 + $0x14] sm:$0xf] %v2191
      %v2193 = vld [vmem:[#allocation7] sm:$0x8]
      %v2194 = vsel %vm361, 0, %v2193
      %2195 = vst [vmem:[#allocation7] sm:$0x8] %v2194
      %v2196 = vld [vmem:[#allocation7 + $0x4] sm:$0x8]
      %v2197 = vsel %vm361, 0, %v2196
      %2198 = vst [vmem:[#allocation7 + $0x4] sm:$0x8] %v2197
      %v2199 = vld [vmem:[#allocation7 + $0x8] sm:$0x8]
      %v2200 = vsel %vm361, 0, %v2199
      %2201 = vst [vmem:[#allocation7 + $0x8] sm:$0x8] %v2200
      %v2202 = vld [vmem:[#allocation7 + $0xc] sm:$0x8]
      %v2203 = vsel %vm361, 0, %v2202
      %2204 = vst [vmem:[#allocation7 + $0xc] sm:$0x8] %v2203
      %v2205 = vld [vmem:[#allocation7 + $0x10] sm:$0x8]
      %v2206 = vsel %vm361, 0, %v2205
      %2207 = vst [vmem:[#allocation7 + $0x10] sm:$0x8] %v2206
      %v2208 = vld [vmem:[#allocation7 + $0x14] sm:$0x8]
      %v2209 = vsel %vm361, 0, %v2208
      %2210 = vst [vmem:[#allocation7 + $0x14] sm:$0x8] %v2209
      // Predicated region
      $region57: #{_forward_impl.1} parent=39 // pred_check
        %p2211 = pneg %p435
      $region58: #{_forward_impl.1} parent=39 // pred_check_branch
        %2213 = sbr.rel (%p2211) target = $region60
      $region59: #{_forward_impl.1} parent=39 // pred_region
        %2214 = vst [vmem:[#allocation5] sm:$0xf] 0
        %2215 = vst [vmem:[#allocation6] sm:$0xf] 0
        %2216 = vst [vmem:[#allocation7] sm:$0xf] 0
      $region60: #{_forward_impl.1} parent=39 // pred_fallthru
        _
      // Predicated region
      $region61: #{_forward_impl.1} parent=39 // pred_check
        %p2217 = pneg %p509
      $region62: #{_forward_impl.1} parent=39 // pred_check_branch
        %2219 = sbr.rel (%p2217) target = $region64
      $region63: #{_forward_impl.1} parent=39 // pred_region
        %s2220 = scalar_lea.vmem [#allocation5], 20
        %2221 = vst [vmem:[%s2220] sm:$0xf] 0
        %s2222 = scalar_lea.vmem [#allocation6], 20
        %2223 = vst [vmem:[%s2222] sm:$0xf] 0
        %s2224 = scalar_lea.vmem [#allocation7], 20
        %2225 = vst [vmem:[%s2224] sm:$0xf] 0
      $region64: #{_forward_impl.1} parent=39 // pred_fallthru
        _
      %2226 = vst [vmem:[#allocation9] sm:$0xff] 0.0
      %2227 = vst [vmem:[#allocation9 + $0x8] sm:$0xff] 0.0
      %2228 = vst [vmem:[#allocation9 + $0x10] sm:$0xff] 0.0
      %2229 = vst [vmem:[#allocation9 + $0x18] sm:$0xff] 0.0
      %v2230 = vld [vmem:[#allocation5] sm:$0xf]
      %v2231 = vld [vmem:[#allocation5 + $0x4] sm:$0xf]
      %v2232 = vld [vmem:[#allocation5 + $0x8] sm:$0xf]
      %v2233 = vld [vmem:[#allocation5 + $0xc] sm:$0xf]
      %v2234 = vld [vmem:[#allocation9] sm:$0xff]
      %v2235 = vld [vmem:[#allocation9 + $0x8] sm:$0xff]
      %v2236 = vld [vmem:[#allocation9 + $0x10] sm:$0xff]
      %v2237 = vld [vmem:[#allocation9 + $0x18] sm:$0xff]
      %v2238 = vld [vmem:[%s3] sm:$0xf]
      %v2239 = vld [vmem:[%s3 + $0x4] sm:$0xf]
      %v2240 = vld [vmem:[%s3 + $0x8] sm:$0xf]
      %v2241 = vld [vmem:[%s3 + $0xc] sm:$0xf]
      %v2242 = vld [vmem:[%s3 + $0x10] sm:$0xf]
      %v2243 = vld [vmem:[%s3 + $0x14] sm:$0xf]
      %v2244 = vld [vmem:[%s3 + $0x18] sm:$0xf]
      %v2245 = vld [vmem:[%s3 + $0x1c] sm:$0xf]
      %v2246 = vld [vmem:[%s3 + $0x20] sm:$0xf]
      %v2247 = vld [vmem:[%s3 + $0x24] sm:$0xf]
      %v2248 = vld [vmem:[%s3 + $0x28] sm:$0xf]
      %v2249 = vld [vmem:[%s3 + $0x2c] sm:$0xf]
      %v2250 = vld [vmem:[%s3 + $0x30] sm:$0xf]
      %v2251 = vld [vmem:[%s3 + $0x34] sm:$0xf]
      %v2252 = vld [vmem:[%s3 + $0x38] sm:$0xf]
      %v2253 = vld [vmem:[%s3 + $0x3c] sm:$0xf]
      %v2258 = vunpack.c.l.b16 %v2230
      %v2259 = vunpack.c.l.b16 %v2231
      %v2260 = vunpack.c.l.b16 %v2232
      %v2261 = vunpack.c.l.b16 %v2233
      %v2262 = vpack.c.b16 %v2259, %v2258
      %v2263 = vpack.c.b16 %v2261, %v2260
      %v2282 = vunpack.c.l.b16 %v2238
      %v2283 = vunpack.c.l.b16 %v2239
      %v2284 = vunpack.c.l.b16 %v2240
      %v2285 = vunpack.c.l.b16 %v2241
      %v2286 = vunpack.c.l.b16 %v2242
      %v2287 = vunpack.c.l.b16 %v2243
      %v2288 = vunpack.c.l.b16 %v2244
      %v2289 = vunpack.c.l.b16 %v2245
      %v2290 = vunpack.c.l.b16 %v2246
      %v2291 = vunpack.c.l.b16 %v2247
      %v2292 = vunpack.c.l.b16 %v2248
      %v2293 = vunpack.c.l.b16 %v2249
      %v2294 = vunpack.c.l.b16 %v2250
      %v2295 = vunpack.c.l.b16 %v2251
      %v2296 = vunpack.c.l.b16 %v2252
      %v2297 = vunpack.c.l.b16 %v2253
      %v2298 = vpack.c.b16 %v2283, %v2282
      %v2299 = vpack.c.b16 %v2285, %v2284
      %v2300 = vpack.c.b16 %v2287, %v2286
      %v2301 = vpack.c.b16 %v2289, %v2288
      %v2302 = vpack.c.b16 %v2291, %v2290
      %v2303 = vpack.c.b16 %v2293, %v2292
      %v2304 = vpack.c.b16 %v2295, %v2294
      %v2305 = vpack.c.b16 %v2297, %v2296
      %2314 = vmatprep.subr.bf16.mxu0 0
      %2315 = vmatpush1.bf16.msra.mxu0 %v2298
      %2316 = vmatprep.subr.bf16.mxu0 0
      %2317 = vmatpush1.bf16.msra.mxu0 %v2299
      %2318 = vmatprep.subr.bf16.mxu0 0
      %2319 = vmatpush1.bf16.msra.mxu0 %v2300
      %2320 = vmatprep.subr.bf16.mxu0 0
      %2321 = vmatpush1.bf16.msra.mxu0 %v2301
      %2322 = vmatprep.subr.bf16.mxu0 0
      %2323 = vmatpush1.bf16.msra.mxu0 %v2302
      %2324 = vmatprep.subr.bf16.mxu0 0
      %2325 = vmatpush1.bf16.msra.mxu0 %v2303
      %2326 = vmatprep.subr.bf16.mxu0 0
      %2327 = vmatpush1.bf16.msra.mxu0 %v2304
      %2328 = vmatprep.subr.bf16.mxu0 0
      %2329 = vmatpush1.bf16.msra.mxu0 %v2305
      %2330 = vmatprep.subr.bf16.mxu0 0
      %2331 = vmatpush1.bf16.msra.mxu0 0
      %2332 = vmatprep.subr.bf16.mxu0 0
      %2333 = vmatpush1.bf16.msra.mxu0 0
      %2334 = vmatprep.subr.bf16.mxu0 0
      %2335 = vmatpush1.bf16.msra.mxu0 0
      %2336 = vmatprep.subr.bf16.mxu0 0
      %2337 = vmatpush1.bf16.msra.mxu0 0
      %2338 = vmatprep.subr.bf16.mxu0 0
      %2339 = vmatpush1.bf16.msra.mxu0 0
      %2340 = vmatprep.subr.bf16.mxu0 0
      %2341 = vmatpush1.bf16.msra.mxu0 0
      %2342 = vmatprep.subr.bf16.mxu0 0
      %2343 = vmatpush1.bf16.msra.mxu0 0
      %2344 = vmatprep.subr.bf16.mxu0 0
      %2345 = vmatpush1.bf16.msra.mxu0 0
      %2346 = vmatprep.mubr.bf16.mxu0 0
      %2347 = vmatmul.mubr.bf16.gmra.mrb[0].mxu0 %v2262
      %v2348 = vpop.f32.mrb[0].mxu0
      %v2349 = vadd.f32 0.0, %v2348
      %v2350 = vpop.f32.mrb[0].mxu0
      %v2351 = vpop.f32.mrb[0].mxu0
      %v2352 = vadd.f32 0.0, %v2351
      %v2353 = vpop.f32.mrb[0].mxu0
      %2354 = vmatprep.mubr.bf16.mxu0 0
      %2355 = vmatmul.mubr.bf16.gmra.mrb[0].mxu0 %v2263
      %v2356 = vpop.f32.mrb[0].mxu0
      %v2357 = vadd.f32 0.0, %v2356
      %v2358 = vpop.f32.mrb[0].mxu0
      %v2359 = vpop.f32.mrb[0].mxu0
      %v2360 = vadd.f32 0.0, %v2359
      %v2361 = vpop.f32.mrb[0].mxu0
      %2362 = vdwg.mxu0
      %v2363 = vadd.f32 %v2234, %v2349
      %v2364 = vadd.f32 %v2235, %v2352
      %v2365 = vadd.f32 %v2236, %v2357
      %v2366 = vadd.f32 %v2237, %v2360
      %2367 = vst [vmem:[#allocation9] sm:$0xff] %v2363
      %2368 = vst [vmem:[#allocation9 + $0x8] sm:$0xff] %v2364
      %2369 = vst [vmem:[#allocation9 + $0x10] sm:$0xff] %v2365
      %2370 = vst [vmem:[#allocation9 + $0x18] sm:$0xff] %v2366
      %v2371 = vld [vmem:[#allocation6] sm:$0xf]
      %v2372 = vld [vmem:[#allocation6 + $0x4] sm:$0xf]
      %v2373 = vld [vmem:[#allocation6 + $0x8] sm:$0xf]
      %v2374 = vld [vmem:[#allocation6 + $0xc] sm:$0xf]
      %v2375 = vld [vmem:[#allocation9] sm:$0xff]
      %v2376 = vld [vmem:[#allocation9 + $0x8] sm:$0xff]
      %v2377 = vld [vmem:[#allocation9 + $0x10] sm:$0xff]
      %v2378 = vld [vmem:[#allocation9 + $0x18] sm:$0xff]
      %s2379 = scalar_lea.vmem %s3, 64
      %v2380 = vld [vmem:[%s2379] sm:$0xf]
      %v2381 = vld [vmem:[%s2379 + $0x4] sm:$0xf]
      %v2382 = vld [vmem:[%s2379 + $0x8] sm:$0xf]
      %v2383 = vld [vmem:[%s2379 + $0xc] sm:$0xf]
      %v2384 = vld [vmem:[%s2379 + $0x10] sm:$0xf]
      %v2385 = vld [vmem:[%s2379 + $0x14] sm:$0xf]
      %v2386 = vld [vmem:[%s2379 + $0x18] sm:$0xf]
      %v2387 = vld [vmem:[%s2379 + $0x1c] sm:$0xf]
      %v2388 = vld [vmem:[%s2379 + $0x20] sm:$0xf]
      %v2389 = vld [vmem:[%s2379 + $0x24] sm:$0xf]
      %v2390 = vld [vmem:[%s2379 + $0x28] sm:$0xf]
      %v2391 = vld [vmem:[%s2379 + $0x2c] sm:$0xf]
      %v2392 = vld [vmem:[%s2379 + $0x30] sm:$0xf]
      %v2393 = vld [vmem:[%s2379 + $0x34] sm:$0xf]
      %v2394 = vld [vmem:[%s2379 + $0x38] sm:$0xf]
      %v2395 = vld [vmem:[%s2379 + $0x3c] sm:$0xf]
      %v2400 = vunpack.c.l.b16 %v2371
      %v2401 = vunpack.c.l.b16 %v2372
      %v2402 = vunpack.c.l.b16 %v2373
      %v2403 = vunpack.c.l.b16 %v2374
      %v2404 = vpack.c.b16 %v2401, %v2400
      %v2405 = vpack.c.b16 %v2403, %v2402
      %v2424 = vunpack.c.l.b16 %v2380
      %v2425 = vunpack.c.l.b16 %v2381
      %v2426 = vunpack.c.l.b16 %v2382
      %v2427 = vunpack.c.l.b16 %v2383
      %v2428 = vunpack.c.l.b16 %v2384
      %v2429 = vunpack.c.l.b16 %v2385
      %v2430 = vunpack.c.l.b16 %v2386
      %v2431 = vunpack.c.l.b16 %v2387
      %v2432 = vunpack.c.l.b16 %v2388
      %v2433 = vunpack.c.l.b16 %v2389
      %v2434 = vunpack.c.l.b16 %v2390
      %v2435 = vunpack.c.l.b16 %v2391
      %v2436 = vunpack.c.l.b16 %v2392
      %v2437 = vunpack.c.l.b16 %v2393
      %v2438 = vunpack.c.l.b16 %v2394
      %v2439 = vunpack.c.l.b16 %v2395
      %v2440 = vpack.c.b16 %v2425, %v2424
      %v2441 = vpack.c.b16 %v2427, %v2426
      %v2442 = vpack.c.b16 %v2429, %v2428
      %v2443 = vpack.c.b16 %v2431, %v2430
      %v2444 = vpack.c.b16 %v2433, %v2432
      %v2445 = vpack.c.b16 %v2435, %v2434
      %v2446 = vpack.c.b16 %v2437, %v2436
      %v2447 = vpack.c.b16 %v2439, %v2438
      %2456 = vmatprep.subr.bf16.mxu0 0
      %2457 = vmatpush1.bf16.msra.mxu0 %v2440
      %2458 = vmatprep.subr.bf16.mxu0 0
      %2459 = vmatpush1.bf16.msra.mxu0 %v2441
      %2460 = vmatprep.subr.bf16.mxu0 0
      %2461 = vmatpush1.bf16.msra.mxu0 %v2442
      %2462 = vmatprep.subr.bf16.mxu0 0
      %2463 = vmatpush1.bf16.msra.mxu0 %v2443
      %2464 = vmatprep.subr.bf16.mxu0 0
      %2465 = vmatpush1.bf16.msra.mxu0 %v2444
      %2466 = vmatprep.subr.bf16.mxu0 0
      %2467 = vmatpush1.bf16.msra.mxu0 %v2445
      %2468 = vmatprep.subr.bf16.mxu0 0
      %2469 = vmatpush1.bf16.msra.mxu0 %v2446
      %2470 = vmatprep.subr.bf16.mxu0 0
      %2471 = vmatpush1.bf16.msra.mxu0 %v2447
      %2472 = vmatprep.subr.bf16.mxu0 0
      %2473 = vmatpush1.bf16.msra.mxu0 0
      %2474 = vmatprep.subr.bf16.mxu0 0
      %2475 = vmatpush1.bf16.msra.mxu0 0
      %2476 = vmatprep.subr.bf16.mxu0 0
      %2477 = vmatpush1.bf16.msra.mxu0 0
      %2478 = vmatprep.subr.bf16.mxu0 0
      %2479 = vmatpush1.bf16.msra.mxu0 0
      %2480 = vmatprep.subr.bf16.mxu0 0
      %2481 = vmatpush1.bf16.msra.mxu0 0
      %2482 = vmatprep.subr.bf16.mxu0 0
      %2483 = vmatpush1.bf16.msra.mxu0 0
      %2484 = vmatprep.subr.bf16.mxu0 0
      %2485 = vmatpush1.bf16.msra.mxu0 0
      %2486 = vmatprep.subr.bf16.mxu0 0
      %2487 = vmatpush1.bf16.msra.mxu0 0
      %2488 = vmatprep.mubr.bf16.mxu0 0
      %2489 = vmatmul.mubr.bf16.gmra.mrb[0].mxu0 %v2404
      %v2490 = vpop.f32.mrb[0].mxu0
      %v2491 = vadd.f32 0.0, %v2490
      %v2492 = vpop.f32.mrb[0].mxu0
      %v2493 = vpop.f32.mrb[0].mxu0
      %v2494 = vadd.f32 0.0, %v2493
      %v2495 = vpop.f32.mrb[0].mxu0
      %2496 = vmatprep.mubr.bf16.mxu0 0
      %2497 = vmatmul.mubr.bf16.gmra.mrb[0].mxu0 %v2405
      %v2498 = vpop.f32.mrb[0].mxu0
      %v2499 = vadd.f32 0.0, %v2498
      %v2500 = vpop.f32.mrb[0].mxu0
      %v2501 = vpop.f32.mrb[0].mxu0
      %v2502 = vadd.f32 0.0, %v2501
      %v2503 = vpop.f32.mrb[0].mxu0
      %2504 = vdwg.mxu0
      %v2505 = vadd.f32 %v2375, %v2491
      %v2506 = vadd.f32 %v2376, %v2494
      %v2507 = vadd.f32 %v2377, %v2499
      %v2508 = vadd.f32 %v2378, %v2502
      %2509 = vst [vmem:[#allocation9] sm:$0xff] %v2505
      %2510 = vst [vmem:[#allocation9 + $0x8] sm:$0xff] %v2506
      %2511 = vst [vmem:[#allocation9 + $0x10] sm:$0xff] %v2507
      %2512 = vst [vmem:[#allocation9 + $0x18] sm:$0xff] %v2508
      %v2513 = vld [vmem:[#allocation7] sm:$0xf]
      %v2514 = vld [vmem:[#allocation7 + $0x4] sm:$0xf]
      %v2515 = vld [vmem:[#allocation7 + $0x8] sm:$0xf]
      %v2516 = vld [vmem:[#allocation7 + $0xc] sm:$0xf]
      %v2517 = vld [vmem:[#allocation9] sm:$0xff]
      %v2518 = vld [vmem:[#allocation9 + $0x8] sm:$0xff]
      %v2519 = vld [vmem:[#allocation9 + $0x10] sm:$0xff]
      %v2520 = vld [vmem:[#allocation9 + $0x18] sm:$0xff]
      %s2521 = scalar_lea.vmem %s3, 128
      %v2522 = vld [vmem:[%s2521] sm:$0xf]
      %v2523 = vld [vmem:[%s2521 + $0x4] sm:$0xf]
      %v2524 = vld [vmem:[%s2521 + $0x8] sm:$0xf]
      %v2525 = vld [vmem:[%s2521 + $0xc] sm:$0xf]
      %v2526 = vld [vmem:[%s2521 + $0x10] sm:$0xf]
      %v2527 = vld [vmem:[%s2521 + $0x14] sm:$0xf]
      %v2528 = vld [vmem:[%s2521 + $0x18] sm:$0xf]
      %v2529 = vld [vmem:[%s2521 + $0x1c] sm:$0xf]
      %v2530 = vld [vmem:[%s2521 + $0x20] sm:$0xf]
      %v2531 = vld [vmem:[%s2521 + $0x24] sm:$0xf]
      %v2532 = vld [vmem:[%s2521 + $0x28] sm:$0xf]
      %v2533 = vld [vmem:[%s2521 + $0x2c] sm:$0xf]
      %v2534 = vld [vmem:[%s2521 + $0x30] sm:$0xf]
      %v2535 = vld [vmem:[%s2521 + $0x34] sm:$0xf]
      %v2536 = vld [vmem:[%s2521 + $0x38] sm:$0xf]
      %v2537 = vld [vmem:[%s2521 + $0x3c] sm:$0xf]
      %v2542 = vunpack.c.l.b16 %v2513
      %v2543 = vunpack.c.l.b16 %v2514
      %v2544 = vunpack.c.l.b16 %v2515
      %v2545 = vunpack.c.l.b16 %v2516
      %v2546 = vpack.c.b16 %v2543, %v2542
      %v2547 = vpack.c.b16 %v2545, %v2544
      %v2566 = vunpack.c.l.b16 %v2522
      %v2567 = vunpack.c.l.b16 %v2523
      %v2568 = vunpack.c.l.b16 %v2524
      %v2569 = vunpack.c.l.b16 %v2525
      %v2570 = vunpack.c.l.b16 %v2526
      %v2571 = vunpack.c.l.b16 %v2527
      %v2572 = vunpack.c.l.b16 %v2528
      %v2573 = vunpack.c.l.b16 %v2529
      %v2574 = vunpack.c.l.b16 %v2530
      %v2575 = vunpack.c.l.b16 %v2531
      %v2576 = vunpack.c.l.b16 %v2532
      %v2577 = vunpack.c.l.b16 %v2533
      %v2578 = vunpack.c.l.b16 %v2534
      %v2579 = vunpack.c.l.b16 %v2535
      %v2580 = vunpack.c.l.b16 %v2536
      %v2581 = vunpack.c.l.b16 %v2537
      %v2582 = vpack.c.b16 %v2567, %v2566
      %v2583 = vpack.c.b16 %v2569, %v2568
      %v2584 = vpack.c.b16 %v2571, %v2570
      %v2585 = vpack.c.b16 %v2573, %v2572
      %v2586 = vpack.c.b16 %v2575, %v2574
      %v2587 = vpack.c.b16 %v2577, %v2576
      %v2588 = vpack.c.b16 %v2579, %v2578
      %v2589 = vpack.c.b16 %v2581, %v2580
      %2598 = vmatprep.subr.bf16.mxu0 0
      %2599 = vmatpush1.bf16.msra.mxu0 %v2582
      %2600 = vmatprep.subr.bf16.mxu0 0
      %2601 = vmatpush1.bf16.msra.mxu0 %v2583
      %2602 = vmatprep.subr.bf16.mxu0 0
      %2603 = vmatpush1.bf16.msra.mxu0 %v2584
      %2604 = vmatprep.subr.bf16.mxu0 0
      %2605 = vmatpush1.bf16.msra.mxu0 %v2585
      %2606 = vmatprep.subr.bf16.mxu0 0
      %2607 = vmatpush1.bf16.msra.mxu0 %v2586
      %2608 = vmatprep.subr.bf16.mxu0 0
      %2609 = vmatpush1.bf16.msra.mxu0 %v2587
      %2610 = vmatprep.subr.bf16.mxu0 0
      %2611 = vmatpush1.bf16.msra.mxu0 %v2588
      %2612 = vmatprep.subr.bf16.mxu0 0
      %2613 = vmatpush1.bf16.msra.mxu0 %v2589
      %2614 = vmatprep.subr.bf16.mxu0 0
      %2615 = vmatpush1.bf16.msra.mxu0 0
      %2616 = vmatprep.subr.bf16.mxu0 0
      %2617 = vmatpush1.bf16.msra.mxu0 0
      %2618 = vmatprep.subr.bf16.mxu0 0
      %2619 = vmatpush1.bf16.msra.mxu0 0
      %2620 = vmatprep.subr.bf16.mxu0 0
      %2621 = vmatpush1.bf16.msra.mxu0 0
      %2622 = vmatprep.subr.bf16.mxu0 0
      %2623 = vmatpush1.bf16.msra.mxu0 0
      %2624 = vmatprep.subr.bf16.mxu0 0
      %2625 = vmatpush1.bf16.msra.mxu0 0
      %2626 = vmatprep.subr.bf16.mxu0 0
      %2627 = vmatpush1.bf16.msra.mxu0 0
      %2628 = vmatprep.subr.bf16.mxu0 0
      %2629 = vmatpush1.bf16.msra.mxu0 0
      %2630 = vmatprep.mubr.bf16.mxu0 0
      %2631 = vmatmul.mubr.bf16.gmra.mrb[0].mxu0 %v2546
      %v2632 = vpop.f32.mrb[0].mxu0
      %v2633 = vadd.f32 0.0, %v2632
      %v2634 = vpop.f32.mrb[0].mxu0
      %v2635 = vpop.f32.mrb[0].mxu0
      %v2636 = vadd.f32 0.0, %v2635
      %v2637 = vpop.f32.mrb[0].mxu0
      %2638 = vmatprep.mubr.bf16.mxu0 0
      %2639 = vmatmul.mubr.bf16.gmra.mrb[0].mxu0 %v2547
      %v2640 = vpop.f32.mrb[0].mxu0
      %v2641 = vadd.f32 0.0, %v2640
      %v2642 = vpop.f32.mrb[0].mxu0
      %v2643 = vpop.f32.mrb[0].mxu0
      %v2644 = vadd.f32 0.0, %v2643
      %v2645 = vpop.f32.mrb[0].mxu0
      %2646 = vdwg.mxu0
      %v2647 = vadd.f32 %v2517, %v2633
      %v2648 = vadd.f32 %v2518, %v2636
      %v2649 = vadd.f32 %v2519, %v2641
      %v2650 = vadd.f32 %v2520, %v2644
      %2651 = vst [vmem:[#allocation9] sm:$0xff] %v2647
      %2652 = vst [vmem:[#allocation9 + $0x8] sm:$0xff] %v2648
      %2653 = vst [vmem:[#allocation9 + $0x10] sm:$0xff] %v2649
      %2654 = vst [vmem:[#allocation9 + $0x18] sm:$0xff] %v2650
      %s2655 = scalar_lea.vmem [#allocation5], 4
      %v2656 = vld [vmem:[%s2655] sm:$0xf]
      %v2657 = vld [vmem:[%s2655 + $0x4] sm:$0xf]
      %v2658 = vld [vmem:[%s2655 + $0x8] sm:$0xf]
      %v2659 = vld [vmem:[%s2655 + $0xc] sm:$0xf]
      %v2660 = vld [vmem:[#allocation9] sm:$0xff]
      %v2661 = vld [vmem:[#allocation9 + $0x8] sm:$0xff]
      %v2662 = vld [vmem:[#allocation9 + $0x10] sm:$0xff]
      %v2663 = vld [vmem:[#allocation9 + $0x18] sm:$0xff]
      %s2664 = scalar_lea.vmem %s3, 192
      %v2665 = vld [vmem:[%s2664] sm:$0xf]
      %v2666 = vld [vmem:[%s2664 + $0x4] sm:$0xf]
      %v2667 = vld [vmem:[%s2664 + $0x8] sm:$0xf]
      %v2668 = vld [vmem:[%s2664 + $0xc] sm:$0xf]
      %v2669 = vld [vmem:[%s2664 + $0x10] sm:$0xf]
      %v2670 = vld [vmem:[%s2664 + $0x14] sm:$0xf]
      %v2671 = vld [vmem:[%s2664 + $0x18] sm:$0xf]
      %v2672 = vld [vmem:[%s2664 + $0x1c] sm:$0xf]
      %v2673 = vld [vmem:[%s2664 + $0x20] sm:$0xf]
      %v2674 = vld [vmem:[%s2664 + $0x24] sm:$0xf]
      %v2675 = vld [vmem:[%s2664 + $0x28] sm:$0xf]
      %v2676 = vld [vmem:[%s2664 + $0x2c] sm:$0xf]
      %v2677 = vld [vmem:[%s2664 + $0x30] sm:$0xf]
      %v2678 = vld [vmem:[%s2664 + $0x34] sm:$0xf]
      %v2679 = vld [vmem:[%s2664 + $0x38] sm:$0xf]
      %v2680 = vld [vmem:[%s2664 + $0x3c] sm:$0xf]
      %v2685 = vunpack.c.l.b16 %v2656
      %v2686 = vunpack.c.l.b16 %v2657
      %v2687 = vunpack.c.l.b16 %v2658
      %v2688 = vunpack.c.l.b16 %v2659
      %v2689 = vpack.c.b16 %v2686, %v2685
      %v2690 = vpack.c.b16 %v2688, %v2687
      %v2709 = vunpack.c.l.b16 %v2665
      %v2710 = vunpack.c.l.b16 %v2666
      %v2711 = vunpack.c.l.b16 %v2667
      %v2712 = vunpack.c.l.b16 %v2668
      %v2713 = vunpack.c.l.b16 %v2669
      %v2714 = vunpack.c.l.b16 %v2670
      %v2715 = vunpack.c.l.b16 %v2671
      %v2716 = vunpack.c.l.b16 %v2672
      %v2717 = vunpack.c.l.b16 %v2673
      %v2718 = vunpack.c.l.b16 %v2674
      %v2719 = vunpack.c.l.b16 %v2675
      %v2720 = vunpack.c.l.b16 %v2676
      %v2721 = vunpack.c.l.b16 %v2677
      %v2722 = vunpack.c.l.b16 %v2678
      %v2723 = vunpack.c.l.b16 %v2679
      %v2724 = vunpack.c.l.b16 %v2680
      %v2725 = vpack.c.b16 %v2710, %v2709
      %v2726 = vpack.c.b16 %v2712, %v2711
      %v2727 = vpack.c.b16 %v2714, %v2713
      %v2728 = vpack.c.b16 %v2716, %v2715
      %v2729 = vpack.c.b16 %v2718, %v2717
      %v2730 = vpack.c.b16 %v2720, %v2719
      %v2731 = vpack.c.b16 %v2722, %v2721
      %v2732 = vpack.c.b16 %v2724, %v2723
      %2741 = vmatprep.subr.bf16.mxu0 0
      %2742 = vmatpush1.bf16.msra.mxu0 %v2725
      %2743 = vmatprep.subr.bf16.mxu0 0
      %2744 = vmatpush1.bf16.msra.mxu0 %v2726
      %2745 = vmatprep.subr.bf16.mxu0 0
      %2746 = vmatpush1.bf16.msra.mxu0 %v2727
      %2747 = vmatprep.subr.bf16.mxu0 0
      %2748 = vmatpush1.bf16.msra.mxu0 %v2728
      %2749 = vmatprep.subr.bf16.mxu0 0
      %2750 = vmatpush1.bf16.msra.mxu0 %v2729
      %2751 = vmatprep.subr.bf16.mxu0 0
      %2752 = vmatpush1.bf16.msra.mxu0 %v2730
      %2753 = vmatprep.subr.bf16.mxu0 0
      %2754 = vmatpush1.bf16.msra.mxu0 %v2731
      %2755 = vmatprep.subr.bf16.mxu0 0
      %2756 = vmatpush1.bf16.msra.mxu0 %v2732
      %2757 = vmatprep.subr.bf16.mxu0 0
      %2758 = vmatpush1.bf16.msra.mxu0 0
      %2759 = vmatprep.subr.bf16.mxu0 0
      %2760 = vmatpush1.bf16.msra.mxu0 0
      %2761 = vmatprep.subr.bf16.mxu0 0
      %2762 = vmatpush1.bf16.msra.mxu0 0
      %2763 = vmatprep.subr.bf16.mxu0 0
      %2764 = vmatpush1.bf16.msra.mxu0 0
      %2765 = vmatprep.subr.bf16.mxu0 0
      %2766 = vmatpush1.bf16.msra.mxu0 0
      %2767 = vmatprep.subr.bf16.mxu0 0
      %2768 = vmatpush1.bf16.msra.mxu0 0
      %2769 = vmatprep.subr.bf16.mxu0 0
      %2770 = vmatpush1.bf16.msra.mxu0 0
      %2771 = vmatprep.subr.bf16.mxu0 0
      %2772 = vmatpush1.bf16.msra.mxu0 0
      %2773 = vmatprep.mubr.bf16.mxu0 0
      %2774 = vmatmul.mubr.bf16.gmra.mrb[0].mxu0 %v2689
      %v2775 = vpop.f32.mrb[0].mxu0
      %v2776 = vadd.f32 0.0, %v2775
      %v2777 = vpop.f32.mrb[0].mxu0
      %v2778 = vpop.f32.mrb[0].mxu0
      %v2779 = vadd.f32 0.0, %v2778
      %v2780 = vpop.f32.mrb[0].mxu0
      %2781 = vmatprep.mubr.bf16.mxu0 0
      %2782 = vmatmul.mubr.bf16.gmra.mrb[0].mxu0 %v2690
      %v2783 = vpop.f32.mrb[0].mxu0
      %v2784 = vadd.f32 0.0, %v2783
      %v2785 = vpop.f32.mrb[0].mxu0
      %v2786 = vpop.f32.mrb[0].mxu0
      %v2787 = vadd.f32 0.0, %v2786
      %v2788 = vpop.f32.mrb[0].mxu0
      %2789 = vdwg.mxu0
      %v2790 = vadd.f32 %v2660, %v2776
      %v2791 = vadd.f32 %v2661, %v2779
      %v2792 = vadd.f32 %v2662, %v2784
      %v2793 = vadd.f32 %v2663, %v2787
      %2794 = vst [vmem:[#allocation9] sm:$0xff] %v2790
      %2795 = vst [vmem:[#allocation9 + $0x8] sm:$0xff] %v2791
      %2796 = vst [vmem:[#allocation9 + $0x10] sm:$0xff] %v2792
      %2797 = vst [vmem:[#allocation9 + $0x18] sm:$0xff] %v2793
      %s2798 = scalar_lea.vmem [#allocation6], 4
      %v2799 = vld [vmem:[%s2798] sm:$0xf]
      %v2800 = vld [vmem:[%s2798 + $0x4] sm:$0xf]
      %v2801 = vld [vmem:[%s2798 + $0x8] sm:$0xf]
      %v2802 = vld [vmem:[%s2798 + $0xc] sm:$0xf]
      %v2803 = vld [vmem:[#allocation9] sm:$0xff]
      %v2804 = vld [vmem:[#allocation9 + $0x8] sm:$0xff]
      %v2805 = vld [vmem:[#allocation9 + $0x10] sm:$0xff]
      %v2806 = vld [vmem:[#allocation9 + $0x18] sm:$0xff]
      %s2807 = scalar_lea.vmem %s3, 256
      %v2808 = vld [vmem:[%s2807] sm:$0xf]
      %v2809 = vld [vmem:[%s2807 + $0x4] sm:$0xf]
      %v2810 = vld [vmem:[%s2807 + $0x8] sm:$0xf]
      %v2811 = vld [vmem:[%s2807 + $0xc] sm:$0xf]
      %v2812 = vld [vmem:[%s2807 + $0x10] sm:$0xf]
      %v2813 = vld [vmem:[%s2807 + $0x14] sm:$0xf]
      %v2814 = vld [vmem:[%s2807 + $0x18] sm:$0xf]
      %v2815 = vld [vmem:[%s2807 + $0x1c] sm:$0xf]
      %v2816 = vld [vmem:[%s2807 + $0x20] sm:$0xf]
      %v2817 = vld [vmem:[%s2807 + $0x24] sm:$0xf]
      %v2818 = vld [vmem:[%s2807 + $0x28] sm:$0xf]
      %v2819 = vld [vmem:[%s2807 + $0x2c] sm:$0xf]
      %v2820 = vld [vmem:[%s2807 + $0x30] sm:$0xf]
      %v2821 = vld [vmem:[%s2807 + $0x34] sm:$0xf]
      %v2822 = vld [vmem:[%s2807 + $0x38] sm:$0xf]
      %v2823 = vld [vmem:[%s2807 + $0x3c] sm:$0xf]
      %v2828 = vunpack.c.l.b16 %v2799
      %v2829 = vunpack.c.l.b16 %v2800
      %v2830 = vunpack.c.l.b16 %v2801
      %v2831 = vunpack.c.l.b16 %v2802
      %v2832 = vpack.c.b16 %v2829, %v2828
      %v2833 = vpack.c.b16 %v2831, %v2830
      %v2852 = vunpack.c.l.b16 %v2808
      %v2853 = vunpack.c.l.b16 %v2809
      %v2854 = vunpack.c.l.b16 %v2810
      %v2855 = vunpack.c.l.b16 %v2811
      %v2856 = vunpack.c.l.b16 %v2812
      %v2857 = vunpack.c.l.b16 %v2813
      %v2858 = vunpack.c.l.b16 %v2814
      %v2859 = vunpack.c.l.b16 %v2815
      %v2860 = vunpack.c.l.b16 %v2816
      %v2861 = vunpack.c.l.b16 %v2817
      %v2862 = vunpack.c.l.b16 %v2818
      %v2863 = vunpack.c.l.b16 %v2819
      %v2864 = vunpack.c.l.b16 %v2820
      %v2865 = vunpack.c.l.b16 %v2821
      %v2866 = vunpack.c.l.b16 %v2822
      %v2867 = vunpack.c.l.b16 %v2823
      %v2868 = vpack.c.b16 %v2853, %v2852
      %v2869 = vpack.c.b16 %v2855, %v2854
      %v2870 = vpack.c.b16 %v2857, %v2856
      %v2871 = vpack.c.b16 %v2859, %v2858
      %v2872 = vpack.c.b16 %v2861, %v2860
      %v2873 = vpack.c.b16 %v2863, %v2862
      %v2874 = vpack.c.b16 %v2865, %v2864
      %v2875 = vpack.c.b16 %v2867, %v2866
      %2884 = vmatprep.subr.bf16.mxu0 0
      %2885 = vmatpush1.bf16.msra.mxu0 %v2868
      %2886 = vmatprep.subr.bf16.mxu0 0
      %2887 = vmatpush1.bf16.msra.mxu0 %v2869
      %2888 = vmatprep.subr.bf16.mxu0 0
      %2889 = vmatpush1.bf16.msra.mxu0 %v2870
      %2890 = vmatprep.subr.bf16.mxu0 0
      %2891 = vmatpush1.bf16.msra.mxu0 %v2871
      %2892 = vmatprep.subr.bf16.mxu0 0
      %2893 = vmatpush1.bf16.msra.mxu0 %v2872
      %2894 = vmatprep.subr.bf16.mxu0 0
      %2895 = vmatpush1.bf16.msra.mxu0 %v2873
      %2896 = vmatprep.subr.bf16.mxu0 0
      %2897 = vmatpush1.bf16.msra.mxu0 %v2874
      %2898 = vmatprep.subr.bf16.mxu0 0
      %2899 = vmatpush1.bf16.msra.mxu0 %v2875
      %2900 = vmatprep.subr.bf16.mxu0 0
      %2901 = vmatpush1.bf16.msra.mxu0 0
      %2902 = vmatprep.subr.bf16.mxu0 0
      %2903 = vmatpush1.bf16.msra.mxu0 0
      %2904 = vmatprep.subr.bf16.mxu0 0
      %2905 = vmatpush1.bf16.msra.mxu0 0
      %2906 = vmatprep.subr.bf16.mxu0 0
      %2907 = vmatpush1.bf16.msra.mxu0 0
      %2908 = vmatprep.subr.bf16.mxu0 0
      %2909 = vmatpush1.bf16.msra.mxu0 0
      %2910 = vmatprep.subr.bf16.mxu0 0
      %2911 = vmatpush1.bf16.msra.mxu0 0
      %2912 = vmatprep.subr.bf16.mxu0 0
      %2913 = vmatpush1.bf16.msra.mxu0 0
      %2914 = vmatprep.subr.bf16.mxu0 0
      %2915 = vmatpush1.bf16.msra.mxu0 0
      %2916 = vmatprep.mubr.bf16.mxu0 0
      %2917 = vmatmul.mubr.bf16.gmra.mrb[0].mxu0 %v2832
      %v2918 = vpop.f32.mrb[0].mxu0
      %v2919 = vadd.f32 0.0, %v2918
      %v2920 = vpop.f32.mrb[0].mxu0
      %v2921 = vpop.f32.mrb[0].mxu0
      %v2922 = vadd.f32 0.0, %v2921
      %v2923 = vpop.f32.mrb[0].mxu0
      %2924 = vmatprep.mubr.bf16.mxu0 0
      %2925 = vmatmul.mubr.bf16.gmra.mrb[0].mxu0 %v2833
      %v2926 = vpop.f32.mrb[0].mxu0
      %v2927 = vadd.f32 0.0, %v2926
      %v2928 = vpop.f32.mrb[0].mxu0
      %v2929 = vpop.f32.mrb[0].mxu0
      %v2930 = vadd.f32 0.0, %v2929
      %v2931 = vpop.f32.mrb[0].mxu0
      %2932 = vdwg.mxu0
      %v2933 = vadd.f32 %v2803, %v2919
      %v2934 = vadd.f32 %v2804, %v2922
      %v2935 = vadd.f32 %v2805, %v2927
      %v2936 = vadd.f32 %v2806, %v2930
      %2937 = vst [vmem:[#allocation9] sm:$0xff] %v2933
      %2938 = vst [vmem:[#allocation9 + $0x8] sm:$0xff] %v2934
      %2939 = vst [vmem:[#allocation9 + $0x10] sm:$0xff] %v2935
      %2940 = vst [vmem:[#allocation9 + $0x18] sm:$0xff] %v2936
      %s2941 = scalar_lea.vmem [#allocation7], 4
      %v2942 = vld [vmem:[%s2941] sm:$0xf]
      %v2943 = vld [vmem:[%s2941 + $0x4] sm:$0xf]
      %v2944 = vld [vmem:[%s2941 + $0x8] sm:$0xf]
      %v2945 = vld [vmem:[%s2941 + $0xc] sm:$0xf]
      %v2946 = vld [vmem:[#allocation9] sm:$0xff]
      %v2947 = vld [vmem:[#allocation9 + $0x8] sm:$0xff]
      %v2948 = vld [vmem:[#allocation9 + $0x10] sm:$0xff]
      %v2949 = vld [vmem:[#allocation9 + $0x18] sm:$0xff]
      %s2950 = scalar_lea.vmem %s3, 320
      %v2951 = vld [vmem:[%s2950] sm:$0xf]
      %v2952 = vld [vmem:[%s2950 + $0x4] sm:$0xf]
      %v2953 = vld [vmem:[%s2950 + $0x8] sm:$0xf]
      %v2954 = vld [vmem:[%s2950 + $0xc] sm:$0xf]
      %v2955 = vld [vmem:[%s2950 + $0x10] sm:$0xf]
      %v2956 = vld [vmem:[%s2950 + $0x14] sm:$0xf]
      %v2957 = vld [vmem:[%s2950 + $0x18] sm:$0xf]
      %v2958 = vld [vmem:[%s2950 + $0x1c] sm:$0xf]
      %v2959 = vld [vmem:[%s2950 + $0x20] sm:$0xf]
      %v2960 = vld [vmem:[%s2950 + $0x24] sm:$0xf]
      %v2961 = vld [vmem:[%s2950 + $0x28] sm:$0xf]
      %v2962 = vld [vmem:[%s2950 + $0x2c] sm:$0xf]
      %v2963 = vld [vmem:[%s2950 + $0x30] sm:$0xf]
      %v2964 = vld [vmem:[%s2950 + $0x34] sm:$0xf]
      %v2965 = vld [vmem:[%s2950 + $0x38] sm:$0xf]
      %v2966 = vld [vmem:[%s2950 + $0x3c] sm:$0xf]
      %v2971 = vunpack.c.l.b16 %v2942
      %v2972 = vunpack.c.l.b16 %v2943
      %v2973 = vunpack.c.l.b16 %v2944
      %v2974 = vunpack.c.l.b16 %v2945
      %v2975 = vpack.c.b16 %v2972, %v2971
      %v2976 = vpack.c.b16 %v2974, %v2973
      %v2995 = vunpack.c.l.b16 %v2951
      %v2996 = vunpack.c.l.b16 %v2952
      %v2997 = vunpack.c.l.b16 %v2953
      %v2998 = vunpack.c.l.b16 %v2954
      %v2999 = vunpack.c.l.b16 %v2955
      %v3000 = vunpack.c.l.b16 %v2956
      %v3001 = vunpack.c.l.b16 %v2957
      %v3002 = vunpack.c.l.b16 %v2958
      %v3003 = vunpack.c.l.b16 %v2959
      %v3004 = vunpack.c.l.b16 %v2960
      %v3005 = vunpack.c.l.b16 %v2961
      %v3006 = vunpack.c.l.b16 %v2962
      %v3007 = vunpack.c.l.b16 %v2963
      %v3008 = vunpack.c.l.b16 %v2964
      %v3009 = vunpack.c.l.b16 %v2965
      %v3010 = vunpack.c.l.b16 %v2966
      %v3011 = vpack.c.b16 %v2996, %v2995
      %v3012 = vpack.c.b16 %v2998, %v2997
      %v3013 = vpack.c.b16 %v3000, %v2999
      %v3014 = vpack.c.b16 %v3002, %v3001
      %v3015 = vpack.c.b16 %v3004, %v3003
      %v3016 = vpack.c.b16 %v3006, %v3005
      %v3017 = vpack.c.b16 %v3008, %v3007
      %v3018 = vpack.c.b16 %v3010, %v3009
      %3027 = vmatprep.subr.bf16.mxu0 0
      %3028 = vmatpush1.bf16.msra.mxu0 %v3011
      %3029 = vmatprep.subr.bf16.mxu0 0
      %3030 = vmatpush1.bf16.msra.mxu0 %v3012
      %3031 = vmatprep.subr.bf16.mxu0 0
      %3032 = vmatpush1.bf16.msra.mxu0 %v3013
      %3033 = vmatprep.subr.bf16.mxu0 0
      %3034 = vmatpush1.bf16.msra.mxu0 %v3014
      %3035 = vmatprep.subr.bf16.mxu0 0
      %3036 = vmatpush1.bf16.msra.mxu0 %v3015
      %3037 = vmatprep.subr.bf16.mxu0 0
      %3038 = vmatpush1.bf16.msra.mxu0 %v3016
      %3039 = vmatprep.subr.bf16.mxu0 0
      %3040 = vmatpush1.bf16.msra.mxu0 %v3017
      %3041 = vmatprep.subr.bf16.mxu0 0
      %3042 = vmatpush1.bf16.msra.mxu0 %v3018
      %3043 = vmatprep.subr.bf16.mxu0 0
      %3044 = vmatpush1.bf16.msra.mxu0 0
      %3045 = vmatprep.subr.bf16.mxu0 0
      %3046 = vmatpush1.bf16.msra.mxu0 0
      %3047 = vmatprep.subr.bf16.mxu0 0
      %3048 = vmatpush1.bf16.msra.mxu0 0
      %3049 = vmatprep.subr.bf16.mxu0 0
      %3050 = vmatpush1.bf16.msra.mxu0 0
      %3051 = vmatprep.subr.bf16.mxu0 0
      %3052 = vmatpush1.bf16.msra.mxu0 0
      %3053 = vmatprep.subr.bf16.mxu0 0
      %3054 = vmatpush1.bf16.msra.mxu0 0
      %3055 = vmatprep.subr.bf16.mxu0 0
      %3056 = vmatpush1.bf16.msra.mxu0 0
      %3057 = vmatprep.subr.bf16.mxu0 0
      %3058 = vmatpush1.bf16.msra.mxu0 0
      %3059 = vmatprep.mubr.bf16.mxu0 0
      %3060 = vmatmul.mubr.bf16.gmra.mrb[0].mxu0 %v2975
      %v3061 = vpop.f32.mrb[0].mxu0
      %v3062 = vadd.f32 0.0, %v3061
      %v3063 = vpop.f32.mrb[0].mxu0
      %v3064 = vpop.f32.mrb[0].mxu0
      %v3065 = vadd.f32 0.0, %v3064
      %v3066 = vpop.f32.mrb[0].mxu0
      %3067 = vmatprep.mubr.bf16.mxu0 0
      %3068 = vmatmul.mubr.bf16.gmra.mrb[0].mxu0 %v2976
      %v3069 = vpop.f32.mrb[0].mxu0
      %v3070 = vadd.f32 0.0, %v3069
      %v3071 = vpop.f32.mrb[0].mxu0
      %v3072 = vpop.f32.mrb[0].mxu0
      %v3073 = vadd.f32 0.0, %v3072
      %v3074 = vpop.f32.mrb[0].mxu0
      %3075 = vdwg.mxu0
      %v3076 = vadd.f32 %v2946, %v3062
      %v3077 = vadd.f32 %v2947, %v3065
      %v3078 = vadd.f32 %v2948, %v3070
      %v3079 = vadd.f32 %v2949, %v3073
      %3080 = vst [vmem:[#allocation9] sm:$0xff] %v3076
      %3081 = vst [vmem:[#allocation9 + $0x8] sm:$0xff] %v3077
      %3082 = vst [vmem:[#allocation9 + $0x10] sm:$0xff] %v3078
      %3083 = vst [vmem:[#allocation9 + $0x18] sm:$0xff] %v3079
      %s3084 = scalar_lea.vmem [#allocation5], 8
      %v3085 = vld [vmem:[%s3084] sm:$0xf]
      %v3086 = vld [vmem:[%s3084 + $0x4] sm:$0xf]
      %v3087 = vld [vmem:[%s3084 + $0x8] sm:$0xf]
      %v3088 = vld [vmem:[%s3084 + $0xc] sm:$0xf]
      %v3089 = vld [vmem:[#allocation9] sm:$0xff]
      %v3090 = vld [vmem:[#allocation9 + $0x8] sm:$0xff]
      %v3091 = vld [vmem:[#allocation9 + $0x10] sm:$0xff]
      %v3092 = vld [vmem:[#allocation9 + $0x18] sm:$0xff]
      %s3093 = scalar_lea.vmem %s3, 384
      %v3094 = vld [vmem:[%s3093] sm:$0xf]
      %v3095 = vld [vmem:[%s3093 + $0x4] sm:$0xf]
      %v3096 = vld [vmem:[%s3093 + $0x8] sm:$0xf]
      %v3097 = vld [vmem:[%s3093 + $0xc] sm:$0xf]
      %v3098 = vld [vmem:[%s3093 + $0x10] sm:$0xf]
      %v3099 = vld [vmem:[%s3093 + $0x14] sm:$0xf]
      %v3100 = vld [vmem:[%s3093 + $0x18] sm:$0xf]
      %v3101 = vld [vmem:[%s3093 + $0x1c] sm:$0xf]
      %v3102 = vld [vmem:[%s3093 + $0x20] sm:$0xf]
      %v3103 = vld [vmem:[%s3093 + $0x24] sm:$0xf]
      %v3104 = vld [vmem:[%s3093 + $0x28] sm:$0xf]
      %v3105 = vld [vmem:[%s3093 + $0x2c] sm:$0xf]
      %v3106 = vld [vmem:[%s3093 + $0x30] sm:$0xf]
      %v3107 = vld [vmem:[%s3093 + $0x34] sm:$0xf]
      %v3108 = vld [vmem:[%s3093 + $0x38] sm:$0xf]
      %v3109 = vld [vmem:[%s3093 + $0x3c] sm:$0xf]
      %v3114 = vunpack.c.l.b16 %v3085
      %v3115 = vunpack.c.l.b16 %v3086
      %v3116 = vunpack.c.l.b16 %v3087
      %v3117 = vunpack.c.l.b16 %v3088
      %v3118 = vpack.c.b16 %v3115, %v3114
      %v3119 = vpack.c.b16 %v3117, %v3116
      %v3138 = vunpack.c.l.b16 %v3094
      %v3139 = vunpack.c.l.b16 %v3095
      %v3140 = vunpack.c.l.b16 %v3096
      %v3141 = vunpack.c.l.b16 %v3097
      %v3142 = vunpack.c.l.b16 %v3098
      %v3143 = vunpack.c.l.b16 %v3099
      %v3144 = vunpack.c.l.b16 %v3100
      %v3145 = vunpack.c.l.b16 %v3101
      %v3146 = vunpack.c.l.b16 %v3102
      %v3147 = vunpack.c.l.b16 %v3103
      %v3148 = vunpack.c.l.b16 %v3104
      %v3149 = vunpack.c.l.b16 %v3105
      %v3150 = vunpack.c.l.b16 %v3106
      %v3151 = vunpack.c.l.b16 %v3107
      %v3152 = vunpack.c.l.b16 %v3108
      %v3153 = vunpack.c.l.b16 %v3109
      %v3154 = vpack.c.b16 %v3139, %v3138
      %v3155 = vpack.c.b16 %v3141, %v3140
      %v3156 = vpack.c.b16 %v3143, %v3142
      %v3157 = vpack.c.b16 %v3145, %v3144
      %v3158 = vpack.c.b16 %v3147, %v3146
      %v3159 = vpack.c.b16 %v3149, %v3148
      %v3160 = vpack.c.b16 %v3151, %v3150
      %v3161 = vpack.c.b16 %v3153, %v3152
      %3170 = vmatprep.subr.bf16.mxu0 0
      %3171 = vmatpush1.bf16.msra.mxu0 %v3154
      %3172 = vmatprep.subr.bf16.mxu0 0
      %3173 = vmatpush1.bf16.msra.mxu0 %v3155
      %3174 = vmatprep.subr.bf16.mxu0 0
      %3175 = vmatpush1.bf16.msra.mxu0 %v3156
      %3176 = vmatprep.subr.bf16.mxu0 0
      %3177 = vmatpush1.bf16.msra.mxu0 %v3157
      %3178 = vmatprep.subr.bf16.mxu0 0
      %3179 = vmatpush1.bf16.msra.mxu0 %v3158
      %3180 = vmatprep.subr.bf16.mxu0 0
      %3181 = vmatpush1.bf16.msra.mxu0 %v3159
      %3182 = vmatprep.subr.bf16.mxu0 0
      %3183 = vmatpush1.bf16.msra.mxu0 %v3160
      %3184 = vmatprep.subr.bf16.mxu0 0
      %3185 = vmatpush1.bf16.msra.mxu0 %v3161
      %3186 = vmatprep.subr.bf16.mxu0 0
      %3187 = vmatpush1.bf16.msra.mxu0 0
      %3188 = vmatprep.subr.bf16.mxu0 0
      %3189 = vmatpush1.bf16.msra.mxu0 0
      %3190 = vmatprep.subr.bf16.mxu0 0
      %3191 = vmatpush1.bf16.msra.mxu0 0
      %3192 = vmatprep.subr.bf16.mxu0 0
      %3193 = vmatpush1.bf16.msra.mxu0 0
      %3194 = vmatprep.subr.bf16.mxu0 0
      %3195 = vmatpush1.bf16.msra.mxu0 0
      %3196 = vmatprep.subr.bf16.mxu0 0
      %3197 = vmatpush1.bf16.msra.mxu0 0
      %3198 = vmatprep.subr.bf16.mxu0 0
      %3199 = vmatpush1.bf16.msra.mxu0 0
      %3200 = vmatprep.subr.bf16.mxu0 0
      %3201 = vmatpush1.bf16.msra.mxu0 0
      %3202 = vmatprep.mubr.bf16.mxu0 0
      %3203 = vmatmul.mubr.bf16.gmra.mrb[0].mxu0 %v3118
      %v3204 = vpop.f32.mrb[0].mxu0
      %v3205 = vadd.f32 0.0, %v3204
      %v3206 = vpop.f32.mrb[0].mxu0
      %v3207 = vpop.f32.mrb[0].mxu0
      %v3208 = vadd.f32 0.0, %v3207
      %v3209 = vpop.f32.mrb[0].mxu0
      %3210 = vmatprep.mubr.bf16.mxu0 0
      %3211 = vmatmul.mubr.bf16.gmra.mrb[0].mxu0 %v3119
      %v3212 = vpop.f32.mrb[0].mxu0
      %v3213 = vadd.f32 0.0, %v3212
      %v3214 = vpop.f32.mrb[0].mxu0
      %v3215 = vpop.f32.mrb[0].mxu0
      %v3216 = vadd.f32 0.0, %v3215
      %v3217 = vpop.f32.mrb[0].mxu0
      %3218 = vdwg.mxu0
      %v3219 = vadd.f32 %v3089, %v3205
      %v3220 = vadd.f32 %v3090, %v3208
      %v3221 = vadd.f32 %v3091, %v3213
      %v3222 = vadd.f32 %v3092, %v3216
      %3223 = vst [vmem:[#allocation9] sm:$0xff] %v3219
      %3224 = vst [vmem:[#allocation9 + $0x8] sm:$0xff] %v3220
      %3225 = vst [vmem:[#allocation9 + $0x10] sm:$0xff] %v3221
      %3226 = vst [vmem:[#allocation9 + $0x18] sm:$0xff] %v3222
      %s3227 = scalar_lea.vmem [#allocation6], 8
      %v3228 = vld [vmem:[%s3227] sm:$0xf]
      %v3229 = vld [vmem:[%s3227 + $0x4] sm:$0xf]
      %v3230 = vld [vmem:[%s3227 + $0x8] sm:$0xf]
      %v3231 = vld [vmem:[%s3227 + $0xc] sm:$0xf]
      %v3232 = vld [vmem:[#allocation9] sm:$0xff]
      %v3233 = vld [vmem:[#allocation9 + $0x8] sm:$0xff]
      %v3234 = vld [vmem:[#allocation9 + $0x10] sm:$0xff]
      %v3235 = vld [vmem:[#allocation9 + $0x18] sm:$0xff]
      %s3236 = scalar_lea.vmem %s3, 448
      %v3237 = vld [vmem:[%s3236] sm:$0xf]
      %v3238 = vld [vmem:[%s3236 + $0x4] sm:$0xf]
      %v3239 = vld [vmem:[%s3236 + $0x8] sm:$0xf]
      %v3240 = vld [vmem:[%s3236 + $0xc] sm:$0xf]
      %v3241 = vld [vmem:[%s3236 + $0x10] sm:$0xf]
      %v3242 = vld [vmem:[%s3236 + $0x14] sm:$0xf]
      %v3243 = vld [vmem:[%s3236 + $0x18] sm:$0xf]
      %v3244 = vld [vmem:[%s3236 + $0x1c] sm:$0xf]
      %v3245 = vld [vmem:[%s3236 + $0x20] sm:$0xf]
      %v3246 = vld [vmem:[%s3236 + $0x24] sm:$0xf]
      %v3247 = vld [vmem:[%s3236 + $0x28] sm:$0xf]
      %v3248 = vld [vmem:[%s3236 + $0x2c] sm:$0xf]
      %v3249 = vld [vmem:[%s3236 + $0x30] sm:$0xf]
      %v3250 = vld [vmem:[%s3236 + $0x34] sm:$0xf]
      %v3251 = vld [vmem:[%s3236 + $0x38] sm:$0xf]
      %v3252 = vld [vmem:[%s3236 + $0x3c] sm:$0xf]
      %v3257 = vunpack.c.l.b16 %v3228
      %v3258 = vunpack.c.l.b16 %v3229
      %v3259 = vunpack.c.l.b16 %v3230
      %v3260 = vunpack.c.l.b16 %v3231
      %v3261 = vpack.c.b16 %v3258, %v3257
      %v3262 = vpack.c.b16 %v3260, %v3259
      %v3281 = vunpack.c.l.b16 %v3237
      %v3282 = vunpack.c.l.b16 %v3238
      %v3283 = vunpack.c.l.b16 %v3239
      %v3284 = vunpack.c.l.b16 %v3240
      %v3285 = vunpack.c.l.b16 %v3241
      %v3286 = vunpack.c.l.b16 %v3242
      %v3287 = vunpack.c.l.b16 %v3243
      %v3288 = vunpack.c.l.b16 %v3244
      %v3289 = vunpack.c.l.b16 %v3245
      %v3290 = vunpack.c.l.b16 %v3246
      %v3291 = vunpack.c.l.b16 %v3247
      %v3292 = vunpack.c.l.b16 %v3248
      %v3293 = vunpack.c.l.b16 %v3249
      %v3294 = vunpack.c.l.b16 %v3250
      %v3295 = vunpack.c.l.b16 %v3251
      %v3296 = vunpack.c.l.b16 %v3252
      %v3297 = vpack.c.b16 %v3282, %v3281
      %v3298 = vpack.c.b16 %v3284, %v3283
      %v3299 = vpack.c.b16 %v3286, %v3285
      %v3300 = vpack.c.b16 %v3288, %v3287
      %v3301 = vpack.c.b16 %v3290, %v3289
      %v3302 = vpack.c.b16 %v3292, %v3291
      %v3303 = vpack.c.b16 %v3294, %v3293
      %v3304 = vpack.c.b16 %v3296, %v3295
      %3313 = vmatprep.subr.bf16.mxu0 0
      %3314 = vmatpush1.bf16.msra.mxu0 %v3297
      %3315 = vmatprep.subr.bf16.mxu0 0
      %3316 = vmatpush1.bf16.msra.mxu0 %v3298
      %3317 = vmatprep.subr.bf16.mxu0 0
      %3318 = vmatpush1.bf16.msra.mxu0 %v3299
      %3319 = vmatprep.subr.bf16.mxu0 0
      %3320 = vmatpush1.bf16.msra.mxu0 %v3300
      %3321 = vmatprep.subr.bf16.mxu0 0
      %3322 = vmatpush1.bf16.msra.mxu0 %v3301
      %3323 = vmatprep.subr.bf16.mxu0 0
      %3324 = vmatpush1.bf16.msra.mxu0 %v3302
      %3325 = vmatprep.subr.bf16.mxu0 0
      %3326 = vmatpush1.bf16.msra.mxu0 %v3303
      %3327 = vmatprep.subr.bf16.mxu0 0
      %3328 = vmatpush1.bf16.msra.mxu0 %v3304
      %3329 = vmatprep.subr.bf16.mxu0 0
      %3330 = vmatpush1.bf16.msra.mxu0 0
      %3331 = vmatprep.subr.bf16.mxu0 0
      %3332 = vmatpush1.bf16.msra.mxu0 0
      %3333 = vmatprep.subr.bf16.mxu0 0
      %3334 = vmatpush1.bf16.msra.mxu0 0
      %3335 = vmatprep.subr.bf16.mxu0 0
      %3336 = vmatpush1.bf16.msra.mxu0 0
      %3337 = vmatprep.subr.bf16.mxu0 0
      %3338 = vmatpush1.bf16.msra.mxu0 0
      %3339 = vmatprep.subr.bf16.mxu0 0
      %3340 = vmatpush1.bf16.msra.mxu0 0
      %3341 = vmatprep.subr.bf16.mxu0 0
      %3342 = vmatpush1.bf16.msra.mxu0 0
      %3343 = vmatprep.subr.bf16.mxu0 0
      %3344 = vmatpush1.bf16.msra.mxu0 0
      %3345 = vmatprep.mubr.bf16.mxu0 0
      %3346 = vmatmul.mubr.bf16.gmra.mrb[0].mxu0 %v3261
      %v3347 = vpop.f32.mrb[0].mxu0
      %v3348 = vadd.f32 0.0, %v3347
      %v3349 = vpop.f32.mrb[0].mxu0
      %v3350 = vpop.f32.mrb[0].mxu0
      %v3351 = vadd.f32 0.0, %v3350
      %v3352 = vpop.f32.mrb[0].mxu0
      %3353 = vmatprep.mubr.bf16.mxu0 0
      %3354 = vmatmul.mubr.bf16.gmra.mrb[0].mxu0 %v3262
      %v3355 = vpop.f32.mrb[0].mxu0
      %v3356 = vadd.f32 0.0, %v3355
      %v3357 = vpop.f32.mrb[0].mxu0
      %v3358 = vpop.f32.mrb[0].mxu0
      %v3359 = vadd.f32 0.0, %v3358
      %v3360 = vpop.f32.mrb[0].mxu0
      %3361 = vdwg.mxu0
      %v3362 = vadd.f32 %v3232, %v3348
      %v3363 = vadd.f32 %v3233, %v3351
      %v3364 = vadd.f32 %v3234, %v3356
      %v3365 = vadd.f32 %v3235, %v3359
      %3366 = vst [vmem:[#allocation9] sm:$0xff] %v3362
      %3367 = vst [vmem:[#allocation9 + $0x8] sm:$0xff] %v3363
      %3368 = vst [vmem:[#allocation9 + $0x10] sm:$0xff] %v3364
      %3369 = vst [vmem:[#allocation9 + $0x18] sm:$0xff] %v3365
      %s3370 = scalar_lea.vmem [#allocation7], 8
      %v3371 = vld [vmem:[%s3370] sm:$0xf]
      %v3372 = vld [vmem:[%s3370 + $0x4] sm:$0xf]
      %v3373 = vld [vmem:[%s3370 + $0x8] sm:$0xf]
      %v3374 = vld [vmem:[%s3370 + $0xc] sm:$0xf]
      %v3375 = vld [vmem:[#allocation9] sm:$0xff]
      %v3376 = vld [vmem:[#allocation9 + $0x8] sm:$0xff]
      %v3377 = vld [vmem:[#allocation9 + $0x10] sm:$0xff]
      %v3378 = vld [vmem:[#allocation9 + $0x18] sm:$0xff]
      %s3379 = scalar_lea.vmem %s3, 512
      %v3380 = vld [vmem:[%s3379] sm:$0xf]
      %v3381 = vld [vmem:[%s3379 + $0x4] sm:$0xf]
      %v3382 = vld [vmem:[%s3379 + $0x8] sm:$0xf]
      %v3383 = vld [vmem:[%s3379 + $0xc] sm:$0xf]
      %v3384 = vld [vmem:[%s3379 + $0x10] sm:$0xf]
      %v3385 = vld [vmem:[%s3379 + $0x14] sm:$0xf]
      %v3386 = vld [vmem:[%s3379 + $0x18] sm:$0xf]
      %v3387 = vld [vmem:[%s3379 + $0x1c] sm:$0xf]
      %v3388 = vld [vmem:[%s3379 + $0x20] sm:$0xf]
      %v3389 = vld [vmem:[%s3379 + $0x24] sm:$0xf]
      %v3390 = vld [vmem:[%s3379 + $0x28] sm:$0xf]
      %v3391 = vld [vmem:[%s3379 + $0x2c] sm:$0xf]
      %v3392 = vld [vmem:[%s3379 + $0x30] sm:$0xf]
      %v3393 = vld [vmem:[%s3379 + $0x34] sm:$0xf]
      %v3394 = vld [vmem:[%s3379 + $0x38] sm:$0xf]
      %v3395 = vld [vmem:[%s3379 + $0x3c] sm:$0xf]
      %v3400 = vunpack.c.l.b16 %v3371
      %v3401 = vunpack.c.l.b16 %v3372
      %v3402 = vunpack.c.l.b16 %v3373
      %v3403 = vunpack.c.l.b16 %v3374
      %v3404 = vpack.c.b16 %v3401, %v3400
      %v3405 = vpack.c.b16 %v3403, %v3402
      %v3424 = vunpack.c.l.b16 %v3380
      %v3425 = vunpack.c.l.b16 %v3381
      %v3426 = vunpack.c.l.b16 %v3382
      %v3427 = vunpack.c.l.b16 %v3383
      %v3428 = vunpack.c.l.b16 %v3384
      %v3429 = vunpack.c.l.b16 %v3385
      %v3430 = vunpack.c.l.b16 %v3386
      %v3431 = vunpack.c.l.b16 %v3387
      %v3432 = vunpack.c.l.b16 %v3388
      %v3433 = vunpack.c.l.b16 %v3389
      %v3434 = vunpack.c.l.b16 %v3390
      %v3435 = vunpack.c.l.b16 %v3391
      %v3436 = vunpack.c.l.b16 %v3392
      %v3437 = vunpack.c.l.b16 %v3393
      %v3438 = vunpack.c.l.b16 %v3394
      %v3439 = vunpack.c.l.b16 %v3395
      %v3440 = vpack.c.b16 %v3425, %v3424
      %v3441 = vpack.c.b16 %v3427, %v3426
      %v3442 = vpack.c.b16 %v3429, %v3428
      %v3443 = vpack.c.b16 %v3431, %v3430
      %v3444 = vpack.c.b16 %v3433, %v3432
      %v3445 = vpack.c.b16 %v3435, %v3434
      %v3446 = vpack.c.b16 %v3437, %v3436
      %v3447 = vpack.c.b16 %v3439, %v3438
      %3456 = vmatprep.subr.bf16.mxu0 0
      %3457 = vmatpush1.bf16.msra.mxu0 %v3440
      %3458 = vmatprep.subr.bf16.mxu0 0
      %3459 = vmatpush1.bf16.msra.mxu0 %v3441
      %3460 = vmatprep.subr.bf16.mxu0 0
      %3461 = vmatpush1.bf16.msra.mxu0 %v3442
      %3462 = vmatprep.subr.bf16.mxu0 0
      %3463 = vmatpush1.bf16.msra.mxu0 %v3443
      %3464 = vmatprep.subr.bf16.mxu0 0
      %3465 = vmatpush1.bf16.msra.mxu0 %v3444
      %3466 = vmatprep.subr.bf16.mxu0 0
      %3467 = vmatpush1.bf16.msra.mxu0 %v3445
      %3468 = vmatprep.subr.bf16.mxu0 0
      %3469 = vmatpush1.bf16.msra.mxu0 %v3446
      %3470 = vmatprep.subr.bf16.mxu0 0
      %3471 = vmatpush1.bf16.msra.mxu0 %v3447
      %3472 = vmatprep.subr.bf16.mxu0 0
      %3473 = vmatpush1.bf16.msra.mxu0 0
      %3474 = vmatprep.subr.bf16.mxu0 0
      %3475 = vmatpush1.bf16.msra.mxu0 0
      %3476 = vmatprep.subr.bf16.mxu0 0
      %3477 = vmatpush1.bf16.msra.mxu0 0
      %3478 = vmatprep.subr.bf16.mxu0 0
      %3479 = vmatpush1.bf16.msra.mxu0 0
      %3480 = vmatprep.subr.bf16.mxu0 0
      %3481 = vmatpush1.bf16.msra.mxu0 0
      %3482 = vmatprep.subr.bf16.mxu0 0
      %3483 = vmatpush1.bf16.msra.mxu0 0
      %3484 = vmatprep.subr.bf16.mxu0 0
      %3485 = vmatpush1.bf16.msra.mxu0 0
      %3486 = vmatprep.subr.bf16.mxu0 0
      %3487 = vmatpush1.bf16.msra.mxu0 0
      %3488 = vmatprep.mubr.bf16.mxu0 0
      %3489 = vmatmul.mubr.bf16.gmra.mrb[0].mxu0 %v3404
      %v3490 = vpop.f32.mrb[0].mxu0
      %v3491 = vadd.f32 0.0, %v3490
      %v3492 = vpop.f32.mrb[0].mxu0
      %v3493 = vpop.f32.mrb[0].mxu0
      %v3494 = vadd.f32 0.0, %v3493
      %v3495 = vpop.f32.mrb[0].mxu0
      %3496 = vmatprep.mubr.bf16.mxu0 0
      %3497 = vmatmul.mubr.bf16.gmra.mrb[0].mxu0 %v3405
      %v3498 = vpop.f32.mrb[0].mxu0
      %v3499 = vadd.f32 0.0, %v3498
      %v3500 = vpop.f32.mrb[0].mxu0
      %v3501 = vpop.f32.mrb[0].mxu0
      %v3502 = vadd.f32 0.0, %v3501
      %v3503 = vpop.f32.mrb[0].mxu0
      %3504 = vdwg.mxu0
      %v3505 = vadd.f32 %v3375, %v3491
      %v3506 = vadd.f32 %v3376, %v3494
      %v3507 = vadd.f32 %v3377, %v3499
      %v3508 = vadd.f32 %v3378, %v3502
      %3509 = vst [vmem:[#allocation9] sm:$0xff] %v3505
      %3510 = vst [vmem:[#allocation9 + $0x8] sm:$0xff] %v3506
      %3511 = vst [vmem:[#allocation9 + $0x10] sm:$0xff] %v3507
      %3512 = vst [vmem:[#allocation9 + $0x18] sm:$0xff] %v3508
      %v3513 = vld [vmem:[%s251] sm:$0xf]
      %v3514 = vld [vmem:[%s251 + $0x4] sm:$0xf]
      %v3515 = vld [vmem:[%s251 + $0x8] sm:$0xf]
      %v3516 = vld [vmem:[%s251 + $0xc] sm:$0xf]
      %v3517 = vld [vmem:[#allocation9] sm:$0xff]
      %v3518 = vld [vmem:[#allocation9 + $0x8] sm:$0xff]
      %v3519 = vld [vmem:[#allocation9 + $0x10] sm:$0xff]
      %v3520 = vld [vmem:[#allocation9 + $0x18] sm:$0xff]
      %v3521 = vld [vmem:[%s4] sm:$0x1]
      %v3523 = vlaneseq
      %v3524 = vshrl.u32 %v3523, 7
      %v3525 = vsub.s32 0, %v3524
      %v3526 = vrot.slane %v3521, %v3525
      %v3528 = vadd.f32 %v3517, %v3526
      %v3529 = vadd.f32 %v3518, %v3526
      %v3530 = vadd.f32 %v3519, %v3526
      %v3531 = vadd.f32 %v3520, %v3526
      %v3532 = vunpack.c.l.bf16 %v3513
      %v3533 = vunpack.c.l.bf16 %v3514
      %v3534 = vunpack.c.l.bf16 %v3515
      %v3535 = vunpack.c.l.bf16 %v3516
      %v3536 = vadd.f32 %v3528, %v3532
      %v3537 = vadd.f32 %v3529, %v3533
      %v3538 = vadd.f32 %v3530, %v3534
      %v3539 = vadd.f32 %v3531, %v3535
      %v3540 = vmax.f32 %v3536, 0.0
      %v3541 = vmax.f32 %v3537, 0.0
      %v3542 = vmax.f32 %v3538, 0.0
      %v3543 = vmax.f32 %v3539, 0.0
      %v3544 = vpack.c.bf16 %v3540, %v3540
      %v3545 = vpack.c.bf16 %v3541, %v3541
      %v3546 = vpack.c.bf16 %v3542, %v3542
      %v3547 = vpack.c.bf16 %v3543, %v3543
      %3548 = vst [vmem:[%s246] sm:$0xf] %v3544
      %3549 = vst [vmem:[%s246 + $0x4] sm:$0xf] %v3545
      %3550 = vst [vmem:[%s246 + $0x8] sm:$0xf] %v3546
      %3551 = vst [vmem:[%s246 + $0xc] sm:$0xf] %v3547
      %s3552 = smul.u32 4, %s21
      %p3553 = scmp.lt.s32.totalorder %s20, 1
      %s3554 = scalar_select %p3553, %s20, 1
      %p3555 = scmp.lt.s32.totalorder %s3552, 7
      %s3556 = scalar_select %p3555, %s3552, 7
      %s3557 = smul.addr %s3554, 8
      %s3558 = sadd.s32 %s3556, %s3557
      %s3559 = smul.addr %s3558, 4
      %s3560 = scalar_lea.vmem %s5, %s3559
      // Predicated region
      $region65: #{_forward_impl.1} parent=39 // pred_check
        %p3561 = pneg %p158
      $region66: #{_forward_impl.1} parent=39 // pred_check_branch
        %3563 = sbr.rel (%p3561) target = $region68
      $region67: #{_forward_impl.1} parent=39 // pred_region
        %s3564 = smul.u32 4, %s21
      $region68: #{_forward_impl.1} parent=39 // pred_fallthru
        _
    $region40: #{_forward_impl.1} parent=5 // pred_fallthru
      _
    %p3565 = scmp.le.s32.totalorder 2, %s11
    // Predicated region
    $region69: #{_forward_impl.1} parent=5 // pred_check
      %p3566 = pneg %p3565
    $region70: #{_forward_impl.1} parent=5 // pred_check_branch
      %3568 = sbr.rel (%p3566) target = $region72
    $region71: #{_forward_impl.1} parent=5 // pred_region
      %s3569 = ssub.s32 %s11, 2
      // Predicated region
      $region73: #{_forward_impl.1} parent=71 // pred_check
        %p3570 = pneg %p164
      $region74: #{_forward_impl.1} parent=71 // pred_check_branch
        %3572 = sbr.rel (%p3570) target = $region76
      $region75: #{_forward_impl.1} parent=71 // pred_region
        %s3573 = smul.u32 4, %s23
        %p3574 = scmp.lt.s32.totalorder %s22, 1
        %s3575 = scalar_select %p3574, %s22, 1
        %p3576 = scmp.lt.s32.totalorder %s3573, 7
        %s3577 = scalar_select %p3576, %s3573, 7
        %s3578 = smul.addr %s3575, 8
        %s3579 = sadd.s32 %s3577, %s3578
        %s3580 = smul.addr %s3579, 4
        %s3581 = scalar_lea.vmem %s5, %s3580
      $region76: #{_forward_impl.1} parent=71 // pred_fallthru
        _
    $region72: #{_forward_impl.1} parent=5 // pred_fallthru
      _
  $region6: #{_forward_impl.1} parent=0 // loop_footer
    %s15 = sadd.s32 1, %s11
  $region7: #{_forward_impl.1} parent=0 // loop_footer_branch
    %10 = sbr.rel target = $region3
  $region8: #{_forward_impl.1} parent=0 // loop_exit
    _

// kernel: tile.13
$region0: #{tile.13}
  #allocation0 [shape = 's32[1]{0}', space=sflag, size = 0x4, scoped, tag = 'scoped memory for tile.13']
  %s0 = inlined_call_operand.vmem [shape: f32[16], index: 0, kind: input, shape index: {}]
  %s1 = inlined_call_operand.vmem [shape: f32[8,16], index: 1, kind: output, shape index: {}]
  // Predicated region
  $region2: #{tile.13} parent=0 // pred_check
    _
  $region3: #{tile.13} parent=0 // pred_check_branch
    %3 = sbr.rel (0) target = $region5
  $region4: #{tile.13} parent=0 // pred_region
    _
  $region5: #{tile.13} parent=0 // pred_fallthru
    _
  %v4 = vld [vmem:[%s0] ss:$0 sm:$0xff]
  %5 = vst [vmem:[%s1] sm:$0xff] %v4

// kernel: tile.14
$region0: #{tile.14}
  %s0 = inlined_call_operand.vmem [shape: f32[8,16], index: 0, kind: input, shape index: {}]
  %s1 = inlined_call_operand.vmem [shape: f32[1,128], index: 1, kind: output, shape index: {}]
  $region1: #{tile.14} parent=0
    #allocation0 [shape = 'u8[4096]{0}', space=vmem, size = 0x1000, scoped, tag = 'scoped mem for output reshape']
    %v2 = vld [vmem:[%s0] sm:$0x1]
    %vm3 = vcmask 130048
    %4 = vst.msk [vmem:[#allocation0] sm:$0x1] %vm3, %v2
    %s5 = scalar_lea.vmem %s0, 7
    %v6 = vld [vmem:[%s5] sm:$0x1]
    %7 = vrot.lane.b32.xlu0 %v6, 112
    %v8 = vpop.permute.xlu0 %7
    %vm9 = vcmask 1048448
    %10 = vst.msk [vmem:[#allocation0] sm:$0x1] %vm9, %v8
    %s11 = scalar_lea.vmem %s0, 6
    %v12 = vld [vmem:[%s11] sm:$0x1]
    %13 = vrot.lane.b32.xlu0 %v12, 96
    %v14 = vpop.permute.xlu0 %13
    %vm15 = vcmask 917248
    %16 = vst.msk [vmem:[#allocation0] sm:$0x1] %vm15, %v14
    %s17 = scalar_lea.vmem %s0, 5
    %v18 = vld [vmem:[%s17] sm:$0x1]
    %19 = vrot.lane.b32.xlu0 %v18, 80
    %v20 = vpop.permute.xlu0 %19
    %vm21 = vcmask 786048
    %22 = vst.msk [vmem:[#allocation0] sm:$0x1] %vm21, %v20
    %s23 = scalar_lea.vmem %s0, 4
    %v24 = vld [vmem:[%s23] sm:$0x1]
    %25 = vrot.lane.b32.xlu0 %v24, 64
    %v26 = vpop.permute.xlu0 %25
    %vm27 = vcmask 654848
    %28 = vst.msk [vmem:[#allocation0] sm:$0x1] %vm27, %v26
    %s29 = scalar_lea.vmem %s0, 3
    %v30 = vld [vmem:[%s29] sm:$0x1]
    %31 = vrot.lane.b32.xlu0 %v30, 48
    %v32 = vpop.permute.xlu0 %31
    %vm33 = vcmask 523648
    %34 = vst.msk [vmem:[#allocation0] sm:$0x1] %vm33, %v32
    %s35 = scalar_lea.vmem %s0, 2
    %v36 = vld [vmem:[%s35] sm:$0x1]
    %37 = vrot.lane.b32.xlu0 %v36, 32
    %v38 = vpop.permute.xlu0 %37
    %vm39 = vcmask 392448
    %40 = vst.msk [vmem:[#allocation0] sm:$0x1] %vm39, %v38
    %s41 = scalar_lea.vmem %s0, 1
    %v42 = vld [vmem:[%s41] sm:$0x1]
    %43 = vrot.lane.b32.xlu0 %v42, 16
    %v44 = vpop.permute.xlu0 %43
    %vm45 = vcmask 261248
    %46 = vst.msk [vmem:[#allocation0] sm:$0x1] %vm45, %v44
    %s48 = sshllo.u32 0, 1
    %v50 = vld [vmem:[#allocation0] sm:%s48]
    %s51 = sshllo.u32 0, 1
    %52 = vst [vmem:[%s1] sm:%s51] %v50

// kernel: _forward_impl.1
$region0: #{_forward_impl.1}
  #allocation0 [shape = 'u32[]', space=smem, size = 0x4, offset = 0x4, fixed_abs, tag = 'smem constant byte address 0x4 - core index']
  #allocation1 [shape = 'u32[144,128]{1,0:T(1,128)}', space=vmem, size = 0x12000, scoped, tag = 'internal scratch']
  #allocation2 [shape = 'bf16[8,8,128]{2,1,0:T(8,128)(2,1)}', space=vmem, size = 0x4000, scoped, tag = 'scratch operand']
  #allocation3 [shape = 'bf16[8,8,128]{2,1,0:T(8,128)(2,1)}', space=vmem, size = 0x4000, scoped, tag = 'scratch operand']
  #allocation4 [shape = 'bf16[8,8,128]{2,1,0:T(8,128)(2,1)}', space=vmem, size = 0x4000, scoped, tag = 'scratch operand']
  #allocation5 [shape = 'bf16[6,8,128]{2,1,0:T(8,128)(2,1)}', space=vmem, size = 0x3000, scoped, tag = 'scratch operand']
  #allocation6 [shape = 'bf16[6,8,128]{2,1,0:T(8,128)(2,1)}', space=vmem, size = 0x3000, scoped, tag = 'scratch operand']
  #allocation7 [shape = 'bf16[6,8,128]{2,1,0:T(8,128)(2,1)}', space=vmem, size = 0x3000, scoped, tag = 'scratch operand']
  #allocation8 [shape = 'f32[48,128]{1,0:T(8,128)}', space=vmem, size = 0x6000, scoped, tag = 'scratch operand']
  #allocation9 [shape = 'f32[32,128]{1,0:T(8,128)}', space=vmem, size = 0x4000, scoped, tag = 'scratch operand']
  %s0 = inlined_call_operand.vmem [shape: bf16[2,8,8,128], index: 0, kind: input, shape index: {}]
  %s1 = inlined_call_operand.vmem [shape: bf16[3,3,128,128], index: 1, kind: input, shape index: {}]
  %s2 = inlined_call_operand.vmem [shape: f32[1,128], index: 2, kind: input, shape index: {}]
  %s3 = inlined_call_operand.vmem [shape: bf16[3,3,128,128], index: 3, kind: input, shape index: {}]
  %s4 = inlined_call_operand.vmem [shape: f32[1,128], index: 4, kind: input, shape index: {}]
  %s5 = inlined_call_operand.vmem [shape: bf16[2,8,8,128], index: 5, kind: output, shape index: {}]
  %s6 = sld [smem:[#allocation0]]
  $region77: #{_forward_impl.1} parent=0
    _
  %s8 = ssub.s32 1, %s6
  %s9 = scalar_select 0, %s8, %s6
  loop: start=0, step=1, limit=6
  $region2: #{_forward_impl.1} parent=0 // loop_pre_header
    _
  $region3: #{_forward_impl.1} parent=0 // loop_header
    %s11 = sphi 0, %s15
    %p12 = scmp.ge.s32.totalorder %s11, 6
    %s18 = sphi 0, %s30
    %s19 = sphi 0, %s26
    %s20 = sphi 0, %s18
    %s21 = sphi 0, %s19
    %s22 = sphi 0, %s20
    %s23 = sphi 0, %s21
    %s33 = sphi 0, %s35
    %s36 = sphi 0, %s33
    %s37 = sphi 0, %s36
    %s53 = sphi 0, %s37
    %s57 = sphi 0, %s57
    %s59 = sphi 0, %s57
    %s60 = sphi 0, %s59
    %s74 = sphi 0, %s60
    %s78 = sphi 0, %s78
    %s80 = sphi 0, %s78
    %s81 = sphi 0, %s80
    %s95 = sphi 0, %s81
    %s99 = sphi 0, %s99
    %s101 = sphi 0, %s99
    %s102 = sphi 0, %s101
    %s116 = sphi 0, %s102
    %s120 = sphi 0, %s120
    %s122 = sphi 0, %s120
    %s123 = sphi 0, %s122
    %s137 = sphi 0, %s123
    %s145 = sphi 0, %s147
    %s148 = sphi 0, %s145
    %s149 = sphi 0, %s148
    %s165 = sphi 0, %s149
  $region4: #{_forward_impl.1} parent=0 // loop_header_branch
    %14 = sbr.rel (%p12) target = $region8
  $region5: #{_forward_impl.1} parent=0 // loop_body
    %s16 = ssub.s32 %s11, 1
    %s17 = ssub.s32 %s11, 2
    %s24 = sadd.s32 1, %s19
    %p25 = scmp.ge.s32.totalorder %s24, 2
    %s26 = scalar_select %p25, 0, %s24
    %s27 = sadd.s32 1, %s18
    %s28 = scalar_select %p25, %s27, %s18
    %p29 = scmp.ge.s32.totalorder %s28, 2
    %s30 = scalar_select %p29, 0, %s28
    %s31 = ssub.s32 %s18, %s30
    %p32 = scmp.eq.s32.totalorder %s31, 0
    %s34 = sadd.s32 %s33, 1
    %s35 = scalar_select %p32, %s33, %s34
    %p38 = pneg %p32
    %p39 = scmp.eq.s32.totalorder %s11, 3
    %p40 = por %p38, %p39
    %p41 = scmp.ne.s32.totalorder %s33, %s36
    %p42 = scmp.eq.s32.totalorder %s11, 0
    %p43 = por %p41, %p42
    %p44 = scmp.ne.s32.totalorder %s33, %s36
    %p45 = scmp.eq.s32.totalorder %s16, 3
    %p46 = por %p44, %p45
    %p47 = scmp.ne.s32.totalorder %s36, %s37
    %p48 = scmp.eq.s32.totalorder %s16, 0
    %p49 = por %p47, %p48
    %p50 = scmp.ne.s32.totalorder %s36, %s37
    %p51 = scmp.eq.s32.totalorder %s17, 3
    %p52 = por %p50, %p51
    %p54 = scmp.ne.s32.totalorder %s37, %s53
    %p55 = scmp.eq.s32.totalorder %s17, 0
    %p56 = por %p54, %p55
    %s58 = sadd.s32 %s57, 1
    %p61 = scmp.eq.s32.totalorder %s11, 3
    %p62 = scmp.ne.s32.totalorder %s57, %s59
    %p63 = scmp.eq.s32.totalorder %s11, 0
    %p64 = por %p62, %p63
    %p65 = scmp.ne.s32.totalorder %s57, %s59
    %p66 = scmp.eq.s32.totalorder %s16, 3
    %p67 = por %p65, %p66
    %p68 = scmp.ne.s32.totalorder %s59, %s60
    %p69 = scmp.eq.s32.totalorder %s16, 0
    %p70 = por %p68, %p69
    %p71 = scmp.ne.s32.totalorder %s59, %s60
    %p72 = scmp.eq.s32.totalorder %s17, 3
    %p73 = por %p71, %p72
    %p75 = scmp.ne.s32.totalorder %s60, %s74
    %p76 = scmp.eq.s32.totalorder %s17, 0
    %p77 = por %p75, %p76
    %s79 = sadd.s32 %s78, 1
    %p82 = scmp.eq.s32.totalorder %s11, 3
    %p83 = scmp.ne.s32.totalorder %s78, %s80
    %p84 = scmp.eq.s32.totalorder %s11, 0
    %p85 = por %p83, %p84
    %p86 = scmp.ne.s32.totalorder %s78, %s80
    %p87 = scmp.eq.s32.totalorder %s16, 3
    %p88 = por %p86, %p87
    %p89 = scmp.ne.s32.totalorder %s80, %s81
    %p90 = scmp.eq.s32.totalorder %s16, 0
    %p91 = por %p89, %p90
    %p92 = scmp.ne.s32.totalorder %s80, %s81
    %p93 = scmp.eq.s32.totalorder %s17, 3
    %p94 = por %p92, %p93
    %p96 = scmp.ne.s32.totalorder %s81, %s95
    %p97 = scmp.eq.s32.totalorder %s17, 0
    %p98 = por %p96, %p97
    %s100 = sadd.s32 %s99, 1
    %p103 = scmp.eq.s32.totalorder %s11, 3
    %p104 = scmp.ne.s32.totalorder %s99, %s101
    %p105 = scmp.eq.s32.totalorder %s11, 0
    %p106 = por %p104, %p105
    %p107 = scmp.ne.s32.totalorder %s99, %s101
    %p108 = scmp.eq.s32.totalorder %s16, 3
    %p109 = por %p107, %p108
    %p110 = scmp.ne.s32.totalorder %s101, %s102
    %p111 = scmp.eq.s32.totalorder %s16, 0
    %p112 = por %p110, %p111
    %p113 = scmp.ne.s32.totalorder %s101, %s102
    %p114 = scmp.eq.s32.totalorder %s17, 3
    %p115 = por %p113, %p114
    %p117 = scmp.ne.s32.totalorder %s102, %s116
    %p118 = scmp.eq.s32.totalorder %s17, 0
    %p119 = por %p117, %p118
    %s121 = sadd.s32 %s120, 1
    %p124 = scmp.eq.s32.totalorder %s11, 3
    %p125 = scmp.ne.s32.totalorder %s120, %s122
    %p126 = scmp.eq.s32.totalorder %s11, 0
    %p127 = por %p125, %p126
    %p128 = scmp.ne.s32.totalorder %s120, %s122
    %p129 = scmp.eq.s32.totalorder %s16, 3
    %p130 = por %p128, %p129
    %p131 = scmp.ne.s32.totalorder %s122, %s123
    %p132 = scmp.eq.s32.totalorder %s16, 0
    %p133 = por %p131, %p132
    %p134 = scmp.ne.s32.totalorder %s122, %s123
    %p135 = scmp.eq.s32.totalorder %s17, 3
    %p136 = por %p134, %p135
    %p138 = scmp.ne.s32.totalorder %s123, %s137
    %p139 = scmp.eq.s32.totalorder %s17, 0
    %p140 = por %p138, %p139
    %s141 = ssub.s32 %s18, %s30
    %s142 = ssub.s32 %s19, %s26
    %s143 = sor.u32 %s141, %s142
    %p144 = scmp.eq.s32.totalorder %s143, 0
    %s146 = sadd.s32 %s145, 1
    %s147 = scalar_select %p144, %s145, %s146
    %p150 = pneg %p144
    %p151 = scmp.eq.s32.totalorder %s11, 3
    %p152 = por %p150, %p151
    %p153 = scmp.ne.s32.totalorder %s145, %s148
    %p154 = scmp.eq.s32.totalorder %s11, 0
    %p155 = por %p153, %p154
    %p156 = scmp.ne.s32.totalorder %s145, %s148
    %p157 = scmp.eq.s32.totalorder %s16, 3
    %p158 = por %p156, %p157
    %p159 = scmp.ne.s32.totalorder %s148, %s149
    %p160 = scmp.eq.s32.totalorder %s16, 0
    %p161 = por %p159, %p160
    %p162 = scmp.ne.s32.totalorder %s148, %s149
    %p163 = scmp.eq.s32.totalorder %s17, 3
    %p164 = por %p162, %p163
    %p166 = scmp.ne.s32.totalorder %s149, %s165
    %p167 = scmp.eq.s32.totalorder %s17, 0
    %p168 = por %p166, %p167
    %p169 = scmp.le.s32.totalorder 1, %s11
    %p170 = scmp.lt.s32.totalorder %s11, 5
    %p171 = pnand %p169, %p170
    %p172 = pneg %p171
    // Predicated region
    $region9: #{_forward_impl.1} parent=5 // pred_check
      _
    $region10: #{_forward_impl.1} parent=5 // pred_check_branch
      %174 = sbr.rel (%p171) target = $region12
    $region11: #{_forward_impl.1} parent=5 // pred_region
      %s175 = ssub.s32 %s11, 1
      // Predicated region
      $region13: #{_forward_impl.1} parent=11 // pred_check
        %p176 = pneg %p70
      $region14: #{_forward_impl.1} parent=11 // pred_check_branch
        %178 = sbr.rel (%p176) target = $region16
      $region15: #{_forward_impl.1} parent=11 // pred_region
        _
      $region16: #{_forward_impl.1} parent=11 // pred_fallthru
        _
      // Predicated region
      $region17: #{_forward_impl.1} parent=11 // pred_check
        %p179 = pneg %p91
      $region18: #{_forward_impl.1} parent=11 // pred_check_branch
        %181 = sbr.rel (%p179) target = $region20
      $region19: #{_forward_impl.1} parent=11 // pred_region
        _
      $region20: #{_forward_impl.1} parent=11 // pred_fallthru
        _
      // Predicated region
      $region21: #{_forward_impl.1} parent=11 // pred_check
        %p182 = pneg %p112
      $region22: #{_forward_impl.1} parent=11 // pred_check_branch
        %184 = sbr.rel (%p182) target = $region24
      $region23: #{_forward_impl.1} parent=11 // pred_region
        _
      $region24: #{_forward_impl.1} parent=11 // pred_fallthru
        _
      // Predicated region
      $region25: #{_forward_impl.1} parent=11 // pred_check
        %p185 = pneg %p133
      $region26: #{_forward_impl.1} parent=11 // pred_check_branch
        %187 = sbr.rel (%p185) target = $region28
      $region27: #{_forward_impl.1} parent=11 // pred_region
        _
      $region28: #{_forward_impl.1} parent=11 // pred_fallthru
        _
    $region12: #{_forward_impl.1} parent=5 // pred_fallthru
      _
    %p188 = scmp.lt.s32.totalorder %s11, 4
    // Predicated region
    $region29: #{_forward_impl.1} parent=5 // pred_check
      %p189 = pneg %p188
    $region30: #{_forward_impl.1} parent=5 // pred_check_branch
      %191 = sbr.rel (%p189) target = $region32
    $region31: #{_forward_impl.1} parent=5 // pred_region
      // Predicated region
      $region33: #{_forward_impl.1} parent=31 // pred_check
        %p192 = pneg %p43
      $region34: #{_forward_impl.1} parent=31 // pred_check_branch
        %194 = sbr.rel (%p192) target = $region36
      $region35: #{_forward_impl.1} parent=31 // pred_region
        %p195 = scmp.lt.s32.totalorder %s18, 1
        %s196 = scalar_select %p195, %s18, 1
        %s197 = smul.addr %s196, 8
        %s198 = smul.addr %s197, 4
        %s199 = scalar_lea.vmem %s0, %s198
      $region36: #{_forward_impl.1} parent=31 // pred_fallthru
        _
    $region32: #{_forward_impl.1} parent=5 // pred_fallthru
      _
    %p200 = scmp.le.s32.totalorder 1, %s11
    %p201 = scmp.lt.s32.totalorder %s11, 5
    %p202 = pnand %p200, %p201
    %p203 = pneg %p202
    // Predicated region
    $region37: #{_forward_impl.1} parent=5 // pred_check
      _
    $region38: #{_forward_impl.1} parent=5 // pred_check_branch
      %205 = sbr.rel (%p202) target = $region40
    $region39: #{_forward_impl.1} parent=5 // pred_region
      %s206 = ssub.s32 %s11, 1
      %p207 = scmp.lt.s32.totalorder %s20, 1
      %s208 = scalar_select %p207, %s20, 1
      %s209 = smul.addr %s208, 8
      %s210 = smul.addr %s209, 4
      %s211 = scalar_lea.vmem %s0, %s210
      %p212 = pneg %p49
      %p213 = pneg %p46
      %p214 = pneg %p70
      %p215 = pneg %p67
      %p216 = pneg %p91
      %p217 = pneg %p88
      %p218 = pneg %p112
      %p219 = pneg %p109
      %p220 = pneg %p133
      %p221 = pneg %p130
      %p222 = pneg %p161
      %p223 = pneg %p158
      %s224 = smul.u32 4, %s21
      %p225 = scmp.lt.s32.totalorder %s20, 1
      %s226 = scalar_select %p225, %s20, 1
      %p227 = scmp.lt.s32.totalorder %s224, 7
      %s228 = scalar_select %p227, %s224, 7
      %s229 = smul.addr %s226, 8
      %s230 = sadd.s32 %s228, %s229
      %s231 = smul.addr %s230, 4
      %s232 = scalar_lea.vmem %s5, %s231
      %p233 = scmp.lt.s32.totalorder %s20, 1
      %s234 = scalar_select %p233, %s20, 1
      %s235 = smul.addr %s234, 8
      %s236 = smul.addr %s235, 4
      %s237 = scalar_lea.vmem %s0, %s236
      %s238 = smul.u32 4, %s21
      %p239 = scmp.lt.s32.totalorder %s20, 1
      %s240 = scalar_select %p239, %s20, 1
      %p241 = scmp.lt.s32.totalorder %s238, 7
      %s242 = scalar_select %p241, %s238, 7
      %s243 = smul.addr %s240, 8
      %s244 = sadd.s32 %s242, %s243
      %s245 = smul.addr %s244, 4
      %s246 = scalar_lea.vmem %s5, %s245
      %s247 = smul.u32 4, %s21
      %s249 = smul.u32 %s21, 4
      %s250 = smul.addr %s249, 4
      %s251 = scalar_lea.vmem %s237, %s250
      %v252 = vld [vmem:[%s251] sm:$0xf]
      %v253 = vld [vmem:[%s251 + $0x4] sm:$0xf]
      %v254 = vld [vmem:[%s251 + $0x8] sm:$0xf]
      %v255 = vld [vmem:[%s251 + $0xc] sm:$0xf]
      %s256 = scalar_lea.vmem [#allocation3], 8
      %257 = vst [vmem:[%s256] sm:$0xf] %v252
      %258 = vst [vmem:[%s256 + $0x4] sm:$0xf] %v253
      %259 = vst [vmem:[%s256 + $0x8] sm:$0xf] %v254
      %260 = vst [vmem:[%s256 + $0xc] sm:$0xf] %v255
      %v262 = vshrl.u32 %v252, 16
      %v264 = vrot.slane %v262, 7
      %v265 = vshll.u32 %v252, 16
      %v267 = vor.u32 %v264, %v265
      %v269 = vshrl.u32 %v253, 16
      %v271 = vrot.slane %v269, 7
      %v272 = vshll.u32 %v253, 16
      %v274 = vor.u32 %v271, %v272
      %v276 = vshrl.u32 %v254, 16
      %v278 = vrot.slane %v276, 7
      %v279 = vshll.u32 %v254, 16
      %v281 = vor.u32 %v278, %v279
      %v283 = vshrl.u32 %v255, 16
      %v285 = vrot.slane %v283, 7
      %v286 = vshll.u32 %v255, 16
      %v288 = vor.u32 %v285, %v286
      %s293 = scalar_lea.vmem [#allocation2], 8
      %vm294 = vcmask 1043456
      %vm295 = vsmask.f32 7938
      %vm296 = vmand %vm294, %vm295
      %v297 = vld [vmem:[%s293] sm:$0xf]
      %v298 = vsel %vm296, %v267, %v297
      %299 = vst [vmem:[%s293] sm:$0xf] %v298
      %v300 = vld [vmem:[%s293 + $0x4] sm:$0xf]
      %v301 = vsel %vm296, %v274, %v300
      %302 = vst [vmem:[%s293 + $0x4] sm:$0xf] %v301
      %v303 = vld [vmem:[%s293 + $0x8] sm:$0xf]
      %v304 = vsel %vm296, %v281, %v303
      %305 = vst [vmem:[%s293 + $0x8] sm:$0xf] %v304
      %v306 = vld [vmem:[%s293 + $0xc] sm:$0xf]
      %v307 = vsel %vm296, %v288, %v306
      %308 = vst [vmem:[%s293 + $0xc] sm:$0xf] %v307
      %vm309 = vcmask 1040384
      %vm310 = vsmask.f32 256
      %vm311 = vmand %vm309, %vm310
      %v312 = vld [vmem:[%s293] sm:$0x1]
      %v313 = vsel %vm311, 0, %v312
      %314 = vst [vmem:[%s293] sm:$0x1] %v313
      %v315 = vld [vmem:[%s293 + $0x4] sm:$0x1]
      %v316 = vsel %vm311, 0, %v315
      %317 = vst [vmem:[%s293 + $0x4] sm:$0x1] %v316
      %v318 = vld [vmem:[%s293 + $0x8] sm:$0x1]
      %v319 = vsel %vm311, 0, %v318
      %320 = vst [vmem:[%s293 + $0x8] sm:$0x1] %v319
      %v321 = vld [vmem:[%s293 + $0xc] sm:$0x1]
      %v322 = vsel %vm311, 0, %v321
      %323 = vst [vmem:[%s293 + $0xc] sm:$0x1] %v322
      %v324 = vrot.slane %v262, 4
      %v325 = vrot.slane %v265, 5
      %v326 = vor.u32 %v324, %v325
      %v327 = vrot.slane %v326, 4
      %v328 = vrot.slane %v269, 4
      %v329 = vrot.slane %v272, 5
      %v330 = vor.u32 %v328, %v329
      %v331 = vrot.slane %v330, 4
      %v332 = vrot.slane %v276, 4
      %v333 = vrot.slane %v279, 5
      %v334 = vor.u32 %v332, %v333
      %v335 = vrot.slane %v334, 4
      %v336 = vrot.slane %v283, 4
      %v337 = vrot.slane %v286, 5
      %v338 = vor.u32 %v336, %v337
      %v339 = vrot.slane %v338, 4
      %s344 = scalar_lea.vmem [#allocation4], 8
      %vm345 = vsmask.f32 3328
      %vm346 = vmand %vm294, %vm345
      %v347 = vld [vmem:[%s344] sm:$0xf]
      %v348 = vsel %vm346, %v327, %v347
      %349 = vst [vmem:[%s344] sm:$0xf] %v348
      %v350 = vld [vmem:[%s344 + $0x4] sm:$0xf]
      %v351 = vsel %vm346, %v331, %v350
      %352 = vst [vmem:[%s344 + $0x4] sm:$0xf] %v351
      %v353 = vld [vmem:[%s344 + $0x8] sm:$0xf]
      %v354 = vsel %vm346, %v335, %v353
      %355 = vst [vmem:[%s344 + $0x8] sm:$0xf] %v354
      %v356 = vld [vmem:[%s344 + $0xc] sm:$0xf]
      %v357 = vsel %vm346, %v339, %v356
      %358 = vst [vmem:[%s344 + $0xc] sm:$0xf] %v357
      %vm359 = vcmask 1043459
      %vm360 = vsmask.f32 7950
      %vm361 = vmand %vm359, %vm360
      %v362 = vld [vmem:[%s344] sm:$0x8]
      %v363 = vsel %vm361, 0, %v362
      %364 = vst [vmem:[%s344] sm:$0x8] %v363
      %v365 = vld [vmem:[%s344 + $0x4] sm:$0x8]
      %v366 = vsel %vm361, 0, %v365
      %367 = vst [vmem:[%s344 + $0x4] sm:$0x8] %v366
      %v368 = vld [vmem:[%s344 + $0x8] sm:$0x8]
      %v369 = vsel %vm361, 0, %v368
      %370 = vst [vmem:[%s344 + $0x8] sm:$0x8] %v369
      %v371 = vld [vmem:[%s344 + $0xc] sm:$0x8]
      %v372 = vsel %vm361, 0, %v371
      %373 = vst [vmem:[%s344 + $0xc] sm:$0x8] %v372
      %p374 = scmp.gt.s32.totalorder %s21, 0
      // Predicated region
      $region41: #{_forward_impl.1} parent=39 // pred_check
        %p375 = pneg %p374
      $region42: #{_forward_impl.1} parent=39 // pred_check_branch
        %377 = sbr.rel (%p375) target = $region44
      $region43: #{_forward_impl.1} parent=39 // pred_region
        %s378 = ssub.s32 %s249, 2
        %s379 = smul.addr %s378, 4
        %s380 = scalar_lea.vmem %s237, %s379
        %v381 = vld [vmem:[%s380] sm:$0xf]
        %v382 = vld [vmem:[%s380 + $0x4] sm:$0xf]
        %383 = vst [vmem:[#allocation3] sm:$0xf] %v381
        %384 = vst [vmem:[#allocation3 + $0x4] sm:$0xf] %v382
        %v386 = vshrl.u32 %v381, 16
        %v388 = vrot.slane %v386, 7
        %v389 = vshll.u32 %v381, 16
        %v391 = vor.u32 %v388, %v389
        %v393 = vshrl.u32 %v382, 16
        %v395 = vrot.slane %v393, 7
        %v396 = vshll.u32 %v382, 16
        %v398 = vor.u32 %v395, %v396
        %v401 = vld [vmem:[#allocation2] sm:$0xf]
        %v402 = vsel %vm296, %v391, %v401
        %403 = vst [vmem:[#allocation2] sm:$0xf] %v402
        %v404 = vld [vmem:[#allocation2 + $0x4] sm:$0xf]
        %v405 = vsel %vm296, %v398, %v404
        %406 = vst [vmem:[#allocation2 + $0x4] sm:$0xf] %v405
        %v407 = vld [vmem:[#allocation2] sm:$0x1]
        %v408 = vsel %vm311, 0, %v407
        %409 = vst [vmem:[#allocation2] sm:$0x1] %v408
        %v410 = vld [vmem:[#allocation2 + $0x4] sm:$0x1]
        %v411 = vsel %vm311, 0, %v410
        %412 = vst [vmem:[#allocation2 + $0x4] sm:$0x1] %v411
        %v413 = vrot.slane %v386, 4
        %v414 = vrot.slane %v389, 5
        %v415 = vor.u32 %v413, %v414
        %v416 = vrot.slane %v415, 4
        %v417 = vrot.slane %v393, 4
        %v418 = vrot.slane %v396, 5
        %v419 = vor.u32 %v417, %v418
        %v420 = vrot.slane %v419, 4
        %v423 = vld [vmem:[#allocation4] sm:$0xf]
        %v424 = vsel %vm346, %v416, %v423
        %425 = vst [vmem:[#allocation4] sm:$0xf] %v424
        %v426 = vld [vmem:[#allocation4 + $0x4] sm:$0xf]
        %v427 = vsel %vm346, %v420, %v426
        %428 = vst [vmem:[#allocation4 + $0x4] sm:$0xf] %v427
        %v429 = vld [vmem:[#allocation4] sm:$0x8]
        %v430 = vsel %vm361, 0, %v429
        %431 = vst [vmem:[#allocation4] sm:$0x8] %v430
        %v432 = vld [vmem:[#allocation4 + $0x4] sm:$0x8]
        %v433 = vsel %vm361, 0, %v432
        %434 = vst [vmem:[#allocation4 + $0x4] sm:$0x8] %v433
      $region44: #{_forward_impl.1} parent=39 // pred_fallthru
        _
      %p435 = scmp.eq.s32.totalorder %s21, 0
      // Predicated region
      $region45: #{_forward_impl.1} parent=39 // pred_check
        %p436 = pneg %p435
      $region46: #{_forward_impl.1} parent=39 // pred_check_branch
        %438 = sbr.rel (%p436) target = $region48
      $region47: #{_forward_impl.1} parent=39 // pred_region
        %439 = vst [vmem:[#allocation2] sm:$0xf] 0
        %440 = vst [vmem:[#allocation2 + $0x4] sm:$0xf] 0
        %441 = vst [vmem:[#allocation3] sm:$0xf] 0
        %442 = vst [vmem:[#allocation3 + $0x4] sm:$0xf] 0
        %443 = vst [vmem:[#allocation4] sm:$0xf] 0
        %444 = vst [vmem:[#allocation4 + $0x4] sm:$0xf] 0
      $region48: #{_forward_impl.1} parent=39 // pred_fallthru
        _
      %p445 = scmp.lt.s32.totalorder %s21, 1
      // Predicated region
      $region49: #{_forward_impl.1} parent=39 // pred_check
        %p446 = pneg %p445
      $region50: #{_forward_impl.1} parent=39 // pred_check_branch
        %448 = sbr.rel (%p446) target = $region52
      $region51: #{_forward_impl.1} parent=39 // pred_region
        %s449 = sadd.s32 %s249, 4
        %s450 = smul.addr %s449, 4
        %s451 = scalar_lea.vmem %s237, %s450
        %v452 = vld [vmem:[%s451] sm:$0xf]
        %v453 = vld [vmem:[%s451 + $0x4] sm:$0xf]
        %s454 = scalar_lea.vmem [#allocation3], 24
        %455 = vst [vmem:[%s454] sm:$0xf] %v452
        %456 = vst [vmem:[%s454 + $0x4] sm:$0xf] %v453
        %v458 = vshrl.u32 %v452, 16
        %v460 = vrot.slane %v458, 7
        %v461 = vshll.u32 %v452, 16
        %v463 = vor.u32 %v460, %v461
        %v465 = vshrl.u32 %v453, 16
        %v467 = vrot.slane %v465, 7
        %v468 = vshll.u32 %v453, 16
        %v470 = vor.u32 %v467, %v468
        %s473 = scalar_lea.vmem [#allocation2], 24
        %v474 = vld [vmem:[%s473] sm:$0xf]
        %v475 = vsel %vm296, %v463, %v474
        %476 = vst [vmem:[%s473] sm:$0xf] %v475
        %v477 = vld [vmem:[%s473 + $0x4] sm:$0xf]
        %v478 = vsel %vm296, %v470, %v477
        %479 = vst [vmem:[%s473 + $0x4] sm:$0xf] %v478
        %v480 = vld [vmem:[%s473] sm:$0x1]
        %v481 = vsel %vm311, 0, %v480
        %482 = vst [vmem:[%s473] sm:$0x1] %v481
        %v483 = vld [vmem:[%s473 + $0x4] sm:$0x1]
        %v484 = vsel %vm311, 0, %v483
        %485 = vst [vmem:[%s473 + $0x4] sm:$0x1] %v484
        %v486 = vrot.slane %v458, 4
        %v487 = vrot.slane %v461, 5
        %v488 = vor.u32 %v486, %v487
        %v489 = vrot.slane %v488, 4
        %v490 = vrot.slane %v465, 4
        %v491 = vrot.slane %v468, 5
        %v492 = vor.u32 %v490, %v491
        %v493 = vrot.slane %v492, 4
        %s496 = scalar_lea.vmem [#allocation4], 24
        %v497 = vld [vmem:[%s496] sm:$0xf]
        %v498 = vsel %vm346, %v489, %v497
        %499 = vst [vmem:[%s496] sm:$0xf] %v498
        %v500 = vld [vmem:[%s496 + $0x4] sm:$0xf]
        %v501 = vsel %vm346, %v493, %v500
        %502 = vst [vmem:[%s496 + $0x4] sm:$0xf] %v501
        %v503 = vld [vmem:[%s496] sm:$0x8]
        %v504 = vsel %vm361, 0, %v503
        %505 = vst [vmem:[%s496] sm:$0x8] %v504
        %v506 = vld [vmem:[%s496 + $0x4] sm:$0x8]
        %v507 = vsel %vm361, 0, %v506
        %508 = vst [vmem:[%s496 + $0x4] sm:$0x8] %v507
      $region52: #{_forward_impl.1} parent=39 // pred_fallthru
        _
      %p509 = scmp.eq.s32.totalorder %s21, 1
      // Predicated region
      $region53: #{_forward_impl.1} parent=39 // pred_check
        %p510 = pneg %p509
      $region54: #{_forward_impl.1} parent=39 // pred_check_branch
        %512 = sbr.rel (%p510) target = $region56
      $region55: #{_forward_impl.1} parent=39 // pred_region
        %s513 = scalar_lea.vmem [#allocation2], 24
        %514 = vst [vmem:[%s513] sm:$0xf] 0
        %515 = vst [vmem:[%s513 + $0x4] sm:$0xf] 0
        %s516 = scalar_lea.vmem [#allocation3], 24
        %517 = vst [vmem:[%s516] sm:$0xf] 0
        %518 = vst [vmem:[%s516 + $0x4] sm:$0xf] 0
        %s519 = scalar_lea.vmem [#allocation4], 24
        %520 = vst [vmem:[%s519] sm:$0xf] 0
        %521 = vst [vmem:[%s519 + $0x4] sm:$0xf] 0
      $region56: #{_forward_impl.1} parent=39 // pred_fallthru
        _
      %522 = vst [vmem:[#allocation8] sm:$0xff] 0.0
      %523 = vst [vmem:[#allocation8 + $0x8] sm:$0xff] 0.0
      %524 = vst [vmem:[#allocation8 + $0x10] sm:$0xff] 0.0
      %525 = vst [vmem:[#allocation8 + $0x18] sm:$0xff] 0.0
      %526 = vst [vmem:[#allocation8 + $0x20] sm:$0xff] 0.0
      %527 = vst [vmem:[#allocation8 + $0x28] sm:$0xff] 0.0
      %v528 = vld [vmem:[#allocation2] sm:$0xf]
      %v529 = vld [vmem:[#allocation2 + $0x4] sm:$0xf]
      %v530 = vld [vmem:[#allocation2 + $0x8] sm:$0xf]
      %v531 = vld [vmem:[#allocation2 + $0xc] sm:$0xf]
      %v532 = vld [vmem:[#allocation2 + $0x10] sm:$0xf]
      %v533 = vld [vmem:[#allocation2 + $0x14] sm:$0xf]
      %v534 = vld [vmem:[#allocation8] sm:$0xff]
      %v535 = vld [vmem:[#allocation8 + $0x8] sm:$0xff]
      %v536 = vld [vmem:[#allocation8 + $0x10] sm:$0xff]
      %v537 = vld [vmem:[#allocation8 + $0x18] sm:$0xff]
      %v538 = vld [vmem:[#allocation8 + $0x20] sm:$0xff]
      %v539 = vld [vmem:[#allocation8 + $0x28] sm:$0xff]
      %v540 = vld [vmem:[%s1] sm:$0xf]
      %v541 = vld [vmem:[%s1 + $0x4] sm:$0xf]
      %v542 = vld [vmem:[%s1 + $0x8] sm:$0xf]
      %v543 = vld [vmem:[%s1 + $0xc] sm:$0xf]
      %v544 = vld [vmem:[%s1 + $0x10] sm:$0xf]
      %v545 = vld [vmem:[%s1 + $0x14] sm:$0xf]
      %v546 = vld [vmem:[%s1 + $0x18] sm:$0xf]
      %v547 = vld [vmem:[%s1 + $0x1c] sm:$0xf]
      %v548 = vld [vmem:[%s1 + $0x20] sm:$0xf]
      %v549 = vld [vmem:[%s1 + $0x24] sm:$0xf]
      %v550 = vld [vmem:[%s1 + $0x28] sm:$0xf]
      %v551 = vld [vmem:[%s1 + $0x2c] sm:$0xf]
      %v552 = vld [vmem:[%s1 + $0x30] sm:$0xf]
      %v553 = vld [vmem:[%s1 + $0x34] sm:$0xf]
      %v554 = vld [vmem:[%s1 + $0x38] sm:$0xf]
      %v555 = vld [vmem:[%s1 + $0x3c] sm:$0xf]
      %v562 = vunpack.c.l.b16 %v528
      %v563 = vunpack.c.l.b16 %v529
      %v564 = vunpack.c.l.b16 %v530
      %v565 = vunpack.c.l.b16 %v531
      %v566 = vunpack.c.l.b16 %v532
      %v567 = vunpack.c.l.b16 %v533
      %v568 = vpack.c.b16 %v563, %v562
      %v569 = vpack.c.b16 %v565, %v564
      %v570 = vpack.c.b16 %v567, %v566
      %v590 = vunpack.c.l.b16 %v540
      %v591 = vunpack.c.l.b16 %v541
      %v592 = vunpack.c.l.b16 %v542
      %v593 = vunpack.c.l.b16 %v543
      %v594 = vunpack.c.l.b16 %v544
      %v595 = vunpack.c.l.b16 %v545
      %v596 = vunpack.c.l.b16 %v546
      %v597 = vunpack.c.l.b16 %v547
      %v598 = vunpack.c.l.b16 %v548
      %v599 = vunpack.c.l.b16 %v549
      %v600 = vunpack.c.l.b16 %v550
      %v601 = vunpack.c.l.b16 %v551
      %v602 = vunpack.c.l.b16 %v552
      %v603 = vunpack.c.l.b16 %v553
      %v604 = vunpack.c.l.b16 %v554
      %v605 = vunpack.c.l.b16 %v555
      %v606 = vpack.c.b16 %v591, %v590
      %v607 = vpack.c.b16 %v593, %v592
      %v608 = vpack.c.b16 %v595, %v594
      %v609 = vpack.c.b16 %v597, %v596
      %v610 = vpack.c.b16 %v599, %v598
      %v611 = vpack.c.b16 %v601, %v600
      %v612 = vpack.c.b16 %v603, %v602
      %v613 = vpack.c.b16 %v605, %v604
      %622 = vmatprep.subr.bf16.mxu0 0
      %623 = vmatpush1.bf16.msra.mxu0 %v606
      %624 = vmatprep.subr.bf16.mxu0 0
      %625 = vmatpush1.bf16.msra.mxu0 %v607
      %626 = vmatprep.subr.bf16.mxu0 0
      %627 = vmatpush1.bf16.msra.mxu0 %v608
      %628 = vmatprep.subr.bf16.mxu0 0
      %629 = vmatpush1.bf16.msra.mxu0 %v609
      %630 = vmatprep.subr.bf16.mxu0 0
      %631 = vmatpush1.bf16.msra.mxu0 %v610
      %632 = vmatprep.subr.bf16.mxu0 0
      %633 = vmatpush1.bf16.msra.mxu0 %v611
      %634 = vmatprep.subr.bf16.mxu0 0
      %635 = vmatpush1.bf16.msra.mxu0 %v612
      %636 = vmatprep.subr.bf16.mxu0 0
      %637 = vmatpush1.bf16.msra.mxu0 %v613
      %638 = vmatprep.subr.bf16.mxu0 0
      %639 = vmatpush1.bf16.msra.mxu0 0
      %640 = vmatprep.subr.bf16.mxu0 0
      %641 = vmatpush1.bf16.msra.mxu0 0
      %642 = vmatprep.subr.bf16.mxu0 0
      %643 = vmatpush1.bf16.msra.mxu0 0
      %644 = vmatprep.subr.bf16.mxu0 0
      %645 = vmatpush1.bf16.msra.mxu0 0
      %646 = vmatprep.subr.bf16.mxu0 0
      %647 = vmatpush1.bf16.msra.mxu0 0
      %648 = vmatprep.subr.bf16.mxu0 0
      %649 = vmatpush1.bf16.msra.mxu0 0
      %650 = vmatprep.subr.bf16.mxu0 0
      %651 = vmatpush1.bf16.msra.mxu0 0
      %652 = vmatprep.subr.bf16.mxu0 0
      %653 = vmatpush1.bf16.msra.mxu0 0
      %654 = vmatprep.mubr.bf16.mxu0 0
      %655 = vmatmul.mubr.bf16.gmra.mrb[0].mxu0 %v568
      %v656 = vpop.f32.mrb[0].mxu0
      %v657 = vadd.f32 0.0, %v656
      %v658 = vpop.f32.mrb[0].mxu0
      %v659 = vpop.f32.mrb[0].mxu0
      %v660 = vadd.f32 0.0, %v659
      %v661 = vpop.f32.mrb[0].mxu0
      %662 = vmatprep.mubr.bf16.mxu0 0
      %663 = vmatmul.mubr.bf16.gmra.mrb[0].mxu0 %v569
      %v664 = vpop.f32.mrb[0].mxu0
      %v665 = vadd.f32 0.0, %v664
      %v666 = vpop.f32.mrb[0].mxu0
      %v667 = vpop.f32.mrb[0].mxu0
      %v668 = vadd.f32 0.0, %v667
      %v669 = vpop.f32.mrb[0].mxu0
      %670 = vmatprep.mubr.bf16.mxu0 0
      %671 = vmatmul.mubr.bf16.gmra.mrb[0].mxu0 %v570
      %v672 = vpop.f32.mrb[0].mxu0
      %v673 = vadd.f32 0.0, %v672
      %v674 = vpop.f32.mrb[0].mxu0
      %v675 = vpop.f32.mrb[0].mxu0
      %v676 = vadd.f32 0.0, %v675
      %v677 = vpop.f32.mrb[0].mxu0
      %678 = vdwg.mxu0
      %v679 = vadd.f32 %v534, %v657
      %v680 = vadd.f32 %v535, %v660
      %v681 = vadd.f32 %v536, %v665
      %v682 = vadd.f32 %v537, %v668
      %v683 = vadd.f32 %v538, %v673
      %v684 = vadd.f32 %v539, %v676
      %685 = vst [vmem:[#allocation8] sm:$0xff] %v679
      %686 = vst [vmem:[#allocation8 + $0x8] sm:$0xff] %v680
      %687 = vst [vmem:[#allocation8 + $0x10] sm:$0xff] %v681
      %688 = vst [vmem:[#allocation8 + $0x18] sm:$0xff] %v682
      %689 = vst [vmem:[#allocation8 + $0x20] sm:$0xff] %v683
      %690 = vst [vmem:[#allocation8 + $0x28] sm:$0xff] %v684
      %v691 = vld [vmem:[#allocation3] sm:$0xf]
      %v692 = vld [vmem:[#allocation3 + $0x4] sm:$0xf]
      %v693 = vld [vmem:[#allocation3 + $0x8] sm:$0xf]
      %v694 = vld [vmem:[#allocation3 + $0xc] sm:$0xf]
      %v695 = vld [vmem:[#allocation3 + $0x10] sm:$0xf]
      %v696 = vld [vmem:[#allocation3 + $0x14] sm:$0xf]
      %v697 = vld [vmem:[#allocation8] sm:$0xff]
      %v698 = vld [vmem:[#allocation8 + $0x8] sm:$0xff]
      %v699 = vld [vmem:[#allocation8 + $0x10] sm:$0xff]
      %v700 = vld [vmem:[#allocation8 + $0x18] sm:$0xff]
      %v701 = vld [vmem:[#allocation8 + $0x20] sm:$0xff]
      %v702 = vld [vmem:[#allocation8 + $0x28] sm:$0xff]
      %s703 = scalar_lea.vmem %s1, 64
      %v704 = vld [vmem:[%s703] sm:$0xf]
      %v705 = vld [vmem:[%s703 + $0x4] sm:$0xf]
      %v706 = vld [vmem:[%s703 + $0x8] sm:$0xf]
      %v707 = vld [vmem:[%s703 + $0xc] sm:$0xf]
      %v708 = vld [vmem:[%s703 + $0x10] sm:$0xf]
      %v709 = vld [vmem:[%s703 + $0x14] sm:$0xf]
      %v710 = vld [vmem:[%s703 + $0x18] sm:$0xf]
      %v711 = vld [vmem:[%s703 + $0x1c] sm:$0xf]
      %v712 = vld [vmem:[%s703 + $0x20] sm:$0xf]
      %v713 = vld [vmem:[%s703 + $0x24] sm:$0xf]
      %v714 = vld [vmem:[%s703 + $0x28] sm:$0xf]
      %v715 = vld [vmem:[%s703 + $0x2c] sm:$0xf]
      %v716 = vld [vmem:[%s703 + $0x30] sm:$0xf]
      %v717 = vld [vmem:[%s703 + $0x34] sm:$0xf]
      %v718 = vld [vmem:[%s703 + $0x38] sm:$0xf]
      %v719 = vld [vmem:[%s703 + $0x3c] sm:$0xf]
      %v726 = vunpack.c.l.b16 %v691
      %v727 = vunpack.c.l.b16 %v692
      %v728 = vunpack.c.l.b16 %v693
      %v729 = vunpack.c.l.b16 %v694
      %v730 = vunpack.c.l.b16 %v695
      %v731 = vunpack.c.l.b16 %v696
      %v732 = vpack.c.b16 %v727, %v726
      %v733 = vpack.c.b16 %v729, %v728
      %v734 = vpack.c.b16 %v731, %v730
      %v754 = vunpack.c.l.b16 %v704
      %v755 = vunpack.c.l.b16 %v705
      %v756 = vunpack.c.l.b16 %v706
      %v757 = vunpack.c.l.b16 %v707
      %v758 = vunpack.c.l.b16 %v708
      %v759 = vunpack.c.l.b16 %v709
      %v760 = vunpack.c.l.b16 %v710
      %v761 = vunpack.c.l.b16 %v711
      %v762 = vunpack.c.l.b16 %v712
      %v763 = vunpack.c.l.b16 %v713
      %v764 = vunpack.c.l.b16 %v714
      %v765 = vunpack.c.l.b16 %v715
      %v766 = vunpack.c.l.b16 %v716
      %v767 = vunpack.c.l.b16 %v717
      %v768 = vunpack.c.l.b16 %v718
      %v769 = vunpack.c.l.b16 %v719
      %v770 = vpack.c.b16 %v755, %v754
      %v771 = vpack.c.b16 %v757, %v756
      %v772 = vpack.c.b16 %v759, %v758
      %v773 = vpack.c.b16 %v761, %v760
      %v774 = vpack.c.b16 %v763, %v762
      %v775 = vpack.c.b16 %v765, %v764
      %v776 = vpack.c.b16 %v767, %v766
      %v777 = vpack.c.b16 %v769, %v768
      %786 = vmatprep.subr.bf16.mxu0 0
      %787 = vmatpush1.bf16.msra.mxu0 %v770
      %788 = vmatprep.subr.bf16.mxu0 0
      %789 = vmatpush1.bf16.msra.mxu0 %v771
      %790 = vmatprep.subr.bf16.mxu0 0
      %791 = vmatpush1.bf16.msra.mxu0 %v772
      %792 = vmatprep.subr.bf16.mxu0 0
      %793 = vmatpush1.bf16.msra.mxu0 %v773
      %794 = vmatprep.subr.bf16.mxu0 0
      %795 = vmatpush1.bf16.msra.mxu0 %v774
      %796 = vmatprep.subr.bf16.mxu0 0
      %797 = vmatpush1.bf16.msra.mxu0 %v775
      %798 = vmatprep.subr.bf16.mxu0 0
      %799 = vmatpush1.bf16.msra.mxu0 %v776
      %800 = vmatprep.subr.bf16.mxu0 0
      %801 = vmatpush1.bf16.msra.mxu0 %v777
      %802 = vmatprep.subr.bf16.mxu0 0
      %803 = vmatpush1.bf16.msra.mxu0 0
      %804 = vmatprep.subr.bf16.mxu0 0
      %805 = vmatpush1.bf16.msra.mxu0 0
      %806 = vmatprep.subr.bf16.mxu0 0
      %807 = vmatpush1.bf16.msra.mxu0 0
      %808 = vmatprep.subr.bf16.mxu0 0
      %809 = vmatpush1.bf16.msra.mxu0 0
      %810 = vmatprep.subr.bf16.mxu0 0
      %811 = vmatpush1.bf16.msra.mxu0 0
      %812 = vmatprep.subr.bf16.mxu0 0
      %813 = vmatpush1.bf16.msra.mxu0 0
      %814 = vmatprep.subr.bf16.mxu0 0
      %815 = vmatpush1.bf16.msra.mxu0 0
      %816 = vmatprep.subr.bf16.mxu0 0
      %817 = vmatpush1.bf16.msra.mxu0 0
      %818 = vmatprep.mubr.bf16.mxu0 0
      %819 = vmatmul.mubr.bf16.gmra.mrb[0].mxu0 %v732
      %v820 = vpop.f32.mrb[0].mxu0
      %v821 = vadd.f32 0.0, %v820
      %v822 = vpop.f32.mrb[0].mxu0
      %v823 = vpop.f32.mrb[0].mxu0
      %v824 = vadd.f32 0.0, %v823
      %v825 = vpop.f32.mrb[0].mxu0
      %826 = vmatprep.mubr.bf16.mxu0 0
      %827 = vmatmul.mubr.bf16.gmra.mrb[0].mxu0 %v733
      %v828 = vpop.f32.mrb[0].mxu0
      %v829 = vadd.f32 0.0, %v828
      %v830 = vpop.f32.mrb[0].mxu0
      %v831 = vpop.f32.mrb[0].mxu0
      %v832 = vadd.f32 0.0, %v831
      %v833 = vpop.f32.mrb[0].mxu0
      %834 = vmatprep.mubr.bf16.mxu0 0
      %835 = vmatmul.mubr.bf16.gmra.mrb[0].mxu0 %v734
      %v836 = vpop.f32.mrb[0].mxu0
      %v837 = vadd.f32 0.0, %v836
      %v838 = vpop.f32.mrb[0].mxu0
      %v839 = vpop.f32.mrb[0].mxu0
      %v840 = vadd.f32 0.0, %v839
      %v841 = vpop.f32.mrb[0].mxu0
      %842 = vdwg.mxu0
      %v843 = vadd.f32 %v697, %v821
      %v844 = vadd.f32 %v698, %v824
      %v845 = vadd.f32 %v699, %v829
      %v846 = vadd.f32 %v700, %v832
      %v847 = vadd.f32 %v701, %v837
      %v848 = vadd.f32 %v702, %v840
      %849 = vst [vmem:[#allocation8] sm:$0xff] %v843
      %850 = vst [vmem:[#allocation8 + $0x8] sm:$0xff] %v844
      %851 = vst [vmem:[#allocation8 + $0x10] sm:$0xff] %v845
      %852 = vst [vmem:[#allocation8 + $0x18] sm:$0xff] %v846
      %853 = vst [vmem:[#allocation8 + $0x20] sm:$0xff] %v847
      %854 = vst [vmem:[#allocation8 + $0x28] sm:$0xff] %v848
      %v855 = vld [vmem:[#allocation4] sm:$0xf]
      %v856 = vld [vmem:[#allocation4 + $0x4] sm:$0xf]
      %v857 = vld [vmem:[#allocation4 + $0x8] sm:$0xf]
      %v858 = vld [vmem:[#allocation4 + $0xc] sm:$0xf]
      %v859 = vld [vmem:[#allocation4 + $0x10] sm:$0xf]
      %v860 = vld [vmem:[#allocation4 + $0x14] sm:$0xf]
      %v861 = vld [vmem:[#allocation8] sm:$0xff]
      %v862 = vld [vmem:[#allocation8 + $0x8] sm:$0xff]
      %v863 = vld [vmem:[#allocation8 + $0x10] sm:$0xff]
      %v864 = vld [vmem:[#allocation8 + $0x18] sm:$0xff]
      %v865 = vld [vmem:[#allocation8 + $0x20] sm:$0xff]
      %v866 = vld [vmem:[#allocation8 + $0x28] sm:$0xff]
      %s867 = scalar_lea.vmem %s1, 128
      %v868 = vld [vmem:[%s867] sm:$0xf]
      %v869 = vld [vmem:[%s867 + $0x4] sm:$0xf]
      %v870 = vld [vmem:[%s867 + $0x8] sm:$0xf]
      %v871 = vld [vmem:[%s867 + $0xc] sm:$0xf]
      %v872 = vld [vmem:[%s867 + $0x10] sm:$0xf]
      %v873 = vld [vmem:[%s867 + $0x14] sm:$0xf]
      %v874 = vld [vmem:[%s867 + $0x18] sm:$0xf]
      %v875 = vld [vmem:[%s867 + $0x1c] sm:$0xf]
      %v876 = vld [vmem:[%s867 + $0x20] sm:$0xf]
      %v877 = vld [vmem:[%s867 + $0x24] sm:$0xf]
      %v878 = vld [vmem:[%s867 + $0x28] sm:$0xf]
      %v879 = vld [vmem:[%s867 + $0x2c] sm:$0xf]
      %v880 = vld [vmem:[%s867 + $0x30] sm:$0xf]
      %v881 = vld [vmem:[%s867 + $0x34] sm:$0xf]
      %v882 = vld [vmem:[%s867 + $0x38] sm:$0xf]
      %v883 = vld [vmem:[%s867 + $0x3c] sm:$0xf]
      %v890 = vunpack.c.l.b16 %v855
      %v891 = vunpack.c.l.b16 %v856
      %v892 = vunpack.c.l.b16 %v857
      %v893 = vunpack.c.l.b16 %v858
      %v894 = vunpack.c.l.b16 %v859
      %v895 = vunpack.c.l.b16 %v860
      %v896 = vpack.c.b16 %v891, %v890
      %v897 = vpack.c.b16 %v893, %v892
      %v898 = vpack.c.b16 %v895, %v894
      %v918 = vunpack.c.l.b16 %v868
      %v919 = vunpack.c.l.b16 %v869
      %v920 = vunpack.c.l.b16 %v870
      %v921 = vunpack.c.l.b16 %v871
      %v922 = vunpack.c.l.b16 %v872
      %v923 = vunpack.c.l.b16 %v873
      %v924 = vunpack.c.l.b16 %v874
      %v925 = vunpack.c.l.b16 %v875
      %v926 = vunpack.c.l.b16 %v876
      %v927 = vunpack.c.l.b16 %v877
      %v928 = vunpack.c.l.b16 %v878
      %v929 = vunpack.c.l.b16 %v879
      %v930 = vunpack.c.l.b16 %v880
      %v931 = vunpack.c.l.b16 %v881
      %v932 = vunpack.c.l.b16 %v882
      %v933 = vunpack.c.l.b16 %v883
      %v934 = vpack.c.b16 %v919, %v918
      %v935 = vpack.c.b16 %v921, %v920
      %v936 = vpack.c.b16 %v923, %v922
      %v937 = vpack.c.b16 %v925, %v924
      %v938 = vpack.c.b16 %v927, %v926
      %v939 = vpack.c.b16 %v929, %v928
      %v940 = vpack.c.b16 %v931, %v930
      %v941 = vpack.c.b16 %v933, %v932
      %950 = vmatprep.subr.bf16.mxu0 0
      %951 = vmatpush1.bf16.msra.mxu0 %v934
      %952 = vmatprep.subr.bf16.mxu0 0
      %953 = vmatpush1.bf16.msra.mxu0 %v935
      %954 = vmatprep.subr.bf16.mxu0 0
      %955 = vmatpush1.bf16.msra.mxu0 %v936
      %956 = vmatprep.subr.bf16.mxu0 0
      %957 = vmatpush1.bf16.msra.mxu0 %v937
      %958 = vmatprep.subr.bf16.mxu0 0
      %959 = vmatpush1.bf16.msra.mxu0 %v938
      %960 = vmatprep.subr.bf16.mxu0 0
      %961 = vmatpush1.bf16.msra.mxu0 %v939
      %962 = vmatprep.subr.bf16.mxu0 0
      %963 = vmatpush1.bf16.msra.mxu0 %v940
      %964 = vmatprep.subr.bf16.mxu0 0
      %965 = vmatpush1.bf16.msra.mxu0 %v941
      %966 = vmatprep.subr.bf16.mxu0 0
      %967 = vmatpush1.bf16.msra.mxu0 0
      %968 = vmatprep.subr.bf16.mxu0 0
      %969 = vmatpush1.bf16.msra.mxu0 0
      %970 = vmatprep.subr.bf16.mxu0 0
      %971 = vmatpush1.bf16.msra.mxu0 0
      %972 = vmatprep.subr.bf16.mxu0 0
      %973 = vmatpush1.bf16.msra.mxu0 0
      %974 = vmatprep.subr.bf16.mxu0 0
      %975 = vmatpush1.bf16.msra.mxu0 0
      %976 = vmatprep.subr.bf16.mxu0 0
      %977 = vmatpush1.bf16.msra.mxu0 0
      %978 = vmatprep.subr.bf16.mxu0 0
      %979 = vmatpush1.bf16.msra.mxu0 0
      %980 = vmatprep.subr.bf16.mxu0 0
      %981 = vmatpush1.bf16.msra.mxu0 0
      %982 = vmatprep.mubr.bf16.mxu0 0
      %983 = vmatmul.mubr.bf16.gmra.mrb[0].mxu0 %v896
      %v984 = vpop.f32.mrb[0].mxu0
      %v985 = vadd.f32 0.0, %v984
      %v986 = vpop.f32.mrb[0].mxu0
      %v987 = vpop.f32.mrb[0].mxu0
      %v988 = vadd.f32 0.0, %v987
      %v989 = vpop.f32.mrb[0].mxu0
      %990 = vmatprep.mubr.bf16.mxu0 0
      %991 = vmatmul.mubr.bf16.gmra.mrb[0].mxu0 %v897
      %v992 = vpop.f32.mrb[0].mxu0
      %v993 = vadd.f32 0.0, %v992
      %v994 = vpop.f32.mrb[0].mxu0
      %v995 = vpop.f32.mrb[0].mxu0
      %v996 = vadd.f32 0.0, %v995
      %v997 = vpop.f32.mrb[0].mxu0
      %998 = vmatprep.mubr.bf16.mxu0 0
      %999 = vmatmul.mubr.bf16.gmra.mrb[0].mxu0 %v898
      %v1000 = vpop.f32.mrb[0].mxu0
      %v1001 = vadd.f32 0.0, %v1000
      %v1002 = vpop.f32.mrb[0].mxu0
      %v1003 = vpop.f32.mrb[0].mxu0
      %v1004 = vadd.f32 0.0, %v1003
      %v1005 = vpop.f32.mrb[0].mxu0
      %1006 = vdwg.mxu0
      %v1007 = vadd.f32 %v861, %v985
      %v1008 = vadd.f32 %v862, %v988
      %v1009 = vadd.f32 %v863, %v993
      %v1010 = vadd.f32 %v864, %v996
      %v1011 = vadd.f32 %v865, %v1001
      %v1012 = vadd.f32 %v866, %v1004
      %1013 = vst [vmem:[#allocation8] sm:$0xff] %v1007
      %1014 = vst [vmem:[#allocation8 + $0x8] sm:$0xff] %v1008
      %1015 = vst [vmem:[#allocation8 + $0x10] sm:$0xff] %v1009
      %1016 = vst [vmem:[#allocation8 + $0x18] sm:$0xff] %v1010
      %1017 = vst [vmem:[#allocation8 + $0x20] sm:$0xff] %v1011
      %1018 = vst [vmem:[#allocation8 + $0x28] sm:$0xff] %v1012
      %s1019 = scalar_lea.vmem [#allocation2], 4
      %v1020 = vld [vmem:[%s1019] sm:$0xf]
      %v1021 = vld [vmem:[%s1019 + $0x4] sm:$0xf]
      %v1022 = vld [vmem:[%s1019 + $0x8] sm:$0xf]
      %v1023 = vld [vmem:[%s1019 + $0xc] sm:$0xf]
      %v1024 = vld [vmem:[%s1019 + $0x10] sm:$0xf]
      %v1025 = vld [vmem:[%s1019 + $0x14] sm:$0xf]
      %v1026 = vld [vmem:[#allocation8] sm:$0xff]
      %v1027 = vld [vmem:[#allocation8 + $0x8] sm:$0xff]
      %v1028 = vld [vmem:[#allocation8 + $0x10] sm:$0xff]
      %v1029 = vld [vmem:[#allocation8 + $0x18] sm:$0xff]
      %v1030 = vld [vmem:[#allocation8 + $0x20] sm:$0xff]
      %v1031 = vld [vmem:[#allocation8 + $0x28] sm:$0xff]
      %s1032 = scalar_lea.vmem %s1, 192
      %v1033 = vld [vmem:[%s1032] sm:$0xf]
      %v1034 = vld [vmem:[%s1032 + $0x4] sm:$0xf]
      %v1035 = vld [vmem:[%s1032 + $0x8] sm:$0xf]
      %v1036 = vld [vmem:[%s1032 + $0xc] sm:$0xf]
      %v1037 = vld [vmem:[%s1032 + $0x10] sm:$0xf]
      %v1038 = vld [vmem:[%s1032 + $0x14] sm:$0xf]
      %v1039 = vld [vmem:[%s1032 + $0x18] sm:$0xf]
      %v1040 = vld [vmem:[%s1032 + $0x1c] sm:$0xf]
      %v1041 = vld [vmem:[%s1032 + $0x20] sm:$0xf]
      %v1042 = vld [vmem:[%s1032 + $0x24] sm:$0xf]
      %v1043 = vld [vmem:[%s1032 + $0x28] sm:$0xf]
      %v1044 = vld [vmem:[%s1032 + $0x2c] sm:$0xf]
      %v1045 = vld [vmem:[%s1032 + $0x30] sm:$0xf]
      %v1046 = vld [vmem:[%s1032 + $0x34] sm:$0xf]
      %v1047 = vld [vmem:[%s1032 + $0x38] sm:$0xf]
      %v1048 = vld [vmem:[%s1032 + $0x3c] sm:$0xf]
      %v1055 = vunpack.c.l.b16 %v1020
      %v1056 = vunpack.c.l.b16 %v1021
      %v1057 = vunpack.c.l.b16 %v1022
      %v1058 = vunpack.c.l.b16 %v1023
      %v1059 = vunpack.c.l.b16 %v1024
      %v1060 = vunpack.c.l.b16 %v1025
      %v1061 = vpack.c.b16 %v1056, %v1055
      %v1062 = vpack.c.b16 %v1058, %v1057
      %v1063 = vpack.c.b16 %v1060, %v1059
      %v1083 = vunpack.c.l.b16 %v1033
      %v1084 = vunpack.c.l.b16 %v1034
      %v1085 = vunpack.c.l.b16 %v1035
      %v1086 = vunpack.c.l.b16 %v1036
      %v1087 = vunpack.c.l.b16 %v1037
      %v1088 = vunpack.c.l.b16 %v1038
      %v1089 = vunpack.c.l.b16 %v1039
      %v1090 = vunpack.c.l.b16 %v1040
      %v1091 = vunpack.c.l.b16 %v1041
      %v1092 = vunpack.c.l.b16 %v1042
      %v1093 = vunpack.c.l.b16 %v1043
      %v1094 = vunpack.c.l.b16 %v1044
      %v1095 = vunpack.c.l.b16 %v1045
      %v1096 = vunpack.c.l.b16 %v1046
      %v1097 = vunpack.c.l.b16 %v1047
      %v1098 = vunpack.c.l.b16 %v1048
      %v1099 = vpack.c.b16 %v1084, %v1083
      %v1100 = vpack.c.b16 %v1086, %v1085
      %v1101 = vpack.c.b16 %v1088, %v1087
      %v1102 = vpack.c.b16 %v1090, %v1089
      %v1103 = vpack.c.b16 %v1092, %v1091
      %v1104 = vpack.c.b16 %v1094, %v1093
      %v1105 = vpack.c.b16 %v1096, %v1095
      %v1106 = vpack.c.b16 %v1098, %v1097
      %1115 = vmatprep.subr.bf16.mxu0 0
      %1116 = vmatpush1.bf16.msra.mxu0 %v1099
      %1117 = vmatprep.subr.bf16.mxu0 0
      %1118 = vmatpush1.bf16.msra.mxu0 %v1100
      %1119 = vmatprep.subr.bf16.mxu0 0
      %1120 = vmatpush1.bf16.msra.mxu0 %v1101
      %1121 = vmatprep.subr.bf16.mxu0 0
      %1122 = vmatpush1.bf16.msra.mxu0 %v1102
      %1123 = vmatprep.subr.bf16.mxu0 0
      %1124 = vmatpush1.bf16.msra.mxu0 %v1103
      %1125 = vmatprep.subr.bf16.mxu0 0
      %1126 = vmatpush1.bf16.msra.mxu0 %v1104
      %1127 = vmatprep.subr.bf16.mxu0 0
      %1128 = vmatpush1.bf16.msra.mxu0 %v1105
      %1129 = vmatprep.subr.bf16.mxu0 0
      %1130 = vmatpush1.bf16.msra.mxu0 %v1106
      %1131 = vmatprep.subr.bf16.mxu0 0
      %1132 = vmatpush1.bf16.msra.mxu0 0
      %1133 = vmatprep.subr.bf16.mxu0 0
      %1134 = vmatpush1.bf16.msra.mxu0 0
      %1135 = vmatprep.subr.bf16.mxu0 0
      %1136 = vmatpush1.bf16.msra.mxu0 0
      %1137 = vmatprep.subr.bf16.mxu0 0
      %1138 = vmatpush1.bf16.msra.mxu0 0
      %1139 = vmatprep.subr.bf16.mxu0 0
      %1140 = vmatpush1.bf16.msra.mxu0 0
      %1141 = vmatprep.subr.bf16.mxu0 0
      %1142 = vmatpush1.bf16.msra.mxu0 0
      %1143 = vmatprep.subr.bf16.mxu0 0
      %1144 = vmatpush1.bf16.msra.mxu0 0
      %1145 = vmatprep.subr.bf16.mxu0 0
      %1146 = vmatpush1.bf16.msra.mxu0 0
      %1147 = vmatprep.mubr.bf16.mxu0 0
      %1148 = vmatmul.mubr.bf16.gmra.mrb[0].mxu0 %v1061
      %v1149 = vpop.f32.mrb[0].mxu0
      %v1150 = vadd.f32 0.0, %v1149
      %v1151 = vpop.f32.mrb[0].mxu0
      %v1152 = vpop.f32.mrb[0].mxu0
      %v1153 = vadd.f32 0.0, %v1152
      %v1154 = vpop.f32.mrb[0].mxu0
      %1155 = vmatprep.mubr.bf16.mxu0 0
      %1156 = vmatmul.mubr.bf16.gmra.mrb[0].mxu0 %v1062
      %v1157 = vpop.f32.mrb[0].mxu0
      %v1158 = vadd.f32 0.0, %v1157
      %v1159 = vpop.f32.mrb[0].mxu0
      %v1160 = vpop.f32.mrb[0].mxu0
      %v1161 = vadd.f32 0.0, %v1160
      %v1162 = vpop.f32.mrb[0].mxu0
      %1163 = vmatprep.mubr.bf16.mxu0 0
      %1164 = vmatmul.mubr.bf16.gmra.mrb[0].mxu0 %v1063
      %v1165 = vpop.f32.mrb[0].mxu0
      %v1166 = vadd.f32 0.0, %v1165
      %v1167 = vpop.f32.mrb[0].mxu0
      %v1168 = vpop.f32.mrb[0].mxu0
      %v1169 = vadd.f32 0.0, %v1168
      %v1170 = vpop.f32.mrb[0].mxu0
      %1171 = vdwg.mxu0
      %v1172 = vadd.f32 %v1026, %v1150
      %v1173 = vadd.f32 %v1027, %v1153
      %v1174 = vadd.f32 %v1028, %v1158
      %v1175 = vadd.f32 %v1029, %v1161
      %v1176 = vadd.f32 %v1030, %v1166
      %v1177 = vadd.f32 %v1031, %v1169
      %1178 = vst [vmem:[#allocation8] sm:$0xff] %v1172
      %1179 = vst [vmem:[#allocation8 + $0x8] sm:$0xff] %v1173
      %1180 = vst [vmem:[#allocation8 + $0x10] sm:$0xff] %v1174
      %1181 = vst [vmem:[#allocation8 + $0x18] sm:$0xff] %v1175
      %1182 = vst [vmem:[#allocation8 + $0x20] sm:$0xff] %v1176
      %1183 = vst [vmem:[#allocation8 + $0x28] sm:$0xff] %v1177
      %s1184 = scalar_lea.vmem [#allocation3], 4
      %v1185 = vld [vmem:[%s1184] sm:$0xf]
      %v1186 = vld [vmem:[%s1184 + $0x4] sm:$0xf]
      %v1187 = vld [vmem:[%s1184 + $0x8] sm:$0xf]
      %v1188 = vld [vmem:[%s1184 + $0xc] sm:$0xf]
      %v1189 = vld [vmem:[%s1184 + $0x10] sm:$0xf]
      %v1190 = vld [vmem:[%s1184 + $0x14] sm:$0xf]
      %v1191 = vld [vmem:[#allocation8] sm:$0xff]
      %v1192 = vld [vmem:[#allocation8 + $0x8] sm:$0xff]
      %v1193 = vld [vmem:[#allocation8 + $0x10] sm:$0xff]
      %v1194 = vld [vmem:[#allocation8 + $0x18] sm:$0xff]
      %v1195 = vld [vmem:[#allocation8 + $0x20] sm:$0xff]
      %v1196 = vld [vmem:[#allocation8 + $0x28] sm:$0xff]
      %s1197 = scalar_lea.vmem %s1, 256
      %v1198 = vld [vmem:[%s1197] sm:$0xf]
      %v1199 = vld [vmem:[%s1197 + $0x4] sm:$0xf]
      %v1200 = vld [vmem:[%s1197 + $0x8] sm:$0xf]
      %v1201 = vld [vmem:[%s1197 + $0xc] sm:$0xf]
      %v1202 = vld [vmem:[%s1197 + $0x10] sm:$0xf]
      %v1203 = vld [vmem:[%s1197 + $0x14] sm:$0xf]
      %v1204 = vld [vmem:[%s1197 + $0x18] sm:$0xf]
      %v1205 = vld [vmem:[%s1197 + $0x1c] sm:$0xf]
      %v1206 = vld [vmem:[%s1197 + $0x20] sm:$0xf]
      %v1207 = vld [vmem:[%s1197 + $0x24] sm:$0xf]
      %v1208 = vld [vmem:[%s1197 + $0x28] sm:$0xf]
      %v1209 = vld [vmem:[%s1197 + $0x2c] sm:$0xf]
      %v1210 = vld [vmem:[%s1197 + $0x30] sm:$0xf]
      %v1211 = vld [vmem:[%s1197 + $0x34] sm:$0xf]
      %v1212 = vld [vmem:[%s1197 + $0x38] sm:$0xf]
      %v1213 = vld [vmem:[%s1197 + $0x3c] sm:$0xf]
      %v1220 = vunpack.c.l.b16 %v1185
      %v1221 = vunpack.c.l.b16 %v1186
      %v1222 = vunpack.c.l.b16 %v1187
      %v1223 = vunpack.c.l.b16 %v1188
      %v1224 = vunpack.c.l.b16 %v1189
      %v1225 = vunpack.c.l.b16 %v1190
      %v1226 = vpack.c.b16 %v1221, %v1220
      %v1227 = vpack.c.b16 %v1223, %v1222
      %v1228 = vpack.c.b16 %v1225, %v1224
      %v1248 = vunpack.c.l.b16 %v1198
      %v1249 = vunpack.c.l.b16 %v1199
      %v1250 = vunpack.c.l.b16 %v1200
      %v1251 = vunpack.c.l.b16 %v1201
      %v1252 = vunpack.c.l.b16 %v1202
      %v1253 = vunpack.c.l.b16 %v1203
      %v1254 = vunpack.c.l.b16 %v1204
      %v1255 = vunpack.c.l.b16 %v1205
      %v1256 = vunpack.c.l.b16 %v1206
      %v1257 = vunpack.c.l.b16 %v1207
      %v1258 = vunpack.c.l.b16 %v1208
      %v1259 = vunpack.c.l.b16 %v1209
      %v1260 = vunpack.c.l.b16 %v1210
      %v1261 = vunpack.c.l.b16 %v1211
      %v1262 = vunpack.c.l.b16 %v1212
      %v1263 = vunpack.c.l.b16 %v1213
      %v1264 = vpack.c.b16 %v1249, %v1248
      %v1265 = vpack.c.b16 %v1251, %v1250
      %v1266 = vpack.c.b16 %v1253, %v1252
      %v1267 = vpack.c.b16 %v1255, %v1254
      %v1268 = vpack.c.b16 %v1257, %v1256
      %v1269 = vpack.c.b16 %v1259, %v1258
      %v1270 = vpack.c.b16 %v1261, %v1260
      %v1271 = vpack.c.b16 %v1263, %v1262
      %1280 = vmatprep.subr.bf16.mxu0 0
      %1281 = vmatpush1.bf16.msra.mxu0 %v1264
      %1282 = vmatprep.subr.bf16.mxu0 0
      %1283 = vmatpush1.bf16.msra.mxu0 %v1265
      %1284 = vmatprep.subr.bf16.mxu0 0
      %1285 = vmatpush1.bf16.msra.mxu0 %v1266
      %1286 = vmatprep.subr.bf16.mxu0 0
      %1287 = vmatpush1.bf16.msra.mxu0 %v1267
      %1288 = vmatprep.subr.bf16.mxu0 0
      %1289 = vmatpush1.bf16.msra.mxu0 %v1268
      %1290 = vmatprep.subr.bf16.mxu0 0
      %1291 = vmatpush1.bf16.msra.mxu0 %v1269
      %1292 = vmatprep.subr.bf16.mxu0 0
      %1293 = vmatpush1.bf16.msra.mxu0 %v1270
      %1294 = vmatprep.subr.bf16.mxu0 0
      %1295 = vmatpush1.bf16.msra.mxu0 %v1271
      %1296 = vmatprep.subr.bf16.mxu0 0
      %1297 = vmatpush1.bf16.msra.mxu0 0
      %1298 = vmatprep.subr.bf16.mxu0 0
      %1299 = vmatpush1.bf16.msra.mxu0 0
      %1300 = vmatprep.subr.bf16.mxu0 0
      %1301 = vmatpush1.bf16.msra.mxu0 0
      %1302 = vmatprep.subr.bf16.mxu0 0
      %1303 = vmatpush1.bf16.msra.mxu0 0
      %1304 = vmatprep.subr.bf16.mxu0 0
      %1305 = vmatpush1.bf16.msra.mxu0 0
      %1306 = vmatprep.subr.bf16.mxu0 0
      %1307 = vmatpush1.bf16.msra.mxu0 0
      %1308 = vmatprep.subr.bf16.mxu0 0
      %1309 = vmatpush1.bf16.msra.mxu0 0
      %1310 = vmatprep.subr.bf16.mxu0 0
      %1311 = vmatpush1.bf16.msra.mxu0 0
      %1312 = vmatprep.mubr.bf16.mxu0 0
      %1313 = vmatmul.mubr.bf16.gmra.mrb[0].mxu0 %v1226
      %v1314 = vpop.f32.mrb[0].mxu0
      %v1315 = vadd.f32 0.0, %v1314
      %v1316 = vpop.f32.mrb[0].mxu0
      %v1317 = vpop.f32.mrb[0].mxu0
      %v1318 = vadd.f32 0.0, %v1317
      %v1319 = vpop.f32.mrb[0].mxu0
      %1320 = vmatprep.mubr.bf16.mxu0 0
      %1321 = vmatmul.mubr.bf16.gmra.mrb[0].mxu0 %v1227
      %v1322 = vpop.f32.mrb[0].mxu0
      %v1323 = vadd.f32 0.0, %v1322
      %v1324 = vpop.f32.mrb[0].mxu0
      %v1325 = vpop.f32.mrb[0].mxu0
      %v1326 = vadd.f32 0.0, %v1325
      %v1327 = vpop.f32.mrb[0].mxu0
      %1328 = vmatprep.mubr.bf16.mxu0 0
      %1329 = vmatmul.mubr.bf16.gmra.mrb[0].mxu0 %v1228
      %v1330 = vpop.f32.mrb[0].mxu0
      %v1331 = vadd.f32 0.0, %v1330
      %v1332 = vpop.f32.mrb[0].mxu0
      %v1333 = vpop.f32.mrb[0].mxu0
      %v1334 = vadd.f32 0.0, %v1333
      %v1335 = vpop.f32.mrb[0].mxu0
      %1336 = vdwg.mxu0
      %v1337 = vadd.f32 %v1191, %v1315
      %v1338 = vadd.f32 %v1192, %v1318
      %v1339 = vadd.f32 %v1193, %v1323
      %v1340 = vadd.f32 %v1194, %v1326
      %v1341 = vadd.f32 %v1195, %v1331
      %v1342 = vadd.f32 %v1196, %v1334
      %1343 = vst [vmem:[#allocation8] sm:$0xff] %v1337
      %1344 = vst [vmem:[#allocation8 + $0x8] sm:$0xff] %v1338
      %1345 = vst [vmem:[#allocation8 + $0x10] sm:$0xff] %v1339
      %1346 = vst [vmem:[#allocation8 + $0x18] sm:$0xff] %v1340
      %1347 = vst [vmem:[#allocation8 + $0x20] sm:$0xff] %v1341
      %1348 = vst [vmem:[#allocation8 + $0x28] sm:$0xff] %v1342
      %s1349 = scalar_lea.vmem [#allocation4], 4
      %v1350 = vld [vmem:[%s1349] sm:$0xf]
      %v1351 = vld [vmem:[%s1349 + $0x4] sm:$0xf]
      %v1352 = vld [vmem:[%s1349 + $0x8] sm:$0xf]
      %v1353 = vld [vmem:[%s1349 + $0xc] sm:$0xf]
      %v1354 = vld [vmem:[%s1349 + $0x10] sm:$0xf]
      %v1355 = vld [vmem:[%s1349 + $0x14] sm:$0xf]
      %v1356 = vld [vmem:[#allocation8] sm:$0xff]
      %v1357 = vld [vmem:[#allocation8 + $0x8] sm:$0xff]
      %v1358 = vld [vmem:[#allocation8 + $0x10] sm:$0xff]
      %v1359 = vld [vmem:[#allocation8 + $0x18] sm:$0xff]
      %v1360 = vld [vmem:[#allocation8 + $0x20] sm:$0xff]
      %v1361 = vld [vmem:[#allocation8 + $0x28] sm:$0xff]
      %s1362 = scalar_lea.vmem %s1, 320
      %v1363 = vld [vmem:[%s1362] sm:$0xf]
      %v1364 = vld [vmem:[%s1362 + $0x4] sm:$0xf]
      %v1365 = vld [vmem:[%s1362 + $0x8] sm:$0xf]
      %v1366 = vld [vmem:[%s1362 + $0xc] sm:$0xf]
      %v1367 = vld [vmem:[%s1362 + $0x10] sm:$0xf]
      %v1368 = vld [vmem:[%s1362 + $0x14] sm:$0xf]
      %v1369 = vld [vmem:[%s1362 + $0x18] sm:$0xf]
      %v1370 = vld [vmem:[%s1362 + $0x1c] sm:$0xf]
      %v1371 = vld [vmem:[%s1362 + $0x20] sm:$0xf]
      %v1372 = vld [vmem:[%s1362 + $0x24] sm:$0xf]
      %v1373 = vld [vmem:[%s1362 + $0x28] sm:$0xf]
      %v1374 = vld [vmem:[%s1362 + $0x2c] sm:$0xf]
      %v1375 = vld [vmem:[%s1362 + $0x30] sm:$0xf]
      %v1376 = vld [vmem:[%s1362 + $0x34] sm:$0xf]
      %v1377 = vld [vmem:[%s1362 + $0x38] sm:$0xf]
      %v1378 = vld [vmem:[%s1362 + $0x3c] sm:$0xf]
      %v1385 = vunpack.c.l.b16 %v1350
      %v1386 = vunpack.c.l.b16 %v1351
      %v1387 = vunpack.c.l.b16 %v1352
      %v1388 = vunpack.c.l.b16 %v1353
      %v1389 = vunpack.c.l.b16 %v1354
      %v1390 = vunpack.c.l.b16 %v1355
      %v1391 = vpack.c.b16 %v1386, %v1385
      %v1392 = vpack.c.b16 %v1388, %v1387
      %v1393 = vpack.c.b16 %v1390, %v1389
      %v1413 = vunpack.c.l.b16 %v1363
      %v1414 = vunpack.c.l.b16 %v1364
      %v1415 = vunpack.c.l.b16 %v1365
      %v1416 = vunpack.c.l.b16 %v1366
      %v1417 = vunpack.c.l.b16 %v1367
      %v1418 = vunpack.c.l.b16 %v1368
      %v1419 = vunpack.c.l.b16 %v1369
      %v1420 = vunpack.c.l.b16 %v1370
      %v1421 = vunpack.c.l.b16 %v1371
      %v1422 = vunpack.c.l.b16 %v1372
      %v1423 = vunpack.c.l.b16 %v1373
      %v1424 = vunpack.c.l.b16 %v1374
      %v1425 = vunpack.c.l.b16 %v1375
      %v1426 = vunpack.c.l.b16 %v1376
      %v1427 = vunpack.c.l.b16 %v1377
      %v1428 = vunpack.c.l.b16 %v1378
      %v1429 = vpack.c.b16 %v1414, %v1413
      %v1430 = vpack.c.b16 %v1416, %v1415
      %v1431 = vpack.c.b16 %v1418, %v1417
      %v1432 = vpack.c.b16 %v1420, %v1419
      %v1433 = vpack.c.b16 %v1422, %v1421
      %v1434 = vpack.c.b16 %v1424, %v1423
      %v1435 = vpack.c.b16 %v1426, %v1425
      %v1436 = vpack.c.b16 %v1428, %v1427
      %1445 = vmatprep.subr.bf16.mxu0 0
      %1446 = vmatpush1.bf16.msra.mxu0 %v1429
      %1447 = vmatprep.subr.bf16.mxu0 0
      %1448 = vmatpush1.bf16.msra.mxu0 %v1430
      %1449 = vmatprep.subr.bf16.mxu0 0
      %1450 = vmatpush1.bf16.msra.mxu0 %v1431
      %1451 = vmatprep.subr.bf16.mxu0 0
      %1452 = vmatpush1.bf16.msra.mxu0 %v1432
      %1453 = vmatprep.subr.bf16.mxu0 0
      %1454 = vmatpush1.bf16.msra.mxu0 %v1433
      %1455 = vmatprep.subr.bf16.mxu0 0
      %1456 = vmatpush1.bf16.msra.mxu0 %v1434
      %1457 = vmatprep.subr.bf16.mxu0 0
      %1458 = vmatpush1.bf16.msra.mxu0 %v1435
      %1459 = vmatprep.subr.bf16.mxu0 0
      %1460 = vmatpush1.bf16.msra.mxu0 %v1436
      %1461 = vmatprep.subr.bf16.mxu0 0
      %1462 = vmatpush1.bf16.msra.mxu0 0
      %1463 = vmatprep.subr.bf16.mxu0 0
      %1464 = vmatpush1.bf16.msra.mxu0 0
      %1465 = vmatprep.subr.bf16.mxu0 0
      %1466 = vmatpush1.bf16.msra.mxu0 0
      %1467 = vmatprep.subr.bf16.mxu0 0
      %1468 = vmatpush1.bf16.msra.mxu0 0
      %1469 = vmatprep.subr.bf16.mxu0 0
      %1470 = vmatpush1.bf16.msra.mxu0 0
      %1471 = vmatprep.subr.bf16.mxu0 0
      %1472 = vmatpush1.bf16.msra.mxu0 0
      %1473 = vmatprep.subr.bf16.mxu0 0
      %1474 = vmatpush1.bf16.msra.mxu0 0
      %1475 = vmatprep.subr.bf16.mxu0 0
      %1476 = vmatpush1.bf16.msra.mxu0 0
      %1477 = vmatprep.mubr.bf16.mxu0 0
      %1478 = vmatmul.mubr.bf16.gmra.mrb[0].mxu0 %v1391
      %v1479 = vpop.f32.mrb[0].mxu0
      %v1480 = vadd.f32 0.0, %v1479
      %v1481 = vpop.f32.mrb[0].mxu0
      %v1482 = vpop.f32.mrb[0].mxu0
      %v1483 = vadd.f32 0.0, %v1482
      %v1484 = vpop.f32.mrb[0].mxu0
      %1485 = vmatprep.mubr.bf16.mxu0 0
      %1486 = vmatmul.mubr.bf16.gmra.mrb[0].mxu0 %v1392
      %v1487 = vpop.f32.mrb[0].mxu0
      %v1488 = vadd.f32 0.0, %v1487
      %v1489 = vpop.f32.mrb[0].mxu0
      %v1490 = vpop.f32.mrb[0].mxu0
      %v1491 = vadd.f32 0.0, %v1490
      %v1492 = vpop.f32.mrb[0].mxu0
      %1493 = vmatprep.mubr.bf16.mxu0 0
      %1494 = vmatmul.mubr.bf16.gmra.mrb[0].mxu0 %v1393
      %v1495 = vpop.f32.mrb[0].mxu0
      %v1496 = vadd.f32 0.0, %v1495
      %v1497 = vpop.f32.mrb[0].mxu0
      %v1498 = vpop.f32.mrb[0].mxu0
      %v1499 = vadd.f32 0.0, %v1498
      %v1500 = vpop.f32.mrb[0].mxu0
      %1501 = vdwg.mxu0
      %v1502 = vadd.f32 %v1356, %v1480
      %v1503 = vadd.f32 %v1357, %v1483
      %v1504 = vadd.f32 %v1358, %v1488
      %v1505 = vadd.f32 %v1359, %v1491
      %v1506 = vadd.f32 %v1360, %v1496
      %v1507 = vadd.f32 %v1361, %v1499
      %1508 = vst [vmem:[#allocation8] sm:$0xff] %v1502
      %1509 = vst [vmem:[#allocation8 + $0x8] sm:$0xff] %v1503
      %1510 = vst [vmem:[#allocation8 + $0x10] sm:$0xff] %v1504
      %1511 = vst [vmem:[#allocation8 + $0x18] sm:$0xff] %v1505
      %1512 = vst [vmem:[#allocation8 + $0x20] sm:$0xff] %v1506
      %1513 = vst [vmem:[#allocation8 + $0x28] sm:$0xff] %v1507
      %v1514 = vld [vmem:[%s293] sm:$0xf]
      %v1515 = vld [vmem:[%s293 + $0x4] sm:$0xf]
      %v1516 = vld [vmem:[%s293 + $0x8] sm:$0xf]
      %v1517 = vld [vmem:[%s293 + $0xc] sm:$0xf]
      %v1518 = vld [vmem:[%s293 + $0x10] sm:$0xf]
      %v1519 = vld [vmem:[%s293 + $0x14] sm:$0xf]
      %v1520 = vld [vmem:[#allocation8] sm:$0xff]
      %v1521 = vld [vmem:[#allocation8 + $0x8] sm:$0xff]
      %v1522 = vld [vmem:[#allocation8 + $0x10] sm:$0xff]
      %v1523 = vld [vmem:[#allocation8 + $0x18] sm:$0xff]
      %v1524 = vld [vmem:[#allocation8 + $0x20] sm:$0xff]
      %v1525 = vld [vmem:[#allocation8 + $0x28] sm:$0xff]
      %s1526 = scalar_lea.vmem %s1, 384
      %v1527 = vld [vmem:[%s1526] sm:$0xf]
      %v1528 = vld [vmem:[%s1526 + $0x4] sm:$0xf]
      %v1529 = vld [vmem:[%s1526 + $0x8] sm:$0xf]
      %v1530 = vld [vmem:[%s1526 + $0xc] sm:$0xf]
      %v1531 = vld [vmem:[%s1526 + $0x10] sm:$0xf]
      %v1532 = vld [vmem:[%s1526 + $0x14] sm:$0xf]
      %v1533 = vld [vmem:[%s1526 + $0x18] sm:$0xf]
      %v1534 = vld [vmem:[%s1526 + $0x1c] sm:$0xf]
      %v1535 = vld [vmem:[%s1526 + $0x20] sm:$0xf]
      %v1536 = vld [vmem:[%s1526 + $0x24] sm:$0xf]
      %v1537 = vld [vmem:[%s1526 + $0x28] sm:$0xf]
      %v1538 = vld [vmem:[%s1526 + $0x2c] sm:$0xf]
      %v1539 = vld [vmem:[%s1526 + $0x30] sm:$0xf]
      %v1540 = vld [vmem:[%s1526 + $0x34] sm:$0xf]
      %v1541 = vld [vmem:[%s1526 + $0x38] sm:$0xf]
      %v1542 = vld [vmem:[%s1526 + $0x3c] sm:$0xf]
      %v1549 = vunpack.c.l.b16 %v1514
      %v1550 = vunpack.c.l.b16 %v1515
      %v1551 = vunpack.c.l.b16 %v1516
      %v1552 = vunpack.c.l.b16 %v1517
      %v1553 = vunpack.c.l.b16 %v1518
      %v1554 = vunpack.c.l.b16 %v1519
      %v1555 = vpack.c.b16 %v1550, %v1549
      %v1556 = vpack.c.b16 %v1552, %v1551
      %v1557 = vpack.c.b16 %v1554, %v1553
      %v1577 = vunpack.c.l.b16 %v1527
      %v1578 = vunpack.c.l.b16 %v1528
      %v1579 = vunpack.c.l.b16 %v1529
      %v1580 = vunpack.c.l.b16 %v1530
      %v1581 = vunpack.c.l.b16 %v1531
      %v1582 = vunpack.c.l.b16 %v1532
      %v1583 = vunpack.c.l.b16 %v1533
      %v1584 = vunpack.c.l.b16 %v1534
      %v1585 = vunpack.c.l.b16 %v1535
      %v1586 = vunpack.c.l.b16 %v1536
      %v1587 = vunpack.c.l.b16 %v1537
      %v1588 = vunpack.c.l.b16 %v1538
      %v1589 = vunpack.c.l.b16 %v1539
      %v1590 = vunpack.c.l.b16 %v1540
      %v1591 = vunpack.c.l.b16 %v1541
      %v1592 = vunpack.c.l.b16 %v1542
      %v1593 = vpack.c.b16 %v1578, %v1577
      %v1594 = vpack.c.b16 %v1580, %v1579
      %v1595 = vpack.c.b16 %v1582, %v1581
      %v1596 = vpack.c.b16 %v1584, %v1583
      %v1597 = vpack.c.b16 %v1586, %v1585
      %v1598 = vpack.c.b16 %v1588, %v1587
      %v1599 = vpack.c.b16 %v1590, %v1589
      %v1600 = vpack.c.b16 %v1592, %v1591
      %1609 = vmatprep.subr.bf16.mxu0 0
      %1610 = vmatpush1.bf16.msra.mxu0 %v1593
      %1611 = vmatprep.subr.bf16.mxu0 0
      %1612 = vmatpush1.bf16.msra.mxu0 %v1594
      %1613 = vmatprep.subr.bf16.mxu0 0
      %1614 = vmatpush1.bf16.msra.mxu0 %v1595
      %1615 = vmatprep.subr.bf16.mxu0 0
      %1616 = vmatpush1.bf16.msra.mxu0 %v1596
      %1617 = vmatprep.subr.bf16.mxu0 0
      %1618 = vmatpush1.bf16.msra.mxu0 %v1597
      %1619 = vmatprep.subr.bf16.mxu0 0
      %1620 = vmatpush1.bf16.msra.mxu0 %v1598
      %1621 = vmatprep.subr.bf16.mxu0 0
      %1622 = vmatpush1.bf16.msra.mxu0 %v1599
      %1623 = vmatprep.subr.bf16.mxu0 0
      %1624 = vmatpush1.bf16.msra.mxu0 %v1600
      %1625 = vmatprep.subr.bf16.mxu0 0
      %1626 = vmatpush1.bf16.msra.mxu0 0
      %1627 = vmatprep.subr.bf16.mxu0 0
      %1628 = vmatpush1.bf16.msra.mxu0 0
      %1629 = vmatprep.subr.bf16.mxu0 0
      %1630 = vmatpush1.bf16.msra.mxu0 0
      %1631 = vmatprep.subr.bf16.mxu0 0
      %1632 = vmatpush1.bf16.msra.mxu0 0
      %1633 = vmatprep.subr.bf16.mxu0 0
      %1634 = vmatpush1.bf16.msra.mxu0 0
      %1635 = vmatprep.subr.bf16.mxu0 0
      %1636 = vmatpush1.bf16.msra.mxu0 0
      %1637 = vmatprep.subr.bf16.mxu0 0
      %1638 = vmatpush1.bf16.msra.mxu0 0
      %1639 = vmatprep.subr.bf16.mxu0 0
      %1640 = vmatpush1.bf16.msra.mxu0 0
      %1641 = vmatprep.mubr.bf16.mxu0 0
      %1642 = vmatmul.mubr.bf16.gmra.mrb[0].mxu0 %v1555
      %v1643 = vpop.f32.mrb[0].mxu0
      %v1644 = vadd.f32 0.0, %v1643
      %v1645 = vpop.f32.mrb[0].mxu0
      %v1646 = vpop.f32.mrb[0].mxu0
      %v1647 = vadd.f32 0.0, %v1646
      %v1648 = vpop.f32.mrb[0].mxu0
      %1649 = vmatprep.mubr.bf16.mxu0 0
      %1650 = vmatmul.mubr.bf16.gmra.mrb[0].mxu0 %v1556
      %v1651 = vpop.f32.mrb[0].mxu0
      %v1652 = vadd.f32 0.0, %v1651
      %v1653 = vpop.f32.mrb[0].mxu0
      %v1654 = vpop.f32.mrb[0].mxu0
      %v1655 = vadd.f32 0.0, %v1654
      %v1656 = vpop.f32.mrb[0].mxu0
      %1657 = vmatprep.mubr.bf16.mxu0 0
      %1658 = vmatmul.mubr.bf16.gmra.mrb[0].mxu0 %v1557
      %v1659 = vpop.f32.mrb[0].mxu0
      %v1660 = vadd.f32 0.0, %v1659
      %v1661 = vpop.f32.mrb[0].mxu0
      %v1662 = vpop.f32.mrb[0].mxu0
      %v1663 = vadd.f32 0.0, %v1662
      %v1664 = vpop.f32.mrb[0].mxu0
      %1665 = vdwg.mxu0
      %v1666 = vadd.f32 %v1520, %v1644
      %v1667 = vadd.f32 %v1521, %v1647
      %v1668 = vadd.f32 %v1522, %v1652
      %v1669 = vadd.f32 %v1523, %v1655
      %v1670 = vadd.f32 %v1524, %v1660
      %v1671 = vadd.f32 %v1525, %v1663
      %1672 = vst [vmem:[#allocation8] sm:$0xff] %v1666
      %1673 = vst [vmem:[#allocation8 + $0x8] sm:$0xff] %v1667
      %1674 = vst [vmem:[#allocation8 + $0x10] sm:$0xff] %v1668
      %1675 = vst [vmem:[#allocation8 + $0x18] sm:$0xff] %v1669
      %1676 = vst [vmem:[#allocation8 + $0x20] sm:$0xff] %v1670
      %1677 = vst [vmem:[#allocation8 + $0x28] sm:$0xff] %v1671
      %v1678 = vld [vmem:[%s256] sm:$0xf]
      %v1679 = vld [vmem:[%s256 + $0x4] sm:$0xf]
      %v1680 = vld [vmem:[%s256 + $0x8] sm:$0xf]
      %v1681 = vld [vmem:[%s256 + $0xc] sm:$0xf]
      %v1682 = vld [vmem:[%s256 + $0x10] sm:$0xf]
      %v1683 = vld [vmem:[%s256 + $0x14] sm:$0xf]
      %v1684 = vld [vmem:[#allocation8] sm:$0xff]
      %v1685 = vld [vmem:[#allocation8 + $0x8] sm:$0xff]
      %v1686 = vld [vmem:[#allocation8 + $0x10] sm:$0xff]
      %v1687 = vld [vmem:[#allocation8 + $0x18] sm:$0xff]
      %v1688 = vld [vmem:[#allocation8 + $0x20] sm:$0xff]
      %v1689 = vld [vmem:[#allocation8 + $0x28] sm:$0xff]
      %s1690 = scalar_lea.vmem %s1, 448
      %v1691 = vld [vmem:[%s1690] sm:$0xf]
      %v1692 = vld [vmem:[%s1690 + $0x4] sm:$0xf]
      %v1693 = vld [vmem:[%s1690 + $0x8] sm:$0xf]
      %v1694 = vld [vmem:[%s1690 + $0xc] sm:$0xf]
      %v1695 = vld [vmem:[%s1690 + $0x10] sm:$0xf]
      %v1696 = vld [vmem:[%s1690 + $0x14] sm:$0xf]
      %v1697 = vld [vmem:[%s1690 + $0x18] sm:$0xf]
      %v1698 = vld [vmem:[%s1690 + $0x1c] sm:$0xf]
      %v1699 = vld [vmem:[%s1690 + $0x20] sm:$0xf]
      %v1700 = vld [vmem:[%s1690 + $0x24] sm:$0xf]
      %v1701 = vld [vmem:[%s1690 + $0x28] sm:$0xf]
      %v1702 = vld [vmem:[%s1690 + $0x2c] sm:$0xf]
      %v1703 = vld [vmem:[%s1690 + $0x30] sm:$0xf]
      %v1704 = vld [vmem:[%s1690 + $0x34] sm:$0xf]
      %v1705 = vld [vmem:[%s1690 + $0x38] sm:$0xf]
      %v1706 = vld [vmem:[%s1690 + $0x3c] sm:$0xf]
      %v1713 = vunpack.c.l.b16 %v1678
      %v1714 = vunpack.c.l.b16 %v1679
      %v1715 = vunpack.c.l.b16 %v1680
      %v1716 = vunpack.c.l.b16 %v1681
      %v1717 = vunpack.c.l.b16 %v1682
      %v1718 = vunpack.c.l.b16 %v1683
      %v1719 = vpack.c.b16 %v1714, %v1713
      %v1720 = vpack.c.b16 %v1716, %v1715
      %v1721 = vpack.c.b16 %v1718, %v1717
      %v1741 = vunpack.c.l.b16 %v1691
      %v1742 = vunpack.c.l.b16 %v1692
      %v1743 = vunpack.c.l.b16 %v1693
      %v1744 = vunpack.c.l.b16 %v1694
      %v1745 = vunpack.c.l.b16 %v1695
      %v1746 = vunpack.c.l.b16 %v1696
      %v1747 = vunpack.c.l.b16 %v1697
      %v1748 = vunpack.c.l.b16 %v1698
      %v1749 = vunpack.c.l.b16 %v1699
      %v1750 = vunpack.c.l.b16 %v1700
      %v1751 = vunpack.c.l.b16 %v1701
      %v1752 = vunpack.c.l.b16 %v1702
      %v1753 = vunpack.c.l.b16 %v1703
      %v1754 = vunpack.c.l.b16 %v1704
      %v1755 = vunpack.c.l.b16 %v1705
      %v1756 = vunpack.c.l.b16 %v1706
      %v1757 = vpack.c.b16 %v1742, %v1741
      %v1758 = vpack.c.b16 %v1744, %v1743
      %v1759 = vpack.c.b16 %v1746, %v1745
      %v1760 = vpack.c.b16 %v1748, %v1747
      %v1761 = vpack.c.b16 %v1750, %v1749
      %v1762 = vpack.c.b16 %v1752, %v1751
      %v1763 = vpack.c.b16 %v1754, %v1753
      %v1764 = vpack.c.b16 %v1756, %v1755
      %1773 = vmatprep.subr.bf16.mxu0 0
      %1774 = vmatpush1.bf16.msra.mxu0 %v1757
      %1775 = vmatprep.subr.bf16.mxu0 0
      %1776 = vmatpush1.bf16.msra.mxu0 %v1758
      %1777 = vmatprep.subr.bf16.mxu0 0
      %1778 = vmatpush1.bf16.msra.mxu0 %v1759
      %1779 = vmatprep.subr.bf16.mxu0 0
      %1780 = vmatpush1.bf16.msra.mxu0 %v1760
      %1781 = vmatprep.subr.bf16.mxu0 0
      %1782 = vmatpush1.bf16.msra.mxu0 %v1761
      %1783 = vmatprep.subr.bf16.mxu0 0
      %1784 = vmatpush1.bf16.msra.mxu0 %v1762
      %1785 = vmatprep.subr.bf16.mxu0 0
      %1786 = vmatpush1.bf16.msra.mxu0 %v1763
      %1787 = vmatprep.subr.bf16.mxu0 0
      %1788 = vmatpush1.bf16.msra.mxu0 %v1764
      %1789 = vmatprep.subr.bf16.mxu0 0
      %1790 = vmatpush1.bf16.msra.mxu0 0
      %1791 = vmatprep.subr.bf16.mxu0 0
      %1792 = vmatpush1.bf16.msra.mxu0 0
      %1793 = vmatprep.subr.bf16.mxu0 0
      %1794 = vmatpush1.bf16.msra.mxu0 0
      %1795 = vmatprep.subr.bf16.mxu0 0
      %1796 = vmatpush1.bf16.msra.mxu0 0
      %1797 = vmatprep.subr.bf16.mxu0 0
      %1798 = vmatpush1.bf16.msra.mxu0 0
      %1799 = vmatprep.subr.bf16.mxu0 0
      %1800 = vmatpush1.bf16.msra.mxu0 0
      %1801 = vmatprep.subr.bf16.mxu0 0
      %1802 = vmatpush1.bf16.msra.mxu0 0
      %1803 = vmatprep.subr.bf16.mxu0 0
      %1804 = vmatpush1.bf16.msra.mxu0 0
      %1805 = vmatprep.mubr.bf16.mxu0 0
      %1806 = vmatmul.mubr.bf16.gmra.mrb[0].mxu0 %v1719
      %v1807 = vpop.f32.mrb[0].mxu0
      %v1808 = vadd.f32 0.0, %v1807
      %v1809 = vpop.f32.mrb[0].mxu0
      %v1810 = vpop.f32.mrb[0].mxu0
      %v1811 = vadd.f32 0.0, %v1810
      %v1812 = vpop.f32.mrb[0].mxu0
      %1813 = vmatprep.mubr.bf16.mxu0 0
      %1814 = vmatmul.mubr.bf16.gmra.mrb[0].mxu0 %v1720
      %v1815 = vpop.f32.mrb[0].mxu0
      %v1816 = vadd.f32 0.0, %v1815
      %v1817 = vpop.f32.mrb[0].mxu0
      %v1818 = vpop.f32.mrb[0].mxu0
      %v1819 = vadd.f32 0.0, %v1818
      %v1820 = vpop.f32.mrb[0].mxu0
      %1821 = vmatprep.mubr.bf16.mxu0 0
      %1822 = vmatmul.mubr.bf16.gmra.mrb[0].mxu0 %v1721
      %v1823 = vpop.f32.mrb[0].mxu0
      %v1824 = vadd.f32 0.0, %v1823
      %v1825 = vpop.f32.mrb[0].mxu0
      %v1826 = vpop.f32.mrb[0].mxu0
      %v1827 = vadd.f32 0.0, %v1826
      %v1828 = vpop.f32.mrb[0].mxu0
      %1829 = vdwg.mxu0
      %v1830 = vadd.f32 %v1684, %v1808
      %v1831 = vadd.f32 %v1685, %v1811
      %v1832 = vadd.f32 %v1686, %v1816
      %v1833 = vadd.f32 %v1687, %v1819
      %v1834 = vadd.f32 %v1688, %v1824
      %v1835 = vadd.f32 %v1689, %v1827
      %1836 = vst [vmem:[#allocation8] sm:$0xff] %v1830
      %1837 = vst [vmem:[#allocation8 + $0x8] sm:$0xff] %v1831
      %1838 = vst [vmem:[#allocation8 + $0x10] sm:$0xff] %v1832
      %1839 = vst [vmem:[#allocation8 + $0x18] sm:$0xff] %v1833
      %1840 = vst [vmem:[#allocation8 + $0x20] sm:$0xff] %v1834
      %1841 = vst [vmem:[#allocation8 + $0x28] sm:$0xff] %v1835
      %v1842 = vld [vmem:[%s344] sm:$0xf]
      %v1843 = vld [vmem:[%s344 + $0x4] sm:$0xf]
      %v1844 = vld [vmem:[%s344 + $0x8] sm:$0xf]
      %v1845 = vld [vmem:[%s344 + $0xc] sm:$0xf]
      %v1846 = vld [vmem:[%s344 + $0x10] sm:$0xf]
      %v1847 = vld [vmem:[%s344 + $0x14] sm:$0xf]
      %v1848 = vld [vmem:[#allocation8] sm:$0xff]
      %v1849 = vld [vmem:[#allocation8 + $0x8] sm:$0xff]
      %v1850 = vld [vmem:[#allocation8 + $0x10] sm:$0xff]
      %v1851 = vld [vmem:[#allocation8 + $0x18] sm:$0xff]
      %v1852 = vld [vmem:[#allocation8 + $0x20] sm:$0xff]
      %v1853 = vld [vmem:[#allocation8 + $0x28] sm:$0xff]
      %s1854 = scalar_lea.vmem %s1, 512
      %v1855 = vld [vmem:[%s1854] sm:$0xf]
      %v1856 = vld [vmem:[%s1854 + $0x4] sm:$0xf]
      %v1857 = vld [vmem:[%s1854 + $0x8] sm:$0xf]
      %v1858 = vld [vmem:[%s1854 + $0xc] sm:$0xf]
      %v1859 = vld [vmem:[%s1854 + $0x10] sm:$0xf]
      %v1860 = vld [vmem:[%s1854 + $0x14] sm:$0xf]
      %v1861 = vld [vmem:[%s1854 + $0x18] sm:$0xf]
      %v1862 = vld [vmem:[%s1854 + $0x1c] sm:$0xf]
      %v1863 = vld [vmem:[%s1854 + $0x20] sm:$0xf]
      %v1864 = vld [vmem:[%s1854 + $0x24] sm:$0xf]
      %v1865 = vld [vmem:[%s1854 + $0x28] sm:$0xf]
      %v1866 = vld [vmem:[%s1854 + $0x2c] sm:$0xf]
      %v1867 = vld [vmem:[%s1854 + $0x30] sm:$0xf]
      %v1868 = vld [vmem:[%s1854 + $0x34] sm:$0xf]
      %v1869 = vld [vmem:[%s1854 + $0x38] sm:$0xf]
      %v1870 = vld [vmem:[%s1854 + $0x3c] sm:$0xf]
      %v1877 = vunpack.c.l.b16 %v1842
      %v1878 = vunpack.c.l.b16 %v1843
      %v1879 = vunpack.c.l.b16 %v1844
      %v1880 = vunpack.c.l.b16 %v1845
      %v1881 = vunpack.c.l.b16 %v1846
      %v1882 = vunpack.c.l.b16 %v1847
      %v1883 = vpack.c.b16 %v1878, %v1877
      %v1884 = vpack.c.b16 %v1880, %v1879
      %v1885 = vpack.c.b16 %v1882, %v1881
      %v1905 = vunpack.c.l.b16 %v1855
      %v1906 = vunpack.c.l.b16 %v1856
      %v1907 = vunpack.c.l.b16 %v1857
      %v1908 = vunpack.c.l.b16 %v1858
      %v1909 = vunpack.c.l.b16 %v1859
      %v1910 = vunpack.c.l.b16 %v1860
      %v1911 = vunpack.c.l.b16 %v1861
      %v1912 = vunpack.c.l.b16 %v1862
      %v1913 = vunpack.c.l.b16 %v1863
      %v1914 = vunpack.c.l.b16 %v1864
      %v1915 = vunpack.c.l.b16 %v1865
      %v1916 = vunpack.c.l.b16 %v1866
      %v1917 = vunpack.c.l.b16 %v1867
      %v1918 = vunpack.c.l.b16 %v1868
      %v1919 = vunpack.c.l.b16 %v1869
      %v1920 = vunpack.c.l.b16 %v1870
      %v1921 = vpack.c.b16 %v1906, %v1905
      %v1922 = vpack.c.b16 %v1908, %v1907
      %v1923 = vpack.c.b16 %v1910, %v1909
      %v1924 = vpack.c.b16 %v1912, %v1911
      %v1925 = vpack.c.b16 %v1914, %v1913
      %v1926 = vpack.c.b16 %v1916, %v1915
      %v1927 = vpack.c.b16 %v1918, %v1917
      %v1928 = vpack.c.b16 %v1920, %v1919
      %1937 = vmatprep.subr.bf16.mxu0 0
      %1938 = vmatpush1.bf16.msra.mxu0 %v1921
      %1939 = vmatprep.subr.bf16.mxu0 0
      %1940 = vmatpush1.bf16.msra.mxu0 %v1922
      %1941 = vmatprep.subr.bf16.mxu0 0
      %1942 = vmatpush1.bf16.msra.mxu0 %v1923
      %1943 = vmatprep.subr.bf16.mxu0 0
      %1944 = vmatpush1.bf16.msra.mxu0 %v1924
      %1945 = vmatprep.subr.bf16.mxu0 0
      %1946 = vmatpush1.bf16.msra.mxu0 %v1925
      %1947 = vmatprep.subr.bf16.mxu0 0
      %1948 = vmatpush1.bf16.msra.mxu0 %v1926
      %1949 = vmatprep.subr.bf16.mxu0 0
      %1950 = vmatpush1.bf16.msra.mxu0 %v1927
      %1951 = vmatprep.subr.bf16.mxu0 0
      %1952 = vmatpush1.bf16.msra.mxu0 %v1928
      %1953 = vmatprep.subr.bf16.mxu0 0
      %1954 = vmatpush1.bf16.msra.mxu0 0
      %1955 = vmatprep.subr.bf16.mxu0 0
      %1956 = vmatpush1.bf16.msra.mxu0 0
      %1957 = vmatprep.subr.bf16.mxu0 0
      %1958 = vmatpush1.bf16.msra.mxu0 0
      %1959 = vmatprep.subr.bf16.mxu0 0
      %1960 = vmatpush1.bf16.msra.mxu0 0
      %1961 = vmatprep.subr.bf16.mxu0 0
      %1962 = vmatpush1.bf16.msra.mxu0 0
      %1963 = vmatprep.subr.bf16.mxu0 0
      %1964 = vmatpush1.bf16.msra.mxu0 0
      %1965 = vmatprep.subr.bf16.mxu0 0
      %1966 = vmatpush1.bf16.msra.mxu0 0
      %1967 = vmatprep.subr.bf16.mxu0 0
      %1968 = vmatpush1.bf16.msra.mxu0 0
      %1969 = vmatprep.mubr.bf16.mxu0 0
      %1970 = vmatmul.mubr.bf16.gmra.mrb[0].mxu0 %v1883
      %v1971 = vpop.f32.mrb[0].mxu0
      %v1972 = vadd.f32 0.0, %v1971
      %v1973 = vpop.f32.mrb[0].mxu0
      %v1974 = vpop.f32.mrb[0].mxu0
      %v1975 = vadd.f32 0.0, %v1974
      %v1976 = vpop.f32.mrb[0].mxu0
      %1977 = vmatprep.mubr.bf16.mxu0 0
      %1978 = vmatmul.mubr.bf16.gmra.mrb[0].mxu0 %v1884
      %v1979 = vpop.f32.mrb[0].mxu0
      %v1980 = vadd.f32 0.0, %v1979
      %v1981 = vpop.f32.mrb[0].mxu0
      %v1982 = vpop.f32.mrb[0].mxu0
      %v1983 = vadd.f32 0.0, %v1982
      %v1984 = vpop.f32.mrb[0].mxu0
      %1985 = vmatprep.mubr.bf16.mxu0 0
      %1986 = vmatmul.mubr.bf16.gmra.mrb[0].mxu0 %v1885
      %v1987 = vpop.f32.mrb[0].mxu0
      %v1988 = vadd.f32 0.0, %v1987
      %v1989 = vpop.f32.mrb[0].mxu0
      %v1990 = vpop.f32.mrb[0].mxu0
      %v1991 = vadd.f32 0.0, %v1990
      %v1992 = vpop.f32.mrb[0].mxu0
      %1993 = vdwg.mxu0
      %v1994 = vadd.f32 %v1848, %v1972
      %v1995 = vadd.f32 %v1849, %v1975
      %v1996 = vadd.f32 %v1850, %v1980
      %v1997 = vadd.f32 %v1851, %v1983
      %v1998 = vadd.f32 %v1852, %v1988
      %v1999 = vadd.f32 %v1853, %v1991
      %2000 = vst [vmem:[#allocation8] sm:$0xff] %v1994
      %2001 = vst [vmem:[#allocation8 + $0x8] sm:$0xff] %v1995
      %2002 = vst [vmem:[#allocation8 + $0x10] sm:$0xff] %v1996
      %2003 = vst [vmem:[#allocation8 + $0x18] sm:$0xff] %v1997
      %2004 = vst [vmem:[#allocation8 + $0x20] sm:$0xff] %v1998
      %2005 = vst [vmem:[#allocation8 + $0x28] sm:$0xff] %v1999
      %v2006 = vld [vmem:[#allocation8] sm:$0xff]
      %v2007 = vld [vmem:[#allocation8 + $0x8] sm:$0xff]
      %v2008 = vld [vmem:[#allocation8 + $0x10] sm:$0xff]
      %v2009 = vld [vmem:[#allocation8 + $0x18] sm:$0xff]
      %v2010 = vld [vmem:[#allocation8 + $0x20] sm:$0xff]
      %v2011 = vld [vmem:[#allocation8 + $0x28] sm:$0xff]
      %v2012 = vld [vmem:[%s2] sm:$0x1]
      %v2014 = vlaneseq
      %v2015 = vshrl.u32 %v2014, 7
      %v2016 = vsub.s32 0, %v2015
      %v2017 = vrot.slane %v2012, %v2016
      %v2019 = vadd.f32 %v2006, %v2017
      %v2020 = vadd.f32 %v2007, %v2017
      %v2021 = vadd.f32 %v2008, %v2017
      %v2022 = vadd.f32 %v2009, %v2017
      %v2023 = vadd.f32 %v2010, %v2017
      %v2024 = vadd.f32 %v2011, %v2017
      %v2025 = vmax.f32 %v2019, 0.0
      %v2026 = vmax.f32 %v2020, 0.0
      %v2027 = vmax.f32 %v2021, 0.0
      %v2028 = vmax.f32 %v2022, 0.0
      %v2029 = vmax.f32 %v2023, 0.0
      %v2030 = vmax.f32 %v2024, 0.0
      %v2031 = vpack.c.bf16 %v2026, %v2025
      %v2032 = vpack.c.bf16 %v2028, %v2027
      %v2033 = vpack.c.bf16 %v2030, %v2029
      %v2037 = vunpack.c.l.b16 %v2031
      %v2038 = vunpack.c.h.b16 %v2031
      %v2039 = vunpack.c.l.b16 %v2032
      %v2040 = vunpack.c.h.b16 %v2032
      %v2041 = vunpack.c.l.b16 %v2033
      %v2042 = vunpack.c.h.b16 %v2033
      %v2043 = vpack.c.b16 %v2037, %v2037
      %v2044 = vpack.c.b16 %v2038, %v2038
      %v2045 = vpack.c.b16 %v2039, %v2039
      %v2046 = vpack.c.b16 %v2040, %v2040
      %v2047 = vpack.c.b16 %v2041, %v2041
      %v2048 = vpack.c.b16 %v2042, %v2042
      %2055 = vst [vmem:[#allocation6] sm:$0xf] %v2043
      %2056 = vst [vmem:[#allocation6 + $0x4] sm:$0xf] %v2044
      %2057 = vst [vmem:[#allocation6 + $0x8] sm:$0xf] %v2045
      %2058 = vst [vmem:[#allocation6 + $0xc] sm:$0xf] %v2046
      %2059 = vst [vmem:[#allocation6 + $0x10] sm:$0xf] %v2047
      %2060 = vst [vmem:[#allocation6 + $0x14] sm:$0xf] %v2048
      %v2062 = vshrl.u32 %v2043, 16
      %v2064 = vrot.slane %v2062, 7
      %v2065 = vshll.u32 %v2043, 16
      %v2067 = vor.u32 %v2064, %v2065
      %v2069 = vshrl.u32 %v2044, 16
      %v2071 = vrot.slane %v2069, 7
      %v2072 = vshll.u32 %v2044, 16
      %v2074 = vor.u32 %v2071, %v2072
      %v2076 = vshrl.u32 %v2045, 16
      %v2078 = vrot.slane %v2076, 7
      %v2079 = vshll.u32 %v2045, 16
      %v2081 = vor.u32 %v2078, %v2079
      %v2083 = vshrl.u32 %v2046, 16
      %v2085 = vrot.slane %v2083, 7
      %v2086 = vshll.u32 %v2046, 16
      %v2088 = vor.u32 %v2085, %v2086
      %v2090 = vshrl.u32 %v2047, 16
      %v2092 = vrot.slane %v2090, 7
      %v2093 = vshll.u32 %v2047, 16
      %v2095 = vor.u32 %v2092, %v2093
      %v2097 = vshrl.u32 %v2048, 16
      %v2099 = vrot.slane %v2097, 7
      %v2100 = vshll.u32 %v2048, 16
      %v2102 = vor.u32 %v2099, %v2100
      %v2109 = vld [vmem:[#allocation5] sm:$0xf]
      %v2110 = vsel %vm296, %v2067, %v2109
      %2111 = vst [vmem:[#allocation5] sm:$0xf] %v2110
      %v2112 = vld [vmem:[#allocation5 + $0x4] sm:$0xf]
      %v2113 = vsel %vm296, %v2074, %v2112
      %2114 = vst [vmem:[#allocation5 + $0x4] sm:$0xf] %v2113
      %v2115 = vld [vmem:[#allocation5 + $0x8] sm:$0xf]
      %v2116 = vsel %vm296, %v2081, %v2115
      %2117 = vst [vmem:[#allocation5 + $0x8] sm:$0xf] %v2116
      %v2118 = vld [vmem:[#allocation5 + $0xc] sm:$0xf]
      %v2119 = vsel %vm296, %v2088, %v2118
      %2120 = vst [vmem:[#allocation5 + $0xc] sm:$0xf] %v2119
      %v2121 = vld [vmem:[#allocation5 + $0x10] sm:$0xf]
      %v2122 = vsel %vm296, %v2095, %v2121
      %2123 = vst [vmem:[#allocation5 + $0x10] sm:$0xf] %v2122
      %v2124 = vld [vmem:[#allocation5 + $0x14] sm:$0xf]
      %v2125 = vsel %vm296, %v2102, %v2124
      %2126 = vst [vmem:[#allocation5 + $0x14] sm:$0xf] %v2125
      %v2127 = vld [vmem:[#allocation5] sm:$0x1]
      %v2128 = vsel %vm311, 0, %v2127
      %2129 = vst [vmem:[#allocation5] sm:$0x1] %v2128
      %v2130 = vld [vmem:[#allocation5 + $0x4] sm:$0x1]
      %v2131 = vsel %vm311, 0, %v2130
      %2132 = vst [vmem:[#allocation5 + $0x4] sm:$0x1] %v2131
      %v2133 = vld [vmem:[#allocation5 + $0x8] sm:$0x1]
      %v2134 = vsel %vm311, 0, %v2133
      %2135 = vst [vmem:[#allocation5 + $0x8] sm:$0x1] %v2134
      %v2136 = vld [vmem:[#allocation5 + $0xc] sm:$0x1]
      %v2137 = vsel %vm311, 0, %v2136
      %2138 = vst [vmem:[#allocation5 + $0xc] sm:$0x1] %v2137
      %v2139 = vld [vmem:[#allocation5 + $0x10] sm:$0x1]
      %v2140 = vsel %vm311, 0, %v2139
      %2141 = vst [vmem:[#allocation5 + $0x10] sm:$0x1] %v2140
      %v2142 = vld [vmem:[#allocation5 + $0x14] sm:$0x1]
      %v2143 = vsel %vm311, 0, %v2142
      %2144 = vst [vmem:[#allocation5 + $0x14] sm:$0x1] %v2143
      %v2145 = vrot.slane %v2062, 4
      %v2146 = vrot.slane %v2065, 5
      %v2147 = vor.u32 %v2145, %v2146
      %v2148 = vrot.slane %v2147, 4
      %v2149 = vrot.slane %v2069, 4
      %v2150 = vrot.slane %v2072, 5
      %v2151 = vor.u32 %v2149, %v2150
      %v2152 = vrot.slane %v2151, 4
      %v2153 = vrot.slane %v2076, 4
      %v2154 = vrot.slane %v2079, 5
      %v2155 = vor.u32 %v2153, %v2154
      %v2156 = vrot.slane %v2155, 4
      %v2157 = vrot.slane %v2083, 4
      %v2158 = vrot.slane %v2086, 5
      %v2159 = vor.u32 %v2157, %v2158
      %v2160 = vrot.slane %v2159, 4
      %v2161 = vrot.slane %v2090, 4
      %v2162 = vrot.slane %v2093, 5
      %v2163 = vor.u32 %v2161, %v2162
      %v2164 = vrot.slane %v2163, 4
      %v2165 = vrot.slane %v2097, 4
      %v2166 = vrot.slane %v2100, 5
      %v2167 = vor.u32 %v2165, %v2166
      %v2168 = vrot.slane %v2167, 4
      %v2175 = vld [vmem:[#allocation7] sm:$0xf]
      %v2176 = vsel %vm346, %v2148, %v2175
      %2177 = vst [vmem:[#allocation7] sm:$0xf] %v2176
      %v2178 = vld [vmem:[#allocation7 + $0x4] sm:$0xf]
      %v2179 = vsel %vm346, %v2152, %v2178
      %2180 = vst [vmem:[#allocation7 + $0x4] sm:$0xf] %v2179
      %v2181 = vld [vmem:[#allocation7 + $0x8] sm:$0xf]
      %v2182 = vsel %vm346, %v2156, %v2181
      %2183 = vst [vmem:[#allocation7 + $0x8] sm:$0xf] %v2182
      %v2184 = vld [vmem:[#allocation7 + $0xc] sm:$0xf]
      %v2185 = vsel %vm346, %v2160, %v2184
      %2186 = vst [vmem:[#allocation7 + $0xc] sm:$0xf] %v2185
      %v2187 = vld [vmem:[#allocation7 + $0x10] sm:$0xf]
      %v2188 = vsel %vm346, %v2164, %v2187
      %2189 = vst [vmem:[#allocation7 + $0x10] sm:$0xf] %v2188
      %v2190 = vld [vmem:[#allocation7 + $0x14] sm:$0xf]
      %v2191 = vsel %vm346, %v2168, %v2190
      %2192 = vst [vmem:[#allocation7 + $0x14] sm:$0xf] %v2191
      %v2193 = vld [vmem:[#allocation7] sm:$0x8]
      %v2194 = vsel %vm361, 0, %v2193
      %2195 = vst [vmem:[#allocation7] sm:$0x8] %v2194
      %v2196 = vld [vmem:[#allocation7 + $0x4] sm:$0x8]
      %v2197 = vsel %vm361, 0, %v2196
      %2198 = vst [vmem:[#allocation7 + $0x4] sm:$0x8] %v2197
      %v2199 = vld [vmem:[#allocation7 + $0x8] sm:$0x8]
      %v2200 = vsel %vm361, 0, %v2199
      %2201 = vst [vmem:[#allocation7 + $0x8] sm:$0x8] %v2200
      %v2202 = vld [vmem:[#allocation7 + $0xc] sm:$0x8]
      %v2203 = vsel %vm361, 0, %v2202
      %2204 = vst [vmem:[#allocation7 + $0xc] sm:$0x8] %v2203
      %v2205 = vld [vmem:[#allocation7 + $0x10] sm:$0x8]
      %v2206 = vsel %vm361, 0, %v2205
      %2207 = vst [vmem:[#allocation7 + $0x10] sm:$0x8] %v2206
      %v2208 = vld [vmem:[#allocation7 + $0x14] sm:$0x8]
      %v2209 = vsel %vm361, 0, %v2208
      %2210 = vst [vmem:[#allocation7 + $0x14] sm:$0x8] %v2209
      // Predicated region
      $region57: #{_forward_impl.1} parent=39 // pred_check
        %p2211 = pneg %p435
      $region58: #{_forward_impl.1} parent=39 // pred_check_branch
        %2213 = sbr.rel (%p2211) target = $region60
      $region59: #{_forward_impl.1} parent=39 // pred_region
        %2214 = vst [vmem:[#allocation5] sm:$0xf] 0
        %2215 = vst [vmem:[#allocation6] sm:$0xf] 0
        %2216 = vst [vmem:[#allocation7] sm:$0xf] 0
      $region60: #{_forward_impl.1} parent=39 // pred_fallthru
        _
      // Predicated region
      $region61: #{_forward_impl.1} parent=39 // pred_check
        %p2217 = pneg %p509
      $region62: #{_forward_impl.1} parent=39 // pred_check_branch
        %2219 = sbr.rel (%p2217) target = $region64
      $region63: #{_forward_impl.1} parent=39 // pred_region
        %s2220 = scalar_lea.vmem [#allocation5], 20
        %2221 = vst [vmem:[%s2220] sm:$0xf] 0
        %s2222 = scalar_lea.vmem [#allocation6], 20
        %2223 = vst [vmem:[%s2222] sm:$0xf] 0
        %s2224 = scalar_lea.vmem [#allocation7], 20
        %2225 = vst [vmem:[%s2224] sm:$0xf] 0
      $region64: #{_forward_impl.1} parent=39 // pred_fallthru
        _
      %2226 = vst [vmem:[#allocation9] sm:$0xff] 0.0
      %2227 = vst [vmem:[#allocation9 + $0x8] sm:$0xff] 0.0
      %2228 = vst [vmem:[#allocation9 + $0x10] sm:$0xff] 0.0
      %2229 = vst [vmem:[#allocation9 + $0x18] sm:$0xff] 0.0
      %v2230 = vld [vmem:[#allocation5] sm:$0xf]
      %v2231 = vld [vmem:[#allocation5 + $0x4] sm:$0xf]
      %v2232 = vld [vmem:[#allocation5 + $0x8] sm:$0xf]
      %v2233 = vld [vmem:[#allocation5 + $0xc] sm:$0xf]
      %v2234 = vld [vmem:[#allocation9] sm:$0xff]
      %v2235 = vld [vmem:[#allocation9 + $0x8] sm:$0xff]
      %v2236 = vld [vmem:[#allocation9 + $0x10] sm:$0xff]
      %v2237 = vld [vmem:[#allocation9 + $0x18] sm:$0xff]
      %v2238 = vld [vmem:[%s3] sm:$0xf]
      %v2239 = vld [vmem:[%s3 + $0x4] sm:$0xf]
      %v2240 = vld [vmem:[%s3 + $0x8] sm:$0xf]
      %v2241 = vld [vmem:[%s3 + $0xc] sm:$0xf]
      %v2242 = vld [vmem:[%s3 + $0x10] sm:$0xf]
      %v2243 = vld [vmem:[%s3 + $0x14] sm:$0xf]
      %v2244 = vld [vmem:[%s3 + $0x18] sm:$0xf]
      %v2245 = vld [vmem:[%s3 + $0x1c] sm:$0xf]
      %v2246 = vld [vmem:[%s3 + $0x20] sm:$0xf]
      %v2247 = vld [vmem:[%s3 + $0x24] sm:$0xf]
      %v2248 = vld [vmem:[%s3 + $0x28] sm:$0xf]
      %v2249 = vld [vmem:[%s3 + $0x2c] sm:$0xf]
      %v2250 = vld [vmem:[%s3 + $0x30] sm:$0xf]
      %v2251 = vld [vmem:[%s3 + $0x34] sm:$0xf]
      %v2252 = vld [vmem:[%s3 + $0x38] sm:$0xf]
      %v2253 = vld [vmem:[%s3 + $0x3c] sm:$0xf]
      %v2258 = vunpack.c.l.b16 %v2230
      %v2259 = vunpack.c.l.b16 %v2231
      %v2260 = vunpack.c.l.b16 %v2232
      %v2261 = vunpack.c.l.b16 %v2233
      %v2262 = vpack.c.b16 %v2259, %v2258
      %v2263 = vpack.c.b16 %v2261, %v2260
      %v2282 = vunpack.c.l.b16 %v2238
      %v2283 = vunpack.c.l.b16 %v2239
      %v2284 = vunpack.c.l.b16 %v2240
      %v2285 = vunpack.c.l.b16 %v2241
      %v2286 = vunpack.c.l.b16 %v2242
      %v2287 = vunpack.c.l.b16 %v2243
      %v2288 = vunpack.c.l.b16 %v2244
      %v2289 = vunpack.c.l.b16 %v2245
      %v2290 = vunpack.c.l.b16 %v2246
      %v2291 = vunpack.c.l.b16 %v2247
      %v2292 = vunpack.c.l.b16 %v2248
      %v2293 = vunpack.c.l.b16 %v2249
      %v2294 = vunpack.c.l.b16 %v2250
      %v2295 = vunpack.c.l.b16 %v2251
      %v2296 = vunpack.c.l.b16 %v2252
      %v2297 = vunpack.c.l.b16 %v2253
      %v2298 = vpack.c.b16 %v2283, %v2282
      %v2299 = vpack.c.b16 %v2285, %v2284
      %v2300 = vpack.c.b16 %v2287, %v2286
      %v2301 = vpack.c.b16 %v2289, %v2288
      %v2302 = vpack.c.b16 %v2291, %v2290
      %v2303 = vpack.c.b16 %v2293, %v2292
      %v2304 = vpack.c.b16 %v2295, %v2294
      %v2305 = vpack.c.b16 %v2297, %v2296
      %2314 = vmatprep.subr.bf16.mxu0 0
      %2315 = vmatpush1.bf16.msra.mxu0 %v2298
      %2316 = vmatprep.subr.bf16.mxu0 0
      %2317 = vmatpush1.bf16.msra.mxu0 %v2299
      %2318 = vmatprep.subr.bf16.mxu0 0
      %2319 = vmatpush1.bf16.msra.mxu0 %v2300
      %2320 = vmatprep.subr.bf16.mxu0 0
      %2321 = vmatpush1.bf16.msra.mxu0 %v2301
      %2322 = vmatprep.subr.bf16.mxu0 0
      %2323 = vmatpush1.bf16.msra.mxu0 %v2302
      %2324 = vmatprep.subr.bf16.mxu0 0
      %2325 = vmatpush1.bf16.msra.mxu0 %v2303
      %2326 = vmatprep.subr.bf16.mxu0 0
      %2327 = vmatpush1.bf16.msra.mxu0 %v2304
      %2328 = vmatprep.subr.bf16.mxu0 0
      %2329 = vmatpush1.bf16.msra.mxu0 %v2305
      %2330 = vmatprep.subr.bf16.mxu0 0
      %2331 = vmatpush1.bf16.msra.mxu0 0
      %2332 = vmatprep.subr.bf16.mxu0 0
      %2333 = vmatpush1.bf16.msra.mxu0 0
      %2334 = vmatprep.subr.bf16.mxu0 0
      %2335 = vmatpush1.bf16.msra.mxu0 0
      %2336 = vmatprep.subr.bf16.mxu0 0
      %2337 = vmatpush1.bf16.msra.mxu0 0
      %2338 = vmatprep.subr.bf16.mxu0 0
      %2339 = vmatpush1.bf16.msra.mxu0 0
      %2340 = vmatprep.subr.bf16.mxu0 0
      %2341 = vmatpush1.bf16.msra.mxu0 0
      %2342 = vmatprep.subr.bf16.mxu0 0
      %2343 = vmatpush1.bf16.msra.mxu0 0
      %2344 = vmatprep.subr.bf16.mxu0 0
      %2345 = vmatpush1.bf16.msra.mxu0 0
      %2346 = vmatprep.mubr.bf16.mxu0 0
      %2347 = vmatmul.mubr.bf16.gmra.mrb[0].mxu0 %v2262
      %v2348 = vpop.f32.mrb[0].mxu0
      %v2349 = vadd.f32 0.0, %v2348
      %v2350 = vpop.f32.mrb[0].mxu0
      %v2351 = vpop.f32.mrb[0].mxu0
      %v2352 = vadd.f32 0.0, %v2351
      %v2353 = vpop.f32.mrb[0].mxu0
      %2354 = vmatprep.mubr.bf16.mxu0 0
      %2355 = vmatmul.mubr.bf16.gmra.mrb[0].mxu0 %v2263
      %v2356 = vpop.f32.mrb[0].mxu0
      %v2357 = vadd.f32 0.0, %v2356
      %v2358 = vpop.f32.mrb[0].mxu0
      %v2359 = vpop.f32.mrb[0].mxu0
      %v2360 = vadd.f32 0.0, %v2359
      %v2361 = vpop.f32.mrb[0].mxu0
      %2362 = vdwg.mxu0
      %v2363 = vadd.f32 %v2234, %v2349
      %v2364 = vadd.f32 %v2235, %v2352
      %v2365 = vadd.f32 %v2236, %v2357
      %v2366 = vadd.f32 %v2237, %v2360
      %2367 = vst [vmem:[#allocation9] sm:$0xff] %v2363
      %2368 = vst [vmem:[#allocation9 + $0x8] sm:$0xff] %v2364
      %2369 = vst [vmem:[#allocation9 + $0x10] sm:$0xff] %v2365
      %2370 = vst [vmem:[#allocation9 + $0x18] sm:$0xff] %v2366
      %v2371 = vld [vmem:[#allocation6] sm:$0xf]
      %v2372 = vld [vmem:[#allocation6 + $0x4] sm:$0xf]
      %v2373 = vld [vmem:[#allocation6 + $0x8] sm:$0xf]
      %v2374 = vld [vmem:[#allocation6 + $0xc] sm:$0xf]
      %v2375 = vld [vmem:[#allocation9] sm:$0xff]
      %v2376 = vld [vmem:[#allocation9 + $0x8] sm:$0xff]
      %v2377 = vld [vmem:[#allocation9 + $0x10] sm:$0xff]
      %v2378 = vld [vmem:[#allocation9 + $0x18] sm:$0xff]
      %s2379 = scalar_lea.vmem %s3, 64
      %v2380 = vld [vmem:[%s2379] sm:$0xf]
      %v2381 = vld [vmem:[%s2379 + $0x4] sm:$0xf]
      %v2382 = vld [vmem:[%s2379 + $0x8] sm:$0xf]
      %v2383 = vld [vmem:[%s2379 + $0xc] sm:$0xf]
      %v2384 = vld [vmem:[%s2379 + $0x10] sm:$0xf]
      %v2385 = vld [vmem:[%s2379 + $0x14] sm:$0xf]
      %v2386 = vld [vmem:[%s2379 + $0x18] sm:$0xf]
      %v2387 = vld [vmem:[%s2379 + $0x1c] sm:$0xf]
      %v2388 = vld [vmem:[%s2379 + $0x20] sm:$0xf]
      %v2389 = vld [vmem:[%s2379 + $0x24] sm:$0xf]
      %v2390 = vld [vmem:[%s2379 + $0x28] sm:$0xf]
      %v2391 = vld [vmem:[%s2379 + $0x2c] sm:$0xf]
      %v2392 = vld [vmem:[%s2379 + $0x30] sm:$0xf]
      %v2393 = vld [vmem:[%s2379 + $0x34] sm:$0xf]
      %v2394 = vld [vmem:[%s2379 + $0x38] sm:$0xf]
      %v2395 = vld [vmem:[%s2379 + $0x3c] sm:$0xf]
      %v2400 = vunpack.c.l.b16 %v2371
      %v2401 = vunpack.c.l.b16 %v2372
      %v2402 = vunpack.c.l.b16 %v2373
      %v2403 = vunpack.c.l.b16 %v2374
      %v2404 = vpack.c.b16 %v2401, %v2400
      %v2405 = vpack.c.b16 %v2403, %v2402
      %v2424 = vunpack.c.l.b16 %v2380
      %v2425 = vunpack.c.l.b16 %v2381
      %v2426 = vunpack.c.l.b16 %v2382
      %v2427 = vunpack.c.l.b16 %v2383
      %v2428 = vunpack.c.l.b16 %v2384
      %v2429 = vunpack.c.l.b16 %v2385
      %v2430 = vunpack.c.l.b16 %v2386
      %v2431 = vunpack.c.l.b16 %v2387
      %v2432 = vunpack.c.l.b16 %v2388
      %v2433 = vunpack.c.l.b16 %v2389
      %v2434 = vunpack.c.l.b16 %v2390
      %v2435 = vunpack.c.l.b16 %v2391
      %v2436 = vunpack.c.l.b16 %v2392
      %v2437 = vunpack.c.l.b16 %v2393
      %v2438 = vunpack.c.l.b16 %v2394
      %v2439 = vunpack.c.l.b16 %v2395
      %v2440 = vpack.c.b16 %v2425, %v2424
      %v2441 = vpack.c.b16 %v2427, %v2426
      %v2442 = vpack.c.b16 %v2429, %v2428
      %v2443 = vpack.c.b16 %v2431, %v2430
      %v2444 = vpack.c.b16 %v2433, %v2432
      %v2445 = vpack.c.b16 %v2435, %v2434
      %v2446 = vpack.c.b16 %v2437, %v2436
      %v2447 = vpack.c.b16 %v2439, %v2438
      %2456 = vmatprep.subr.bf16.mxu0 0
      %2457 = vmatpush1.bf16.msra.mxu0 %v2440
      %2458 = vmatprep.subr.bf16.mxu0 0
      %2459 = vmatpush1.bf16.msra.mxu0 %v2441
      %2460 = vmatprep.subr.bf16.mxu0 0
      %2461 = vmatpush1.bf16.msra.mxu0 %v2442
      %2462 = vmatprep.subr.bf16.mxu0 0
      %2463 = vmatpush1.bf16.msra.mxu0 %v2443
      %2464 = vmatprep.subr.bf16.mxu0 0
      %2465 = vmatpush1.bf16.msra.mxu0 %v2444
      %2466 = vmatprep.subr.bf16.mxu0 0
      %2467 = vmatpush1.bf16.msra.mxu0 %v2445
      %2468 = vmatprep.subr.bf16.mxu0 0
      %2469 = vmatpush1.bf16.msra.mxu0 %v2446
      %2470 = vmatprep.subr.bf16.mxu0 0
      %2471 = vmatpush1.bf16.msra.mxu0 %v2447
      %2472 = vmatprep.subr.bf16.mxu0 0
      %2473 = vmatpush1.bf16.msra.mxu0 0
      %2474 = vmatprep.subr.bf16.mxu0 0
      %2475 = vmatpush1.bf16.msra.mxu0 0
      %2476 = vmatprep.subr.bf16.mxu0 0
      %2477 = vmatpush1.bf16.msra.mxu0 0
      %2478 = vmatprep.subr.bf16.mxu0 0
      %2479 = vmatpush1.bf16.msra.mxu0 0
      %2480 = vmatprep.subr.bf16.mxu0 0
      %2481 = vmatpush1.bf16.msra.mxu0 0
      %2482 = vmatprep.subr.bf16.mxu0 0
      %2483 = vmatpush1.bf16.msra.mxu0 0
      %2484 = vmatprep.subr.bf16.mxu0 0
      %2485 = vmatpush1.bf16.msra.mxu0 0
      %2486 = vmatprep.subr.bf16.mxu0 0
      %2487 = vmatpush1.bf16.msra.mxu0 0
      %2488 = vmatprep.mubr.bf16.mxu0 0
      %2489 = vmatmul.mubr.bf16.gmra.mrb[0].mxu0 %v2404
      %v2490 = vpop.f32.mrb[0].mxu0
      %v2491 = vadd.f32 0.0, %v2490
      %v2492 = vpop.f32.mrb[0].mxu0
      %v2493 = vpop.f32.mrb[0].mxu0
      %v2494 = vadd.f32 0.0, %v2493
      %v2495 = vpop.f32.mrb[0].mxu0
      %2496 = vmatprep.mubr.bf16.mxu0 0
      %2497 = vmatmul.mubr.bf16.gmra.mrb[0].mxu0 %v2405
      %v2498 = vpop.f32.mrb[0].mxu0
      %v2499 = vadd.f32 0.0, %v2498
      %v2500 = vpop.f32.mrb[0].mxu0
      %v2501 = vpop.f32.mrb[0].mxu0
      %v2502 = vadd.f32 0.0, %v2501
      %v2503 = vpop.f32.mrb[0].mxu0
      %2504 = vdwg.mxu0
      %v2505 = vadd.f32 %v2375, %v2491
      %v2506 = vadd.f32 %v2376, %v2494
      %v2507 = vadd.f32 %v2377, %v2499
      %v2508 = vadd.f32 %v2378, %v2502
      %2509 = vst [vmem:[#allocation9] sm:$0xff] %v2505
      %2510 = vst [vmem:[#allocation9 + $0x8] sm:$0xff] %v2506
      %2511 = vst [vmem:[#allocation9 + $0x10] sm:$0xff] %v2507
      %2512 = vst [vmem:[#allocation9 + $0x18] sm:$0xff] %v2508
      %v2513 = vld [vmem:[#allocation7] sm:$0xf]
      %v2514 = vld [vmem:[#allocation7 + $0x4] sm:$0xf]
      %v2515 = vld [vmem:[#allocation7 + $0x8] sm:$0xf]
      %v2516 = vld [vmem:[#allocation7 + $0xc] sm:$0xf]
      %v2517 = vld [vmem:[#allocation9] sm:$0xff]
      %v2518 = vld [vmem:[#allocation9 + $0x8] sm:$0xff]
      %v2519 = vld [vmem:[#allocation9 + $0x10] sm:$0xff]
      %v2520 = vld [vmem:[#allocation9 + $0x18] sm:$0xff]
      %s2521 = scalar_lea.vmem %s3, 128
      %v2522 = vld [vmem:[%s2521] sm:$0xf]
      %v2523 = vld [vmem:[%s2521 + $0x4] sm:$0xf]
      %v2524 = vld [vmem:[%s2521 + $0x8] sm:$0xf]
      %v2525 = vld [vmem:[%s2521 + $0xc] sm:$0xf]
      %v2526 = vld [vmem:[%s2521 + $0x10] sm:$0xf]
      %v2527 = vld [vmem:[%s2521 + $0x14] sm:$0xf]
      %v2528 = vld [vmem:[%s2521 + $0x18] sm:$0xf]
      %v2529 = vld [vmem:[%s2521 + $0x1c] sm:$0xf]
      %v2530 = vld [vmem:[%s2521 + $0x20] sm:$0xf]
      %v2531 = vld [vmem:[%s2521 + $0x24] sm:$0xf]
      %v2532 = vld [vmem:[%s2521 + $0x28] sm:$0xf]
      %v2533 = vld [vmem:[%s2521 + $0x2c] sm:$0xf]
      %v2534 = vld [vmem:[%s2521 + $0x30] sm:$0xf]
      %v2535 = vld [vmem:[%s2521 + $0x34] sm:$0xf]
      %v2536 = vld [vmem:[%s2521 + $0x38] sm:$0xf]
      %v2537 = vld [vmem:[%s2521 + $0x3c] sm:$0xf]
      %v2542 = vunpack.c.l.b16 %v2513
      %v2543 = vunpack.c.l.b16 %v2514
      %v2544 = vunpack.c.l.b16 %v2515
      %v2545 = vunpack.c.l.b16 %v2516
      %v2546 = vpack.c.b16 %v2543, %v2542
      %v2547 = vpack.c.b16 %v2545, %v2544
      %v2566 = vunpack.c.l.b16 %v2522
      %v2567 = vunpack.c.l.b16 %v2523
      %v2568 = vunpack.c.l.b16 %v2524
      %v2569 = vunpack.c.l.b16 %v2525
      %v2570 = vunpack.c.l.b16 %v2526
      %v2571 = vunpack.c.l.b16 %v2527
      %v2572 = vunpack.c.l.b16 %v2528
      %v2573 = vunpack.c.l.b16 %v2529
      %v2574 = vunpack.c.l.b16 %v2530
      %v2575 = vunpack.c.l.b16 %v2531
      %v2576 = vunpack.c.l.b16 %v2532
      %v2577 = vunpack.c.l.b16 %v2533
      %v2578 = vunpack.c.l.b16 %v2534
      %v2579 = vunpack.c.l.b16 %v2535
      %v2580 = vunpack.c.l.b16 %v2536
      %v2581 = vunpack.c.l.b16 %v2537
      %v2582 = vpack.c.b16 %v2567, %v2566
      %v2583 = vpack.c.b16 %v2569, %v2568
      %v2584 = vpack.c.b16 %v2571, %v2570
      %v2585 = vpack.c.b16 %v2573, %v2572
      %v2586 = vpack.c.b16 %v2575, %v2574
      %v2587 = vpack.c.b16 %v2577, %v2576
      %v2588 = vpack.c.b16 %v2579, %v2578
      %v2589 = vpack.c.b16 %v2581, %v2580
      %2598 = vmatprep.subr.bf16.mxu0 0
      %2599 = vmatpush1.bf16.msra.mxu0 %v2582
      %2600 = vmatprep.subr.bf16.mxu0 0
      %2601 = vmatpush1.bf16.msra.mxu0 %v2583
      %2602 = vmatprep.subr.bf16.mxu0 0
      %2603 = vmatpush1.bf16.msra.mxu0 %v2584
      %2604 = vmatprep.subr.bf16.mxu0 0
      %2605 = vmatpush1.bf16.msra.mxu0 %v2585
      %2606 = vmatprep.subr.bf16.mxu0 0
      %2607 = vmatpush1.bf16.msra.mxu0 %v2586
      %2608 = vmatprep.subr.bf16.mxu0 0
      %2609 = vmatpush1.bf16.msra.mxu0 %v2587
      %2610 = vmatprep.subr.bf16.mxu0 0
      %2611 = vmatpush1.bf16.msra.mxu0 %v2588
      %2612 = vmatprep.subr.bf16.mxu0 0
      %2613 = vmatpush1.bf16.msra.mxu0 %v2589
      %2614 = vmatprep.subr.bf16.mxu0 0
      %2615 = vmatpush1.bf16.msra.mxu0 0
      %2616 = vmatprep.subr.bf16.mxu0 0
      %2617 = vmatpush1.bf16.msra.mxu0 0
      %2618 = vmatprep.subr.bf16.mxu0 0
      %2619 = vmatpush1.bf16.msra.mxu0 0
      %2620 = vmatprep.subr.bf16.mxu0 0
      %2621 = vmatpush1.bf16.msra.mxu0 0
      %2622 = vmatprep.subr.bf16.mxu0 0
      %2623 = vmatpush1.bf16.msra.mxu0 0
      %2624 = vmatprep.subr.bf16.mxu0 0
      %2625 = vmatpush1.bf16.msra.mxu0 0
      %2626 = vmatprep.subr.bf16.mxu0 0
      %2627 = vmatpush1.bf16.msra.mxu0 0
      %2628 = vmatprep.subr.bf16.mxu0 0
      %2629 = vmatpush1.bf16.msra.mxu0 0
      %2630 = vmatprep.mubr.bf16.mxu0 0
      %2631 = vmatmul.mubr.bf16.gmra.mrb[0].mxu0 %v2546
      %v2632 = vpop.f32.mrb[0].mxu0
      %v2633 = vadd.f32 0.0, %v2632
      %v2634 = vpop.f32.mrb[0].mxu0
      %v2635 = vpop.f32.mrb[0].mxu0
      %v2636 = vadd.f32 0.0, %v2635
      %v2637 = vpop.f32.mrb[0].mxu0
      %2638 = vmatprep.mubr.bf16.mxu0 0
      %2639 = vmatmul.mubr.bf16.gmra.mrb[0].mxu0 %v2547
      %v2640 = vpop.f32.mrb[0].mxu0
      %v2641 = vadd.f32 0.0, %v2640
      %v2642 = vpop.f32.mrb[0].mxu0
      %v2643 = vpop.f32.mrb[0].mxu0
      %v2644 = vadd.f32 0.0, %v2643
      %v2645 = vpop.f32.mrb[0].mxu0
      %2646 = vdwg.mxu0
      %v2647 = vadd.f32 %v2517, %v2633
      %v2648 = vadd.f32 %v2518, %v2636
      %v2649 = vadd.f32 %v2519, %v2641
      %v2650 = vadd.f32 %v2520, %v2644
      %2651 = vst [vmem:[#allocation9] sm:$0xff] %v2647
      %2652 = vst [vmem:[#allocation9 + $0x8] sm:$0xff] %v2648
      %2653 = vst [vmem:[#allocation9 + $0x10] sm:$0xff] %v2649
      %2654 = vst [vmem:[#allocation9 + $0x18] sm:$0xff] %v2650
      %s2655 = scalar_lea.vmem [#allocation5], 4
      %v2656 = vld [vmem:[%s2655] sm:$0xf]
      %v2657 = vld [vmem:[%s2655 + $0x4] sm:$0xf]
      %v2658 = vld [vmem:[%s2655 + $0x8] sm:$0xf]
      %v2659 = vld [vmem:[%s2655 + $0xc] sm:$0xf]
      %v2660 = vld [vmem:[#allocation9] sm:$0xff]
      %v2661 = vld [vmem:[#allocation9 + $0x8] sm:$0xff]
      %v2662 = vld [vmem:[#allocation9 + $0x10] sm:$0xff]
      %v2663 = vld [vmem:[#allocation9 + $0x18] sm:$0xff]
      %s2664 = scalar_lea.vmem %s3, 192
      %v2665 = vld [vmem:[%s2664] sm:$0xf]
      %v2666 = vld [vmem:[%s2664 + $0x4] sm:$0xf]
      %v2667 = vld [vmem:[%s2664 + $0x8] sm:$0xf]
      %v2668 = vld [vmem:[%s2664 + $0xc] sm:$0xf]
      %v2669 = vld [vmem:[%s2664 + $0x10] sm:$0xf]
      %v2670 = vld [vmem:[%s2664 + $0x14] sm:$0xf]
      %v2671 = vld [vmem:[%s2664 + $0x18] sm:$0xf]
      %v2672 = vld [vmem:[%s2664 + $0x1c] sm:$0xf]
      %v2673 = vld [vmem:[%s2664 + $0x20] sm:$0xf]
      %v2674 = vld [vmem:[%s2664 + $0x24] sm:$0xf]
      %v2675 = vld [vmem:[%s2664 + $0x28] sm:$0xf]
      %v2676 = vld [vmem:[%s2664 + $0x2c] sm:$0xf]
      %v2677 = vld [vmem:[%s2664 + $0x30] sm:$0xf]
      %v2678 = vld [vmem:[%s2664 + $0x34] sm:$0xf]
      %v2679 = vld [vmem:[%s2664 + $0x38] sm:$0xf]
      %v2680 = vld [vmem:[%s2664 + $0x3c] sm:$0xf]
      %v2685 = vunpack.c.l.b16 %v2656
      %v2686 = vunpack.c.l.b16 %v2657
      %v2687 = vunpack.c.l.b16 %v2658
      %v2688 = vunpack.c.l.b16 %v2659
      %v2689 = vpack.c.b16 %v2686, %v2685
      %v2690 = vpack.c.b16 %v2688, %v2687
      %v2709 = vunpack.c.l.b16 %v2665
      %v2710 = vunpack.c.l.b16 %v2666
      %v2711 = vunpack.c.l.b16 %v2667
      %v2712 = vunpack.c.l.b16 %v2668
      %v2713 = vunpack.c.l.b16 %v2669
      %v2714 = vunpack.c.l.b16 %v2670
      %v2715 = vunpack.c.l.b16 %v2671
      %v2716 = vunpack.c.l.b16 %v2672
      %v2717 = vunpack.c.l.b16 %v2673
      %v2718 = vunpack.c.l.b16 %v2674
      %v2719 = vunpack.c.l.b16 %v2675
      %v2720 = vunpack.c.l.b16 %v2676
      %v2721 = vunpack.c.l.b16 %v2677
      %v2722 = vunpack.c.l.b16 %v2678
      %v2723 = vunpack.c.l.b16 %v2679
      %v2724 = vunpack.c.l.b16 %v2680
      %v2725 = vpack.c.b16 %v2710, %v2709
      %v2726 = vpack.c.b16 %v2712, %v2711
      %v2727 = vpack.c.b16 %v2714, %v2713
      %v2728 = vpack.c.b16 %v2716, %v2715
      %v2729 = vpack.c.b16 %v2718, %v2717
      %v2730 = vpack.c.b16 %v2720, %v2719
      %v2731 = vpack.c.b16 %v2722, %v2721
      %v2732 = vpack.c.b16 %v2724, %v2723
      %2741 = vmatprep.subr.bf16.mxu0 0
      %2742 = vmatpush1.bf16.msra.mxu0 %v2725
      %2743 = vmatprep.subr.bf16.mxu0 0
      %2744 = vmatpush1.bf16.msra.mxu0 %v2726
      %2745 = vmatprep.subr.bf16.mxu0 0
      %2746 = vmatpush1.bf16.msra.mxu0 %v2727
      %2747 = vmatprep.subr.bf16.mxu0 0
      %2748 = vmatpush1.bf16.msra.mxu0 %v2728
      %2749 = vmatprep.subr.bf16.mxu0 0
      %2750 = vmatpush1.bf16.msra.mxu0 %v2729
      %2751 = vmatprep.subr.bf16.mxu0 0
      %2752 = vmatpush1.bf16.msra.mxu0 %v2730
      %2753 = vmatprep.subr.bf16.mxu0 0
      %2754 = vmatpush1.bf16.msra.mxu0 %v2731
      %2755 = vmatprep.subr.bf16.mxu0 0
      %2756 = vmatpush1.bf16.msra.mxu0 %v2732
      %2757 = vmatprep.subr.bf16.mxu0 0
      %2758 = vmatpush1.bf16.msra.mxu0 0
      %2759 = vmatprep.subr.bf16.mxu0 0
      %2760 = vmatpush1.bf16.msra.mxu0 0
      %2761 = vmatprep.subr.bf16.mxu0 0
      %2762 = vmatpush1.bf16.msra.mxu0 0
      %2763 = vmatprep.subr.bf16.mxu0 0
      %2764 = vmatpush1.bf16.msra.mxu0 0
      %2765 = vmatprep.subr.bf16.mxu0 0
      %2766 = vmatpush1.bf16.msra.mxu0 0
      %2767 = vmatprep.subr.bf16.mxu0 0
      %2768 = vmatpush1.bf16.msra.mxu0 0
      %2769 = vmatprep.subr.bf16.mxu0 0
      %2770 = vmatpush1.bf16.msra.mxu0 0
      %2771 = vmatprep.subr.bf16.mxu0 0
      %2772 = vmatpush1.bf16.msra.mxu0 0
      %2773 = vmatprep.mubr.bf16.mxu0 0
      %2774 = vmatmul.mubr.bf16.gmra.mrb[0].mxu0 %v2689
      %v2775 = vpop.f32.mrb[0].mxu0
      %v2776 = vadd.f32 0.0, %v2775
      %v2777 = vpop.f32.mrb[0].mxu0
      %v2778 = vpop.f32.mrb[0].mxu0
      %v2779 = vadd.f32 0.0, %v2778
      %v2780 = vpop.f32.mrb[0].mxu0
      %2781 = vmatprep.mubr.bf16.mxu0 0
      %2782 = vmatmul.mubr.bf16.gmra.mrb[0].mxu0 %v2690
      %v2783 = vpop.f32.mrb[0].mxu0
      %v2784 = vadd.f32 0.0, %v2783
      %v2785 = vpop.f32.mrb[0].mxu0
      %v2786 = vpop.f32.mrb[0].mxu0
      %v2787 = vadd.f32 0.0, %v2786
      %v2788 = vpop.f32.mrb[0].mxu0
      %2789 = vdwg.mxu0
      %v2790 = vadd.f32 %v2660, %v2776
      %v2791 = vadd.f32 %v2661, %v2779
      %v2792 = vadd.f32 %v2662, %v2784
      %v2793 = vadd.f32 %v2663, %v2787
      %2794 = vst [vmem:[#allocation9] sm:$0xff] %v2790
      %2795 = vst [vmem:[#allocation9 + $0x8] sm:$0xff] %v2791
      %2796 = vst [vmem:[#allocation9 + $0x10] sm:$0xff] %v2792
      %2797 = vst [vmem:[#allocation9 + $0x18] sm:$0xff] %v2793
      %s2798 = scalar_lea.vmem [#allocation6], 4
      %v2799 = vld [vmem:[%s2798] sm:$0xf]
      %v2800 = vld [vmem:[%s2798 + $0x4] sm:$0xf]
      %v2801 = vld [vmem:[%s2798 + $0x8] sm:$0xf]
      %v2802 = vld [vmem:[%s2798 + $0xc] sm:$0xf]
      %v2803 = vld [vmem:[#allocation9] sm:$0xff]
      %v2804 = vld [vmem:[#allocation9 + $0x8] sm:$0xff]
      %v2805 = vld [vmem:[#allocation9 + $0x10] sm:$0xff]
      %v2806 = vld [vmem:[#allocation9 + $0x18] sm:$0xff]
      %s2807 = scalar_lea.vmem %s3, 256
      %v2808 = vld [vmem:[%s2807] sm:$0xf]
      %v2809 = vld [vmem:[%s2807 + $0x4] sm:$0xf]
      %v2810 = vld [vmem:[%s2807 + $0x8] sm:$0xf]
      %v2811 = vld [vmem:[%s2807 + $0xc] sm:$0xf]
      %v2812 = vld [vmem:[%s2807 + $0x10] sm:$0xf]
      %v2813 = vld [vmem:[%s2807 + $0x14] sm:$0xf]
      %v2814 = vld [vmem:[%s2807 + $0x18] sm:$0xf]
      %v2815 = vld [vmem:[%s2807 + $0x1c] sm:$0xf]
      %v2816 = vld [vmem:[%s2807 + $0x20] sm:$0xf]
      %v2817 = vld [vmem:[%s2807 + $0x24] sm:$0xf]
      %v2818 = vld [vmem:[%s2807 + $0x28] sm:$0xf]
      %v2819 = vld [vmem:[%s2807 + $0x2c] sm:$0xf]
      %v2820 = vld [vmem:[%s2807 + $0x30] sm:$0xf]
      %v2821 = vld [vmem:[%s2807 + $0x34] sm:$0xf]
      %v2822 = vld [vmem:[%s2807 + $0x38] sm:$0xf]
      %v2823 = vld [vmem:[%s2807 + $0x3c] sm:$0xf]
      %v2828 = vunpack.c.l.b16 %v2799
      %v2829 = vunpack.c.l.b16 %v2800
      %v2830 = vunpack.c.l.b16 %v2801
      %v2831 = vunpack.c.l.b16 %v2802
      %v2832 = vpack.c.b16 %v2829, %v2828
      %v2833 = vpack.c.b16 %v2831, %v2830
      %v2852 = vunpack.c.l.b16 %v2808
      %v2853 = vunpack.c.l.b16 %v2809
      %v2854 = vunpack.c.l.b16 %v2810
      %v2855 = vunpack.c.l.b16 %v2811
      %v2856 = vunpack.c.l.b16 %v2812
      %v2857 = vunpack.c.l.b16 %v2813
      %v2858 = vunpack.c.l.b16 %v2814
      %v2859 = vunpack.c.l.b16 %v2815
      %v2860 = vunpack.c.l.b16 %v2816
      %v2861 = vunpack.c.l.b16 %v2817
      %v2862 = vunpack.c.l.b16 %v2818
      %v2863 = vunpack.c.l.b16 %v2819
      %v2864 = vunpack.c.l.b16 %v2820
      %v2865 = vunpack.c.l.b16 %v2821
      %v2866 = vunpack.c.l.b16 %v2822
      %v2867 = vunpack.c.l.b16 %v2823
      %v2868 = vpack.c.b16 %v2853, %v2852
      %v2869 = vpack.c.b16 %v2855, %v2854
      %v2870 = vpack.c.b16 %v2857, %v2856
      %v2871 = vpack.c.b16 %v2859, %v2858
      %v2872 = vpack.c.b16 %v2861, %v2860
      %v2873 = vpack.c.b16 %v2863, %v2862
      %v2874 = vpack.c.b16 %v2865, %v2864
      %v2875 = vpack.c.b16 %v2867, %v2866
      %2884 = vmatprep.subr.bf16.mxu0 0
      %2885 = vmatpush1.bf16.msra.mxu0 %v2868
      %2886 = vmatprep.subr.bf16.mxu0 0
      %2887 = vmatpush1.bf16.msra.mxu0 %v2869
      %2888 = vmatprep.subr.bf16.mxu0 0
      %2889 = vmatpush1.bf16.msra.mxu0 %v2870
      %2890 = vmatprep.subr.bf16.mxu0 0
      %2891 = vmatpush1.bf16.msra.mxu0 %v2871
      %2892 = vmatprep.subr.bf16.mxu0 0
      %2893 = vmatpush1.bf16.msra.mxu0 %v2872
      %2894 = vmatprep.subr.bf16.mxu0 0
      %2895 = vmatpush1.bf16.msra.mxu0 %v2873
      %2896 = vmatprep.subr.bf16.mxu0 0
      %2897 = vmatpush1.bf16.msra.mxu0 %v2874
      %2898 = vmatprep.subr.bf16.mxu0 0
      %2899 = vmatpush1.bf16.msra.mxu0 %v2875
      %2900 = vmatprep.subr.bf16.mxu0 0
      %2901 = vmatpush1.bf16.msra.mxu0 0
      %2902 = vmatprep.subr.bf16.mxu0 0
      %2903 = vmatpush1.bf16.msra.mxu0 0
      %2904 = vmatprep.subr.bf16.mxu0 0
      %2905 = vmatpush1.bf16.msra.mxu0 0
      %2906 = vmatprep.subr.bf16.mxu0 0
      %2907 = vmatpush1.bf16.msra.mxu0 0
      %2908 = vmatprep.subr.bf16.mxu0 0
      %2909 = vmatpush1.bf16.msra.mxu0 0
      %2910 = vmatprep.subr.bf16.mxu0 0
      %2911 = vmatpush1.bf16.msra.mxu0 0
      %2912 = vmatprep.subr.bf16.mxu0 0
      %2913 = vmatpush1.bf16.msra.mxu0 0
      %2914 = vmatprep.subr.bf16.mxu0 0
      %2915 = vmatpush1.bf16.msra.mxu0 0
      %2916 = vmatprep.mubr.bf16.mxu0 0
      %2917 = vmatmul.mubr.bf16.gmra.mrb[0].mxu0 %v2832
      %v2918 = vpop.f32.mrb[0].mxu0
      %v2919 = vadd.f32 0.0, %v2918
      %v2920 = vpop.f32.mrb[0].mxu0
      %v2921 = vpop.f32.mrb[0].mxu0
      %v2922 = vadd.f32 0.0, %v2921
      %v2923 = vpop.f32.mrb[0].mxu0
      %2924 = vmatprep.mubr.bf16.mxu0 0
      %2925 = vmatmul.mubr.bf16.gmra.mrb[0].mxu0 %v2833
      %v2926 = vpop.f32.mrb[0].mxu0
      %v2927 = vadd.f32 0.0, %v2926
      %v2928 = vpop.f32.mrb[0].mxu0
      %v2929 = vpop.f32.mrb[0].mxu0
      %v2930 = vadd.f32 0.0, %v2929
      %v2931 = vpop.f32.mrb[0].mxu0
      %2932 = vdwg.mxu0
      %v2933 = vadd.f32 %v2803, %v2919
      %v2934 = vadd.f32 %v2804, %v2922
      %v2935 = vadd.f32 %v2805, %v2927
      %v2936 = vadd.f32 %v2806, %v2930
      %2937 = vst [vmem:[#allocation9] sm:$0xff] %v2933
      %2938 = vst [vmem:[#allocation9 + $0x8] sm:$0xff] %v2934
      %2939 = vst [vmem:[#allocation9 + $0x10] sm:$0xff] %v2935
      %2940 = vst [vmem:[#allocation9 + $0x18] sm:$0xff] %v2936
      %s2941 = scalar_lea.vmem [#allocation7], 4
      %v2942 = vld [vmem:[%s2941] sm:$0xf]
      %v2943 = vld [vmem:[%s2941 + $0x4] sm:$0xf]
      %v2944 = vld [vmem:[%s2941 + $0x8] sm:$0xf]
      %v2945 = vld [vmem:[%s2941 + $0xc] sm:$0xf]
      %v2946 = vld [vmem:[#allocation9] sm:$0xff]
      %v2947 = vld [vmem:[#allocation9 + $0x8] sm:$0xff]
      %v2948 = vld [vmem:[#allocation9 + $0x10] sm:$0xff]
      %v2949 = vld [vmem:[#allocation9 + $0x18] sm:$0xff]
      %s2950 = scalar_lea.vmem %s3, 320
      %v2951 = vld [vmem:[%s2950] sm:$0xf]
      %v2952 = vld [vmem:[%s2950 + $0x4] sm:$0xf]
      %v2953 = vld [vmem:[%s2950 + $0x8] sm:$0xf]
      %v2954 = vld [vmem:[%s2950 + $0xc] sm:$0xf]
      %v2955 = vld [vmem:[%s2950 + $0x10] sm:$0xf]
      %v2956 = vld [vmem:[%s2950 + $0x14] sm:$0xf]
      %v2957 = vld [vmem:[%s2950 + $0x18] sm:$0xf]
      %v2958 = vld [vmem:[%s2950 + $0x1c] sm:$0xf]
      %v2959 = vld [vmem:[%s2950 + $0x20] sm:$0xf]
      %v2960 = vld [vmem:[%s2950 + $0x24] sm:$0xf]
      %v2961 = vld [vmem:[%s2950 + $0x28] sm:$0xf]
      %v2962 = vld [vmem:[%s2950 + $0x2c] sm:$0xf]
      %v2963 = vld [vmem:[%s2950 + $0x30] sm:$0xf]
      %v2964 = vld [vmem:[%s2950 + $0x34] sm:$0xf]
      %v2965 = vld [vmem:[%s2950 + $0x38] sm:$0xf]
      %v2966 = vld [vmem:[%s2950 + $0x3c] sm:$0xf]
      %v2971 = vunpack.c.l.b16 %v2942
      %v2972 = vunpack.c.l.b16 %v2943
      %v2973 = vunpack.c.l.b16 %v2944
      %v2974 = vunpack.c.l.b16 %v2945
      %v2975 = vpack.c.b16 %v2972, %v2971
      %v2976 = vpack.c.b16 %v2974, %v2973
      %v2995 = vunpack.c.l.b16 %v2951
      %v2996 = vunpack.c.l.b16 %v2952
      %v2997 = vunpack.c.l.b16 %v2953
      %v2998 = vunpack.c.l.b16 %v2954
      %v2999 = vunpack.c.l.b16 %v2955
      %v3000 = vunpack.c.l.b16 %v2956
      %v3001 = vunpack.c.l.b16 %v2957
      %v3002 = vunpack.c.l.b16 %v2958
      %v3003 = vunpack.c.l.b16 %v2959
      %v3004 = vunpack.c.l.b16 %v2960
      %v3005 = vunpack.c.l.b16 %v2961
      %v3006 = vunpack.c.l.b16 %v2962
      %v3007 = vunpack.c.l.b16 %v2963
      %v3008 = vunpack.c.l.b16 %v2964
      %v3009 = vunpack.c.l.b16 %v2965
      %v3010 = vunpack.c.l.b16 %v2966
      %v3011 = vpack.c.b16 %v2996, %v2995
      %v3012 = vpack.c.b16 %v2998, %v2997
      %v3013 = vpack.c.b16 %v3000, %v2999
      %v3014 = vpack.c.b16 %v3002, %v3001
      %v3015 = vpack.c.b16 %v3004, %v3003
      %v3016 = vpack.c.b16 %v3006, %v3005
      %v3017 = vpack.c.b16 %v3008, %v3007
      %v3018 = vpack.c.b16 %v3010, %v3009
      %3027 = vmatprep.subr.bf16.mxu0 0
      %3028 = vmatpush1.bf16.msra.mxu0 %v3011
      %3029 = vmatprep.subr.bf16.mxu0 0
      %3030 = vmatpush1.bf16.msra.mxu0 %v3012
      %3031 = vmatprep.subr.bf16.mxu0 0
      %3032 = vmatpush1.bf16.msra.mxu0 %v3013
      %3033 = vmatprep.subr.bf16.mxu0 0
      %3034 = vmatpush1.bf16.msra.mxu0 %v3014
      %3035 = vmatprep.subr.bf16.mxu0 0
      %3036 = vmatpush1.bf16.msra.mxu0 %v3015
      %3037 = vmatprep.subr.bf16.mxu0 0
      %3038 = vmatpush1.bf16.msra.mxu0 %v3016
      %3039 = vmatprep.subr.bf16.mxu0 0
      %3040 = vmatpush1.bf16.msra.mxu0 %v3017
      %3041 = vmatprep.subr.bf16.mxu0 0
      %3042 = vmatpush1.bf16.msra.mxu0 %v3018
      %3043 = vmatprep.subr.bf16.mxu0 0
      %3044 = vmatpush1.bf16.msra.mxu0 0
      %3045 = vmatprep.subr.bf16.mxu0 0
      %3046 = vmatpush1.bf16.msra.mxu0 0
      %3047 = vmatprep.subr.bf16.mxu0 0
      %3048 = vmatpush1.bf16.msra.mxu0 0
      %3049 = vmatprep.subr.bf16.mxu0 0
      %3050 = vmatpush1.bf16.msra.mxu0 0
      %3051 = vmatprep.subr.bf16.mxu0 0
      %3052 = vmatpush1.bf16.msra.mxu0 0
      %3053 = vmatprep.subr.bf16.mxu0 0
      %3054 = vmatpush1.bf16.msra.mxu0 0
      %3055 = vmatprep.subr.bf16.mxu0 0
      %3056 = vmatpush1.bf16.msra.mxu0 0
      %3057 = vmatprep.subr.bf16.mxu0 0
      %3058 = vmatpush1.bf16.msra.mxu0 0
      %3059 = vmatprep.mubr.bf16.mxu0 0
      %3060 = vmatmul.mubr.bf16.gmra.mrb[0].mxu0 %v2975
      %v3061 = vpop.f32.mrb[0].mxu0
      %v3062 = vadd.f32 0.0, %v3061
      %v3063 = vpop.f32.mrb[0].mxu0
      %v3064 = vpop.f32.mrb[0].mxu0
      %v3065 = vadd.f32 0.0, %v3064
      %v3066 = vpop.f32.mrb[0].mxu0
      %3067 = vmatprep.mubr.bf16.mxu0 0
      %3068 = vmatmul.mubr.bf16.gmra.mrb[0].mxu0 %v2976
      %v3069 = vpop.f32.mrb[0].mxu0
      %v3070 = vadd.f32 0.0, %v3069
      %v3071 = vpop.f32.mrb[0].mxu0
      %v3072 = vpop.f32.mrb[0].mxu0
      %v3073 = vadd.f32 0.0, %v3072
      %v3074 = vpop.f32.mrb[0].mxu0
      %3075 = vdwg.mxu0
      %v3076 = vadd.f32 %v2946, %v3062
      %v3077 = vadd.f32 %v2947, %v3065
      %v3078 = vadd.f32 %v2948, %v3070
      %v3079 = vadd.f32 %v2949, %v3073
      %3080 = vst [vmem:[#allocation9] sm:$0xff] %v3076
      %3081 = vst [vmem:[#allocation9 + $0x8] sm:$0xff] %v3077
      %3082 = vst [vmem:[#allocation9 + $0x10] sm:$0xff] %v3078
      %3083 = vst [vmem:[#allocation9 + $0x18] sm:$0xff] %v3079
      %s3084 = scalar_lea.vmem [#allocation5], 8
      %v3085 = vld [vmem:[%s3084] sm:$0xf]
      %v3086 = vld [vmem:[%s3084 + $0x4] sm:$0xf]
      %v3087 = vld [vmem:[%s3084 + $0x8] sm:$0xf]
      %v3088 = vld [vmem:[%s3084 + $0xc] sm:$0xf]
      %v3089 = vld [vmem:[#allocation9] sm:$0xff]
      %v3090 = vld [vmem:[#allocation9 + $0x8] sm:$0xff]
      %v3091 = vld [vmem:[#allocation9 + $0x10] sm:$0xff]
      %v3092 = vld [vmem:[#allocation9 + $0x18] sm:$0xff]
      %s3093 = scalar_lea.vmem %s3, 384
      %v3094 = vld [vmem:[%s3093] sm:$0xf]
      %v3095 = vld [vmem:[%s3093 + $0x4] sm:$0xf]
      %v3096 = vld [vmem:[%s3093 + $0x8] sm:$0xf]
      %v3097 = vld [vmem:[%s3093 + $0xc] sm:$0xf]
      %v3098 = vld [vmem:[%s3093 + $0x10] sm:$0xf]
      %v3099 = vld [vmem:[%s3093 + $0x14] sm:$0xf]
      %v3100 = vld [vmem:[%s3093 + $0x18] sm:$0xf]
      %v3101 = vld [vmem:[%s3093 + $0x1c] sm:$0xf]
      %v3102 = vld [vmem:[%s3093 + $0x20] sm:$0xf]
      %v3103 = vld [vmem:[%s3093 + $0x24] sm:$0xf]
      %v3104 = vld [vmem:[%s3093 + $0x28] sm:$0xf]
      %v3105 = vld [vmem:[%s3093 + $0x2c] sm:$0xf]
      %v3106 = vld [vmem:[%s3093 + $0x30] sm:$0xf]
      %v3107 = vld [vmem:[%s3093 + $0x34] sm:$0xf]
      %v3108 = vld [vmem:[%s3093 + $0x38] sm:$0xf]
      %v3109 = vld [vmem:[%s3093 + $0x3c] sm:$0xf]
      %v3114 = vunpack.c.l.b16 %v3085
      %v3115 = vunpack.c.l.b16 %v3086
      %v3116 = vunpack.c.l.b16 %v3087
      %v3117 = vunpack.c.l.b16 %v3088
      %v3118 = vpack.c.b16 %v3115, %v3114
      %v3119 = vpack.c.b16 %v3117, %v3116
      %v3138 = vunpack.c.l.b16 %v3094
      %v3139 = vunpack.c.l.b16 %v3095
      %v3140 = vunpack.c.l.b16 %v3096
      %v3141 = vunpack.c.l.b16 %v3097
      %v3142 = vunpack.c.l.b16 %v3098
      %v3143 = vunpack.c.l.b16 %v3099
      %v3144 = vunpack.c.l.b16 %v3100
      %v3145 = vunpack.c.l.b16 %v3101
      %v3146 = vunpack.c.l.b16 %v3102
      %v3147 = vunpack.c.l.b16 %v3103
      %v3148 = vunpack.c.l.b16 %v3104
      %v3149 = vunpack.c.l.b16 %v3105
      %v3150 = vunpack.c.l.b16 %v3106
      %v3151 = vunpack.c.l.b16 %v3107
      %v3152 = vunpack.c.l.b16 %v3108
      %v3153 = vunpack.c.l.b16 %v3109
      %v3154 = vpack.c.b16 %v3139, %v3138
      %v3155 = vpack.c.b16 %v3141, %v3140
      %v3156 = vpack.c.b16 %v3143, %v3142
      %v3157 = vpack.c.b16 %v3145, %v3144
      %v3158 = vpack.c.b16 %v3147, %v3146
      %v3159 = vpack.c.b16 %v3149, %v3148
      %v3160 = vpack.c.b16 %v3151, %v3150
      %v3161 = vpack.c.b16 %v3153, %v3152
      %3170 = vmatprep.subr.bf16.mxu0 0
      %3171 = vmatpush1.bf16.msra.mxu0 %v3154
      %3172 = vmatprep.subr.bf16.mxu0 0
      %3173 = vmatpush1.bf16.msra.mxu0 %v3155
      %3174 = vmatprep.subr.bf16.mxu0 0
      %3175 = vmatpush1.bf16.msra.mxu0 %v3156
      %3176 = vmatprep.subr.bf16.mxu0 0
      %3177 = vmatpush1.bf16.msra.mxu0 %v3157
      %3178 = vmatprep.subr.bf16.mxu0 0
      %3179 = vmatpush1.bf16.msra.mxu0 %v3158
      %3180 = vmatprep.subr.bf16.mxu0 0
      %3181 = vmatpush1.bf16.msra.mxu0 %v3159
      %3182 = vmatprep.subr.bf16.mxu0 0
      %3183 = vmatpush1.bf16.msra.mxu0 %v3160
      %3184 = vmatprep.subr.bf16.mxu0 0
      %3185 = vmatpush1.bf16.msra.mxu0 %v3161
      %3186 = vmatprep.subr.bf16.mxu0 0
      %3187 = vmatpush1.bf16.msra.mxu0 0
      %3188 = vmatprep.subr.bf16.mxu0 0
      %3189 = vmatpush1.bf16.msra.mxu0 0
      %3190 = vmatprep.subr.bf16.mxu0 0
      %3191 = vmatpush1.bf16.msra.mxu0 0
      %3192 = vmatprep.subr.bf16.mxu0 0
      %3193 = vmatpush1.bf16.msra.mxu0 0
      %3194 = vmatprep.subr.bf16.mxu0 0
      %3195 = vmatpush1.bf16.msra.mxu0 0
      %3196 = vmatprep.subr.bf16.mxu0 0
      %3197 = vmatpush1.bf16.msra.mxu0 0
      %3198 = vmatprep.subr.bf16.mxu0 0
      %3199 = vmatpush1.bf16.msra.mxu0 0
      %3200 = vmatprep.subr.bf16.mxu0 0
      %3201 = vmatpush1.bf16.msra.mxu0 0
      %3202 = vmatprep.mubr.bf16.mxu0 0
      %3203 = vmatmul.mubr.bf16.gmra.mrb[0].mxu0 %v3118
      %v3204 = vpop.f32.mrb[0].mxu0
      %v3205 = vadd.f32 0.0, %v3204
      %v3206 = vpop.f32.mrb[0].mxu0
      %v3207 = vpop.f32.mrb[0].mxu0
      %v3208 = vadd.f32 0.0, %v3207
      %v3209 = vpop.f32.mrb[0].mxu0
      %3210 = vmatprep.mubr.bf16.mxu0 0
      %3211 = vmatmul.mubr.bf16.gmra.mrb[0].mxu0 %v3119
      %v3212 = vpop.f32.mrb[0].mxu0
      %v3213 = vadd.f32 0.0, %v3212
      %v3214 = vpop.f32.mrb[0].mxu0
      %v3215 = vpop.f32.mrb[0].mxu0
      %v3216 = vadd.f32 0.0, %v3215
      %v3217 = vpop.f32.mrb[0].mxu0
      %3218 = vdwg.mxu0
      %v3219 = vadd.f32 %v3089, %v3205
      %v3220 = vadd.f32 %v3090, %v3208
      %v3221 = vadd.f32 %v3091, %v3213
      %v3222 = vadd.f32 %v3092, %v3216
      %3223 = vst [vmem:[#allocation9] sm:$0xff] %v3219
      %3224 = vst [vmem:[#allocation9 + $0x8] sm:$0xff] %v3220
      %3225 = vst [vmem:[#allocation9 + $0x10] sm:$0xff] %v3221
      %3226 = vst [vmem:[#allocation9 + $0x18] sm:$0xff] %v3222
      %s3227 = scalar_lea.vmem [#allocation6], 8
      %v3228 = vld [vmem:[%s3227] sm:$0xf]
      %v3229 = vld [vmem:[%s3227 + $0x4] sm:$0xf]
      %v3230 = vld [vmem:[%s3227 + $0x8] sm:$0xf]
      %v3231 = vld [vmem:[%s3227 + $0xc] sm:$0xf]
      %v3232 = vld [vmem:[#allocation9] sm:$0xff]
      %v3233 = vld [vmem:[#allocation9 + $0x8] sm:$0xff]
      %v3234 = vld [vmem:[#allocation9 + $0x10] sm:$0xff]
      %v3235 = vld [vmem:[#allocation9 + $0x18] sm:$0xff]
      %s3236 = scalar_lea.vmem %s3, 448
      %v3237 = vld [vmem:[%s3236] sm:$0xf]
      %v3238 = vld [vmem:[%s3236 + $0x4] sm:$0xf]
      %v3239 = vld [vmem:[%s3236 + $0x8] sm:$0xf]
      %v3240 = vld [vmem:[%s3236 + $0xc] sm:$0xf]
      %v3241 = vld [vmem:[%s3236 + $0x10] sm:$0xf]
      %v3242 = vld [vmem:[%s3236 + $0x14] sm:$0xf]
      %v3243 = vld [vmem:[%s3236 + $0x18] sm:$0xf]
      %v3244 = vld [vmem:[%s3236 + $0x1c] sm:$0xf]
      %v3245 = vld [vmem:[%s3236 + $0x20] sm:$0xf]
      %v3246 = vld [vmem:[%s3236 + $0x24] sm:$0xf]
      %v3247 = vld [vmem:[%s3236 + $0x28] sm:$0xf]
      %v3248 = vld [vmem:[%s3236 + $0x2c] sm:$0xf]
      %v3249 = vld [vmem:[%s3236 + $0x30] sm:$0xf]
      %v3250 = vld [vmem:[%s3236 + $0x34] sm:$0xf]
      %v3251 = vld [vmem:[%s3236 + $0x38] sm:$0xf]
      %v3252 = vld [vmem:[%s3236 + $0x3c] sm:$0xf]
      %v3257 = vunpack.c.l.b16 %v3228
      %v3258 = vunpack.c.l.b16 %v3229
      %v3259 = vunpack.c.l.b16 %v3230
      %v3260 = vunpack.c.l.b16 %v3231
      %v3261 = vpack.c.b16 %v3258, %v3257
      %v3262 = vpack.c.b16 %v3260, %v3259
      %v3281 = vunpack.c.l.b16 %v3237
      %v3282 = vunpack.c.l.b16 %v3238
      %v3283 = vunpack.c.l.b16 %v3239
      %v3284 = vunpack.c.l.b16 %v3240
      %v3285 = vunpack.c.l.b16 %v3241
      %v3286 = vunpack.c.l.b16 %v3242
      %v3287 = vunpack.c.l.b16 %v3243
      %v3288 = vunpack.c.l.b16 %v3244
      %v3289 = vunpack.c.l.b16 %v3245
      %v3290 = vunpack.c.l.b16 %v3246
      %v3291 = vunpack.c.l.b16 %v3247
      %v3292 = vunpack.c.l.b16 %v3248
      %v3293 = vunpack.c.l.b16 %v3249
      %v3294 = vunpack.c.l.b16 %v3250
      %v3295 = vunpack.c.l.b16 %v3251
      %v3296 = vunpack.c.l.b16 %v3252
      %v3297 = vpack.c.b16 %v3282, %v3281
      %v3298 = vpack.c.b16 %v3284, %v3283
      %v3299 = vpack.c.b16 %v3286, %v3285
      %v3300 = vpack.c.b16 %v3288, %v3287
      %v3301 = vpack.c.b16 %v3290, %v3289
      %v3302 = vpack.c.b16 %v3292, %v3291
      %v3303 = vpack.c.b16 %v3294, %v3293
      %v3304 = vpack.c.b16 %v3296, %v3295
      %3313 = vmatprep.subr.bf16.mxu0 0
      %3314 = vmatpush1.bf16.msra.mxu0 %v3297
      %3315 = vmatprep.subr.bf16.mxu0 0
      %3316 = vmatpush1.bf16.msra.mxu0 %v3298
      %3317 = vmatprep.subr.bf16.mxu0 0
      %3318 = vmatpush1.bf16.msra.mxu0 %v3299
      %3319 = vmatprep.subr.bf16.mxu0 0
      %3320 = vmatpush1.bf16.msra.mxu0 %v3300
      %3321 = vmatprep.subr.bf16.mxu0 0
      %3322 = vmatpush1.bf16.msra.mxu0 %v3301
      %3323 = vmatprep.subr.bf16.mxu0 0
      %3324 = vmatpush1.bf16.msra.mxu0 %v3302
      %3325 = vmatprep.subr.bf16.mxu0 0
      %3326 = vmatpush1.bf16.msra.mxu0 %v3303
      %3327 = vmatprep.subr.bf16.mxu0 0
      %3328 = vmatpush1.bf16.msra.mxu0 %v3304
      %3329 = vmatprep.subr.bf16.mxu0 0
      %3330 = vmatpush1.bf16.msra.mxu0 0
      %3331 = vmatprep.subr.bf16.mxu0 0
      %3332 = vmatpush1.bf16.msra.mxu0 0
      %3333 = vmatprep.subr.bf16.mxu0 0
      %3334 = vmatpush1.bf16.msra.mxu0 0
      %3335 = vmatprep.subr.bf16.mxu0 0
      %3336 = vmatpush1.bf16.msra.mxu0 0
      %3337 = vmatprep.subr.bf16.mxu0 0
      %3338 = vmatpush1.bf16.msra.mxu0 0
      %3339 = vmatprep.subr.bf16.mxu0 0
      %3340 = vmatpush1.bf16.msra.mxu0 0
      %3341 = vmatprep.subr.bf16.mxu0 0
      %3342 = vmatpush1.bf16.msra.mxu0 0
      %3343 = vmatprep.subr.bf16.mxu0 0
      %3344 = vmatpush1.bf16.msra.mxu0 0
      %3345 = vmatprep.mubr.bf16.mxu0 0
      %3346 = vmatmul.mubr.bf16.gmra.mrb[0].mxu0 %v3261
      %v3347 = vpop.f32.mrb[0].mxu0
      %v3348 = vadd.f32 0.0, %v3347
      %v3349 = vpop.f32.mrb[0].mxu0
      %v3350 = vpop.f32.mrb[0].mxu0
      %v3351 = vadd.f32 0.0, %v3350
      %v3352 = vpop.f32.mrb[0].mxu0
      %3353 = vmatprep.mubr.bf16.mxu0 0
      %3354 = vmatmul.mubr.bf16.gmra.mrb[0].mxu0 %v3262
      %v3355 = vpop.f32.mrb[0].mxu0
      %v3356 = vadd.f32 0.0, %v3355
      %v3357 = vpop.f32.mrb[0].mxu0
      %v3358 = vpop.f32.mrb[0].mxu0
      %v3359 = vadd.f32 0.0, %v3358
      %v3360 = vpop.f32.mrb[0].mxu0
      %3361 = vdwg.mxu0
      %v3362 = vadd.f32 %v3232, %v3348
      %v3363 = vadd.f32 %v3233, %v3351
      %v3364 = vadd.f32 %v3234, %v3356
      %v3365 = vadd.f32 %v3235, %v3359
      %3366 = vst [vmem:[#allocation9] sm:$0xff] %v3362
      %3367 = vst [vmem:[#allocation9 + $0x8] sm:$0xff] %v3363
      %3368 = vst [vmem:[#allocation9 + $0x10] sm:$0xff] %v3364
      %3369 = vst [vmem:[#allocation9 + $0x18] sm:$0xff] %v3365
      %s3370 = scalar_lea.vmem [#allocation7], 8
      %v3371 = vld [vmem:[%s3370] sm:$0xf]
      %v3372 = vld [vmem:[%s3370 + $0x4] sm:$0xf]
      %v3373 = vld [vmem:[%s3370 + $0x8] sm:$0xf]
      %v3374 = vld [vmem:[%s3370 + $0xc] sm:$0xf]
      %v3375 = vld [vmem:[#allocation9] sm:$0xff]
      %v3376 = vld [vmem:[#allocation9 + $0x8] sm:$0xff]
      %v3377 = vld [vmem:[#allocation9 + $0x10] sm:$0xff]
      %v3378 = vld [vmem:[#allocation9 + $0x18] sm:$0xff]
      %s3379 = scalar_lea.vmem %s3, 512
      %v3380 = vld [vmem:[%s3379] sm:$0xf]
      %v3381 = vld [vmem:[%s3379 + $0x4] sm:$0xf]
      %v3382 = vld [vmem:[%s3379 + $0x8] sm:$0xf]
      %v3383 = vld [vmem:[%s3379 + $0xc] sm:$0xf]
      %v3384 = vld [vmem:[%s3379 + $0x10] sm:$0xf]
      %v3385 = vld [vmem:[%s3379 + $0x14] sm:$0xf]
      %v3386 = vld [vmem:[%s3379 + $0x18] sm:$0xf]
      %v3387 = vld [vmem:[%s3379 + $0x1c] sm:$0xf]
      %v3388 = vld [vmem:[%s3379 + $0x20] sm:$0xf]
      %v3389 = vld [vmem:[%s3379 + $0x24] sm:$0xf]
      %v3390 = vld [vmem:[%s3379 + $0x28] sm:$0xf]
      %v3391 = vld [vmem:[%s3379 + $0x2c] sm:$0xf]
      %v3392 = vld [vmem:[%s3379 + $0x30] sm:$0xf]
      %v3393 = vld [vmem:[%s3379 + $0x34] sm:$0xf]
      %v3394 = vld [vmem:[%s3379 + $0x38] sm:$0xf]
      %v3395 = vld [vmem:[%s3379 + $0x3c] sm:$0xf]
      %v3400 = vunpack.c.l.b16 %v3371
      %v3401 = vunpack.c.l.b16 %v3372
      %v3402 = vunpack.c.l.b16 %v3373
      %v3403 = vunpack.c.l.b16 %v3374
      %v3404 = vpack.c.b16 %v3401, %v3400
      %v3405 = vpack.c.b16 %v3403, %v3402
      %v3424 = vunpack.c.l.b16 %v3380
      %v3425 = vunpack.c.l.b16 %v3381
      %v3426 = vunpack.c.l.b16 %v3382
      %v3427 = vunpack.c.l.b16 %v3383
      %v3428 = vunpack.c.l.b16 %v3384
      %v3429 = vunpack.c.l.b16 %v3385
      %v3430 = vunpack.c.l.b16 %v3386
      %v3431 = vunpack.c.l.b16 %v3387
      %v3432 = vunpack.c.l.b16 %v3388
      %v3433 = vunpack.c.l.b16 %v3389
      %v3434 = vunpack.c.l.b16 %v3390
      %v3435 = vunpack.c.l.b16 %v3391
      %v3436 = vunpack.c.l.b16 %v3392
      %v3437 = vunpack.c.l.b16 %v3393
      %v3438 = vunpack.c.l.b16 %v3394
      %v3439 = vunpack.c.l.b16 %v3395
      %v3440 = vpack.c.b16 %v3425, %v3424
      %v3441 = vpack.c.b16 %v3427, %v3426
      %v3442 = vpack.c.b16 %v3429, %v3428
      %v3443 = vpack.c.b16 %v3431, %v3430
      %v3444 = vpack.c.b16 %v3433, %v3432
      %v3445 = vpack.c.b16 %v3435, %v3434
      %v3446 = vpack.c.b16 %v3437, %v3436
      %v3447 = vpack.c.b16 %v3439, %v3438
      %3456 = vmatprep.subr.bf16.mxu0 0
      %3457 = vmatpush1.bf16.msra.mxu0 %v3440
      %3458 = vmatprep.subr.bf16.mxu0 0
      %3459 = vmatpush1.bf16.msra.mxu0 %v3441
      %3460 = vmatprep.subr.bf16.mxu0 0
      %3461 = vmatpush1.bf16.msra.mxu0 %v3442
      %3462 = vmatprep.subr.bf16.mxu0 0
      %3463 = vmatpush1.bf16.msra.mxu0 %v3443
      %3464 = vmatprep.subr.bf16.mxu0 0
      %3465 = vmatpush1.bf16.msra.mxu0 %v3444
      %3466 = vmatprep.subr.bf16.mxu0 0
      %3467 = vmatpush1.bf16.msra.mxu0 %v3445
      %3468 = vmatprep.subr.bf16.mxu0 0
      %3469 = vmatpush1.bf16.msra.mxu0 %v3446
      %3470 = vmatprep.subr.bf16.mxu0 0
      %3471 = vmatpush1.bf16.msra.mxu0 %v3447
      %3472 = vmatprep.subr.bf16.mxu0 0
      %3473 = vmatpush1.bf16.msra.mxu0 0
      %3474 = vmatprep.subr.bf16.mxu0 0
      %3475 = vmatpush1.bf16.msra.mxu0 0
      %3476 = vmatprep.subr.bf16.mxu0 0
      %3477 = vmatpush1.bf16.msra.mxu0 0
      %3478 = vmatprep.subr.bf16.mxu0 0
      %3479 = vmatpush1.bf16.msra.mxu0 0
      %3480 = vmatprep.subr.bf16.mxu0 0
      %3481 = vmatpush1.bf16.msra.mxu0 0
      %3482 = vmatprep.subr.bf16.mxu0 0
      %3483 = vmatpush1.bf16.msra.mxu0 0
      %3484 = vmatprep.subr.bf16.mxu0 0
      %3485 = vmatpush1.bf16.msra.mxu0 0
      %3486 = vmatprep.subr.bf16.mxu0 0
      %3487 = vmatpush1.bf16.msra.mxu0 0
      %3488 = vmatprep.mubr.bf16.mxu0 0
      %3489 = vmatmul.mubr.bf16.gmra.mrb[0].mxu0 %v3404
      %v3490 = vpop.f32.mrb[0].mxu0
      %v3491 = vadd.f32 0.0, %v3490
      %v3492 = vpop.f32.mrb[0].mxu0
      %v3493 = vpop.f32.mrb[0].mxu0
      %v3494 = vadd.f32 0.0, %v3493
      %v3495 = vpop.f32.mrb[0].mxu0
      %3496 = vmatprep.mubr.bf16.mxu0 0
      %3497 = vmatmul.mubr.bf16.gmra.mrb[0].mxu0 %v3405
      %v3498 = vpop.f32.mrb[0].mxu0
      %v3499 = vadd.f32 0.0, %v3498
      %v3500 = vpop.f32.mrb[0].mxu0
      %v3501 = vpop.f32.mrb[0].mxu0
      %v3502 = vadd.f32 0.0, %v3501
      %v3503 = vpop.f32.mrb[0].mxu0
      %3504 = vdwg.mxu0
      %v3505 = vadd.f32 %v3375, %v3491
      %v3506 = vadd.f32 %v3376, %v3494
      %v3507 = vadd.f32 %v3377, %v3499
      %v3508 = vadd.f32 %v3378, %v3502
      %3509 = vst [vmem:[#allocation9] sm:$0xff] %v3505
      %3510 = vst [vmem:[#allocation9 + $0x8] sm:$0xff] %v3506
      %3511 = vst [vmem:[#allocation9 + $0x10] sm:$0xff] %v3507
      %3512 = vst [vmem:[#allocation9 + $0x18] sm:$0xff] %v3508
      %v3513 = vld [vmem:[%s251] sm:$0xf]
      %v3514 = vld [vmem:[%s251 + $0x4] sm:$0xf]
      %v3515 = vld [vmem:[%s251 + $0x8] sm:$0xf]
      %v3516 = vld [vmem:[%s251 + $0xc] sm:$0xf]
      %v3517 = vld [vmem:[#allocation9] sm:$0xff]
      %v3518 = vld [vmem:[#allocation9 + $0x8] sm:$0xff]
      %v3519 = vld [vmem:[#allocation9 + $0x10] sm:$0xff]
      %v3520 = vld [vmem:[#allocation9 + $0x18] sm:$0xff]
      %v3521 = vld [vmem:[%s4] sm:$0x1]
      %v3523 = vlaneseq
      %v3524 = vshrl.u32 %v3523, 7
      %v3525 = vsub.s32 0, %v3524
      %v3526 = vrot.slane %v3521, %v3525
      %v3528 = vadd.f32 %v3517, %v3526
      %v3529 = vadd.f32 %v3518, %v3526
      %v3530 = vadd.f32 %v3519, %v3526
      %v3531 = vadd.f32 %v3520, %v3526
      %v3532 = vunpack.c.l.bf16 %v3513
      %v3533 = vunpack.c.l.bf16 %v3514
      %v3534 = vunpack.c.l.bf16 %v3515
      %v3535 = vunpack.c.l.bf16 %v3516
      %v3536 = vadd.f32 %v3528, %v3532
      %v3537 = vadd.f32 %v3529, %v3533
      %v3538 = vadd.f32 %v3530, %v3534
      %v3539 = vadd.f32 %v3531, %v3535
      %v3540 = vmax.f32 %v3536, 0.0
      %v3541 = vmax.f32 %v3537, 0.0
      %v3542 = vmax.f32 %v3538, 0.0
      %v3543 = vmax.f32 %v3539, 0.0
      %v3544 = vpack.c.bf16 %v3540, %v3540
      %v3545 = vpack.c.bf16 %v3541, %v3541
      %v3546 = vpack.c.bf16 %v3542, %v3542
      %v3547 = vpack.c.bf16 %v3543, %v3543
      %3548 = vst [vmem:[%s246] sm:$0xf] %v3544
      %3549 = vst [vmem:[%s246 + $0x4] sm:$0xf] %v3545
      %3550 = vst [vmem:[%s246 + $0x8] sm:$0xf] %v3546
      %3551 = vst [vmem:[%s246 + $0xc] sm:$0xf] %v3547
      %s3552 = smul.u32 4, %s21
      %p3553 = scmp.lt.s32.totalorder %s20, 1
      %s3554 = scalar_select %p3553, %s20, 1
      %p3555 = scmp.lt.s32.totalorder %s3552, 7
      %s3556 = scalar_select %p3555, %s3552, 7
      %s3557 = smul.addr %s3554, 8
      %s3558 = sadd.s32 %s3556, %s3557
      %s3559 = smul.addr %s3558, 4
      %s3560 = scalar_lea.vmem %s5, %s3559
      // Predicated region
      $region65: #{_forward_impl.1} parent=39 // pred_check
        %p3561 = pneg %p158
      $region66: #{_forward_impl.1} parent=39 // pred_check_branch
        %3563 = sbr.rel (%p3561) target = $region68
      $region67: #{_forward_impl.1} parent=39 // pred_region
        %s3564 = smul.u32 4, %s21
      $region68: #{_forward_impl.1} parent=39 // pred_fallthru
        _
    $region40: #{_forward_impl.1} parent=5 // pred_fallthru
      _
    %p3565 = scmp.le.s32.totalorder 2, %s11
    // Predicated region
    $region69: #{_forward_impl.1} parent=5 // pred_check
      %p3566 = pneg %p3565
    $region70: #{_forward_impl.1} parent=5 // pred_check_branch
      %3568 = sbr.rel (%p3566) target = $region72
    $region71: #{_forward_impl.1} parent=5 // pred_region
      %s3569 = ssub.s32 %s11, 2
      // Predicated region
      $region73: #{_forward_impl.1} parent=71 // pred_check
        %p3570 = pneg %p164
      $region74: #{_forward_impl.1} parent=71 // pred_check_branch
        %3572 = sbr.rel (%p3570) target = $region76
      $region75: #{_forward_impl.1} parent=71 // pred_region
        %s3573 = smul.u32 4, %s23
        %p3574 = scmp.lt.s32.totalorder %s22, 1
        %s3575 = scalar_select %p3574, %s22, 1
        %p3576 = scmp.lt.s32.totalorder %s3573, 7
        %s3577 = scalar_select %p3576, %s3573, 7
        %s3578 = smul.addr %s3575, 8
        %s3579 = sadd.s32 %s3577, %s3578
        %s3580 = smul.addr %s3579, 4
        %s3581 = scalar_lea.vmem %s5, %s3580
      $region76: #{_forward_impl.1} parent=71 // pred_fallthru
        _
    $region72: #{_forward_impl.1} parent=5 // pred_fallthru
      _
  $region6: #{_forward_impl.1} parent=0 // loop_footer
    %s15 = sadd.s32 1, %s11
  $region7: #{_forward_impl.1} parent=0 // loop_footer_branch
    %10 = sbr.rel target = $region3
  $region8: #{_forward_impl.1} parent=0 // loop_exit
    _

</llo_original>
